<compile_context>
chip_gen: v5e
topology: v5e:2x2
jax: 0.10.0
libtpu: 0.0.40
codegen_flags: <defaults>
</compile_context>

<pallas_src>
import math
from functools import partial

import jax
import jax.numpy as jnp
from jax.experimental import pallas as pl
from jax.experimental.pallas import tpu as pltpu


# ----------------------------------------------------------------------------
# Small helpers
# ----------------------------------------------------------------------------

def _round_up(x, m):
    return ((x + m - 1) // m) * m


def _bcast_spec(w):
    """BlockSpec for a weight that is identical for every grid step."""
    return pl.BlockSpec(w.shape, lambda *_, nd=w.ndim: (0,) * nd)


def _ln(x, g, b, eps=1e-5):
    """LayerNorm over the last axis (f32)."""
    mu = jnp.mean(x, axis=-1, keepdims=True)
    var = jnp.mean((x - mu) ** 2, axis=-1, keepdims=True)
    return (x - mu) * jax.lax.rsqrt(var + eps) * g + b


def _mha_heads(q, k, v, bias, nheads, scratch_ref):
    """Per-head softmax attention; head outputs are written into a [Sq,D] VMEM
    scratch so the output projection can be one D-wide matmul."""
    _, D = q.shape
    dh = D // nheads
    for h in range(nheads):                               # static unroll
        sl = slice(h * dh, (h + 1) * dh)
        s = jax.lax.dot_general(q[:, sl].astype(jnp.bfloat16),
                                k[:, sl].astype(jnp.bfloat16),
                                (((1,), (1,)), ((), ())),
                                preferred_element_type=jnp.float32)
        if bias is not None:
            s = s + bias
        s = s - jnp.max(s, axis=-1, keepdims=True)
        p = jnp.exp(s)
        p = p * pl.reciprocal(jnp.sum(p, axis=-1, keepdims=True), approx=True)
        scratch_ref[:, sl] = jnp.dot(p.astype(jnp.bfloat16),
                                     v[:, sl].astype(jnp.bfloat16),
                                     preferred_element_type=jnp.float32)
    return scratch_ref[...]                               # [Sq, D] f32


# ----------------------------------------------------------------------------
# Fused 2-layer MLP (backbone patch-embed + input_proj)
# ----------------------------------------------------------------------------

def _mlp2_kernel(x_ref, w1_ref, b1_ref, w2_ref, b2_ref, o_ref):
    h = jnp.dot(x_ref[...].astype(jnp.bfloat16), w1_ref[...],
                preferred_element_type=jnp.float32) + b1_ref[...]
    h = jnp.maximum(h, 0.0)
    o_ref[...] = (jnp.dot(h.astype(jnp.bfloat16), w2_ref[...],
                          preferred_element_type=jnp.float32)
                  + b2_ref[...]).astype(o_ref.dtype)


def pallas_mlp2(x, w1, b1, w2, b2, *, cap=512):
    """o = relu(x @ w1 + b1) @ w2 + b2.  x:[M,K].  Single grid step when M is
    small; row-tiled only when M exceeds `cap`."""
    M, K = x.shape
    H = w1.shape[1]
    N = w2.shape[1]
    Mp = _round_up(M, 8)
    tm = Mp if Mp <= cap else cap
    Mp = _round_up(Mp, tm)
    xp = x if Mp == M else jnp.pad(x, ((0, Mp - M), (0, 0)))
    out = pl.pallas_call(
        _mlp2_kernel,
        out_shape=jax.ShapeDtypeStruct((Mp, N), jnp.float32),
        grid=(Mp // tm,),
        in_specs=[pl.BlockSpec((tm, K), lambda i: (i, 0)),
                  _bcast_spec(w1), _bcast_spec(b1), _bcast_spec(w2), _bcast_spec(b2)],
        out_specs=pl.BlockSpec((tm, N), lambda i: (i, 0)),
        compiler_params=pltpu.CompilerParams(dimension_semantics=("parallel",)),
    )(xp, w1, b1, w2, b2)
    return out if Mp == M else out[:M]


# ----------------------------------------------------------------------------
# Fused transformer encoder layer (one pallas_call, grid over batch)
# ----------------------------------------------------------------------------

def _encoder_layer_kernel(src_ref, pos_ref, bias_ref,
                          wqk_ref, bqk_ref, wv_ref, bv_ref, wo_ref, bo_ref,
                          ln1g_ref, ln1b_ref,
                          w1_ref, b1_ref, w2_ref, b2_ref,
                          ln2g_ref, ln2b_ref,
                          o_ref, head_scratch, *, nheads):
    src = src_ref[0]                                     # [S, D] f32
    pos = pos_ref[0]
    bias = bias_ref[0]                                   # [1, S]
    D = src.shape[-1]

    # fused Q|K projection (q = k = src + pos, scale folded into wq), V on src
    qk = jnp.dot((src + pos).astype(jnp.bfloat16), wqk_ref[...],
                 preferred_element_type=jnp.float32) + bqk_ref[...]
    v = jnp.dot(src.astype(jnp.bfloat16), wv_ref[...],
                preferred_element_type=jnp.float32) + bv_ref[...]

    attn = _mha_heads(qk[:, :D], qk[:, D:], v, bias, nheads, head_scratch)
    attn = jnp.dot(attn.astype(jnp.bfloat16), wo_ref[...],
                   preferred_element_type=jnp.float32) + bo_ref[...]

    x = _ln(src + attn, ln1g_ref[...], ln1b_ref[...])
    h = jnp.maximum(jnp.dot(x.astype(jnp.bfloat16), w1_ref[...],
                            preferred_element_type=jnp.float32) + b1_ref[...], 0.0)
    y = jnp.dot(h.astype(jnp.bfloat16), w2_ref[...],
                preferred_element_type=jnp.float32) + b2_ref[...]
    o_ref[0] = _ln(x + y, ln2g_ref[...], ln2b_ref[...]).astype(o_ref.dtype)


def encoder_layer_fused(src, pos, bias, lw, nheads):
    B, S, D = src.shape
    names = ["wqk", "bqk", "wv", "bv", "wo", "bo", "ln1g", "ln1b",
             "w1", "b1", "w2", "b2", "ln2g", "ln2b"]
    weights = [lw[n] for n in names]
    in_specs = [pl.BlockSpec((1, S, D), lambda b: (b, 0, 0)),
                pl.BlockSpec((1, S, D), lambda b: (b, 0, 0)),
                pl.BlockSpec((1, 1, S), lambda b: (b, 0, 0))]
    in_specs += [_bcast_spec(w) for w in weights]
    return pl.pallas_call(
        partial(_encoder_layer_kernel, nheads=nheads),
        out_shape=jax.ShapeDtypeStruct((B, S, D), jnp.float32),
        grid=(B,),
        in_specs=in_specs,
        out_specs=pl.BlockSpec((1, S, D), lambda b: (b, 0, 0)),
        scratch_shapes=[pltpu.VMEM((S, D), jnp.float32)],
        compiler_params=pltpu.CompilerParams(dimension_semantics=("parallel",)),
    )(src, pos, bias, *weights)


# ----------------------------------------------------------------------------
# Fused transformer decoder layer (self-attn + cross-attn + FFN + dec_norm)
# ----------------------------------------------------------------------------

def _decoder_layer_kernel(tgt_ref, qpos_ref, mem_ref, mpos_ref, bias_ref,
                          sa_wqk, sa_bqk, sa_wv, sa_bv, sa_wo, sa_bo,
                          ln1g, ln1b,
                          ca_wq, ca_bq, ca_wk, ca_bk, ca_wv, ca_bv, ca_wo, ca_bo,
                          ln2g, ln2b,
                          w1, b1, w2, b2,
                          ln3g, ln3b,
                          ng, nb,
                          tgt_out_ref, hs_out_ref, head_scratch, *, nheads):
    tgt = tgt_ref[0]                                     # [Q, D]
    qpos = qpos_ref[0]
    mem = mem_ref[0]                                     # [S, D]
    mpos = mpos_ref[0]
    bias = bias_ref[0]                                   # [1, S]
    D = tgt.shape[-1]

    # --- self-attention: q = k = tgt + query_pos, v = tgt (no key padding) ---
    qk = jnp.dot((tgt + qpos).astype(jnp.bfloat16), sa_wqk[...],
                 preferred_element_type=jnp.float32) + sa_bqk[...]
    v = jnp.dot(tgt.astype(jnp.bfloat16), sa_wv[...],
                preferred_element_type=jnp.float32) + sa_bv[...]
    attn = _mha_heads(qk[:, :D], qk[:, D:], v, None, nheads, head_scratch)
    attn = jnp.dot(attn.astype(jnp.bfloat16), sa_wo[...],
                   preferred_element_type=jnp.float32) + sa_bo[...]
    x = _ln(tgt + attn, ln1g[...], ln1b[...])

    # --- cross-attention: q = x + query_pos, k = memory + pos, v = memory ---
    q = jnp.dot((x + qpos).astype(jnp.bfloat16), ca_wq[...],
                preferred_element_type=jnp.float32) + ca_bq[...]
    k = jnp.dot((mem + mpos).astype(jnp.bfloat16), ca_wk[...],
                preferred_element_type=jnp.float32) + ca_bk[...]
    v = jnp.dot(mem.astype(jnp.bfloat16), ca_wv[...],
                preferred_element_type=jnp.float32) + ca_bv[...]
    attn = _mha_heads(q, k, v, bias, nheads, head_scratch)
    attn = jnp.dot(attn.astype(jnp.bfloat16), ca_wo[...],
                   preferred_element_type=jnp.float32) + ca_bo[...]
    x = _ln(x + attn, ln2g[...], ln2b[...])

    # --- FFN ---
    h = jnp.maximum(jnp.dot(x.astype(jnp.bfloat16), w1[...],
                            preferred_element_type=jnp.float32) + b1[...], 0.0)
    y = jnp.dot(h.astype(jnp.bfloat16), w2[...],
                preferred_element_type=jnp.float32) + b2[...]
    x = _ln(x + y, ln3g[...], ln3b[...])

    tgt_out_ref[0] = x.astype(tgt_out_ref.dtype)
    hs_out_ref[0] = _ln(x, ng[...], nb[...]).astype(hs_out_ref.dtype)   # dec_norm


def decoder_layer_fused(tgt, qpos, memory, pos, bias, lw, nheads):
    B, Q, D = tgt.shape
    S = memory.shape[1]
    names = ["sa_wqk", "sa_bqk", "sa_wv", "sa_bv", "sa_wo", "sa_bo",
             "ln1g", "ln1b",
             "ca_wq", "ca_bq", "ca_wk", "ca_bk", "ca_wv", "ca_bv", "ca_wo", "ca_bo",
             "ln2g", "ln2b", "w1", "b1", "w2", "b2", "ln3g", "ln3b", "ng", "nb"]
    weights = [lw[n] for n in names]
    in_specs = [pl.BlockSpec((1, Q, D), lambda b: (b, 0, 0)),
                pl.BlockSpec((1, Q, D), lambda b: (0, 0, 0)),   # shared query_pos
                pl.BlockSpec((1, S, D), lambda b: (b, 0, 0)),
                pl.BlockSpec((1, S, D), lambda b: (b, 0, 0)),
                pl.BlockSpec((1, 1, S), lambda b: (b, 0, 0))]
    in_specs += [_bcast_spec(w) for w in weights]
    tgt_out, hs_out = pl.pallas_call(
        partial(_decoder_layer_kernel, nheads=nheads),
        out_shape=(jax.ShapeDtypeStruct((B, Q, D), jnp.float32),
                   jax.ShapeDtypeStruct((B, Q, D), jnp.float32)),
        grid=(B,),
        in_specs=in_specs,
        out_specs=(pl.BlockSpec((1, Q, D), lambda b: (b, 0, 0)),
                   pl.BlockSpec((1, Q, D), lambda b: (b, 0, 0))),
        scratch_shapes=[pltpu.VMEM((Q, D), jnp.float32)],
        compiler_params=pltpu.CompilerParams(dimension_semantics=("parallel",)),
    )(tgt, qpos, memory, pos, bias, *weights)
    return tgt_out, hs_out


# ----------------------------------------------------------------------------
# Fused prediction heads: class / bbox MLP / graph bilinear
# ----------------------------------------------------------------------------

def _heads_kernel(hs_ref, wcat_ref, bcat_ref, wb2_ref, bb2_ref, wb3_ref, bb3_ref,
                  lb_ref, graph_ref, *, num_classes, hidden_dim):
    C1 = num_classes + 1
    D = hidden_dim
    h = hs_ref[0]                                        # [B*Q, D]
    # one concatenated lane-dense matmul: [bbox1 | graph_src | graph_dst | class]
    cat = jnp.dot(h.astype(jnp.bfloat16), wcat_ref[...],
                  preferred_element_type=jnp.float32) + bcat_ref[...]
    b1 = jnp.maximum(cat[:, :D], 0.0)
    es = cat[:, D:2 * D]
    ed = cat[:, 2 * D:3 * D]
    logits = cat[:, 3 * D:]

    b2 = jnp.maximum(jnp.dot(b1.astype(jnp.bfloat16), wb2_ref[...],
                             preferred_element_type=jnp.float32) + bb2_ref[...], 0.0)
    boxes = jax.nn.sigmoid(jnp.dot(b2.astype(jnp.bfloat16), wb3_ref[...],
                                   preferred_element_type=jnp.float32) + bb3_ref[...])

    # packed logits|boxes output (one store stream)
    lb_ref[0, :, :C1] = logits.astype(lb_ref.dtype)
    lb_ref[0, :, C1:] = boxes.astype(lb_ref.dtype)

    # pairwise bilinear graph scores per batch element
    B = graph_ref.shape[1]
    Q = graph_ref.shape[2]
    es3 = es.reshape(B, Q, D).astype(jnp.bfloat16)
    ed3 = ed.reshape(B, Q, D).astype(jnp.bfloat16)
    graph_ref[0] = jnp.einsum("bqd,bkd->bqk", es3, ed3,
                              preferred_element_type=jnp.float32).astype(graph_ref.dtype)


def pallas_heads(hs, hw, num_classes):
    """hs:[L,B,Q,D] -> (logits [L,B,Q,C+1], boxes [L,B,Q,4], graph [L,B,Q,Q,1])."""
    L, B, Q, D = hs.shape
    C1 = num_classes + 1
    hs2 = hs.reshape(L, B * Q, D)
    weights = [hw["wcat"], hw["bcat"], hw["wb2"], hw["bb2"], hw["wb3"], hw["bb3"]]
    lb, graph = pl.pallas_call(
        partial(_heads_kernel, num_classes=num_classes, hidden_dim=D),
        out_shape=(jax.ShapeDtypeStruct((L, B * Q, C1 + 4), jnp.float32),
                   jax.ShapeDtypeStruct((L, B, Q, Q), jnp.float32)),
        grid=(L,),
        in_specs=[pl.BlockSpec((1, B * Q, D), lambda l: (l, 0, 0))] +
                 [_bcast_spec(w) for w in weights],
        out_specs=(pl.BlockSpec((1, B * Q, C1 + 4), lambda l: (l, 0, 0)),
                   pl.BlockSpec((1, B, Q, Q), lambda l: (l, 0, 0, 0))),
        compiler_params=pltpu.CompilerParams(dimension_semantics=("parallel",)),
    )(hs2, *weights)
    logits = lb[..., :C1].reshape(L, B, Q, C1)
    boxes = lb[..., C1:].reshape(L, B, Q, 4)
    return logits, boxes, graph[..., None]


# ----------------------------------------------------------------------------
# Weight preparation: concat/fold/cast once (traced inside jit, negligible)
# ----------------------------------------------------------------------------

def prepare_weights(params, cfg):
    D = cfg["hidden_dim"]
    nheads = cfg["nheads"]
    scale = 1.0 / math.sqrt(D // nheads)
    bf = lambda a: a.astype(jnp.bfloat16)
    row = lambda a: a.reshape(1, -1).astype(jnp.float32)

    def fuse_qk(mha):
        wqk = jnp.concatenate([mha["q"]["w"] * scale, mha["k"]["w"]], axis=1)
        bqk = jnp.concatenate([mha["q"]["b"] * scale, mha["k"]["b"]], axis=0)
        return bf(wqk), row(bqk)

    enc = []
    for lp in params["encoder"]:
        wqk, bqk = fuse_qk(lp["sa"])
        enc.append(dict(
            wqk=wqk, bqk=bqk,
            wv=bf(lp["sa"]["v"]["w"]), bv=row(lp["sa"]["v"]["b"]),
            wo=bf(lp["sa"]["o"]["w"]), bo=row(lp["sa"]["o"]["b"]),
            ln1g=row(lp["ln1"]["g"]), ln1b=row(lp["ln1"]["b"]),
            w1=bf(lp["lin1"]["w"]), b1=row(lp["lin1"]["b"]),
            w2=bf(lp["lin2"]["w"]), b2=row(lp["lin2"]["b"]),
            ln2g=row(lp["ln2"]["g"]), ln2b=row(lp["ln2"]["b"])))

    dec = []
    for lp in params["decoder"]:
        wqk, bqk = fuse_qk(lp["sa"])
        dec.append(dict(
            sa_wqk=wqk, sa_bqk=bqk,
            sa_wv=bf(lp["sa"]["v"]["w"]), sa_bv=row(lp["sa"]["v"]["b"]),
            sa_wo=bf(lp["sa"]["o"]["w"]), sa_bo=row(lp["sa"]["o"]["b"]),
            ln1g=row(lp["ln1"]["g"]), ln1b=row(lp["ln1"]["b"]),
            ca_wq=bf(lp["ca"]["q"]["w"] * scale), ca_bq=row(lp["ca"]["q"]["b"] * scale),
            ca_wk=bf(lp["ca"]["k"]["w"]), ca_bk=row(lp["ca"]["k"]["b"]),
            ca_wv=bf(lp["ca"]["v"]["w"]), ca_bv=row(lp["ca"]["v"]["b"]),
            ca_wo=bf(lp["ca"]["o"]["w"]), ca_bo=row(lp["ca"]["o"]["b"]),
            ln2g=row(lp["ln2"]["g"]), ln2b=row(lp["ln2"]["b"]),
            w1=bf(lp["lin1"]["w"]), b1=row(lp["lin1"]["b"]),
            w2=bf(lp["lin2"]["w"]), b2=row(lp["lin2"]["b"]),
            ln3g=row(lp["ln3"]["g"]), ln3b=row(lp["ln3"]["b"]),
            ng=row(params["dec_norm"]["g"]), nb=row(params["dec_norm"]["b"])))

    heads = dict(
        wcat=bf(jnp.concatenate([params["bbox_embed"][0]["w"],
                                 params["graph_src"]["w"],
                                 params["graph_dst"]["w"],
                                 params["class_embed"]["w"]], axis=1)),
        bcat=row(jnp.concatenate([params["bbox_embed"][0]["b"],
                                  params["graph_src"]["b"],
                                  params["graph_dst"]["b"],
                                  params["class_embed"]["b"]], axis=0)),
        wb2=bf(params["bbox_embed"][1]["w"]), bb2=row(params["bbox_embed"][1]["b"]),
        wb3=bf(params["bbox_embed"][2]["w"]), bb3=row(params["bbox_embed"][2]["b"]))

    backbone = dict(
        w1=bf(params["backbone"]["w"]), b1=row(params["backbone"]["b"]),
        w2=bf(params["input_proj"]["w"]), b2=row(params["input_proj"]["b"]))

    return dict(encoder=enc, decoder=dec, heads=heads, backbone=backbone,
                query_embed=params["query_embed"], graph_bias=params["graph_bias"])


# ----------------------------------------------------------------------------
# Model glue (positional encodings, patchify) in plain JAX
# ----------------------------------------------------------------------------

def position_embedding_sine(mask, num_pos_feats, temperature=10000.0, eps=1e-6):
    """PositionEmbeddingSine(normalize=True). mask: [B,H,W] bool (True = padded)."""
    not_mask = (~mask).astype(jnp.float32)
    y_embed = jnp.cumsum(not_mask, axis=1)
    x_embed = jnp.cumsum(not_mask, axis=2)
    scale = 2.0 * math.pi
    y_embed = y_embed / (y_embed[:, -1:, :] + eps) * scale
    x_embed = x_embed / (x_embed[:, :, -1:] + eps) * scale
    dim_t = jnp.arange(num_pos_feats, dtype=jnp.float32)
    dim_t = temperature ** (2.0 * jnp.floor(dim_t / 2.0) / num_pos_feats)
    pos_x = x_embed[..., None] / dim_t
    pos_y = y_embed[..., None] / dim_t
    B, H, W = mask.shape
    pos_x = jnp.stack([jnp.sin(pos_x[..., 0::2]), jnp.cos(pos_x[..., 1::2])],
                      axis=4).reshape(B, H, W, -1)
    pos_y = jnp.stack([jnp.sin(pos_y[..., 0::2]), jnp.cos(pos_y[..., 1::2])],
                      axis=4).reshape(B, H, W, -1)
    return jnp.concatenate([pos_y, pos_x], axis=3)       # [B,H,W,2*num_pos_feats]


def backbone_and_proj(x_nchw, bw, patch):
    """Synthetic MaskedBackbone (patchify + linear + relu) fused with the 1x1-conv
    input_proj into one linear->relu->linear Pallas kernel."""
    B, C, H, W = x_nchw.shape
    x = jnp.transpose(x_nchw, (0, 2, 3, 1))              # NHWC
    Hf, Wf = H // patch, W // patch
    patches = x.reshape(B, Hf, patch, Wf, patch, C)
    patches = patches.transpose(0, 1, 3, 2, 4, 5).reshape(B * Hf * Wf, patch * patch * C)
    src = pallas_mlp2(patches, bw["w1"], bw["b1"], bw["w2"], bw["b2"])
    return src.reshape(B, Hf, Wf, -1)


def graphdetr_forward(params, images, cfg):
    """GRAPHDETR.forward (eval): returns pred_logits / pred_boxes / pred_graph."""
    D = cfg["hidden_dim"]
    nheads = cfg["nheads"]
    Q = cfg["num_queries"]
    pw = prepare_weights(params, cfg)

    # GraphDetr.preprocess_image: normalize with pixel_mean / pixel_std
    x = (images - cfg["pixel_mean"][None, :, None, None]) / cfg["pixel_std"][None, :, None, None]

    # backbone + input_proj (fused) + sine positional embedding (Joiner)
    src = backbone_and_proj(x, pw["backbone"], cfg["patch"])
    B, Hf, Wf, _ = src.shape
    mask = jnp.zeros((B, Hf, Wf), dtype=bool)            # no padding in batch
    pos = position_embedding_sine(mask, D // 2)          # [B,Hf,Wf,D]

    src = src.reshape(B, Hf * Wf, D)
    pos = pos.reshape(B, Hf * Wf, D)
    # bf16-safe additive key-padding bias (mask is all-False here)
    key_bias = jnp.where(mask.reshape(B, 1, Hf * Wf), -3e4, 0.0).astype(jnp.float32)

    # transformer encoder (one fused pallas_call per layer, grid over B)
    memory = src
    for lw in pw["encoder"]:
        memory = encoder_layer_fused(memory, pos, key_bias, lw, nheads)

    # transformer decoder (return_intermediate_dec=True; dec_norm fused in-kernel)
    query_pos = pw["query_embed"][None]                  # [1, Q, D], shared across batch
    tgt = jnp.zeros((B, Q, D), jnp.float32)
    inter = []
    for lw in pw["decoder"]:
        tgt, hs_l = decoder_layer_fused(tgt, query_pos, memory, pos, key_bias, lw, nheads)
        inter.append(hs_l)
    hs = jnp.stack(inter, axis=0)                        # [L,B,Q,D]

    # fused prediction heads (class / bbox / graph), grid over L
    logits, boxes, graph = pallas_heads(hs, pw["heads"], cfg["num_classes"])
    graph = graph + pw["graph_bias"]

    return {"pred_logits": logits[-1],
            "pred_boxes": boxes[-1],
            "pred_graph": graph[-1]}


# ----------------------------------------------------------------------------
# Deterministic parameter construction
# ----------------------------------------------------------------------------

class ParamInit:
    def __init__(self, seed=0):
        self.key = jax.random.PRNGKey(seed)

    def next(self, shape, scale=0.05):
        self.key, sub = jax.random.split(self.key)
        return scale * jax.random.normal(sub, shape, dtype=jnp.float32)


def make_linear(pi, din, dout):
    return {"w": pi.next((din, dout)), "b": jnp.zeros((dout,), jnp.float32)}


def make_ln(d):
    return {"g": jnp.ones((d,), jnp.float32), "b": jnp.zeros((d,), jnp.float32)}


def make_mha(pi, d):
    return {"q": make_linear(pi, d, d), "k": make_linear(pi, d, d),
            "v": make_linear(pi, d, d), "o": make_linear(pi, d, d)}


def make_enc_layer(pi, d, dff):
    return {"sa": make_mha(pi, d), "ln1": make_ln(d),
            "lin1": make_linear(pi, d, dff), "lin2": make_linear(pi, dff, d),
            "ln2": make_ln(d)}


def make_dec_layer(pi, d, dff):
    return {"sa": make_mha(pi, d), "ca": make_mha(pi, d),
            "ln1": make_ln(d), "ln2": make_ln(d), "ln3": make_ln(d),
            "lin1": make_linear(pi, d, dff), "lin2": make_linear(pi, dff, d)}


def init_params(cfg, seed=0):
    pi = ParamInit(seed)
    D, dff = cfg["hidden_dim"], cfg["dim_feedforward"]
    P, Cb = cfg["patch"], cfg["backbone_channels"]
    return {
        "backbone": make_linear(pi, P * P * 3, Cb),
        "input_proj": make_linear(pi, Cb, D),
        "query_embed": pi.next((cfg["num_queries"], D)),
        "encoder": [make_enc_layer(pi, D, dff) for _ in range(cfg["enc_layers"])],
        "decoder": [make_dec_layer(pi, D, dff) for _ in range(cfg["dec_layers"])],
        "dec_norm": make_ln(D),
        "class_embed": make_linear(pi, D, cfg["num_classes"] + 1),
        "bbox_embed": [make_linear(pi, D, D), make_linear(pi, D, D), make_linear(pi, D, 4)],
        "graph_src": make_linear(pi, D, D),
        "graph_dst": make_linear(pi, D, D),
        "graph_bias": jnp.zeros((), jnp.float32),
    }


# ----------------------------------------------------------------------------
# Main
# ----------------------------------------------------------------------------

if __name__ == "__main__":
    cfg = dict(
        hidden_dim=32, nheads=4, dim_feedforward=64,
        enc_layers=2, dec_layers=2, num_queries=8, num_classes=4,
        backbone_channels=16, patch=4,
        pixel_mean=jnp.array([123.675, 116.28, 103.53], jnp.float32),
        pixel_std=jnp.array([58.395, 57.12, 57.375], jnp.float32),
    )
    params = init_params(cfg, seed=0)

    key = jax.random.PRNGKey(0)
    images = jax.random.uniform(key, (2, 3, 32, 32), dtype=jnp.float32) * 255.0  # NCHW

    fwd = jax.jit(partial(graphdetr_forward, cfg=cfg))
    out = fwd(params, images)
    out = jax.block_until_ready(out)

    assert out["pred_logits"].shape == (2, cfg["num_queries"], cfg["num_classes"] + 1)
    assert out["pred_boxes"].shape == (2, cfg["num_queries"], 4)
    assert out["pred_graph"].shape == (2, cfg["num_queries"], cfg["num_queries"], 1)
    assert all(bool(jnp.all(jnp.isfinite(v))) for v in out.values())

    # inference-style post-heads (GraphDetr.inference, glue-level):
    probs = jax.nn.softmax(out["pred_logits"], axis=-1)[..., :-1]
    scores, labels = probs.max(-1), probs.argmax(-1)
    graph_bool = jax.nn.sigmoid(out["pred_graph"])[..., 0] > 0.5
    jax.block_until_ready((scores, labels, graph_bool))

    print("KERNEL_OK")
</pallas_src>

<mosaic_0001>
module attributes {stable_mosaic.version = 11 : i64} {
  func.func @_mlp2_kernel(%arg0: i32, %arg1: memref<128x48xf32, #tpu.memory_space<vmem>>, %arg2: memref<48x16xbf16, #tpu.memory_space<vmem>>, %arg3: memref<1x16xf32, #tpu.memory_space<vmem>>, %arg4: memref<16x32xbf16, #tpu.memory_space<vmem>>, %arg5: memref<1x32xf32, #tpu.memory_space<vmem>>, %arg6: memref<128x32xf32, #tpu.memory_space<vmem>>) attributes {dimension_semantics = [#tpu.dimension_semantics<parallel>], iteration_bounds = array<i64: 1>, scalar_prefetch = 0 : i64, scratch_operands = 0 : i64, tpu.core_type = #tpu.core_type<tc>, window_params = [{transform_indices = @transform_0, window_bounds = array<i64: 128, 48>}, {pipeline_mode = #tpu.pipeline_mode<synchronous>, transform_indices = @transform_1, window_bounds = array<i64: 48, 16>}, {pipeline_mode = #tpu.pipeline_mode<synchronous>, transform_indices = @transform_2, window_bounds = array<i64: 1, 16>}, {pipeline_mode = #tpu.pipeline_mode<synchronous>, transform_indices = @transform_3, window_bounds = array<i64: 16, 32>}, {pipeline_mode = #tpu.pipeline_mode<synchronous>, transform_indices = @transform_4, window_bounds = array<i64: 1, 32>}, {transform_indices = @transform_5, window_bounds = array<i64: 128, 32>}]} {
    %c0 = arith.constant 0 : index
    %c0_0 = arith.constant 0 : index
    %0 = vector.load %arg1[%c0, %c0_0] : memref<128x48xf32, #tpu.memory_space<vmem>>, vector<128x48xf32>
    %1 = arith.truncf %0 : vector<128x48xf32> to vector<128x48xbf16>
    %c0_1 = arith.constant 0 : index
    %c0_2 = arith.constant 0 : index
    %2 = vector.load %arg2[%c0_1, %c0_2] : memref<48x16xbf16, #tpu.memory_space<vmem>>, vector<48x16xbf16>
    %cst = arith.constant dense<0.000000e+00> : vector<128x16xf32>
    %3 = tpu.matmul %1, %2, %cst {dimension_numbers = #tpu.dot_dimension_numbers<[1], [0], [0], [1], [0, 0, 1, 1], [], []>} : vector<128x48xbf16>, vector<48x16xbf16>, vector<128x16xf32> -> vector<128x16xf32>
    %c0_3 = arith.constant 0 : index
    %c0_4 = arith.constant 0 : index
    %4 = vector.load %arg3[%c0_3, %c0_4] : memref<1x16xf32, #tpu.memory_space<vmem>>, vector<1x16xf32>
    %5 = vector.broadcast %4 : vector<1x16xf32> to vector<128x16xf32>
    %6 = arith.addf %3, %5 : vector<128x16xf32>
    %cst_5 = arith.constant 0.000000e+00 : f32
    %7 = vector.broadcast %cst_5 : f32 to vector<128x16xf32>
    %8 = arith.maximumf %6, %7 : vector<128x16xf32>
    %9 = arith.truncf %8 : vector<128x16xf32> to vector<128x16xbf16>
    %c0_6 = arith.constant 0 : index
    %c0_7 = arith.constant 0 : index
    %10 = vector.load %arg4[%c0_6, %c0_7] : memref<16x32xbf16, #tpu.memory_space<vmem>>, vector<16x32xbf16>
    %cst_8 = arith.constant dense<0.000000e+00> : vector<128x32xf32>
    %11 = tpu.matmul %9, %10, %cst_8 {dimension_numbers = #tpu.dot_dimension_numbers<[1], [0], [0], [1], [0, 0, 1, 1], [], []>} : vector<128x16xbf16>, vector<16x32xbf16>, vector<128x32xf32> -> vector<128x32xf32>
    %c0_9 = arith.constant 0 : index
    %c0_10 = arith.constant 0 : index
    %12 = vector.load %arg5[%c0_9, %c0_10] : memref<1x32xf32, #tpu.memory_space<vmem>>, vector<1x32xf32>
    %13 = vector.broadcast %12 : vector<1x32xf32> to vector<128x32xf32>
    %14 = arith.addf %11, %13 : vector<128x32xf32>
    %c0_11 = arith.constant 0 : index
    %c0_12 = arith.constant 0 : index
    %15 = vector.load %arg6[%c0_11, %c0_12] : memref<128x32xf32, #tpu.memory_space<vmem>>, vector<128x32xf32>
    tpu.vector_store %arg6[%c0_11, %c0_12], %14 {strides = array<i32>} : memref<128x32xf32, #tpu.memory_space<vmem>>, vector<128x32xf32>,
    return
  }
  func.func @transform_0(%arg0: i32) -> (i32, i32) {
    %c0_i32 = arith.constant 0 : i32
    %c0_i32_0 = arith.constant 0 : i32
    return %arg0, %c0_i32 : i32, i32
  }
  func.func @transform_1(%arg0: i32) -> (i32, i32) {
    %c0_i32 = arith.constant 0 : i32
    %c0_i32_0 = arith.constant 0 : i32
    %c0_i32_1 = arith.constant 0 : i32
    return %c0_i32, %c0_i32_0 : i32, i32
  }
  func.func @transform_2(%arg0: i32) -> (i32, i32) {
    %c0_i32 = arith.constant 0 : i32
    %c0_i32_0 = arith.constant 0 : i32
    %c0_i32_1 = arith.constant 0 : i32
    return %c0_i32, %c0_i32_0 : i32, i32
  }
  func.func @transform_3(%arg0: i32) -> (i32, i32) {
    %c0_i32 = arith.constant 0 : i32
    %c0_i32_0 = arith.constant 0 : i32
    %c0_i32_1 = arith.constant 0 : i32
    return %c0_i32, %c0_i32_0 : i32, i32
  }
  func.func @transform_4(%arg0: i32) -> (i32, i32) {
    %c0_i32 = arith.constant 0 : i32
    %c0_i32_0 = arith.constant 0 : i32
    %c0_i32_1 = arith.constant 0 : i32
    return %c0_i32, %c0_i32_0 : i32, i32
  }
  func.func @transform_5(%arg0: i32) -> (i32, i32) {
    %c0_i32 = arith.constant 0 : i32
    %c0_i32_0 = arith.constant 0 : i32
    return %arg0, %c0_i32 : i32, i32
  }
}

module attributes {stable_mosaic.version = 11 : i64} {
  func.func @_encoder_layer_kernel(%arg0: i32, %arg1: memref<1x64x32xf32, #tpu.memory_space<vmem>>, %arg2: memref<1x64x32xf32, #tpu.memory_space<vmem>>, %arg3: memref<1x1x64xf32, #tpu.memory_space<vmem>>, %arg4: memref<32x64xbf16, #tpu.memory_space<vmem>>, %arg5: memref<1x64xf32, #tpu.memory_space<vmem>>, %arg6: memref<32x32xbf16, #tpu.memory_space<vmem>>, %arg7: memref<1x32xf32, #tpu.memory_space<vmem>>, %arg8: memref<32x32xbf16, #tpu.memory_space<vmem>>, %arg9: memref<1x32xf32, #tpu.memory_space<vmem>>, %arg10: memref<1x32xf32, #tpu.memory_space<vmem>>, %arg11: memref<1x32xf32, #tpu.memory_space<vmem>>, %arg12: memref<32x64xbf16, #tpu.memory_space<vmem>>, %arg13: memref<1x64xf32, #tpu.memory_space<vmem>>, %arg14: memref<64x32xbf16, #tpu.memory_space<vmem>>, %arg15: memref<1x32xf32, #tpu.memory_space<vmem>>, %arg16: memref<1x32xf32, #tpu.memory_space<vmem>>, %arg17: memref<1x32xf32, #tpu.memory_space<vmem>>, %arg18: memref<1x64x32xf32, #tpu.memory_space<vmem>>, %arg19: memref<64x32xf32, #tpu.memory_space<vmem>>) attributes {dimension_semantics = [#tpu.dimension_semantics<parallel>], iteration_bounds = array<i64: 2>, scalar_prefetch = 0 : i64, scratch_operands = 1 : i64, tpu.core_type = #tpu.core_type<tc>, window_params = [{transform_indices = @transform_0, window_bounds = array<i64: 1, 64, 32>}, {transform_indices = @transform_1, window_bounds = array<i64: 1, 64, 32>}, {transform_indices = @transform_2, window_bounds = array<i64: 1, 1, 64>}, {pipeline_mode = #tpu.pipeline_mode<synchronous>, transform_indices = @transform_3, window_bounds = array<i64: 32, 64>}, {pipeline_mode = #tpu.pipeline_mode<synchronous>, transform_indices = @transform_4, window_bounds = array<i64: 1, 64>}, {pipeline_mode = #tpu.pipeline_mode<synchronous>, transform_indices = @transform_5, window_bounds = array<i64: 32, 32>}, {pipeline_mode = #tpu.pipeline_mode<synchronous>, transform_indices = @transform_6, window_bounds = array<i64: 1, 32>}, {pipeline_mode = #tpu.pipeline_mode<synchronous>, transform_indices = @transform_7, window_bounds = array<i64: 32, 32>}, {pipeline_mode = #tpu.pipeline_mode<synchronous>, transform_indices = @transform_8, window_bounds = array<i64: 1, 32>}, {pipeline_mode = #tpu.pipeline_mode<synchronous>, transform_indices = @transform_9, window_bounds = array<i64: 1, 32>}, {pipeline_mode = #tpu.pipeline_mode<synchronous>, transform_indices = @transform_10, window_bounds = array<i64: 1, 32>}, {pipeline_mode = #tpu.pipeline_mode<synchronous>, transform_indices = @transform_11, window_bounds = array<i64: 32, 64>}, {pipeline_mode = #tpu.pipeline_mode<synchronous>, transform_indices = @transform_12, window_bounds = array<i64: 1, 64>}, {pipeline_mode = #tpu.pipeline_mode<synchronous>, transform_indices = @transform_13, window_bounds = array<i64: 64, 32>}, {pipeline_mode = #tpu.pipeline_mode<synchronous>, transform_indices = @transform_14, window_bounds = array<i64: 1, 32>}, {pipeline_mode = #tpu.pipeline_mode<synchronous>, transform_indices = @transform_15, window_bounds = array<i64: 1, 32>}, {pipeline_mode = #tpu.pipeline_mode<synchronous>, transform_indices = @transform_16, window_bounds = array<i64: 1, 32>}, {transform_indices = @transform_17, window_bounds = array<i64: 1, 64, 32>}]} {
    %c0 = arith.constant 0 : index
    %c0_0 = arith.constant 0 : index
    %c0_1 = arith.constant 0 : index
    %0 = vector.load %arg1[%c0, %c0_0, %c0_1] : memref<1x64x32xf32, #tpu.memory_space<vmem>>, vector<1x64x32xf32>
    %1 = vector.shape_cast %0 : vector<1x64x32xf32> to vector<64x32xf32>
    %c0_2 = arith.constant 0 : index
    %c0_3 = arith.constant 0 : index
    %c0_4 = arith.constant 0 : index
    %2 = vector.load %arg2[%c0_2, %c0_3, %c0_4] : memref<1x64x32xf32, #tpu.memory_space<vmem>>, vector<1x64x32xf32>
    %3 = vector.shape_cast %2 : vector<1x64x32xf32> to vector<64x32xf32>
    %c0_5 = arith.constant 0 : index
    %c0_6 = arith.constant 0 : index
    %c0_7 = arith.constant 0 : index
    %4 = vector.load %arg3[%c0_5, %c0_6, %c0_7] : memref<1x1x64xf32, #tpu.memory_space<vmem>>, vector<1x1x64xf32>
    %5 = vector.shape_cast %4 : vector<1x1x64xf32> to vector<1x64xf32>
    %6 = arith.addf %1, %3 : vector<64x32xf32>
    %7 = arith.truncf %6 : vector<64x32xf32> to vector<64x32xbf16>
    %c0_8 = arith.constant 0 : index
    %c0_9 = arith.constant 0 : index
    %8 = vector.load %arg4[%c0_8, %c0_9] : memref<32x64xbf16, #tpu.memory_space<vmem>>, vector<32x64xbf16>
    %cst = arith.constant dense<0.000000e+00> : vector<64x64xf32>
    %9 = tpu.matmul %7, %8, %cst {dimension_numbers = #tpu.dot_dimension_numbers<[1], [0], [0], [1], [0, 0, 1, 1], [], []>} : vector<64x32xbf16>, vector<32x64xbf16>, vector<64x64xf32> -> vector<64x64xf32>
    %c0_10 = arith.constant 0 : index
    %c0_11 = arith.constant 0 : index
    %10 = vector.load %arg5[%c0_10, %c0_11] : memref<1x64xf32, #tpu.memory_space<vmem>>, vector<1x64xf32>
    %11 = vector.broadcast %10 : vector<1x64xf32> to vector<64x64xf32>
    %12 = arith.addf %9, %11 : vector<64x64xf32>
    %13 = arith.truncf %1 : vector<64x32xf32> to vector<64x32xbf16>
    %c0_12 = arith.constant 0 : index
    %c0_13 = arith.constant 0 : index
    %14 = vector.load %arg6[%c0_12, %c0_13] : memref<32x32xbf16, #tpu.memory_space<vmem>>, vector<32x32xbf16>
    %cst_14 = arith.constant dense<0.000000e+00> : vector<64x32xf32>
    %15 = tpu.matmul %13, %14, %cst_14 {dimension_numbers = #tpu.dot_dimension_numbers<[1], [0], [0], [1], [0, 0, 1, 1], [], []>} : vector<64x32xbf16>, vector<32x32xbf16>, vector<64x32xf32> -> vector<64x32xf32>
    %c0_15 = arith.constant 0 : index
    %c0_16 = arith.constant 0 : index
    %16 = vector.load %arg7[%c0_15, %c0_16] : memref<1x32xf32, #tpu.memory_space<vmem>>, vector<1x32xf32>
    %17 = vector.broadcast %16 : vector<1x32xf32> to vector<64x32xf32>
    %18 = arith.addf %15, %17 : vector<64x32xf32>
    %19 = vector.extract_strided_slice %12 {offsets = [0, 0], sizes = [64, 32], strides = [1, 1]} : vector<64x64xf32> to vector<64x32xf32>
    %20 = vector.extract_strided_slice %12 {offsets = [0, 32], sizes = [64, 32], strides = [1, 1]} : vector<64x64xf32> to vector<64x32xf32>
    %21 = vector.extract_strided_slice %19 {offsets = [0, 0], sizes = [64, 8], strides = [1, 1]} : vector<64x32xf32> to vector<64x8xf32>
    %22 = arith.truncf %21 : vector<64x8xf32> to vector<64x8xbf16>
    %23 = vector.extract_strided_slice %20 {offsets = [0, 0], sizes = [64, 8], strides = [1, 1]} : vector<64x32xf32> to vector<64x8xf32>
    %24 = arith.truncf %23 : vector<64x8xf32> to vector<64x8xbf16>
    %cst_17 = arith.constant dense<0.000000e+00> : vector<64x64xf32>
    %25 = tpu.matmul %22, %24, %cst_17 {dimension_numbers = #tpu.dot_dimension_numbers<[1], [1], [0], [0], [0, 0, 1, 0], [], []>} : vector<64x8xbf16>, vector<64x8xbf16>, vector<64x64xf32> -> vector<64x64xf32>
    %26 = vector.broadcast %5 : vector<1x64xf32> to vector<64x64xf32>
    %27 = arith.addf %25, %26 : vector<64x64xf32>
    %cst_18 = arith.constant dense<0xFF800000> : vector<64xf32>
    %28 = vector.multi_reduction <maximumf>, %27, %cst_18 [1] : vector<64x64xf32> to vector<64xf32>
    %29 = vector.shape_cast %28 : vector<64xf32> to vector<64x1xf32>
    %30 = vector.broadcast %29 : vector<64x1xf32> to vector<64x64xf32>
    %31 = arith.subf %27, %30 : vector<64x64xf32>
    %32 = math.exp %31 : vector<64x64xf32>
    %cst_19 = arith.constant dense<0.000000e+00> : vector<64xf32>
    %33 = vector.multi_reduction <add>, %32, %cst_19 [1] : vector<64x64xf32> to vector<64xf32>
    %34 = vector.shape_cast %33 : vector<64xf32> to vector<64x1xf32>
    %35 = tpu.reciprocal %34 {approx = true} : vector<64x1xf32> -> vector<64x1xf32>
    %36 = vector.broadcast %35 : vector<64x1xf32> to vector<64x64xf32>
    %37 = arith.mulf %32, %36 : vector<64x64xf32>
    %38 = arith.truncf %37 : vector<64x64xf32> to vector<64x64xbf16>
    %39 = vector.extract_strided_slice %18 {offsets = [0, 0], sizes = [64, 8], strides = [1, 1]} : vector<64x32xf32> to vector<64x8xf32>
    %40 = arith.truncf %39 : vector<64x8xf32> to vector<64x8xbf16>
    %cst_20 = arith.constant dense<0.000000e+00> : vector<64x8xf32>
    %41 = tpu.matmul %38, %40, %cst_20 {dimension_numbers = #tpu.dot_dimension_numbers<[1], [0], [0], [1], [0, 0, 1, 1], [], []>} : vector<64x64xbf16>, vector<64x8xbf16>, vector<64x8xf32> -> vector<64x8xf32>
    %c0_21 = arith.constant 0 : index
    %c0_22 = arith.constant 0 : index
    %42 = vector.load %arg19[%c0_21, %c0_22] : memref<64x32xf32, #tpu.memory_space<vmem>>, vector<64x8xf32>
    tpu.vector_store %arg19[%c0_21, %c0_22], %41 {strides = array<i32>} : memref<64x32xf32, #tpu.memory_space<vmem>>, vector<64x8xf32>,
    %43 = vector.extract_strided_slice %19 {offsets = [0, 8], sizes = [64, 8], strides = [1, 1]} : vector<64x32xf32> to vector<64x8xf32>
    %44 = arith.truncf %43 : vector<64x8xf32> to vector<64x8xbf16>
    %45 = vector.extract_strided_slice %20 {offsets = [0, 8], sizes = [64, 8], strides = [1, 1]} : vector<64x32xf32> to vector<64x8xf32>
    %46 = arith.truncf %45 : vector<64x8xf32> to vector<64x8xbf16>
    %cst_23 = arith.constant dense<0.000000e+00> : vector<64x64xf32>
    %47 = tpu.matmul %44, %46, %cst_23 {dimension_numbers = #tpu.dot_dimension_numbers<[1], [1], [0], [0], [0, 0, 1, 0], [], []>} : vector<64x8xbf16>, vector<64x8xbf16>, vector<64x64xf32> -> vector<64x64xf32>
    %48 = vector.broadcast %5 : vector<1x64xf32> to vector<64x64xf32>
    %49 = arith.addf %47, %48 : vector<64x64xf32>
    %cst_24 = arith.constant dense<0xFF800000> : vector<64xf32>
    %50 = vector.multi_reduction <maximumf>, %49, %cst_24 [1] : vector<64x64xf32> to vector<64xf32>
    %51 = vector.shape_cast %50 : vector<64xf32> to vector<64x1xf32>
    %52 = vector.broadcast %51 : vector<64x1xf32> to vector<64x64xf32>
    %53 = arith.subf %49, %52 : vector<64x64xf32>
    %54 = math.exp %53 : vector<64x64xf32>
    %cst_25 = arith.constant dense<0.000000e+00> : vector<64xf32>
    %55 = vector.multi_reduction <add>, %54, %cst_25 [1] : vector<64x64xf32> to vector<64xf32>
    %56 = vector.shape_cast %55 : vector<64xf32> to vector<64x1xf32>
    %57 = tpu.reciprocal %56 {approx = true} : vector<64x1xf32> -> vector<64x1xf32>
    %58 = vector.broadcast %57 : vector<64x1xf32> to vector<64x64xf32>
    %59 = arith.mulf %54, %58 : vector<64x64xf32>
    %60 = arith.truncf %59 : vector<64x64xf32> to vector<64x64xbf16>
    %61 = vector.extract_strided_slice %18 {offsets = [0, 8], sizes = [64, 8], strides = [1, 1]} : vector<64x32xf32> to vector<64x8xf32>
    %62 = arith.truncf %61 : vector<64x8xf32> to vector<64x8xbf16>
    %cst_26 = arith.constant dense<0.000000e+00> : vector<64x8xf32>
    %63 = tpu.matmul %60, %62, %cst_26 {dimension_numbers = #tpu.dot_dimension_numbers<[1], [0], [0], [1], [0, 0, 1, 1], [], []>} : vector<64x64xbf16>, vector<64x8xbf16>, vector<64x8xf32> -> vector<64x8xf32>
    %c0_27 = arith.constant 0 : index
    %c8 = arith.constant 8 : index
    %64 = vector.load %arg19[%c0_27, %c8] : memref<64x32xf32, #tpu.memory_space<vmem>>, vector<64x8xf32>
    tpu.vector_store %arg19[%c0_27, %c8], %63 {strides = array<i32>} : memref<64x32xf32, #tpu.memory_space<vmem>>, vector<64x8xf32>,
    %65 = vector.extract_strided_slice %19 {offsets = [0, 16], sizes = [64, 8], strides = [1, 1]} : vector<64x32xf32> to vector<64x8xf32>
    %66 = arith.truncf %65 : vector<64x8xf32> to vector<64x8xbf16>
    %67 = vector.extract_strided_slice %20 {offsets = [0, 16], sizes = [64, 8], strides = [1, 1]} : vector<64x32xf32> to vector<64x8xf32>
    %68 = arith.truncf %67 : vector<64x8xf32> to vector<64x8xbf16>
    %cst_28 = arith.constant dense<0.000000e+00> : vector<64x64xf32>
    %69 = tpu.matmul %66, %68, %cst_28 {dimension_numbers = #tpu.dot_dimension_numbers<[1], [1], [0], [0], [0, 0, 1, 0], [], []>} : vector<64x8xbf16>, vector<64x8xbf16>, vector<64x64xf32> -> vector<64x64xf32>
    %70 = vector.broadcast %5 : vector<1x64xf32> to vector<64x64xf32>
    %71 = arith.addf %69, %70 : vector<64x64xf32>
    %cst_29 = arith.constant dense<0xFF800000> : vector<64xf32>
    %72 = vector.multi_reduction <maximumf>, %71, %cst_29 [1] : vector<64x64xf32> to vector<64xf32>
    %73 = vector.shape_cast %72 : vector<64xf32> to vector<64x1xf32>
    %74 = vector.broadcast %73 : vector<64x1xf32> to vector<64x64xf32>
    %75 = arith.subf %71, %74 : vector<64x64xf32>
    %76 = math.exp %75 : vector<64x64xf32>
    %cst_30 = arith.constant dense<0.000000e+00> : vector<64xf32>
    %77 = vector.multi_reduction <add>, %76, %cst_30 [1] : vector<64x64xf32> to vector<64xf32>
    %78 = vector.shape_cast %77 : vector<64xf32> to vector<64x1xf32>
    %79 = tpu.reciprocal %78 {approx = true} : vector<64x1xf32> -> vector<64x1xf32>
    %80 = vector.broadcast %79 : vector<64x1xf32> to vector<64x64xf32>
    %81 = arith.mulf %76, %80 : vector<64x64xf32>
    %82 = arith.truncf %81 : vector<64x64xf32> to vector<64x64xbf16>
    %83 = vector.extract_strided_slice %18 {offsets = [0, 16], sizes = [64, 8], strides = [1, 1]} : vector<64x32xf32> to vector<64x8xf32>
    %84 = arith.truncf %83 : vector<64x8xf32> to vector<64x8xbf16>
    %cst_31 = arith.constant dense<0.000000e+00> : vector<64x8xf32>
    %85 = tpu.matmul %82, %84, %cst_31 {dimension_numbers = #tpu.dot_dimension_numbers<[1], [0], [0], [1], [0, 0, 1, 1], [], []>} : vector<64x64xbf16>, vector<64x8xbf16>, vector<64x8xf32> -> vector<64x8xf32>
    %c0_32 = arith.constant 0 : index
    %c16 = arith.constant 16 : index
    %86 = vector.load %arg19[%c0_32, %c16] : memref<64x32xf32, #tpu.memory_space<vmem>>, vector<64x8xf32>
    tpu.vector_store %arg19[%c0_32, %c16], %85 {strides = array<i32>} : memref<64x32xf32, #tpu.memory_space<vmem>>, vector<64x8xf32>,
    %87 = vector.extract_strided_slice %19 {offsets = [0, 24], sizes = [64, 8], strides = [1, 1]} : vector<64x32xf32> to vector<64x8xf32>
    %88 = arith.truncf %87 : vector<64x8xf32> to vector<64x8xbf16>
    %89 = vector.extract_strided_slice %20 {offsets = [0, 24], sizes = [64, 8], strides = [1, 1]} : vector<64x32xf32> to vector<64x8xf32>
    %90 = arith.truncf %89 : vector<64x8xf32> to vector<64x8xbf16>
    %cst_33 = arith.constant dense<0.000000e+00> : vector<64x64xf32>
    %91 = tpu.matmul %88, %90, %cst_33 {dimension_numbers = #tpu.dot_dimension_numbers<[1], [1], [0], [0], [0, 0, 1, 0], [], []>} : vector<64x8xbf16>, vector<64x8xbf16>, vector<64x64xf32> -> vector<64x64xf32>
    %92 = vector.broadcast %5 : vector<1x64xf32> to vector<64x64xf32>
    %93 = arith.addf %91, %92 : vector<64x64xf32>
    %cst_34 = arith.constant dense<0xFF800000> : vector<64xf32>
    %94 = vector.multi_reduction <maximumf>, %93, %cst_34 [1] : vector<64x64xf32> to vector<64xf32>
    %95 = vector.shape_cast %94 : vector<64xf32> to vector<64x1xf32>
    %96 = vector.broadcast %95 : vector<64x1xf32> to vector<64x64xf32>
    %97 = arith.subf %93, %96 : vector<64x64xf32>
    %98 = math.exp %97 : vector<64x64xf32>
    %cst_35 = arith.constant dense<0.000000e+00> : vector<64xf32>
    %99 = vector.multi_reduction <add>, %98, %cst_35 [1] : vector<64x64xf32> to vector<64xf32>
    %100 = vector.shape_cast %99 : vector<64xf32> to vector<64x1xf32>
    %101 = tpu.reciprocal %100 {approx = true} : vector<64x1xf32> -> vector<64x1xf32>
    %102 = vector.broadcast %101 : vector<64x1xf32> to vector<64x64xf32>
    %103 = arith.mulf %98, %102 : vector<64x64xf32>
    %104 = arith.truncf %103 : vector<64x64xf32> to vector<64x64xbf16>
    %105 = vector.extract_strided_slice %18 {offsets = [0, 24], sizes = [64, 8], strides = [1, 1]} : vector<64x32xf32> to vector<64x8xf32>
    %106 = arith.truncf %105 : vector<64x8xf32> to vector<64x8xbf16>
    %cst_36 = arith.constant dense<0.000000e+00> : vector<64x8xf32>
    %107 = tpu.matmul %104, %106, %cst_36 {dimension_numbers = #tpu.dot_dimension_numbers<[1], [0], [0], [1], [0, 0, 1, 1], [], []>} : vector<64x64xbf16>, vector<64x8xbf16>, vector<64x8xf32> -> vector<64x8xf32>
    %c0_37 = arith.constant 0 : index
    %c24 = arith.constant 24 : index
    %108 = vector.load %arg19[%c0_37, %c24] : memref<64x32xf32, #tpu.memory_space<vmem>>, vector<64x8xf32>
    tpu.vector_store %arg19[%c0_37, %c24], %107 {strides = array<i32>} : memref<64x32xf32, #tpu.memory_space<vmem>>, vector<64x8xf32>,
    %c0_38 = arith.constant 0 : index
    %c0_39 = arith.constant 0 : index
    %109 = vector.load %arg19[%c0_38, %c0_39] : memref<64x32xf32, #tpu.memory_space<vmem>>, vector<64x32xf32>
    %110 = arith.truncf %109 : vector<64x32xf32> to vector<64x32xbf16>
    %c0_40 = arith.constant 0 : index
    %c0_41 = arith.constant 0 : index
    %111 = vector.load %arg8[%c0_40, %c0_41] : memref<32x32xbf16, #tpu.memory_space<vmem>>, vector<32x32xbf16>
    %cst_42 = arith.constant dense<0.000000e+00> : vector<64x32xf32>
    %112 = tpu.matmul %110, %111, %cst_42 {dimension_numbers = #tpu.dot_dimension_numbers<[1], [0], [0], [1], [0, 0, 1, 1], [], []>} : vector<64x32xbf16>, vector<32x32xbf16>, vector<64x32xf32> -> vector<64x32xf32>
    %c0_43 = arith.constant 0 : index
    %c0_44 = arith.constant 0 : index
    %113 = vector.load %arg9[%c0_43, %c0_44] : memref<1x32xf32, #tpu.memory_space<vmem>>, vector<1x32xf32>
    %114 = vector.broadcast %113 : vector<1x32xf32> to vector<64x32xf32>
    %115 = arith.addf %112, %114 : vector<64x32xf32>
    %116 = arith.addf %1, %115 : vector<64x32xf32>
    %c0_45 = arith.constant 0 : index
    %c0_46 = arith.constant 0 : index
    %117 = vector.load %arg10[%c0_45, %c0_46] : memref<1x32xf32, #tpu.memory_space<vmem>>, vector<1x32xf32>
    %c0_47 = arith.constant 0 : index
    %c0_48 = arith.constant 0 : index
    %118 = vector.load %arg11[%c0_47, %c0_48] : memref<1x32xf32, #tpu.memory_space<vmem>>, vector<1x32xf32>
    %cst_49 = arith.constant dense<0.000000e+00> : vector<64xf32>
    %119 = vector.multi_reduction <add>, %116, %cst_49 [1] : vector<64x32xf32> to vector<64xf32>
    %120 = vector.shape_cast %119 : vector<64xf32> to vector<64x1xf32>
    %cst_50 = arith.constant 3.200000e+01 : f32
    %121 = vector.broadcast %cst_50 : f32 to vector<64x1xf32>
    %122 = arith.divf %120, %121 : vector<64x1xf32>
    %123 = vector.broadcast %122 : vector<64x1xf32> to vector<64x32xf32>
    %124 = arith.subf %116, %123 : vector<64x32xf32>
    %125 = arith.mulf %124, %124 : vector<64x32xf32>
    %cst_51 = arith.constant dense<0.000000e+00> : vector<64xf32>
    %126 = vector.multi_reduction <add>, %125, %cst_51 [1] : vector<64x32xf32> to vector<64xf32>
    %127 = vector.shape_cast %126 : vector<64xf32> to vector<64x1xf32>
    %cst_52 = arith.constant 3.200000e+01 : f32
    %128 = vector.broadcast %cst_52 : f32 to vector<64x1xf32>
    %129 = arith.divf %127, %128 : vector<64x1xf32>
    %130 = vector.broadcast %122 : vector<64x1xf32> to vector<64x32xf32>
    %131 = arith.subf %116, %130 : vector<64x32xf32>
    %cst_53 = arith.constant 9.99999974E-6 : f32
    %132 = vector.broadcast %cst_53 : f32 to vector<64x1xf32>
    %133 = arith.addf %129, %132 : vector<64x1xf32>
    %134 = math.rsqrt %133 : vector<64x1xf32>
    %135 = vector.broadcast %134 : vector<64x1xf32> to vector<64x32xf32>
    %136 = arith.mulf %131, %135 : vector<64x32xf32>
    %137 = vector.broadcast %117 : vector<1x32xf32> to vector<64x32xf32>
    %138 = arith.mulf %136, %137 : vector<64x32xf32>
    %139 = vector.broadcast %118 : vector<1x32xf32> to vector<64x32xf32>
    %140 = arith.addf %138, %139 : vector<64x32xf32>
    %141 = arith.truncf %140 : vector<64x32xf32> to vector<64x32xbf16>
    %c0_54 = arith.constant 0 : index
    %c0_55 = arith.constant 0 : index
    %142 = vector.load %arg12[%c0_54, %c0_55] : memref<32x64xbf16, #tpu.memory_space<vmem>>, vector<32x64xbf16>
    %cst_56 = arith.constant dense<0.000000e+00> : vector<64x64xf32>
    %143 = tpu.matmul %141, %142, %cst_56 {dimension_numbers = #tpu.dot_dimension_numbers<[1], [0], [0], [1], [0, 0, 1, 1], [], []>} : vector<64x32xbf16>, vector<32x64xbf16>, vector<64x64xf32> -> vector<64x64xf32>
    %c0_57 = arith.constant 0 : index
    %c0_58 = arith.constant 0 : index
    %144 = vector.load %arg13[%c0_57, %c0_58] : memref<1x64xf32, #tpu.memory_space<vmem>>, vector<1x64xf32>
    %145 = vector.broadcast %144 : vector<1x64xf32> to vector<64x64xf32>
    %146 = arith.addf %143, %145 : vector<64x64xf32>
    %cst_59 = arith.constant 0.000000e+00 : f32
    %147 = vector.broadcast %cst_59 : f32 to vector<64x64xf32>
    %148 = arith.maximumf %146, %147 : vector<64x64xf32>
    %149 = arith.truncf %148 : vector<64x64xf32> to vector<64x64xbf16>
    %c0_60 = arith.constant 0 : index
    %c0_61 = arith.constant 0 : index
    %150 = vector.load %arg14[%c0_60, %c0_61] : memref<64x32xbf16, #tpu.memory_space<vmem>>, vector<64x32xbf16>
    %cst_62 = arith.constant dense<0.000000e+00> : vector<64x32xf32>
    %151 = tpu.matmul %149, %150, %cst_62 {dimension_numbers = #tpu.dot_dimension_numbers<[1], [0], [0], [1], [0, 0, 1, 1], [], []>} : vector<64x64xbf16>, vector<64x32xbf16>, vector<64x32xf32> -> vector<64x32xf32>
    %c0_63 = arith.constant 0 : index
    %c0_64 = arith.constant 0 : index
    %152 = vector.load %arg15[%c0_63, %c0_64] : memref<1x32xf32, #tpu.memory_space<vmem>>, vector<1x32xf32>
    %153 = vector.broadcast %152 : vector<1x32xf32> to vector<64x32xf32>
    %154 = arith.addf %151, %153 : vector<64x32xf32>
    %155 = arith.addf %140, %154 : vector<64x32xf32>
    %c0_65 = arith.constant 0 : index
    %c0_66 = arith.constant 0 : index
    %156 = vector.load %arg16[%c0_65, %c0_66] : memref<1x32xf32, #tpu.memory_space<vmem>>, vector<1x32xf32>
    %c0_67 = arith.constant 0 : index
    %c0_68 = arith.constant 0 : index
    %157 = vector.load %arg17[%c0_67, %c0_68] : memref<1x32xf32, #tpu.memory_space<vmem>>, vector<1x32xf32>
    %cst_69 = arith.constant dense<0.000000e+00> : vector<64xf32>
    %158 = vector.multi_reduction <add>, %155, %cst_69 [1] : vector<64x32xf32> to vector<64xf32>
    %159 = vector.shape_cast %158 : vector<64xf32> to vector<64x1xf32>
    %cst_70 = arith.constant 3.200000e+01 : f32
    %160 = vector.broadcast %cst_70 : f32 to vector<64x1xf32>
    %161 = arith.divf %159, %160 : vector<64x1xf32>
    %162 = vector.broadcast %161 : vector<64x1xf32> to vector<64x32xf32>
    %163 = arith.subf %155, %162 : vector<64x32xf32>
    %164 = arith.mulf %163, %163 : vector<64x32xf32>
    %cst_71 = arith.constant dense<0.000000e+00> : vector<64xf32>
    %165 = vector.multi_reduction <add>, %164, %cst_71 [1] : vector<64x32xf32> to vector<64xf32>
    %166 = vector.shape_cast %165 : vector<64xf32> to vector<64x1xf32>
    %cst_72 = arith.constant 3.200000e+01 : f32
    %167 = vector.broadcast %cst_72 : f32 to vector<64x1xf32>
    %168 = arith.divf %166, %167 : vector<64x1xf32>
    %169 = vector.broadcast %161 : vector<64x1xf32> to vector<64x32xf32>
    %170 = arith.subf %155, %169 : vector<64x32xf32>
    %cst_73 = arith.constant 9.99999974E-6 : f32
    %171 = vector.broadcast %cst_73 : f32 to vector<64x1xf32>
    %172 = arith.addf %168, %171 : vector<64x1xf32>
    %173 = math.rsqrt %172 : vector<64x1xf32>
    %174 = vector.broadcast %173 : vector<64x1xf32> to vector<64x32xf32>
    %175 = arith.mulf %170, %174 : vector<64x32xf32>
    %176 = vector.broadcast %156 : vector<1x32xf32> to vector<64x32xf32>
    %177 = arith.mulf %175, %176 : vector<64x32xf32>
    %178 = vector.broadcast %157 : vector<1x32xf32> to vector<64x32xf32>
    %179 = arith.addf %177, %178 : vector<64x32xf32>
    %c0_74 = arith.constant 0 : index
    %c0_75 = arith.constant 0 : index
    %c0_76 = arith.constant 0 : index
    %180 = vector.load %arg18[%c0_74, %c0_75, %c0_76] : memref<1x64x32xf32, #tpu.memory_space<vmem>>, vector<1x64x32xf32>
    %181 = vector.shape_cast %180 : vector<1x64x32xf32> to vector<64x32xf32>
    %182 = vector.shape_cast %179 : vector<64x32xf32> to vector<1x64x32xf32>
    tpu.vector_store %arg18[%c0_74, %c0_75, %c0_76], %182 {strides = array<i32>} : memref<1x64x32xf32, #tpu.memory_space<vmem>>, vector<1x64x32xf32>,
    return
  }
  func.func @transform_0(%arg0: i32) -> (i32, i32, i32) {
    %c0_i32 = arith.constant 0 : i32
    %c0_i32_0 = arith.constant 0 : i32
    %c0_i32_1 = arith.constant 0 : i32
    return %arg0, %c0_i32, %c0_i32_0 : i32, i32, i32
  }
  func.func @transform_1(%arg0: i32) -> (i32, i32, i32) {
    %c0_i32 = arith.constant 0 : i32
    %c0_i32_0 = arith.constant 0 : i32
    %c0_i32_1 = arith.constant 0 : i32
    return %arg0, %c0_i32, %c0_i32_0 : i32, i32, i32
  }
  func.func @transform_2(%arg0: i32) -> (i32, i32, i32) {
    %c0_i32 = arith.constant 0 : i32
    %c0_i32_0 = arith.constant 0 : i32
    %c0_i32_1 = arith.constant 0 : i32
    return %arg0, %c0_i32, %c0_i32_0 : i32, i32, i32
  }
  func.func @transform_3(%arg0: i32) -> (i32, i32) {
    %c0_i32 = arith.constant 0 : i32
    %c0_i32_0 = arith.constant 0 : i32
    %c0_i32_1 = arith.constant 0 : i32
    return %c0_i32, %c0_i32_0 : i32, i32
  }
  func.func @transform_4(%arg0: i32) -> (i32, i32) {
    %c0_i32 = arith.constant 0 : i32
    %c0_i32_0 = arith.constant 0 : i32
    %c0_i32_1 = arith.constant 0 : i32
    return %c0_i32, %c0_i32_0 : i32, i32
  }
  func.func @transform_5(%arg0: i32) -> (i32, i32) {
    %c0_i32 = arith.constant 0 : i32
    %c0_i32_0 = arith.constant 0 : i32
    %c0_i32_1 = arith.constant 0 : i32
    return %c0_i32, %c0_i32_0 : i32, i32
  }
  func.func @transform_6(%arg0: i32) -> (i32, i32) {
    %c0_i32 = arith.constant 0 : i32
    %c0_i32_0 = arith.constant 0 : i32
    %c0_i32_1 = arith.constant 0 : i32
    return %c0_i32, %c0_i32_0 : i32, i32
  }
  func.func @transform_7(%arg0: i32) -> (i32, i32) {
    %c0_i32 = arith.constant 0 : i32
    %c0_i32_0 = arith.constant 0 : i32
    %c0_i32_1 = arith.constant 0 : i32
    return %c0_i32, %c0_i32_0 : i32, i32
  }
  func.func @transform_8(%arg0: i32) -> (i32, i32) {
    %c0_i32 = arith.constant 0 : i32
    %c0_i32_0 = arith.constant 0 : i32
    %c0_i32_1 = arith.constant 0 : i32
    return %c0_i32, %c0_i32_0 : i32, i32
  }
  func.func @transform_9(%arg0: i32) -> (i32, i32) {
    %c0_i32 = arith.constant 0 : i32
    %c0_i32_0 = arith.constant 0 : i32
    %c0_i32_1 = arith.constant 0 : i32
    return %c0_i32, %c0_i32_0 : i32, i32
  }
  func.func @transform_10(%arg0: i32) -> (i32, i32) {
    %c0_i32 = arith.constant 0 : i32
    %c0_i32_0 = arith.constant 0 : i32
    %c0_i32_1 = arith.constant 0 : i32
    return %c0_i32, %c0_i32_0 : i32, i32
  }
  func.func @transform_11(%arg0: i32) -> (i32, i32) {
    %c0_i32 = arith.constant 0 : i32
    %c0_i32_0 = arith.constant 0 : i32
    %c0_i32_1 = arith.constant 0 : i32
    return %c0_i32, %c0_i32_0 : i32, i32
  }
  func.func @transform_12(%arg0: i32) -> (i32, i32) {
    %c0_i32 = arith.constant 0 : i32
    %c0_i32_0 = arith.constant 0 : i32
    %c0_i32_1 = arith.constant 0 : i32
    return %c0_i32, %c0_i32_0 : i32, i32
  }
  func.func @transform_13(%arg0: i32) -> (i32, i32) {
    %c0_i32 = arith.constant 0 : i32
    %c0_i32_0 = arith.constant 0 : i32
    %c0_i32_1 = arith.constant 0 : i32
    return %c0_i32, %c0_i32_0 : i32, i32
  }
  func.func @transform_14(%arg0: i32) -> (i32, i32) {
    %c0_i32 = arith.constant 0 : i32
    %c0_i32_0 = arith.constant 0 : i32
    %c0_i32_1 = arith.constant 0 : i32
    return %c0_i32, %c0_i32_0 : i32, i32
  }
  func.func @transform_15(%arg0: i32) -> (i32, i32) {
    %c0_i32 = arith.constant 0 : i32
    %c0_i32_0 = arith.constant 0 : i32
    %c0_i32_1 = arith.constant 0 : i32
    return %c0_i32, %c0_i32_0 : i32, i32
  }
  func.func @transform_16(%arg0: i32) -> (i32, i32) {
    %c0_i32 = arith.constant 0 : i32
    %c0_i32_0 = arith.constant 0 : i32
    %c0_i32_1 = arith.constant 0 : i32
    return %c0_i32, %c0_i32_0 : i32, i32
  }
  func.func @transform_17(%arg0: i32) -> (i32, i32, i32) {
    %c0_i32 = arith.constant 0 : i32
    %c0_i32_0 = arith.constant 0 : i32
    %c0_i32_1 = arith.constant 0 : i32
    return %arg0, %c0_i32, %c0_i32_0 : i32, i32, i32
  }
}

module attributes {stable_mosaic.version = 11 : i64} {
  func.func @_decoder_layer_kernel(%arg0: i32, %arg1: memref<1x8x32xf32, #tpu.memory_space<vmem>>, %arg2: memref<1x8x32xf32, #tpu.memory_space<vmem>>, %arg3: memref<1x64x32xf32, #tpu.memory_space<vmem>>, %arg4: memref<1x64x32xf32, #tpu.memory_space<vmem>>, %arg5: memref<1x1x64xf32, #tpu.memory_space<vmem>>, %arg6: memref<32x64xbf16, #tpu.memory_space<vmem>>, %arg7: memref<1x64xf32, #tpu.memory_space<vmem>>, %arg8: memref<32x32xbf16, #tpu.memory_space<vmem>>, %arg9: memref<1x32xf32, #tpu.memory_space<vmem>>, %arg10: memref<32x32xbf16, #tpu.memory_space<vmem>>, %arg11: memref<1x32xf32, #tpu.memory_space<vmem>>, %arg12: memref<1x32xf32, #tpu.memory_space<vmem>>, %arg13: memref<1x32xf32, #tpu.memory_space<vmem>>, %arg14: memref<32x32xbf16, #tpu.memory_space<vmem>>, %arg15: memref<1x32xf32, #tpu.memory_space<vmem>>, %arg16: memref<32x32xbf16, #tpu.memory_space<vmem>>, %arg17: memref<1x32xf32, #tpu.memory_space<vmem>>, %arg18: memref<32x32xbf16, #tpu.memory_space<vmem>>, %arg19: memref<1x32xf32, #tpu.memory_space<vmem>>, %arg20: memref<32x32xbf16, #tpu.memory_space<vmem>>, %arg21: memref<1x32xf32, #tpu.memory_space<vmem>>, %arg22: memref<1x32xf32, #tpu.memory_space<vmem>>, %arg23: memref<1x32xf32, #tpu.memory_space<vmem>>, %arg24: memref<32x64xbf16, #tpu.memory_space<vmem>>, %arg25: memref<1x64xf32, #tpu.memory_space<vmem>>, %arg26: memref<64x32xbf16, #tpu.memory_space<vmem>>, %arg27: memref<1x32xf32, #tpu.memory_space<vmem>>, %arg28: memref<1x32xf32, #tpu.memory_space<vmem>>, %arg29: memref<1x32xf32, #tpu.memory_space<vmem>>, %arg30: memref<1x32xf32, #tpu.memory_space<vmem>>, %arg31: memref<1x32xf32, #tpu.memory_space<vmem>>, %arg32: memref<1x8x32xf32, #tpu.memory_space<vmem>>, %arg33: memref<1x8x32xf32, #tpu.memory_space<vmem>>, %arg34: memref<8x32xf32, #tpu.memory_space<vmem>>) attributes {dimension_semantics = [#tpu.dimension_semantics<parallel>], iteration_bounds = array<i64: 2>, scalar_prefetch = 0 : i64, scratch_operands = 1 : i64, tpu.core_type = #tpu.core_type<tc>, window_params = [{transform_indices = @transform_0, window_bounds = array<i64: 1, 8, 32>}, {pipeline_mode = #tpu.pipeline_mode<synchronous>, transform_indices = @transform_1, window_bounds = array<i64: 1, 8, 32>}, {transform_indices = @transform_2, window_bounds = array<i64: 1, 64, 32>}, {transform_indices = @transform_3, window_bounds = array<i64: 1, 64, 32>}, {transform_indices = @transform_4, window_bounds = array<i64: 1, 1, 64>}, {pipeline_mode = #tpu.pipeline_mode<synchronous>, transform_indices = @transform_5, window_bounds = array<i64: 32, 64>}, {pipeline_mode = #tpu.pipeline_mode<synchronous>, transform_indices = @transform_6, window_bounds = array<i64: 1, 64>}, {pipeline_mode = #tpu.pipeline_mode<synchronous>, transform_indices = @transform_7, window_bounds = array<i64: 32, 32>}, {pipeline_mode = #tpu.pipeline_mode<synchronous>, transform_indices = @transform_8, window_bounds = array<i64: 1, 32>}, {pipeline_mode = #tpu.pipeline_mode<synchronous>, transform_indices = @transform_9, window_bounds = array<i64: 32, 32>}, {pipeline_mode = #tpu.pipeline_mode<synchronous>, transform_indices = @transform_10, window_bounds = array<i64: 1, 32>}, {pipeline_mode = #tpu.pipeline_mode<synchronous>, transform_indices = @transform_11, window_bounds = array<i64: 1, 32>}, {pipeline_mode = #tpu.pipeline_mode<synchronous>, transform_indices = @transform_12, window_bounds = array<i64: 1, 32>}, {pipeline_mode = #tpu.pipeline_mode<synchronous>, transform_indices = @transform_13, window_bounds = array<i64: 32, 32>}, {pipeline_mode = #tpu.pipeline_mode<synchronous>, transform_indices = @transform_14, window_bounds = array<i64: 1, 32>}, {pipeline_mode = #tpu.pipeline_mode<synchronous>, transform_indices = @transform_15, window_bounds = array<i64: 32, 32>}, {pipeline_mode = #tpu.pipeline_mode<synchronous>, transform_indices = @transform_16, window_bounds = array<i64: 1, 32>}, {pipeline_mode = #tpu.pipeline_mode<synchronous>, transform_indices = @transform_17, window_bounds = array<i64: 32, 32>}, {pipeline_mode = #tpu.pipeline_mode<synchronous>, transform_indices = @transform_18, window_bounds = array<i64: 1, 32>}, {pipeline_mode = #tpu.pipeline_mode<synchronous>, transform_indices = @transform_19, window_bounds = array<i64: 32, 32>}, {pipeline_mode = #tpu.pipeline_mode<synchronous>, transform_indices = @transform_20, window_bounds = array<i64: 1, 32>}, {pipeline_mode = #tpu.pipeline_mode<synchronous>, transform_indices = @transform_21, window_bounds = array<i64: 1, 32>}, {pipeline_mode = #tpu.pipeline_mode<synchronous>, transform_indices = @transform_22, window_bounds = array<i64: 1, 32>}, {pipeline_mode = #tpu.pipeline_mode<synchronous>, transform_indices = @transform_23, window_bounds = array<i64: 32, 64>}, {pipeline_mode = #tpu.pipeline_mode<synchronous>, transform_indices = @transform_24, window_bounds = array<i64: 1, 64>}, {pipeline_mode = #tpu.pipeline_mode<synchronous>, transform_indices = @transform_25, window_bounds = array<i64: 64, 32>}, {pipeline_mode = #tpu.pipeline_mode<synchronous>, transform_indices = @transform_26, window_bounds = array<i64: 1, 32>}, {pipeline_mode = #tpu.pipeline_mode<synchronous>, transform_indices = @transform_27, window_bounds = array<i64: 1, 32>}, {pipeline_mode = #tpu.pipeline_mode<synchronous>, transform_indices = @transform_28, window_bounds = array<i64: 1, 32>}, {pipeline_mode = #tpu.pipeline_mode<synchronous>, transform_indices = @transform_29, window_bounds = array<i64: 1, 32>}, {pipeline_mode = #tpu.pipeline_mode<synchronous>, transform_indices = @transform_30, window_bounds = array<i64: 1, 32>}, {transform_indices = @transform_31, window_bounds = array<i64: 1, 8, 32>}, {transform_indices = @transform_32, window_bounds = array<i64: 1, 8, 32>}]} {
    %c0 = arith.constant 0 : index
    %c0_0 = arith.constant 0 : index
    %c0_1 = arith.constant 0 : index
    %0 = vector.load %arg1[%c0, %c0_0, %c0_1] : memref<1x8x32xf32, #tpu.memory_space<vmem>>, vector<1x8x32xf32>
    %1 = vector.shape_cast %0 : vector<1x8x32xf32> to vector<8x32xf32>
    %c0_2 = arith.constant 0 : index
    %c0_3 = arith.constant 0 : index
    %c0_4 = arith.constant 0 : index
    %2 = vector.load %arg2[%c0_2, %c0_3, %c0_4] : memref<1x8x32xf32, #tpu.memory_space<vmem>>, vector<1x8x32xf32>
    %3 = vector.shape_cast %2 : vector<1x8x32xf32> to vector<8x32xf32>
    %c0_5 = arith.constant 0 : index
    %c0_6 = arith.constant 0 : index
    %c0_7 = arith.constant 0 : index
    %4 = vector.load %arg3[%c0_5, %c0_6, %c0_7] : memref<1x64x32xf32, #tpu.memory_space<vmem>>, vector<1x64x32xf32>
    %5 = vector.shape_cast %4 : vector<1x64x32xf32> to vector<64x32xf32>
    %c0_8 = arith.constant 0 : index
    %c0_9 = arith.constant 0 : index
    %c0_10 = arith.constant 0 : index
    %6 = vector.load %arg4[%c0_8, %c0_9, %c0_10] : memref<1x64x32xf32, #tpu.memory_space<vmem>>, vector<1x64x32xf32>
    %7 = vector.shape_cast %6 : vector<1x64x32xf32> to vector<64x32xf32>
    %c0_11 = arith.constant 0 : index
    %c0_12 = arith.constant 0 : index
    %c0_13 = arith.constant 0 : index
    %8 = vector.load %arg5[%c0_11, %c0_12, %c0_13] : memref<1x1x64xf32, #tpu.memory_space<vmem>>, vector<1x1x64xf32>
    %9 = vector.shape_cast %8 : vector<1x1x64xf32> to vector<1x64xf32>
    %10 = arith.addf %1, %3 : vector<8x32xf32>
    %11 = arith.truncf %10 : vector<8x32xf32> to vector<8x32xbf16>
    %c0_14 = arith.constant 0 : index
    %c0_15 = arith.constant 0 : index
    %12 = vector.load %arg6[%c0_14, %c0_15] : memref<32x64xbf16, #tpu.memory_space<vmem>>, vector<32x64xbf16>
    %cst = arith.constant dense<0.000000e+00> : vector<8x64xf32>
    %13 = tpu.matmul %11, %12, %cst {dimension_numbers = #tpu.dot_dimension_numbers<[1], [0], [0], [1], [0, 0, 1, 1], [], []>} : vector<8x32xbf16>, vector<32x64xbf16>, vector<8x64xf32> -> vector<8x64xf32>
    %c0_16 = arith.constant 0 : index
    %c0_17 = arith.constant 0 : index
    %14 = vector.load %arg7[%c0_16, %c0_17] : memref<1x64xf32, #tpu.memory_space<vmem>>, vector<1x64xf32>
    %15 = vector.broadcast %14 : vector<1x64xf32> to vector<8x64xf32>
    %16 = arith.addf %13, %15 : vector<8x64xf32>
    %17 = arith.truncf %1 : vector<8x32xf32> to vector<8x32xbf16>
    %c0_18 = arith.constant 0 : index
    %c0_19 = arith.constant 0 : index
    %18 = vector.load %arg8[%c0_18, %c0_19] : memref<32x32xbf16, #tpu.memory_space<vmem>>, vector<32x32xbf16>
    %cst_20 = arith.constant dense<0.000000e+00> : vector<8x32xf32>
    %19 = tpu.matmul %17, %18, %cst_20 {dimension_numbers = #tpu.dot_dimension_numbers<[1], [0], [0], [1], [0, 0, 1, 1], [], []>} : vector<8x32xbf16>, vector<32x32xbf16>, vector<8x32xf32> -> vector<8x32xf32>
    %c0_21 = arith.constant 0 : index
    %c0_22 = arith.constant 0 : index
    %20 = vector.load %arg9[%c0_21, %c0_22] : memref<1x32xf32, #tpu.memory_space<vmem>>, vector<1x32xf32>
    %21 = vector.broadcast %20 : vector<1x32xf32> to vector<8x32xf32>
    %22 = arith.addf %19, %21 : vector<8x32xf32>
    %23 = vector.extract_strided_slice %16 {offsets = [0, 0], sizes = [8, 32], strides = [1, 1]} : vector<8x64xf32> to vector<8x32xf32>
    %24 = vector.extract_strided_slice %16 {offsets = [0, 32], sizes = [8, 32], strides = [1, 1]} : vector<8x64xf32> to vector<8x32xf32>
    %25 = vector.extract_strided_slice %23 {offsets = [0, 0], sizes = [8, 8], strides = [1, 1]} : vector<8x32xf32> to vector<8x8xf32>
    %26 = arith.truncf %25 : vector<8x8xf32> to vector<8x8xbf16>
    %27 = vector.extract_strided_slice %24 {offsets = [0, 0], sizes = [8, 8], strides = [1, 1]} : vector<8x32xf32> to vector<8x8xf32>
    %28 = arith.truncf %27 : vector<8x8xf32> to vector<8x8xbf16>
    %cst_23 = arith.constant dense<0.000000e+00> : vector<8x8xf32>
    %29 = tpu.matmul %26, %28, %cst_23 {dimension_numbers = #tpu.dot_dimension_numbers<[1], [1], [0], [0], [0, 0, 1, 0], [], []>} : vector<8x8xbf16>, vector<8x8xbf16>, vector<8x8xf32> -> vector<8x8xf32>
    %cst_24 = arith.constant dense<0xFF800000> : vector<8xf32>
    %30 = vector.multi_reduction <maximumf>, %29, %cst_24 [1] : vector<8x8xf32> to vector<8xf32>
    %31 = vector.shape_cast %30 : vector<8xf32> to vector<8x1xf32>
    %32 = vector.broadcast %31 : vector<8x1xf32> to vector<8x8xf32>
    %33 = arith.subf %29, %32 : vector<8x8xf32>
    %34 = math.exp %33 : vector<8x8xf32>
    %cst_25 = arith.constant dense<0.000000e+00> : vector<8xf32>
    %35 = vector.multi_reduction <add>, %34, %cst_25 [1] : vector<8x8xf32> to vector<8xf32>
    %36 = vector.shape_cast %35 : vector<8xf32> to vector<8x1xf32>
    %37 = tpu.reciprocal %36 {approx = true} : vector<8x1xf32> -> vector<8x1xf32>
    %38 = vector.broadcast %37 : vector<8x1xf32> to vector<8x8xf32>
    %39 = arith.mulf %34, %38 : vector<8x8xf32>
    %40 = arith.truncf %39 : vector<8x8xf32> to vector<8x8xbf16>
    %41 = vector.extract_strided_slice %22 {offsets = [0, 0], sizes = [8, 8], strides = [1, 1]} : vector<8x32xf32> to vector<8x8xf32>
    %42 = arith.truncf %41 : vector<8x8xf32> to vector<8x8xbf16>
    %cst_26 = arith.constant dense<0.000000e+00> : vector<8x8xf32>
    %43 = tpu.matmul %40, %42, %cst_26 {dimension_numbers = #tpu.dot_dimension_numbers<[1], [0], [0], [1], [0, 0, 1, 1], [], []>} : vector<8x8xbf16>, vector<8x8xbf16>, vector<8x8xf32> -> vector<8x8xf32>
    %c0_27 = arith.constant 0 : index
    %c0_28 = arith.constant 0 : index
    %44 = vector.load %arg34[%c0_27, %c0_28] : memref<8x32xf32, #tpu.memory_space<vmem>>, vector<8x8xf32>
    tpu.vector_store %arg34[%c0_27, %c0_28], %43 {strides = array<i32>} : memref<8x32xf32, #tpu.memory_space<vmem>>, vector<8x8xf32>,
    %45 = vector.extract_strided_slice %23 {offsets = [0, 8], sizes = [8, 8], strides = [1, 1]} : vector<8x32xf32> to vector<8x8xf32>
    %46 = arith.truncf %45 : vector<8x8xf32> to vector<8x8xbf16>
    %47 = vector.extract_strided_slice %24 {offsets = [0, 8], sizes = [8, 8], strides = [1, 1]} : vector<8x32xf32> to vector<8x8xf32>
    %48 = arith.truncf %47 : vector<8x8xf32> to vector<8x8xbf16>
    %cst_29 = arith.constant dense<0.000000e+00> : vector<8x8xf32>
    %49 = tpu.matmul %46, %48, %cst_29 {dimension_numbers = #tpu.dot_dimension_numbers<[1], [1], [0], [0], [0, 0, 1, 0], [], []>} : vector<8x8xbf16>, vector<8x8xbf16>, vector<8x8xf32> -> vector<8x8xf32>
    %cst_30 = arith.constant dense<0xFF800000> : vector<8xf32>
    %50 = vector.multi_reduction <maximumf>, %49, %cst_30 [1] : vector<8x8xf32> to vector<8xf32>
    %51 = vector.shape_cast %50 : vector<8xf32> to vector<8x1xf32>
    %52 = vector.broadcast %51 : vector<8x1xf32> to vector<8x8xf32>
    %53 = arith.subf %49, %52 : vector<8x8xf32>
    %54 = math.exp %53 : vector<8x8xf32>
    %cst_31 = arith.constant dense<0.000000e+00> : vector<8xf32>
    %55 = vector.multi_reduction <add>, %54, %cst_31 [1] : vector<8x8xf32> to vector<8xf32>
    %56 = vector.shape_cast %55 : vector<8xf32> to vector<8x1xf32>
    %57 = tpu.reciprocal %56 {approx = true} : vector<8x1xf32> -> vector<8x1xf32>
    %58 = vector.broadcast %57 : vector<8x1xf32> to vector<8x8xf32>
    %59 = arith.mulf %54, %58 : vector<8x8xf32>
    %60 = arith.truncf %59 : vector<8x8xf32> to vector<8x8xbf16>
    %61 = vector.extract_strided_slice %22 {offsets = [0, 8], sizes = [8, 8], strides = [1, 1]} : vector<8x32xf32> to vector<8x8xf32>
    %62 = arith.truncf %61 : vector<8x8xf32> to vector<8x8xbf16>
    %cst_32 = arith.constant dense<0.000000e+00> : vector<8x8xf32>
    %63 = tpu.matmul %60, %62, %cst_32 {dimension_numbers = #tpu.dot_dimension_numbers<[1], [0], [0], [1], [0, 0, 1, 1], [], []>} : vector<8x8xbf16>, vector<8x8xbf16>, vector<8x8xf32> -> vector<8x8xf32>
    %c0_33 = arith.constant 0 : index
    %c8 = arith.constant 8 : index
    %64 = vector.load %arg34[%c0_33, %c8] : memref<8x32xf32, #tpu.memory_space<vmem>>, vector<8x8xf32>
    tpu.vector_store %arg34[%c0_33, %c8], %63 {strides = array<i32>} : memref<8x32xf32, #tpu.memory_space<vmem>>, vector<8x8xf32>,
    %65 = vector.extract_strided_slice %23 {offsets = [0, 16], sizes = [8, 8], strides = [1, 1]} : vector<8x32xf32> to vector<8x8xf32>
    %66 = arith.truncf %65 : vector<8x8xf32> to vector<8x8xbf16>
    %67 = vector.extract_strided_slice %24 {offsets = [0, 16], sizes = [8, 8], strides = [1, 1]} : vector<8x32xf32> to vector<8x8xf32>
    %68 = arith.truncf %67 : vector<8x8xf32> to vector<8x8xbf16>
    %cst_34 = arith.constant dense<0.000000e+00> : vector<8x8xf32>
    %69 = tpu.matmul %66, %68, %cst_34 {dimension_numbers = #tpu.dot_dimension_numbers<[1], [1], [0], [0], [0, 0, 1, 0], [], []>} : vector<8x8xbf16>, vector<8x8xbf16>, vector<8x8xf32> -> vector<8x8xf32>
    %cst_35 = arith.constant dense<0xFF800000> : vector<8xf32>
    %70 = vector.multi_reduction <maximumf>, %69, %cst_35 [1] : vector<8x8xf32> to vector<8xf32>
    %71 = vector.shape_cast %70 : vector<8xf32> to vector<8x1xf32>
    %72 = vector.broadcast %71 : vector<8x1xf32> to vector<8x8xf32>
    %73 = arith.subf %69, %72 : vector<8x8xf32>
    %74 = math.exp %73 : vector<8x8xf32>
    %cst_36 = arith.constant dense<0.000000e+00> : vector<8xf32>
    %75 = vector.multi_reduction <add>, %74, %cst_36 [1] : vector<8x8xf32> to vector<8xf32>
    %76 = vector.shape_cast %75 : vector<8xf32> to vector<8x1xf32>
    %77 = tpu.reciprocal %76 {approx = true} : vector<8x1xf32> -> vector<8x1xf32>
    %78 = vector.broadcast %77 : vector<8x1xf32> to vector<8x8xf32>
    %79 = arith.mulf %74, %78 : vector<8x8xf32>
    %80 = arith.truncf %79 : vector<8x8xf32> to vector<8x8xbf16>
    %81 = vector.extract_strided_slice %22 {offsets = [0, 16], sizes = [8, 8], strides = [1, 1]} : vector<8x32xf32> to vector<8x8xf32>
    %82 = arith.truncf %81 : vector<8x8xf32> to vector<8x8xbf16>
    %cst_37 = arith.constant dense<0.000000e+00> : vector<8x8xf32>
    %83 = tpu.matmul %80, %82, %cst_37 {dimension_numbers = #tpu.dot_dimension_numbers<[1], [0], [0], [1], [0, 0, 1, 1], [], []>} : vector<8x8xbf16>, vector<8x8xbf16>, vector<8x8xf32> -> vector<8x8xf32>
    %c0_38 = arith.constant 0 : index
    %c16 = arith.constant 16 : index
    %84 = vector.load %arg34[%c0_38, %c16] : memref<8x32xf32, #tpu.memory_space<vmem>>, vector<8x8xf32>
    tpu.vector_store %arg34[%c0_38, %c16], %83 {strides = array<i32>} : memref<8x32xf32, #tpu.memory_space<vmem>>, vector<8x8xf32>,
    %85 = vector.extract_strided_slice %23 {offsets = [0, 24], sizes = [8, 8], strides = [1, 1]} : vector<8x32xf32> to vector<8x8xf32>
    %86 = arith.truncf %85 : vector<8x8xf32> to vector<8x8xbf16>
    %87 = vector.extract_strided_slice %24 {offsets = [0, 24], sizes = [8, 8], strides = [1, 1]} : vector<8x32xf32> to vector<8x8xf32>
    %88 = arith.truncf %87 : vector<8x8xf32> to vector<8x8xbf16>
    %cst_39 = arith.constant dense<0.000000e+00> : vector<8x8xf32>
    %89 = tpu.matmul %86, %88, %cst_39 {dimension_numbers = #tpu.dot_dimension_numbers<[1], [1], [0], [0], [0, 0, 1, 0], [], []>} : vector<8x8xbf16>, vector<8x8xbf16>, vector<8x8xf32> -> vector<8x8xf32>
    %cst_40 = arith.constant dense<0xFF800000> : vector<8xf32>
    %90 = vector.multi_reduction <maximumf>, %89, %cst_40 [1] : vector<8x8xf32> to vector<8xf32>
    %91 = vector.shape_cast %90 : vector<8xf32> to vector<8x1xf32>
    %92 = vector.broadcast %91 : vector<8x1xf32> to vector<8x8xf32>
    %93 = arith.subf %89, %92 : vector<8x8xf32>
    %94 = math.exp %93 : vector<8x8xf32>
    %cst_41 = arith.constant dense<0.000000e+00> : vector<8xf32>
    %95 = vector.multi_reduction <add>, %94, %cst_41 [1] : vector<8x8xf32> to vector<8xf32>
    %96 = vector.shape_cast %95 : vector<8xf32> to vector<8x1xf32>
    %97 = tpu.reciprocal %96 {approx = true} : vector<8x1xf32> -> vector<8x1xf32>
    %98 = vector.broadcast %97 : vector<8x1xf32> to vector<8x8xf32>
    %99 = arith.mulf %94, %98 : vector<8x8xf32>
    %100 = arith.truncf %99 : vector<8x8xf32> to vector<8x8xbf16>
    %101 = vector.extract_strided_slice %22 {offsets = [0, 24], sizes = [8, 8], strides = [1, 1]} : vector<8x32xf32> to vector<8x8xf32>
    %102 = arith.truncf %101 : vector<8x8xf32> to vector<8x8xbf16>
    %cst_42 = arith.constant dense<0.000000e+00> : vector<8x8xf32>
    %103 = tpu.matmul %100, %102, %cst_42 {dimension_numbers = #tpu.dot_dimension_numbers<[1], [0], [0], [1], [0, 0, 1, 1], [], []>} : vector<8x8xbf16>, vector<8x8xbf16>, vector<8x8xf32> -> vector<8x8xf32>
    %c0_43 = arith.constant 0 : index
    %c24 = arith.constant 24 : index
    %104 = vector.load %arg34[%c0_43, %c24] : memref<8x32xf32, #tpu.memory_space<vmem>>, vector<8x8xf32>
    tpu.vector_store %arg34[%c0_43, %c24], %103 {strides = array<i32>} : memref<8x32xf32, #tpu.memory_space<vmem>>, vector<8x8xf32>,
    %c0_44 = arith.constant 0 : index
    %c0_45 = arith.constant 0 : index
    %105 = vector.load %arg34[%c0_44, %c0_45] : memref<8x32xf32, #tpu.memory_space<vmem>>, vector<8x32xf32>
    %106 = arith.truncf %105 : vector<8x32xf32> to vector<8x32xbf16>
    %c0_46 = arith.constant 0 : index
    %c0_47 = arith.constant 0 : index
    %107 = vector.load %arg10[%c0_46, %c0_47] : memref<32x32xbf16, #tpu.memory_space<vmem>>, vector<32x32xbf16>
    %cst_48 = arith.constant dense<0.000000e+00> : vector<8x32xf32>
    %108 = tpu.matmul %106, %107, %cst_48 {dimension_numbers = #tpu.dot_dimension_numbers<[1], [0], [0], [1], [0, 0, 1, 1], [], []>} : vector<8x32xbf16>, vector<32x32xbf16>, vector<8x32xf32> -> vector<8x32xf32>
    %c0_49 = arith.constant 0 : index
    %c0_50 = arith.constant 0 : index
    %109 = vector.load %arg11[%c0_49, %c0_50] : memref<1x32xf32, #tpu.memory_space<vmem>>, vector<1x32xf32>
    %110 = vector.broadcast %109 : vector<1x32xf32> to vector<8x32xf32>
    %111 = arith.addf %108, %110 : vector<8x32xf32>
    %112 = arith.addf %1, %111 : vector<8x32xf32>
    %c0_51 = arith.constant 0 : index
    %c0_52 = arith.constant 0 : index
    %113 = vector.load %arg12[%c0_51, %c0_52] : memref<1x32xf32, #tpu.memory_space<vmem>>, vector<1x32xf32>
    %c0_53 = arith.constant 0 : index
    %c0_54 = arith.constant 0 : index
    %114 = vector.load %arg13[%c0_53, %c0_54] : memref<1x32xf32, #tpu.memory_space<vmem>>, vector<1x32xf32>
    %cst_55 = arith.constant dense<0.000000e+00> : vector<8xf32>
    %115 = vector.multi_reduction <add>, %112, %cst_55 [1] : vector<8x32xf32> to vector<8xf32>
    %116 = vector.shape_cast %115 : vector<8xf32> to vector<8x1xf32>
    %cst_56 = arith.constant 3.200000e+01 : f32
    %117 = vector.broadcast %cst_56 : f32 to vector<8x1xf32>
    %118 = arith.divf %116, %117 : vector<8x1xf32>
    %119 = vector.broadcast %118 : vector<8x1xf32> to vector<8x32xf32>
    %120 = arith.subf %112, %119 : vector<8x32xf32>
    %121 = arith.mulf %120, %120 : vector<8x32xf32>
    %cst_57 = arith.constant dense<0.000000e+00> : vector<8xf32>
    %122 = vector.multi_reduction <add>, %121, %cst_57 [1] : vector<8x32xf32> to vector<8xf32>
    %123 = vector.shape_cast %122 : vector<8xf32> to vector<8x1xf32>
    %cst_58 = arith.constant 3.200000e+01 : f32
    %124 = vector.broadcast %cst_58 : f32 to vector<8x1xf32>
    %125 = arith.divf %123, %124 : vector<8x1xf32>
    %126 = vector.broadcast %118 : vector<8x1xf32> to vector<8x32xf32>
    %127 = arith.subf %112, %126 : vector<8x32xf32>
    %cst_59 = arith.constant 9.99999974E-6 : f32
    %128 = vector.broadcast %cst_59 : f32 to vector<8x1xf32>
    %129 = arith.addf %125, %128 : vector<8x1xf32>
    %130 = math.rsqrt %129 : vector<8x1xf32>
    %131 = vector.broadcast %130 : vector<8x1xf32> to vector<8x32xf32>
    %132 = arith.mulf %127, %131 : vector<8x32xf32>
    %133 = vector.broadcast %113 : vector<1x32xf32> to vector<8x32xf32>
    %134 = arith.mulf %132, %133 : vector<8x32xf32>
    %135 = vector.broadcast %114 : vector<1x32xf32> to vector<8x32xf32>
    %136 = arith.addf %134, %135 : vector<8x32xf32>
    %137 = arith.addf %136, %3 : vector<8x32xf32>
    %138 = arith.truncf %137 : vector<8x32xf32> to vector<8x32xbf16>
    %c0_60 = arith.constant 0 : index
    %c0_61 = arith.constant 0 : index
    %139 = vector.load %arg14[%c0_60, %c0_61] : memref<32x32xbf16, #tpu.memory_space<vmem>>, vector<32x32xbf16>
    %cst_62 = arith.constant dense<0.000000e+00> : vector<8x32xf32>
    %140 = tpu.matmul %138, %139, %cst_62 {dimension_numbers = #tpu.dot_dimension_numbers<[1], [0], [0], [1], [0, 0, 1, 1], [], []>} : vector<8x32xbf16>, vector<32x32xbf16>, vector<8x32xf32> -> vector<8x32xf32>
    %c0_63 = arith.constant 0 : index
    %c0_64 = arith.constant 0 : index
    %141 = vector.load %arg15[%c0_63, %c0_64] : memref<1x32xf32, #tpu.memory_space<vmem>>, vector<1x32xf32>
    %142 = vector.broadcast %141 : vector<1x32xf32> to vector<8x32xf32>
    %143 = arith.addf %140, %142 : vector<8x32xf32>
    %144 = arith.addf %5, %7 : vector<64x32xf32>
    %145 = arith.truncf %144 : vector<64x32xf32> to vector<64x32xbf16>
    %c0_65 = arith.constant 0 : index
    %c0_66 = arith.constant 0 : index
    %146 = vector.load %arg16[%c0_65, %c0_66] : memref<32x32xbf16, #tpu.memory_space<vmem>>, vector<32x32xbf16>
    %cst_67 = arith.constant dense<0.000000e+00> : vector<64x32xf32>
    %147 = tpu.matmul %145, %146, %cst_67 {dimension_numbers = #tpu.dot_dimension_numbers<[1], [0], [0], [1], [0, 0, 1, 1], [], []>} : vector<64x32xbf16>, vector<32x32xbf16>, vector<64x32xf32> -> vector<64x32xf32>
    %c0_68 = arith.constant 0 : index
    %c0_69 = arith.constant 0 : index
    %148 = vector.load %arg17[%c0_68, %c0_69] : memref<1x32xf32, #tpu.memory_space<vmem>>, vector<1x32xf32>
    %149 = vector.broadcast %148 : vector<1x32xf32> to vector<64x32xf32>
    %150 = arith.addf %147, %149 : vector<64x32xf32>
    %151 = arith.truncf %5 : vector<64x32xf32> to vector<64x32xbf16>
    %c0_70 = arith.constant 0 : index
    %c0_71 = arith.constant 0 : index
    %152 = vector.load %arg18[%c0_70, %c0_71] : memref<32x32xbf16, #tpu.memory_space<vmem>>, vector<32x32xbf16>
    %cst_72 = arith.constant dense<0.000000e+00> : vector<64x32xf32>
    %153 = tpu.matmul %151, %152, %cst_72 {dimension_numbers = #tpu.dot_dimension_numbers<[1], [0], [0], [1], [0, 0, 1, 1], [], []>} : vector<64x32xbf16>, vector<32x32xbf16>, vector<64x32xf32> -> vector<64x32xf32>
    %c0_73 = arith.constant 0 : index
    %c0_74 = arith.constant 0 : index
    %154 = vector.load %arg19[%c0_73, %c0_74] : memref<1x32xf32, #tpu.memory_space<vmem>>, vector<1x32xf32>
    %155 = vector.broadcast %154 : vector<1x32xf32> to vector<64x32xf32>
    %156 = arith.addf %153, %155 : vector<64x32xf32>
    %157 = vector.extract_strided_slice %143 {offsets = [0, 0], sizes = [8, 8], strides = [1, 1]} : vector<8x32xf32> to vector<8x8xf32>
    %158 = arith.truncf %157 : vector<8x8xf32> to vector<8x8xbf16>
    %159 = vector.extract_strided_slice %150 {offsets = [0, 0], sizes = [64, 8], strides = [1, 1]} : vector<64x32xf32> to vector<64x8xf32>
    %160 = arith.truncf %159 : vector<64x8xf32> to vector<64x8xbf16>
    %cst_75 = arith.constant dense<0.000000e+00> : vector<8x64xf32>
    %161 = tpu.matmul %158, %160, %cst_75 {dimension_numbers = #tpu.dot_dimension_numbers<[1], [1], [0], [0], [0, 0, 1, 0], [], []>} : vector<8x8xbf16>, vector<64x8xbf16>, vector<8x64xf32> -> vector<8x64xf32>
    %162 = vector.broadcast %9 : vector<1x64xf32> to vector<8x64xf32>
    %163 = arith.addf %161, %162 : vector<8x64xf32>
    %cst_76 = arith.constant dense<0xFF800000> : vector<8xf32>
    %164 = vector.multi_reduction <maximumf>, %163, %cst_76 [1] : vector<8x64xf32> to vector<8xf32>
    %165 = vector.shape_cast %164 : vector<8xf32> to vector<8x1xf32>
    %166 = vector.broadcast %165 : vector<8x1xf32> to vector<8x64xf32>
    %167 = arith.subf %163, %166 : vector<8x64xf32>
    %168 = math.exp %167 : vector<8x64xf32>
    %cst_77 = arith.constant dense<0.000000e+00> : vector<8xf32>
    %169 = vector.multi_reduction <add>, %168, %cst_77 [1] : vector<8x64xf32> to vector<8xf32>
    %170 = vector.shape_cast %169 : vector<8xf32> to vector<8x1xf32>
    %171 = tpu.reciprocal %170 {approx = true} : vector<8x1xf32> -> vector<8x1xf32>
    %172 = vector.broadcast %171 : vector<8x1xf32> to vector<8x64xf32>
    %173 = arith.mulf %168, %172 : vector<8x64xf32>
    %174 = arith.truncf %173 : vector<8x64xf32> to vector<8x64xbf16>
    %175 = vector.extract_strided_slice %156 {offsets = [0, 0], sizes = [64, 8], strides = [1, 1]} : vector<64x32xf32> to vector<64x8xf32>
    %176 = arith.truncf %175 : vector<64x8xf32> to vector<64x8xbf16>
    %cst_78 = arith.constant dense<0.000000e+00> : vector<8x8xf32>
    %177 = tpu.matmul %174, %176, %cst_78 {dimension_numbers = #tpu.dot_dimension_numbers<[1], [0], [0], [1], [0, 0, 1, 1], [], []>} : vector<8x64xbf16>, vector<64x8xbf16>, vector<8x8xf32> -> vector<8x8xf32>
    %c0_79 = arith.constant 0 : index
    %c0_80 = arith.constant 0 : index
    %178 = vector.load %arg34[%c0_79, %c0_80] : memref<8x32xf32, #tpu.memory_space<vmem>>, vector<8x8xf32>
    tpu.vector_store %arg34[%c0_79, %c0_80], %177 {strides = array<i32>} : memref<8x32xf32, #tpu.memory_space<vmem>>, vector<8x8xf32>,
    %179 = vector.extract_strided_slice %143 {offsets = [0, 8], sizes = [8, 8], strides = [1, 1]} : vector<8x32xf32> to vector<8x8xf32>
    %180 = arith.truncf %179 : vector<8x8xf32> to vector<8x8xbf16>
    %181 = vector.extract_strided_slice %150 {offsets = [0, 8], sizes = [64, 8], strides = [1, 1]} : vector<64x32xf32> to vector<64x8xf32>
    %182 = arith.truncf %181 : vector<64x8xf32> to vector<64x8xbf16>
    %cst_81 = arith.constant dense<0.000000e+00> : vector<8x64xf32>
    %183 = tpu.matmul %180, %182, %cst_81 {dimension_numbers = #tpu.dot_dimension_numbers<[1], [1], [0], [0], [0, 0, 1, 0], [], []>} : vector<8x8xbf16>, vector<64x8xbf16>, vector<8x64xf32> -> vector<8x64xf32>
    %184 = vector.broadcast %9 : vector<1x64xf32> to vector<8x64xf32>
    %185 = arith.addf %183, %184 : vector<8x64xf32>
    %cst_82 = arith.constant dense<0xFF800000> : vector<8xf32>
    %186 = vector.multi_reduction <maximumf>, %185, %cst_82 [1] : vector<8x64xf32> to vector<8xf32>
    %187 = vector.shape_cast %186 : vector<8xf32> to vector<8x1xf32>
    %188 = vector.broadcast %187 : vector<8x1xf32> to vector<8x64xf32>
    %189 = arith.subf %185, %188 : vector<8x64xf32>
    %190 = math.exp %189 : vector<8x64xf32>
    %cst_83 = arith.constant dense<0.000000e+00> : vector<8xf32>
    %191 = vector.multi_reduction <add>, %190, %cst_83 [1] : vector<8x64xf32> to vector<8xf32>
    %192 = vector.shape_cast %191 : vector<8xf32> to vector<8x1xf32>
    %193 = tpu.reciprocal %192 {approx = true} : vector<8x1xf32> -> vector<8x1xf32>
    %194 = vector.broadcast %193 : vector<8x1xf32> to vector<8x64xf32>
    %195 = arith.mulf %190, %194 : vector<8x64xf32>
    %196 = arith.truncf %195 : vector<8x64xf32> to vector<8x64xbf16>
    %197 = vector.extract_strided_slice %156 {offsets = [0, 8], sizes = [64, 8], strides = [1, 1]} : vector<64x32xf32> to vector<64x8xf32>
    %198 = arith.truncf %197 : vector<64x8xf32> to vector<64x8xbf16>
    %cst_84 = arith.constant dense<0.000000e+00> : vector<8x8xf32>
    %199 = tpu.matmul %196, %198, %cst_84 {dimension_numbers = #tpu.dot_dimension_numbers<[1], [0], [0], [1], [0, 0, 1, 1], [], []>} : vector<8x64xbf16>, vector<64x8xbf16>, vector<8x8xf32> -> vector<8x8xf32>
    %c0_85 = arith.constant 0 : index
    %c8_86 = arith.constant 8 : index
    %200 = vector.load %arg34[%c0_85, %c8_86] : memref<8x32xf32, #tpu.memory_space<vmem>>, vector<8x8xf32>
    tpu.vector_store %arg34[%c0_85, %c8_86], %199 {strides = array<i32>} : memref<8x32xf32, #tpu.memory_space<vmem>>, vector<8x8xf32>,
    %201 = vector.extract_strided_slice %143 {offsets = [0, 16], sizes = [8, 8], strides = [1, 1]} : vector<8x32xf32> to vector<8x8xf32>
    %202 = arith.truncf %201 : vector<8x8xf32> to vector<8x8xbf16>
    %203 = vector.extract_strided_slice %150 {offsets = [0, 16], sizes = [64, 8], strides = [1, 1]} : vector<64x32xf32> to vector<64x8xf32>
    %204 = arith.truncf %203 : vector<64x8xf32> to vector<64x8xbf16>
    %cst_87 = arith.constant dense<0.000000e+00> : vector<8x64xf32>
    %205 = tpu.matmul %202, %204, %cst_87 {dimension_numbers = #tpu.dot_dimension_numbers<[1], [1], [0], [0], [0, 0, 1, 0], [], []>} : vector<8x8xbf16>, vector<64x8xbf16>, vector<8x64xf32> -> vector<8x64xf32>
    %206 = vector.broadcast %9 : vector<1x64xf32> to vector<8x64xf32>
    %207 = arith.addf %205, %206 : vector<8x64xf32>
    %cst_88 = arith.constant dense<0xFF800000> : vector<8xf32>
    %208 = vector.multi_reduction <maximumf>, %207, %cst_88 [1] : vector<8x64xf32> to vector<8xf32>
    %209 = vector.shape_cast %208 : vector<8xf32> to vector<8x1xf32>
    %210 = vector.broadcast %209 : vector<8x1xf32> to vector<8x64xf32>
    %211 = arith.subf %207, %210 : vector<8x64xf32>
    %212 = math.exp %211 : vector<8x64xf32>
    %cst_89 = arith.constant dense<0.000000e+00> : vector<8xf32>
    %213 = vector.multi_reduction <add>, %212, %cst_89 [1] : vector<8x64xf32> to vector<8xf32>
    %214 = vector.shape_cast %213 : vector<8xf32> to vector<8x1xf32>
    %215 = tpu.reciprocal %214 {approx = true} : vector<8x1xf32> -> vector<8x1xf32>
    %216 = vector.broadcast %215 : vector<8x1xf32> to vector<8x64xf32>
    %217 = arith.mulf %212, %216 : vector<8x64xf32>
    %218 = arith.truncf %217 : vector<8x64xf32> to vector<8x64xbf16>
    %219 = vector.extract_strided_slice %156 {offsets = [0, 16], sizes = [64, 8], strides = [1, 1]} : vector<64x32xf32> to vector<64x8xf32>
    %220 = arith.truncf %219 : vector<64x8xf32> to vector<64x8xbf16>
    %cst_90 = arith.constant dense<0.000000e+00> : vector<8x8xf32>
    %221 = tpu.matmul %218, %220, %cst_90 {dimension_numbers = #tpu.dot_dimension_numbers<[1], [0], [0], [1], [0, 0, 1, 1], [], []>} : vector<8x64xbf16>, vector<64x8xbf16>, vector<8x8xf32> -> vector<8x8xf32>
    %c0_91 = arith.constant 0 : index
    %c16_92 = arith.constant 16 : index
    %222 = vector.load %arg34[%c0_91, %c16_92] : memref<8x32xf32, #tpu.memory_space<vmem>>, vector<8x8xf32>
    tpu.vector_store %arg34[%c0_91, %c16_92], %221 {strides = array<i32>} : memref<8x32xf32, #tpu.memory_space<vmem>>, vector<8x8xf32>,
    %223 = vector.extract_strided_slice %143 {offsets = [0, 24], sizes = [8, 8], strides = [1, 1]} : vector<8x32xf32> to vector<8x8xf32>
    %224 = arith.truncf %223 : vector<8x8xf32> to vector<8x8xbf16>
    %225 = vector.extract_strided_slice %150 {offsets = [0, 24], sizes = [64, 8], strides = [1, 1]} : vector<64x32xf32> to vector<64x8xf32>
    %226 = arith.truncf %225 : vector<64x8xf32> to vector<64x8xbf16>
    %cst_93 = arith.constant dense<0.000000e+00> : vector<8x64xf32>
    %227 = tpu.matmul %224, %226, %cst_93 {dimension_numbers = #tpu.dot_dimension_numbers<[1], [1], [0], [0], [0, 0, 1, 0], [], []>} : vector<8x8xbf16>, vector<64x8xbf16>, vector<8x64xf32> -> vector<8x64xf32>
    %228 = vector.broadcast %9 : vector<1x64xf32> to vector<8x64xf32>
    %229 = arith.addf %227, %228 : vector<8x64xf32>
    %cst_94 = arith.constant dense<0xFF800000> : vector<8xf32>
    %230 = vector.multi_reduction <maximumf>, %229, %cst_94 [1] : vector<8x64xf32> to vector<8xf32>
    %231 = vector.shape_cast %230 : vector<8xf32> to vector<8x1xf32>
    %232 = vector.broadcast %231 : vector<8x1xf32> to vector<8x64xf32>
    %233 = arith.subf %229, %232 : vector<8x64xf32>
    %234 = math.exp %233 : vector<8x64xf32>
    %cst_95 = arith.constant dense<0.000000e+00> : vector<8xf32>
    %235 = vector.multi_reduction <add>, %234, %cst_95 [1] : vector<8x64xf32> to vector<8xf32>
    %236 = vector.shape_cast %235 : vector<8xf32> to vector<8x1xf32>
    %237 = tpu.reciprocal %236 {approx = true} : vector<8x1xf32> -> vector<8x1xf32>
    %238 = vector.broadcast %237 : vector<8x1xf32> to vector<8x64xf32>
    %239 = arith.mulf %234, %238 : vector<8x64xf32>
    %240 = arith.truncf %239 : vector<8x64xf32> to vector<8x64xbf16>
    %241 = vector.extract_strided_slice %156 {offsets = [0, 24], sizes = [64, 8], strides = [1, 1]} : vector<64x32xf32> to vector<64x8xf32>
    %242 = arith.truncf %241 : vector<64x8xf32> to vector<64x8xbf16>
    %cst_96 = arith.constant dense<0.000000e+00> : vector<8x8xf32>
    %243 = tpu.matmul %240, %242, %cst_96 {dimension_numbers = #tpu.dot_dimension_numbers<[1], [0], [0], [1], [0, 0, 1, 1], [], []>} : vector<8x64xbf16>, vector<64x8xbf16>, vector<8x8xf32> -> vector<8x8xf32>
    %c0_97 = arith.constant 0 : index
    %c24_98 = arith.constant 24 : index
    %244 = vector.load %arg34[%c0_97, %c24_98] : memref<8x32xf32, #tpu.memory_space<vmem>>, vector<8x8xf32>
    tpu.vector_store %arg34[%c0_97, %c24_98], %243 {strides = array<i32>} : memref<8x32xf32, #tpu.memory_space<vmem>>, vector<8x8xf32>,
    %c0_99 = arith.constant 0 : index
    %c0_100 = arith.constant 0 : index
    %245 = vector.load %arg34[%c0_99, %c0_100] : memref<8x32xf32, #tpu.memory_space<vmem>>, vector<8x32xf32>
    %246 = arith.truncf %245 : vector<8x32xf32> to vector<8x32xbf16>
    %c0_101 = arith.constant 0 : index
    %c0_102 = arith.constant 0 : index
    %247 = vector.load %arg20[%c0_101, %c0_102] : memref<32x32xbf16, #tpu.memory_space<vmem>>, vector<32x32xbf16>
    %cst_103 = arith.constant dense<0.000000e+00> : vector<8x32xf32>
    %248 = tpu.matmul %246, %247, %cst_103 {dimension_numbers = #tpu.dot_dimension_numbers<[1], [0], [0], [1], [0, 0, 1, 1], [], []>} : vector<8x32xbf16>, vector<32x32xbf16>, vector<8x32xf32> -> vector<8x32xf32>
    %c0_104 = arith.constant 0 : index
    %c0_105 = arith.constant 0 : index
    %249 = vector.load %arg21[%c0_104, %c0_105] : memref<1x32xf32, #tpu.memory_space<vmem>>, vector<1x32xf32>
    %250 = vector.broadcast %249 : vector<1x32xf32> to vector<8x32xf32>
    %251 = arith.addf %248, %250 : vector<8x32xf32>
    %252 = arith.addf %136, %251 : vector<8x32xf32>
    %c0_106 = arith.constant 0 : index
    %c0_107 = arith.constant 0 : index
    %253 = vector.load %arg22[%c0_106, %c0_107] : memref<1x32xf32, #tpu.memory_space<vmem>>, vector<1x32xf32>
    %c0_108 = arith.constant 0 : index
    %c0_109 = arith.constant 0 : index
    %254 = vector.load %arg23[%c0_108, %c0_109] : memref<1x32xf32, #tpu.memory_space<vmem>>, vector<1x32xf32>
    %cst_110 = arith.constant dense<0.000000e+00> : vector<8xf32>
    %255 = vector.multi_reduction <add>, %252, %cst_110 [1] : vector<8x32xf32> to vector<8xf32>
    %256 = vector.shape_cast %255 : vector<8xf32> to vector<8x1xf32>
    %cst_111 = arith.constant 3.200000e+01 : f32
    %257 = vector.broadcast %cst_111 : f32 to vector<8x1xf32>
    %258 = arith.divf %256, %257 : vector<8x1xf32>
    %259 = vector.broadcast %258 : vector<8x1xf32> to vector<8x32xf32>
    %260 = arith.subf %252, %259 : vector<8x32xf32>
    %261 = arith.mulf %260, %260 : vector<8x32xf32>
    %cst_112 = arith.constant dense<0.000000e+00> : vector<8xf32>
    %262 = vector.multi_reduction <add>, %261, %cst_112 [1] : vector<8x32xf32> to vector<8xf32>
    %263 = vector.shape_cast %262 : vector<8xf32> to vector<8x1xf32>
    %cst_113 = arith.constant 3.200000e+01 : f32
    %264 = vector.broadcast %cst_113 : f32 to vector<8x1xf32>
    %265 = arith.divf %263, %264 : vector<8x1xf32>
    %266 = vector.broadcast %258 : vector<8x1xf32> to vector<8x32xf32>
    %267 = arith.subf %252, %266 : vector<8x32xf32>
    %cst_114 = arith.constant 9.99999974E-6 : f32
    %268 = vector.broadcast %cst_114 : f32 to vector<8x1xf32>
    %269 = arith.addf %265, %268 : vector<8x1xf32>
    %270 = math.rsqrt %269 : vector<8x1xf32>
    %271 = vector.broadcast %270 : vector<8x1xf32> to vector<8x32xf32>
    %272 = arith.mulf %267, %271 : vector<8x32xf32>
    %273 = vector.broadcast %253 : vector<1x32xf32> to vector<8x32xf32>
    %274 = arith.mulf %272, %273 : vector<8x32xf32>
    %275 = vector.broadcast %254 : vector<1x32xf32> to vector<8x32xf32>
    %276 = arith.addf %274, %275 : vector<8x32xf32>
    %277 = arith.truncf %276 : vector<8x32xf32> to vector<8x32xbf16>
    %c0_115 = arith.constant 0 : index
    %c0_116 = arith.constant 0 : index
    %278 = vector.load %arg24[%c0_115, %c0_116] : memref<32x64xbf16, #tpu.memory_space<vmem>>, vector<32x64xbf16>
    %cst_117 = arith.constant dense<0.000000e+00> : vector<8x64xf32>
    %279 = tpu.matmul %277, %278, %cst_117 {dimension_numbers = #tpu.dot_dimension_numbers<[1], [0], [0], [1], [0, 0, 1, 1], [], []>} : vector<8x32xbf16>, vector<32x64xbf16>, vector<8x64xf32> -> vector<8x64xf32>
    %c0_118 = arith.constant 0 : index
    %c0_119 = arith.constant 0 : index
    %280 = vector.load %arg25[%c0_118, %c0_119] : memref<1x64xf32, #tpu.memory_space<vmem>>, vector<1x64xf32>
    %281 = vector.broadcast %280 : vector<1x64xf32> to vector<8x64xf32>
    %282 = arith.addf %279, %281 : vector<8x64xf32>
    %cst_120 = arith.constant 0.000000e+00 : f32
    %283 = vector.broadcast %cst_120 : f32 to vector<8x64xf32>
    %284 = arith.maximumf %282, %283 : vector<8x64xf32>
    %285 = arith.truncf %284 : vector<8x64xf32> to vector<8x64xbf16>
    %c0_121 = arith.constant 0 : index
    %c0_122 = arith.constant 0 : index
    %286 = vector.load %arg26[%c0_121, %c0_122] : memref<64x32xbf16, #tpu.memory_space<vmem>>, vector<64x32xbf16>
    %cst_123 = arith.constant dense<0.000000e+00> : vector<8x32xf32>
    %287 = tpu.matmul %285, %286, %cst_123 {dimension_numbers = #tpu.dot_dimension_numbers<[1], [0], [0], [1], [0, 0, 1, 1], [], []>} : vector<8x64xbf16>, vector<64x32xbf16>, vector<8x32xf32> -> vector<8x32xf32>
    %c0_124 = arith.constant 0 : index
    %c0_125 = arith.constant 0 : index
    %288 = vector.load %arg27[%c0_124, %c0_125] : memref<1x32xf32, #tpu.memory_space<vmem>>, vector<1x32xf32>
    %289 = vector.broadcast %288 : vector<1x32xf32> to vector<8x32xf32>
    %290 = arith.addf %287, %289 : vector<8x32xf32>
    %291 = arith.addf %276, %290 : vector<8x32xf32>
    %c0_126 = arith.constant 0 : index
    %c0_127 = arith.constant 0 : index
    %292 = vector.load %arg28[%c0_126, %c0_127] : memref<1x32xf32, #tpu.memory_space<vmem>>, vector<1x32xf32>
    %c0_128 = arith.constant 0 : index
    %c0_129 = arith.constant 0 : index
    %293 = vector.load %arg29[%c0_128, %c0_129] : memref<1x32xf32, #tpu.memory_space<vmem>>, vector<1x32xf32>
    %cst_130 = arith.constant dense<0.000000e+00> : vector<8xf32>
    %294 = vector.multi_reduction <add>, %291, %cst_130 [1] : vector<8x32xf32> to vector<8xf32>
    %295 = vector.shape_cast %294 : vector<8xf32> to vector<8x1xf32>
    %cst_131 = arith.constant 3.200000e+01 : f32
    %296 = vector.broadcast %cst_131 : f32 to vector<8x1xf32>
    %297 = arith.divf %295, %296 : vector<8x1xf32>
    %298 = vector.broadcast %297 : vector<8x1xf32> to vector<8x32xf32>
    %299 = arith.subf %291, %298 : vector<8x32xf32>
    %300 = arith.mulf %299, %299 : vector<8x32xf32>
    %cst_132 = arith.constant dense<0.000000e+00> : vector<8xf32>
    %301 = vector.multi_reduction <add>, %300, %cst_132 [1] : vector<8x32xf32> to vector<8xf32>
    %302 = vector.shape_cast %301 : vector<8xf32> to vector<8x1xf32>
    %cst_133 = arith.constant 3.200000e+01 : f32
    %303 = vector.broadcast %cst_133 : f32 to vector<8x1xf32>
    %304 = arith.divf %302, %303 : vector<8x1xf32>
    %305 = vector.broadcast %297 : vector<8x1xf32> to vector<8x32xf32>
    %306 = arith.subf %291, %305 : vector<8x32xf32>
    %cst_134 = arith.constant 9.99999974E-6 : f32
    %307 = vector.broadcast %cst_134 : f32 to vector<8x1xf32>
    %308 = arith.addf %304, %307 : vector<8x1xf32>
    %309 = math.rsqrt %308 : vector<8x1xf32>
    %310 = vector.broadcast %309 : vector<8x1xf32> to vector<8x32xf32>
    %311 = arith.mulf %306, %310 : vector<8x32xf32>
    %312 = vector.broadcast %292 : vector<1x32xf32> to vector<8x32xf32>
    %313 = arith.mulf %311, %312 : vector<8x32xf32>
    %314 = vector.broadcast %293 : vector<1x32xf32> to vector<8x32xf32>
    %315 = arith.addf %313, %314 : vector<8x32xf32>
    %c0_135 = arith.constant 0 : index
    %c0_136 = arith.constant 0 : index
    %c0_137 = arith.constant 0 : index
    %316 = vector.load %arg32[%c0_135, %c0_136, %c0_137] : memref<1x8x32xf32, #tpu.memory_space<vmem>>, vector<1x8x32xf32>
    %317 = vector.shape_cast %316 : vector<1x8x32xf32> to vector<8x32xf32>
    %318 = vector.shape_cast %315 : vector<8x32xf32> to vector<1x8x32xf32>
    tpu.vector_store %arg32[%c0_135, %c0_136, %c0_137], %318 {strides = array<i32>} : memref<1x8x32xf32, #tpu.memory_space<vmem>>, vector<1x8x32xf32>,
    %c0_138 = arith.constant 0 : index
    %c0_139 = arith.constant 0 : index
    %319 = vector.load %arg30[%c0_138, %c0_139] : memref<1x32xf32, #tpu.memory_space<vmem>>, vector<1x32xf32>
    %c0_140 = arith.constant 0 : index
    %c0_141 = arith.constant 0 : index
    %320 = vector.load %arg31[%c0_140, %c0_141] : memref<1x32xf32, #tpu.memory_space<vmem>>, vector<1x32xf32>
    %cst_142 = arith.constant dense<0.000000e+00> : vector<8xf32>
    %321 = vector.multi_reduction <add>, %315, %cst_142 [1] : vector<8x32xf32> to vector<8xf32>
    %322 = vector.shape_cast %321 : vector<8xf32> to vector<8x1xf32>
    %cst_143 = arith.constant 3.200000e+01 : f32
    %323 = vector.broadcast %cst_143 : f32 to vector<8x1xf32>
    %324 = arith.divf %322, %323 : vector<8x1xf32>
    %325 = vector.broadcast %324 : vector<8x1xf32> to vector<8x32xf32>
    %326 = arith.subf %315, %325 : vector<8x32xf32>
    %327 = arith.mulf %326, %326 : vector<8x32xf32>
    %cst_144 = arith.constant dense<0.000000e+00> : vector<8xf32>
    %328 = vector.multi_reduction <add>, %327, %cst_144 [1] : vector<8x32xf32> to vector<8xf32>
    %329 = vector.shape_cast %328 : vector<8xf32> to vector<8x1xf32>
    %cst_145 = arith.constant 3.200000e+01 : f32
    %330 = vector.broadcast %cst_145 : f32 to vector<8x1xf32>
    %331 = arith.divf %329, %330 : vector<8x1xf32>
    %332 = vector.broadcast %324 : vector<8x1xf32> to vector<8x32xf32>
    %333 = arith.subf %315, %332 : vector<8x32xf32>
    %cst_146 = arith.constant 9.99999974E-6 : f32
    %334 = vector.broadcast %cst_146 : f32 to vector<8x1xf32>
    %335 = arith.addf %331, %334 : vector<8x1xf32>
    %336 = math.rsqrt %335 : vector<8x1xf32>
    %337 = vector.broadcast %336 : vector<8x1xf32> to vector<8x32xf32>
    %338 = arith.mulf %333, %337 : vector<8x32xf32>
    %339 = vector.broadcast %319 : vector<1x32xf32> to vector<8x32xf32>
    %340 = arith.mulf %338, %339 : vector<8x32xf32>
    %341 = vector.broadcast %320 : vector<1x32xf32> to vector<8x32xf32>
    %342 = arith.addf %340, %341 : vector<8x32xf32>
    %c0_147 = arith.constant 0 : index
    %c0_148 = arith.constant 0 : index
    %c0_149 = arith.constant 0 : index
    %343 = vector.load %arg33[%c0_147, %c0_148, %c0_149] : memref<1x8x32xf32, #tpu.memory_space<vmem>>, vector<1x8x32xf32>
    %344 = vector.shape_cast %343 : vector<1x8x32xf32> to vector<8x32xf32>
    %345 = vector.shape_cast %342 : vector<8x32xf32> to vector<1x8x32xf32>
    tpu.vector_store %arg33[%c0_147, %c0_148, %c0_149], %345 {strides = array<i32>} : memref<1x8x32xf32, #tpu.memory_space<vmem>>, vector<1x8x32xf32>,
    return
  }
  func.func @transform_0(%arg0: i32) -> (i32, i32, i32) {
    %c0_i32 = arith.constant 0 : i32
    %c0_i32_0 = arith.constant 0 : i32
    %c0_i32_1 = arith.constant 0 : i32
    return %arg0, %c0_i32, %c0_i32_0 : i32, i32, i32
  }
  func.func @transform_1(%arg0: i32) -> (i32, i32, i32) {
    %c0_i32 = arith.constant 0 : i32
    %c0_i32_0 = arith.constant 0 : i32
    %c0_i32_1 = arith.constant 0 : i32
    %c0_i32_2 = arith.constant 0 : i32
    return %c0_i32, %c0_i32_0, %c0_i32_1 : i32, i32, i32
  }
  func.func @transform_2(%arg0: i32) -> (i32, i32, i32) {
    %c0_i32 = arith.constant 0 : i32
    %c0_i32_0 = arith.constant 0 : i32
    %c0_i32_1 = arith.constant 0 : i32
    return %arg0, %c0_i32, %c0_i32_0 : i32, i32, i32
  }
  func.func @transform_3(%arg0: i32) -> (i32, i32, i32) {
    %c0_i32 = arith.constant 0 : i32
    %c0_i32_0 = arith.constant 0 : i32
    %c0_i32_1 = arith.constant 0 : i32
    return %arg0, %c0_i32, %c0_i32_0 : i32, i32, i32
  }
  func.func @transform_4(%arg0: i32) -> (i32, i32, i32) {
    %c0_i32 = arith.constant 0 : i32
    %c0_i32_0 = arith.constant 0 : i32
    %c0_i32_1 = arith.constant 0 : i32
    return %arg0, %c0_i32, %c0_i32_0 : i32, i32, i32
  }
  func.func @transform_5(%arg0: i32) -> (i32, i32) {
    %c0_i32 = arith.constant 0 : i32
    %c0_i32_0 = arith.constant 0 : i32
    %c0_i32_1 = arith.constant 0 : i32
    return %c0_i32, %c0_i32_0 : i32, i32
  }
  func.func @transform_6(%arg0: i32) -> (i32, i32) {
    %c0_i32 = arith.constant 0 : i32
    %c0_i32_0 = arith.constant 0 : i32
    %c0_i32_1 = arith.constant 0 : i32
    return %c0_i32, %c0_i32_0 : i32, i32
  }
  func.func @transform_7(%arg0: i32) -> (i32, i32) {
    %c0_i32 = arith.constant 0 : i32
    %c0_i32_0 = arith.constant 0 : i32
    %c0_i32_1 = arith.constant 0 : i32
    return %c0_i32, %c0_i32_0 : i32, i32
  }
  func.func @transform_8(%arg0: i32) -> (i32, i32) {
    %c0_i32 = arith.constant 0 : i32
    %c0_i32_0 = arith.constant 0 : i32
    %c0_i32_1 = arith.constant 0 : i32
    return %c0_i32, %c0_i32_0 : i32, i32
  }
  func.func @transform_9(%arg0: i32) -> (i32, i32) {
    %c0_i32 = arith.constant 0 : i32
    %c0_i32_0 = arith.constant 0 : i32
    %c0_i32_1 = arith.constant 0 : i32
    return %c0_i32, %c0_i32_0 : i32, i32
  }
  func.func @transform_10(%arg0: i32) -> (i32, i32) {
    %c0_i32 = arith.constant 0 : i32
    %c0_i32_0 = arith.constant 0 : i32
    %c0_i32_1 = arith.constant 0 : i32
    return %c0_i32, %c0_i32_0 : i32, i32
  }
  func.func @transform_11(%arg0: i32) -> (i32, i32) {
    %c0_i32 = arith.constant 0 : i32
    %c0_i32_0 = arith.constant 0 : i32
    %c0_i32_1 = arith.constant 0 : i32
    return %c0_i32, %c0_i32_0 : i32, i32
  }
  func.func @transform_12(%arg0: i32) -> (i32, i32) {
    %c0_i32 = arith.constant 0 : i32
    %c0_i32_0 = arith.constant 0 : i32
    %c0_i32_1 = arith.constant 0 : i32
    return %c0_i32, %c0_i32_0 : i32, i32
  }
  func.func @transform_13(%arg0: i32) -> (i32, i32) {
    %c0_i32 = arith.constant 0 : i32
    %c0_i32_0 = arith.constant 0 : i32
    %c0_i32_1 = arith.constant 0 : i32
    return %c0_i32, %c0_i32_0 : i32, i32
  }
  func.func @transform_14(%arg0: i32) -> (i32, i32) {
    %c0_i32 = arith.constant 0 : i32
    %c0_i32_0 = arith.constant 0 : i32
    %c0_i32_1 = arith.constant 0 : i32
    return %c0_i32, %c0_i32_0 : i32, i32
  }
  func.func @transform_15(%arg0: i32) -> (i32, i32) {
    %c0_i32 = arith.constant 0 : i32
    %c0_i32_0 = arith.constant 0 : i32
    %c0_i32_1 = arith.constant 0 : i32
    return %c0_i32, %c0_i32_0 : i32, i32
  }
  func.func @transform_16(%arg0: i32) -> (i32, i32) {
    %c0_i32 = arith.constant 0 : i32
    %c0_i32_0 = arith.constant 0 : i32
    %c0_i32_1 = arith.constant 0 : i32
    return %c0_i32, %c0_i32_0 : i32, i32
  }
  func.func @transform_17(%arg0: i32) -> (i32, i32) {
    %c0_i32 = arith.constant 0 : i32
    %c0_i32_0 = arith.constant 0 : i32
    %c0_i32_1 = arith.constant 0 : i32
    return %c0_i32, %c0_i32_0 : i32, i32
  }
  func.func @transform_18(%arg0: i32) -> (i32, i32) {
    %c0_i32 = arith.constant 0 : i32
    %c0_i32_0 = arith.constant 0 : i32
    %c0_i32_1 = arith.constant 0 : i32
    return %c0_i32, %c0_i32_0 : i32, i32
  }
  func.func @transform_19(%arg0: i32) -> (i32, i32) {
    %c0_i32 = arith.constant 0 : i32
    %c0_i32_0 = arith.constant 0 : i32
    %c0_i32_1 = arith.constant 0 : i32
    return %c0_i32, %c0_i32_0 : i32, i32
  }
  func.func @transform_20(%arg0: i32) -> (i32, i32) {
    %c0_i32 = arith.constant 0 : i32
    %c0_i32_0 = arith.constant 0 : i32
    %c0_i32_1 = arith.constant 0 : i32
    return %c0_i32, %c0_i32_0 : i32, i32
  }
  func.func @transform_21(%arg0: i32) -> (i32, i32) {
    %c0_i32 = arith.constant 0 : i32
    %c0_i32_0 = arith.constant 0 : i32
    %c0_i32_1 = arith.constant 0 : i32
    return %c0_i32, %c0_i32_0 : i32, i32
  }
  func.func @transform_22(%arg0: i32) -> (i32, i32) {
    %c0_i32 = arith.constant 0 : i32
    %c0_i32_0 = arith.constant 0 : i32
    %c0_i32_1 = arith.constant 0 : i32
    return %c0_i32, %c0_i32_0 : i32, i32
  }
  func.func @transform_23(%arg0: i32) -> (i32, i32) {
    %c0_i32 = arith.constant 0 : i32
    %c0_i32_0 = arith.constant 0 : i32
    %c0_i32_1 = arith.constant 0 : i32
    return %c0_i32, %c0_i32_0 : i32, i32
  }
  func.func @transform_24(%arg0: i32) -> (i32, i32) {
    %c0_i32 = arith.constant 0 : i32
    %c0_i32_0 = arith.constant 0 : i32
    %c0_i32_1 = arith.constant 0 : i32
    return %c0_i32, %c0_i32_0 : i32, i32
  }
  func.func @transform_25(%arg0: i32) -> (i32, i32) {
    %c0_i32 = arith.constant 0 : i32
    %c0_i32_0 = arith.constant 0 : i32
    %c0_i32_1 = arith.constant 0 : i32
    return %c0_i32, %c0_i32_0 : i32, i32
  }
  func.func @transform_26(%arg0: i32) -> (i32, i32) {
    %c0_i32 = arith.constant 0 : i32
    %c0_i32_0 = arith.constant 0 : i32
    %c0_i32_1 = arith.constant 0 : i32
    return %c0_i32, %c0_i32_0 : i32, i32
  }
  func.func @transform_27(%arg0: i32) -> (i32, i32) {
    %c0_i32 = arith.constant 0 : i32
    %c0_i32_0 = arith.constant 0 : i32
    %c0_i32_1 = arith.constant 0 : i32
    return %c0_i32, %c0_i32_0 : i32, i32
  }
  func.func @transform_28(%arg0: i32) -> (i32, i32) {
    %c0_i32 = arith.constant 0 : i32
    %c0_i32_0 = arith.constant 0 : i32
    %c0_i32_1 = arith.constant 0 : i32
    return %c0_i32, %c0_i32_0 : i32, i32
  }
  func.func @transform_29(%arg0: i32) -> (i32, i32) {
    %c0_i32 = arith.constant 0 : i32
    %c0_i32_0 = arith.constant 0 : i32
    %c0_i32_1 = arith.constant 0 : i32
    return %c0_i32, %c0_i32_0 : i32, i32
  }
  func.func @transform_30(%arg0: i32) -> (i32, i32) {
    %c0_i32 = arith.constant 0 : i32
    %c0_i32_0 = arith.constant 0 : i32
    %c0_i32_1 = arith.constant 0 : i32
    return %c0_i32, %c0_i32_0 : i32, i32
  }
  func.func @transform_31(%arg0: i32) -> (i32, i32, i32) {
    %c0_i32 = arith.constant 0 : i32
    %c0_i32_0 = arith.constant 0 : i32
    %c0_i32_1 = arith.constant 0 : i32
    return %arg0, %c0_i32, %c0_i32_0 : i32, i32, i32
  }
  func.func @transform_32(%arg0: i32) -> (i32, i32, i32) {
    %c0_i32 = arith.constant 0 : i32
    %c0_i32_0 = arith.constant 0 : i32
    %c0_i32_1 = arith.constant 0 : i32
    return %arg0, %c0_i32, %c0_i32_0 : i32, i32, i32
  }
}

module attributes {stable_mosaic.version = 11 : i64} {
  func.func @_decoder_layer_kernel(%arg0: i32, %arg1: memref<1x8x32xf32, #tpu.memory_space<vmem>>, %arg2: memref<1x8x32xf32, #tpu.memory_space<vmem>>, %arg3: memref<1x64x32xf32, #tpu.memory_space<vmem>>, %arg4: memref<1x64x32xf32, #tpu.memory_space<vmem>>, %arg5: memref<1x1x64xf32, #tpu.memory_space<vmem>>, %arg6: memref<32x64xbf16, #tpu.memory_space<vmem>>, %arg7: memref<1x64xf32, #tpu.memory_space<vmem>>, %arg8: memref<32x32xbf16, #tpu.memory_space<vmem>>, %arg9: memref<1x32xf32, #tpu.memory_space<vmem>>, %arg10: memref<32x32xbf16, #tpu.memory_space<vmem>>, %arg11: memref<1x32xf32, #tpu.memory_space<vmem>>, %arg12: memref<1x32xf32, #tpu.memory_space<vmem>>, %arg13: memref<1x32xf32, #tpu.memory_space<vmem>>, %arg14: memref<32x32xbf16, #tpu.memory_space<vmem>>, %arg15: memref<1x32xf32, #tpu.memory_space<vmem>>, %arg16: memref<32x32xbf16, #tpu.memory_space<vmem>>, %arg17: memref<1x32xf32, #tpu.memory_space<vmem>>, %arg18: memref<32x32xbf16, #tpu.memory_space<vmem>>, %arg19: memref<1x32xf32, #tpu.memory_space<vmem>>, %arg20: memref<32x32xbf16, #tpu.memory_space<vmem>>, %arg21: memref<1x32xf32, #tpu.memory_space<vmem>>, %arg22: memref<1x32xf32, #tpu.memory_space<vmem>>, %arg23: memref<1x32xf32, #tpu.memory_space<vmem>>, %arg24: memref<32x64xbf16, #tpu.memory_space<vmem>>, %arg25: memref<1x64xf32, #tpu.memory_space<vmem>>, %arg26: memref<64x32xbf16, #tpu.memory_space<vmem>>, %arg27: memref<1x32xf32, #tpu.memory_space<vmem>>, %arg28: memref<1x32xf32, #tpu.memory_space<vmem>>, %arg29: memref<1x32xf32, #tpu.memory_space<vmem>>, %arg30: memref<1x32xf32, #tpu.memory_space<vmem>>, %arg31: memref<1x32xf32, #tpu.memory_space<vmem>>, %arg32: memref<1x8x32xf32, #tpu.memory_space<vmem>>, %arg33: memref<1x8x32xf32, #tpu.memory_space<vmem>>, %arg34: memref<8x32xf32, #tpu.memory_space<vmem>>) attributes {dimension_semantics = [#tpu.dimension_semantics<parallel>], iteration_bounds = array<i64: 2>, scalar_prefetch = 0 : i64, scratch_operands = 1 : i64, tpu.core_type = #tpu.core_type<tc>, window_params = [{transform_indices = @transform_0, window_bounds = array<i64: 1, 8, 32>}, {pipeline_mode = #tpu.pipeline_mode<synchronous>, transform_indices = @transform_1, window_bounds = array<i64: 1, 8, 32>}, {transform_indices = @transform_2, window_bounds = array<i64: 1, 64, 32>}, {transform_indices = @transform_3, window_bounds = array<i64: 1, 64, 32>}, {transform_indices = @transform_4, window_bounds = array<i64: 1, 1, 64>}, {pipeline_mode = #tpu.pipeline_mode<synchronous>, transform_indices = @transform_5, window_bounds = array<i64: 32, 64>}, {pipeline_mode = #tpu.pipeline_mode<synchronous>, transform_indices = @transform_6, window_bounds = array<i64: 1, 64>}, {pipeline_mode = #tpu.pipeline_mode<synchronous>, transform_indices = @transform_7, window_bounds = array<i64: 32, 32>}, {pipeline_mode = #tpu.pipeline_mode<synchronous>, transform_indices = @transform_8, window_bounds = array<i64: 1, 32>}, {pipeline_mode = #tpu.pipeline_mode<synchronous>, transform_indices = @transform_9, window_bounds = array<i64: 32, 32>}, {pipeline_mode = #tpu.pipeline_mode<synchronous>, transform_indices = @transform_10, window_bounds = array<i64: 1, 32>}, {pipeline_mode = #tpu.pipeline_mode<synchronous>, transform_indices = @transform_11, window_bounds = array<i64: 1, 32>}, {pipeline_mode = #tpu.pipeline_mode<synchronous>, transform_indices = @transform_12, window_bounds = array<i64: 1, 32>}, {pipeline_mode = #tpu.pipeline_mode<synchronous>, transform_indices = @transform_13, window_bounds = array<i64: 32, 32>}, {pipeline_mode = #tpu.pipeline_mode<synchronous>, transform_indices = @transform_14, window_bounds = array<i64: 1, 32>}, {pipeline_mode = #tpu.pipeline_mode<synchronous>, transform_indices = @transform_15, window_bounds = array<i64: 32, 32>}, {pipeline_mode = #tpu.pipeline_mode<synchronous>, transform_indices = @transform_16, window_bounds = array<i64: 1, 32>}, {pipeline_mode = #tpu.pipeline_mode<synchronous>, transform_indices = @transform_17, window_bounds = array<i64: 32, 32>}, {pipeline_mode = #tpu.pipeline_mode<synchronous>, transform_indices = @transform_18, window_bounds = array<i64: 1, 32>}, {pipeline_mode = #tpu.pipeline_mode<synchronous>, transform_indices = @transform_19, window_bounds = array<i64: 32, 32>}, {pipeline_mode = #tpu.pipeline_mode<synchronous>, transform_indices = @transform_20, window_bounds = array<i64: 1, 32>}, {pipeline_mode = #tpu.pipeline_mode<synchronous>, transform_indices = @transform_21, window_bounds = array<i64: 1, 32>}, {pipeline_mode = #tpu.pipeline_mode<synchronous>, transform_indices = @transform_22, window_bounds = array<i64: 1, 32>}, {pipeline_mode = #tpu.pipeline_mode<synchronous>, transform_indices = @transform_23, window_bounds = array<i64: 32, 64>}, {pipeline_mode = #tpu.pipeline_mode<synchronous>, transform_indices = @transform_24, window_bounds = array<i64: 1, 64>}, {pipeline_mode = #tpu.pipeline_mode<synchronous>, transform_indices = @transform_25, window_bounds = array<i64: 64, 32>}, {pipeline_mode = #tpu.pipeline_mode<synchronous>, transform_indices = @transform_26, window_bounds = array<i64: 1, 32>}, {pipeline_mode = #tpu.pipeline_mode<synchronous>, transform_indices = @transform_27, window_bounds = array<i64: 1, 32>}, {pipeline_mode = #tpu.pipeline_mode<synchronous>, transform_indices = @transform_28, window_bounds = array<i64: 1, 32>}, {pipeline_mode = #tpu.pipeline_mode<synchronous>, transform_indices = @transform_29, window_bounds = array<i64: 1, 32>}, {pipeline_mode = #tpu.pipeline_mode<synchronous>, transform_indices = @transform_30, window_bounds = array<i64: 1, 32>}, {transform_indices = @transform_31, window_bounds = array<i64: 1, 8, 32>}, {transform_indices = @transform_32, window_bounds = array<i64: 1, 8, 32>}]} {
    %c0 = arith.constant 0 : index
    %c0_0 = arith.constant 0 : index
    %c0_1 = arith.constant 0 : index
    %0 = vector.load %arg1[%c0, %c0_0, %c0_1] : memref<1x8x32xf32, #tpu.memory_space<vmem>>, vector<1x8x32xf32>
    %1 = vector.shape_cast %0 : vector<1x8x32xf32> to vector<8x32xf32>
    %c0_2 = arith.constant 0 : index
    %c0_3 = arith.constant 0 : index
    %c0_4 = arith.constant 0 : index
    %2 = vector.load %arg2[%c0_2, %c0_3, %c0_4] : memref<1x8x32xf32, #tpu.memory_space<vmem>>, vector<1x8x32xf32>
    %3 = vector.shape_cast %2 : vector<1x8x32xf32> to vector<8x32xf32>
    %c0_5 = arith.constant 0 : index
    %c0_6 = arith.constant 0 : index
    %c0_7 = arith.constant 0 : index
    %4 = vector.load %arg3[%c0_5, %c0_6, %c0_7] : memref<1x64x32xf32, #tpu.memory_space<vmem>>, vector<1x64x32xf32>
    %5 = vector.shape_cast %4 : vector<1x64x32xf32> to vector<64x32xf32>
    %c0_8 = arith.constant 0 : index
    %c0_9 = arith.constant 0 : index
    %c0_10 = arith.constant 0 : index
    %6 = vector.load %arg4[%c0_8, %c0_9, %c0_10] : memref<1x64x32xf32, #tpu.memory_space<vmem>>, vector<1x64x32xf32>
    %7 = vector.shape_cast %6 : vector<1x64x32xf32> to vector<64x32xf32>
    %c0_11 = arith.constant 0 : index
    %c0_12 = arith.constant 0 : index
    %c0_13 = arith.constant 0 : index
    %8 = vector.load %arg5[%c0_11, %c0_12, %c0_13] : memref<1x1x64xf32, #tpu.memory_space<vmem>>, vector<1x1x64xf32>
    %9 = vector.shape_cast %8 : vector<1x1x64xf32> to vector<1x64xf32>
    %10 = arith.addf %1, %3 : vector<8x32xf32>
    %11 = arith.truncf %10 : vector<8x32xf32> to vector<8x32xbf16>
    %c0_14 = arith.constant 0 : index
    %c0_15 = arith.constant 0 : index
    %12 = vector.load %arg6[%c0_14, %c0_15] : memref<32x64xbf16, #tpu.memory_space<vmem>>, vector<32x64xbf16>
    %cst = arith.constant dense<0.000000e+00> : vector<8x64xf32>
    %13 = tpu.matmul %11, %12, %cst {dimension_numbers = #tpu.dot_dimension_numbers<[1], [0], [0], [1], [0, 0, 1, 1], [], []>} : vector<8x32xbf16>, vector<32x64xbf16>, vector<8x64xf32> -> vector<8x64xf32>
    %c0_16 = arith.constant 0 : index
    %c0_17 = arith.constant 0 : index
    %14 = vector.load %arg7[%c0_16, %c0_17] : memref<1x64xf32, #tpu.memory_space<vmem>>, vector<1x64xf32>
    %15 = vector.broadcast %14 : vector<1x64xf32> to vector<8x64xf32>
    %16 = arith.addf %13, %15 : vector<8x64xf32>
    %17 = arith.truncf %1 : vector<8x32xf32> to vector<8x32xbf16>
    %c0_18 = arith.constant 0 : index
    %c0_19 = arith.constant 0 : index
    %18 = vector.load %arg8[%c0_18, %c0_19] : memref<32x32xbf16, #tpu.memory_space<vmem>>, vector<32x32xbf16>
    %cst_20 = arith.constant dense<0.000000e+00> : vector<8x32xf32>
    %19 = tpu.matmul %17, %18, %cst_20 {dimension_numbers = #tpu.dot_dimension_numbers<[1], [0], [0], [1], [0, 0, 1, 1], [], []>} : vector<8x32xbf16>, vector<32x32xbf16>, vector<8x32xf32> -> vector<8x32xf32>
    %c0_21 = arith.constant 0 : index
    %c0_22 = arith.constant 0 : index
    %20 = vector.load %arg9[%c0_21, %c0_22] : memref<1x32xf32, #tpu.memory_space<vmem>>, vector<1x32xf32>
    %21 = vector.broadcast %20 : vector<1x32xf32> to vector<8x32xf32>
    %22 = arith.addf %19, %21 : vector<8x32xf32>
    %23 = vector.extract_strided_slice %16 {offsets = [0, 0], sizes = [8, 32], strides = [1, 1]} : vector<8x64xf32> to vector<8x32xf32>
    %24 = vector.extract_strided_slice %16 {offsets = [0, 32], sizes = [8, 32], strides = [1, 1]} : vector<8x64xf32> to vector<8x32xf32>
    %25 = vector.extract_strided_slice %23 {offsets = [0, 0], sizes = [8, 8], strides = [1, 1]} : vector<8x32xf32> to vector<8x8xf32>
    %26 = arith.truncf %25 : vector<8x8xf32> to vector<8x8xbf16>
    %27 = vector.extract_strided_slice %24 {offsets = [0, 0], sizes = [8, 8], strides = [1, 1]} : vector<8x32xf32> to vector<8x8xf32>
    %28 = arith.truncf %27 : vector<8x8xf32> to vector<8x8xbf16>
    %cst_23 = arith.constant dense<0.000000e+00> : vector<8x8xf32>
    %29 = tpu.matmul %26, %28, %cst_23 {dimension_numbers = #tpu.dot_dimension_numbers<[1], [1], [0], [0], [0, 0, 1, 0], [], []>} : vector<8x8xbf16>, vector<8x8xbf16>, vector<8x8xf32> -> vector<8x8xf32>
    %cst_24 = arith.constant dense<0xFF800000> : vector<8xf32>
    %30 = vector.multi_reduction <maximumf>, %29, %cst_24 [1] : vector<8x8xf32> to vector<8xf32>
    %31 = vector.shape_cast %30 : vector<8xf32> to vector<8x1xf32>
    %32 = vector.broadcast %31 : vector<8x1xf32> to vector<8x8xf32>
    %33 = arith.subf %29, %32 : vector<8x8xf32>
    %34 = math.exp %33 : vector<8x8xf32>
    %cst_25 = arith.constant dense<0.000000e+00> : vector<8xf32>
    %35 = vector.multi_reduction <add>, %34, %cst_25 [1] : vector<8x8xf32> to vector<8xf32>
    %36 = vector.shape_cast %35 : vector<8xf32> to vector<8x1xf32>
    %37 = tpu.reciprocal %36 {approx = true} : vector<8x1xf32> -> vector<8x1xf32>
    %38 = vector.broadcast %37 : vector<8x1xf32> to vector<8x8xf32>
    %39 = arith.mulf %34, %38 : vector<8x8xf32>
    %40 = arith.truncf %39 : vector<8x8xf32> to vector<8x8xbf16>
    %41 = vector.extract_strided_slice %22 {offsets = [0, 0], sizes = [8, 8], strides = [1, 1]} : vector<8x32xf32> to vector<8x8xf32>
    %42 = arith.truncf %41 : vector<8x8xf32> to vector<8x8xbf16>
    %cst_26 = arith.constant dense<0.000000e+00> : vector<8x8xf32>
    %43 = tpu.matmul %40, %42, %cst_26 {dimension_numbers = #tpu.dot_dimension_numbers<[1], [0], [0], [1], [0, 0, 1, 1], [], []>} : vector<8x8xbf16>, vector<8x8xbf16>, vector<8x8xf32> -> vector<8x8xf32>
    %c0_27 = arith.constant 0 : index
    %c0_28 = arith.constant 0 : index
    %44 = vector.load %arg34[%c0_27, %c0_28] : memref<8x32xf32, #tpu.memory_space<vmem>>, vector<8x8xf32>
    tpu.vector_store %arg34[%c0_27, %c0_28], %43 {strides = array<i32>} : memref<8x32xf32, #tpu.memory_space<vmem>>, vector<8x8xf32>,
    %45 = vector.extract_strided_slice %23 {offsets = [0, 8], sizes = [8, 8], strides = [1, 1]} : vector<8x32xf32> to vector<8x8xf32>
    %46 = arith.truncf %45 : vector<8x8xf32> to vector<8x8xbf16>
    %47 = vector.extract_strided_slice %24 {offsets = [0, 8], sizes = [8, 8], strides = [1, 1]} : vector<8x32xf32> to vector<8x8xf32>
    %48 = arith.truncf %47 : vector<8x8xf32> to vector<8x8xbf16>
    %cst_29 = arith.constant dense<0.000000e+00> : vector<8x8xf32>
    %49 = tpu.matmul %46, %48, %cst_29 {dimension_numbers = #tpu.dot_dimension_numbers<[1], [1], [0], [0], [0, 0, 1, 0], [], []>} : vector<8x8xbf16>, vector<8x8xbf16>, vector<8x8xf32> -> vector<8x8xf32>
    %cst_30 = arith.constant dense<0xFF800000> : vector<8xf32>
    %50 = vector.multi_reduction <maximumf>, %49, %cst_30 [1] : vector<8x8xf32> to vector<8xf32>
    %51 = vector.shape_cast %50 : vector<8xf32> to vector<8x1xf32>
    %52 = vector.broadcast %51 : vector<8x1xf32> to vector<8x8xf32>
    %53 = arith.subf %49, %52 : vector<8x8xf32>
    %54 = math.exp %53 : vector<8x8xf32>
    %cst_31 = arith.constant dense<0.000000e+00> : vector<8xf32>
    %55 = vector.multi_reduction <add>, %54, %cst_31 [1] : vector<8x8xf32> to vector<8xf32>
    %56 = vector.shape_cast %55 : vector<8xf32> to vector<8x1xf32>
    %57 = tpu.reciprocal %56 {approx = true} : vector<8x1xf32> -> vector<8x1xf32>
    %58 = vector.broadcast %57 : vector<8x1xf32> to vector<8x8xf32>
    %59 = arith.mulf %54, %58 : vector<8x8xf32>
    %60 = arith.truncf %59 : vector<8x8xf32> to vector<8x8xbf16>
    %61 = vector.extract_strided_slice %22 {offsets = [0, 8], sizes = [8, 8], strides = [1, 1]} : vector<8x32xf32> to vector<8x8xf32>
    %62 = arith.truncf %61 : vector<8x8xf32> to vector<8x8xbf16>
    %cst_32 = arith.constant dense<0.000000e+00> : vector<8x8xf32>
    %63 = tpu.matmul %60, %62, %cst_32 {dimension_numbers = #tpu.dot_dimension_numbers<[1], [0], [0], [1], [0, 0, 1, 1], [], []>} : vector<8x8xbf16>, vector<8x8xbf16>, vector<8x8xf32> -> vector<8x8xf32>
    %c0_33 = arith.constant 0 : index
    %c8 = arith.constant 8 : index
    %64 = vector.load %arg34[%c0_33, %c8] : memref<8x32xf32, #tpu.memory_space<vmem>>, vector<8x8xf32>
    tpu.vector_store %arg34[%c0_33, %c8], %63 {strides = array<i32>} : memref<8x32xf32, #tpu.memory_space<vmem>>, vector<8x8xf32>,
    %65 = vector.extract_strided_slice %23 {offsets = [0, 16], sizes = [8, 8], strides = [1, 1]} : vector<8x32xf32> to vector<8x8xf32>
    %66 = arith.truncf %65 : vector<8x8xf32> to vector<8x8xbf16>
    %67 = vector.extract_strided_slice %24 {offsets = [0, 16], sizes = [8, 8], strides = [1, 1]} : vector<8x32xf32> to vector<8x8xf32>
    %68 = arith.truncf %67 : vector<8x8xf32> to vector<8x8xbf16>
    %cst_34 = arith.constant dense<0.000000e+00> : vector<8x8xf32>
    %69 = tpu.matmul %66, %68, %cst_34 {dimension_numbers = #tpu.dot_dimension_numbers<[1], [1], [0], [0], [0, 0, 1, 0], [], []>} : vector<8x8xbf16>, vector<8x8xbf16>, vector<8x8xf32> -> vector<8x8xf32>
    %cst_35 = arith.constant dense<0xFF800000> : vector<8xf32>
    %70 = vector.multi_reduction <maximumf>, %69, %cst_35 [1] : vector<8x8xf32> to vector<8xf32>
    %71 = vector.shape_cast %70 : vector<8xf32> to vector<8x1xf32>
    %72 = vector.broadcast %71 : vector<8x1xf32> to vector<8x8xf32>
    %73 = arith.subf %69, %72 : vector<8x8xf32>
    %74 = math.exp %73 : vector<8x8xf32>
    %cst_36 = arith.constant dense<0.000000e+00> : vector<8xf32>
    %75 = vector.multi_reduction <add>, %74, %cst_36 [1] : vector<8x8xf32> to vector<8xf32>
    %76 = vector.shape_cast %75 : vector<8xf32> to vector<8x1xf32>
    %77 = tpu.reciprocal %76 {approx = true} : vector<8x1xf32> -> vector<8x1xf32>
    %78 = vector.broadcast %77 : vector<8x1xf32> to vector<8x8xf32>
    %79 = arith.mulf %74, %78 : vector<8x8xf32>
    %80 = arith.truncf %79 : vector<8x8xf32> to vector<8x8xbf16>
    %81 = vector.extract_strided_slice %22 {offsets = [0, 16], sizes = [8, 8], strides = [1, 1]} : vector<8x32xf32> to vector<8x8xf32>
    %82 = arith.truncf %81 : vector<8x8xf32> to vector<8x8xbf16>
    %cst_37 = arith.constant dense<0.000000e+00> : vector<8x8xf32>
    %83 = tpu.matmul %80, %82, %cst_37 {dimension_numbers = #tpu.dot_dimension_numbers<[1], [0], [0], [1], [0, 0, 1, 1], [], []>} : vector<8x8xbf16>, vector<8x8xbf16>, vector<8x8xf32> -> vector<8x8xf32>
    %c0_38 = arith.constant 0 : index
    %c16 = arith.constant 16 : index
    %84 = vector.load %arg34[%c0_38, %c16] : memref<8x32xf32, #tpu.memory_space<vmem>>, vector<8x8xf32>
    tpu.vector_store %arg34[%c0_38, %c16], %83 {strides = array<i32>} : memref<8x32xf32, #tpu.memory_space<vmem>>, vector<8x8xf32>,
    %85 = vector.extract_strided_slice %23 {offsets = [0, 24], sizes = [8, 8], strides = [1, 1]} : vector<8x32xf32> to vector<8x8xf32>
    %86 = arith.truncf %85 : vector<8x8xf32> to vector<8x8xbf16>
    %87 = vector.extract_strided_slice %24 {offsets = [0, 24], sizes = [8, 8], strides = [1, 1]} : vector<8x32xf32> to vector<8x8xf32>
    %88 = arith.truncf %87 : vector<8x8xf32> to vector<8x8xbf16>
    %cst_39 = arith.constant dense<0.000000e+00> : vector<8x8xf32>
    %89 = tpu.matmul %86, %88, %cst_39 {dimension_numbers = #tpu.dot_dimension_numbers<[1], [1], [0], [0], [0, 0, 1, 0], [], []>} : vector<8x8xbf16>, vector<8x8xbf16>, vector<8x8xf32> -> vector<8x8xf32>
    %cst_40 = arith.constant dense<0xFF800000> : vector<8xf32>
    %90 = vector.multi_reduction <maximumf>, %89, %cst_40 [1] : vector<8x8xf32> to vector<8xf32>
    %91 = vector.shape_cast %90 : vector<8xf32> to vector<8x1xf32>
    %92 = vector.broadcast %91 : vector<8x1xf32> to vector<8x8xf32>
    %93 = arith.subf %89, %92 : vector<8x8xf32>
    %94 = math.exp %93 : vector<8x8xf32>
    %cst_41 = arith.constant dense<0.000000e+00> : vector<8xf32>
    %95 = vector.multi_reduction <add>, %94, %cst_41 [1] : vector<8x8xf32> to vector<8xf32>
    %96 = vector.shape_cast %95 : vector<8xf32> to vector<8x1xf32>
    %97 = tpu.reciprocal %96 {approx = true} : vector<8x1xf32> -> vector<8x1xf32>
    %98 = vector.broadcast %97 : vector<8x1xf32> to vector<8x8xf32>
    %99 = arith.mulf %94, %98 : vector<8x8xf32>
    %100 = arith.truncf %99 : vector<8x8xf32> to vector<8x8xbf16>
    %101 = vector.extract_strided_slice %22 {offsets = [0, 24], sizes = [8, 8], strides = [1, 1]} : vector<8x32xf32> to vector<8x8xf32>
    %102 = arith.truncf %101 : vector<8x8xf32> to vector<8x8xbf16>
    %cst_42 = arith.constant dense<0.000000e+00> : vector<8x8xf32>
    %103 = tpu.matmul %100, %102, %cst_42 {dimension_numbers = #tpu.dot_dimension_numbers<[1], [0], [0], [1], [0, 0, 1, 1], [], []>} : vector<8x8xbf16>, vector<8x8xbf16>, vector<8x8xf32> -> vector<8x8xf32>
    %c0_43 = arith.constant 0 : index
    %c24 = arith.constant 24 : index
    %104 = vector.load %arg34[%c0_43, %c24] : memref<8x32xf32, #tpu.memory_space<vmem>>, vector<8x8xf32>
    tpu.vector_store %arg34[%c0_43, %c24], %103 {strides = array<i32>} : memref<8x32xf32, #tpu.memory_space<vmem>>, vector<8x8xf32>,
    %c0_44 = arith.constant 0 : index
    %c0_45 = arith.constant 0 : index
    %105 = vector.load %arg34[%c0_44, %c0_45] : memref<8x32xf32, #tpu.memory_space<vmem>>, vector<8x32xf32>
    %106 = arith.truncf %105 : vector<8x32xf32> to vector<8x32xbf16>
    %c0_46 = arith.constant 0 : index
    %c0_47 = arith.constant 0 : index
    %107 = vector.load %arg10[%c0_46, %c0_47] : memref<32x32xbf16, #tpu.memory_space<vmem>>, vector<32x32xbf16>
    %cst_48 = arith.constant dense<0.000000e+00> : vector<8x32xf32>
    %108 = tpu.matmul %106, %107, %cst_48 {dimension_numbers = #tpu.dot_dimension_numbers<[1], [0], [0], [1], [0, 0, 1, 1], [], []>} : vector<8x32xbf16>, vector<32x32xbf16>, vector<8x32xf32> -> vector<8x32xf32>
    %c0_49 = arith.constant 0 : index
    %c0_50 = arith.constant 0 : index
    %109 = vector.load %arg11[%c0_49, %c0_50] : memref<1x32xf32, #tpu.memory_space<vmem>>, vector<1x32xf32>
    %110 = vector.broadcast %109 : vector<1x32xf32> to vector<8x32xf32>
    %111 = arith.addf %108, %110 : vector<8x32xf32>
    %112 = arith.addf %1, %111 : vector<8x32xf32>
    %c0_51 = arith.constant 0 : index
    %c0_52 = arith.constant 0 : index
    %113 = vector.load %arg12[%c0_51, %c0_52] : memref<1x32xf32, #tpu.memory_space<vmem>>, vector<1x32xf32>
    %c0_53 = arith.constant 0 : index
    %c0_54 = arith.constant 0 : index
    %114 = vector.load %arg13[%c0_53, %c0_54] : memref<1x32xf32, #tpu.memory_space<vmem>>, vector<1x32xf32>
    %cst_55 = arith.constant dense<0.000000e+00> : vector<8xf32>
    %115 = vector.multi_reduction <add>, %112, %cst_55 [1] : vector<8x32xf32> to vector<8xf32>
    %116 = vector.shape_cast %115 : vector<8xf32> to vector<8x1xf32>
    %cst_56 = arith.constant 3.200000e+01 : f32
    %117 = vector.broadcast %cst_56 : f32 to vector<8x1xf32>
    %118 = arith.divf %116, %117 : vector<8x1xf32>
    %119 = vector.broadcast %118 : vector<8x1xf32> to vector<8x32xf32>
    %120 = arith.subf %112, %119 : vector<8x32xf32>
    %121 = arith.mulf %120, %120 : vector<8x32xf32>
    %cst_57 = arith.constant dense<0.000000e+00> : vector<8xf32>
    %122 = vector.multi_reduction <add>, %121, %cst_57 [1] : vector<8x32xf32> to vector<8xf32>
    %123 = vector.shape_cast %122 : vector<8xf32> to vector<8x1xf32>
    %cst_58 = arith.constant 3.200000e+01 : f32
    %124 = vector.broadcast %cst_58 : f32 to vector<8x1xf32>
    %125 = arith.divf %123, %124 : vector<8x1xf32>
    %126 = vector.broadcast %118 : vector<8x1xf32> to vector<8x32xf32>
    %127 = arith.subf %112, %126 : vector<8x32xf32>
    %cst_59 = arith.constant 9.99999974E-6 : f32
    %128 = vector.broadcast %cst_59 : f32 to vector<8x1xf32>
    %129 = arith.addf %125, %128 : vector<8x1xf32>
    %130 = math.rsqrt %129 : vector<8x1xf32>
    %131 = vector.broadcast %130 : vector<8x1xf32> to vector<8x32xf32>
    %132 = arith.mulf %127, %131 : vector<8x32xf32>
    %133 = vector.broadcast %113 : vector<1x32xf32> to vector<8x32xf32>
    %134 = arith.mulf %132, %133 : vector<8x32xf32>
    %135 = vector.broadcast %114 : vector<1x32xf32> to vector<8x32xf32>
    %136 = arith.addf %134, %135 : vector<8x32xf32>
    %137 = arith.addf %136, %3 : vector<8x32xf32>
    %138 = arith.truncf %137 : vector<8x32xf32> to vector<8x32xbf16>
    %c0_60 = arith.constant 0 : index
    %c0_61 = arith.constant 0 : index
    %139 = vector.load %arg14[%c0_60, %c0_61] : memref<32x32xbf16, #tpu.memory_space<vmem>>, vector<32x32xbf16>
    %cst_62 = arith.constant dense<0.000000e+00> : vector<8x32xf32>
    %140 = tpu.matmul %138, %139, %cst_62 {dimension_numbers = #tpu.dot_dimension_numbers<[1], [0], [0], [1], [0, 0, 1, 1], [], []>} : vector<8x32xbf16>, vector<32x32xbf16>, vector<8x32xf32> -> vector<8x32xf32>
    %c0_63 = arith.constant 0 : index
    %c0_64 = arith.constant 0 : index
    %141 = vector.load %arg15[%c0_63, %c0_64] : memref<1x32xf32, #tpu.memory_space<vmem>>, vector<1x32xf32>
    %142 = vector.broadcast %141 : vector<1x32xf32> to vector<8x32xf32>
    %143 = arith.addf %140, %142 : vector<8x32xf32>
    %144 = arith.addf %5, %7 : vector<64x32xf32>
    %145 = arith.truncf %144 : vector<64x32xf32> to vector<64x32xbf16>
    %c0_65 = arith.constant 0 : index
    %c0_66 = arith.constant 0 : index
    %146 = vector.load %arg16[%c0_65, %c0_66] : memref<32x32xbf16, #tpu.memory_space<vmem>>, vector<32x32xbf16>
    %cst_67 = arith.constant dense<0.000000e+00> : vector<64x32xf32>
    %147 = tpu.matmul %145, %146, %cst_67 {dimension_numbers = #tpu.dot_dimension_numbers<[1], [0], [0], [1], [0, 0, 1, 1], [], []>} : vector<64x32xbf16>, vector<32x32xbf16>, vector<64x32xf32> -> vector<64x32xf32>
    %c0_68 = arith.constant 0 : index
    %c0_69 = arith.constant 0 : index
    %148 = vector.load %arg17[%c0_68, %c0_69] : memref<1x32xf32, #tpu.memory_space<vmem>>, vector<1x32xf32>
    %149 = vector.broadcast %148 : vector<1x32xf32> to vector<64x32xf32>
    %150 = arith.addf %147, %149 : vector<64x32xf32>
    %151 = arith.truncf %5 : vector<64x32xf32> to vector<64x32xbf16>
    %c0_70 = arith.constant 0 : index
    %c0_71 = arith.constant 0 : index
    %152 = vector.load %arg18[%c0_70, %c0_71] : memref<32x32xbf16, #tpu.memory_space<vmem>>, vector<32x32xbf16>
    %cst_72 = arith.constant dense<0.000000e+00> : vector<64x32xf32>
    %153 = tpu.matmul %151, %152, %cst_72 {dimension_numbers = #tpu.dot_dimension_numbers<[1], [0], [0], [1], [0, 0, 1, 1], [], []>} : vector<64x32xbf16>, vector<32x32xbf16>, vector<64x32xf32> -> vector<64x32xf32>
    %c0_73 = arith.constant 0 : index
    %c0_74 = arith.constant 0 : index
    %154 = vector.load %arg19[%c0_73, %c0_74] : memref<1x32xf32, #tpu.memory_space<vmem>>, vector<1x32xf32>
    %155 = vector.broadcast %154 : vector<1x32xf32> to vector<64x32xf32>
    %156 = arith.addf %153, %155 : vector<64x32xf32>
    %157 = vector.extract_strided_slice %143 {offsets = [0, 0], sizes = [8, 8], strides = [1, 1]} : vector<8x32xf32> to vector<8x8xf32>
    %158 = arith.truncf %157 : vector<8x8xf32> to vector<8x8xbf16>
    %159 = vector.extract_strided_slice %150 {offsets = [0, 0], sizes = [64, 8], strides = [1, 1]} : vector<64x32xf32> to vector<64x8xf32>
    %160 = arith.truncf %159 : vector<64x8xf32> to vector<64x8xbf16>
    %cst_75 = arith.constant dense<0.000000e+00> : vector<8x64xf32>
    %161 = tpu.matmul %158, %160, %cst_75 {dimension_numbers = #tpu.dot_dimension_numbers<[1], [1], [0], [0], [0, 0, 1, 0], [], []>} : vector<8x8xbf16>, vector<64x8xbf16>, vector<8x64xf32> -> vector<8x64xf32>
    %162 = vector.broadcast %9 : vector<1x64xf32> to vector<8x64xf32>
    %163 = arith.addf %161, %162 : vector<8x64xf32>
    %cst_76 = arith.constant dense<0xFF800000> : vector<8xf32>
    %164 = vector.multi_reduction <maximumf>, %163, %cst_76 [1] : vector<8x64xf32> to vector<8xf32>
    %165 = vector.shape_cast %164 : vector<8xf32> to vector<8x1xf32>
    %166 = vector.broadcast %165 : vector<8x1xf32> to vector<8x64xf32>
    %167 = arith.subf %163, %166 : vector<8x64xf32>
    %168 = math.exp %167 : vector<8x64xf32>
    %cst_77 = arith.constant dense<0.000000e+00> : vector<8xf32>
    %169 = vector.multi_reduction <add>, %168, %cst_77 [1] : vector<8x64xf32> to vector<8xf32>
    %170 = vector.shape_cast %169 : vector<8xf32> to vector<8x1xf32>
    %171 = tpu.reciprocal %170 {approx = true} : vector<8x1xf32> -> vector<8x1xf32>
    %172 = vector.broadcast %171 : vector<8x1xf32> to vector<8x64xf32>
    %173 = arith.mulf %168, %172 : vector<8x64xf32>
    %174 = arith.truncf %173 : vector<8x64xf32> to vector<8x64xbf16>
    %175 = vector.extract_strided_slice %156 {offsets = [0, 0], sizes = [64, 8], strides = [1, 1]} : vector<64x32xf32> to vector<64x8xf32>
    %176 = arith.truncf %175 : vector<64x8xf32> to vector<64x8xbf16>
    %cst_78 = arith.constant dense<0.000000e+00> : vector<8x8xf32>
    %177 = tpu.matmul %174, %176, %cst_78 {dimension_numbers = #tpu.dot_dimension_numbers<[1], [0], [0], [1], [0, 0, 1, 1], [], []>} : vector<8x64xbf16>, vector<64x8xbf16>, vector<8x8xf32> -> vector<8x8xf32>
    %c0_79 = arith.constant 0 : index
    %c0_80 = arith.constant 0 : index
    %178 = vector.load %arg34[%c0_79, %c0_80] : memref<8x32xf32, #tpu.memory_space<vmem>>, vector<8x8xf32>
    tpu.vector_store %arg34[%c0_79, %c0_80], %177 {strides = array<i32>} : memref<8x32xf32, #tpu.memory_space<vmem>>, vector<8x8xf32>,
    %179 = vector.extract_strided_slice %143 {offsets = [0, 8], sizes = [8, 8], strides = [1, 1]} : vector<8x32xf32> to vector<8x8xf32>
    %180 = arith.truncf %179 : vector<8x8xf32> to vector<8x8xbf16>
    %181 = vector.extract_strided_slice %150 {offsets = [0, 8], sizes = [64, 8], strides = [1, 1]} : vector<64x32xf32> to vector<64x8xf32>
    %182 = arith.truncf %181 : vector<64x8xf32> to vector<64x8xbf16>
    %cst_81 = arith.constant dense<0.000000e+00> : vector<8x64xf32>
    %183 = tpu.matmul %180, %182, %cst_81 {dimension_numbers = #tpu.dot_dimension_numbers<[1], [1], [0], [0], [0, 0, 1, 0], [], []>} : vector<8x8xbf16>, vector<64x8xbf16>, vector<8x64xf32> -> vector<8x64xf32>
    %184 = vector.broadcast %9 : vector<1x64xf32> to vector<8x64xf32>
    %185 = arith.addf %183, %184 : vector<8x64xf32>
    %cst_82 = arith.constant dense<0xFF800000> : vector<8xf32>
    %186 = vector.multi_reduction <maximumf>, %185, %cst_82 [1] : vector<8x64xf32> to vector<8xf32>
    %187 = vector.shape_cast %186 : vector<8xf32> to vector<8x1xf32>
    %188 = vector.broadcast %187 : vector<8x1xf32> to vector<8x64xf32>
    %189 = arith.subf %185, %188 : vector<8x64xf32>
    %190 = math.exp %189 : vector<8x64xf32>
    %cst_83 = arith.constant dense<0.000000e+00> : vector<8xf32>
    %191 = vector.multi_reduction <add>, %190, %cst_83 [1] : vector<8x64xf32> to vector<8xf32>
    %192 = vector.shape_cast %191 : vector<8xf32> to vector<8x1xf32>
    %193 = tpu.reciprocal %192 {approx = true} : vector<8x1xf32> -> vector<8x1xf32>
    %194 = vector.broadcast %193 : vector<8x1xf32> to vector<8x64xf32>
    %195 = arith.mulf %190, %194 : vector<8x64xf32>
    %196 = arith.truncf %195 : vector<8x64xf32> to vector<8x64xbf16>
    %197 = vector.extract_strided_slice %156 {offsets = [0, 8], sizes = [64, 8], strides = [1, 1]} : vector<64x32xf32> to vector<64x8xf32>
    %198 = arith.truncf %197 : vector<64x8xf32> to vector<64x8xbf16>
    %cst_84 = arith.constant dense<0.000000e+00> : vector<8x8xf32>
    %199 = tpu.matmul %196, %198, %cst_84 {dimension_numbers = #tpu.dot_dimension_numbers<[1], [0], [0], [1], [0, 0, 1, 1], [], []>} : vector<8x64xbf16>, vector<64x8xbf16>, vector<8x8xf32> -> vector<8x8xf32>
    %c0_85 = arith.constant 0 : index
    %c8_86 = arith.constant 8 : index
    %200 = vector.load %arg34[%c0_85, %c8_86] : memref<8x32xf32, #tpu.memory_space<vmem>>, vector<8x8xf32>
    tpu.vector_store %arg34[%c0_85, %c8_86], %199 {strides = array<i32>} : memref<8x32xf32, #tpu.memory_space<vmem>>, vector<8x8xf32>,
    %201 = vector.extract_strided_slice %143 {offsets = [0, 16], sizes = [8, 8], strides = [1, 1]} : vector<8x32xf32> to vector<8x8xf32>
    %202 = arith.truncf %201 : vector<8x8xf32> to vector<8x8xbf16>
    %203 = vector.extract_strided_slice %150 {offsets = [0, 16], sizes = [64, 8], strides = [1, 1]} : vector<64x32xf32> to vector<64x8xf32>
    %204 = arith.truncf %203 : vector<64x8xf32> to vector<64x8xbf16>
    %cst_87 = arith.constant dense<0.000000e+00> : vector<8x64xf32>
    %205 = tpu.matmul %202, %204, %cst_87 {dimension_numbers = #tpu.dot_dimension_numbers<[1], [1], [0], [0], [0, 0, 1, 0], [], []>} : vector<8x8xbf16>, vector<64x8xbf16>, vector<8x64xf32> -> vector<8x64xf32>
    %206 = vector.broadcast %9 : vector<1x64xf32> to vector<8x64xf32>
    %207 = arith.addf %205, %206 : vector<8x64xf32>
    %cst_88 = arith.constant dense<0xFF800000> : vector<8xf32>
    %208 = vector.multi_reduction <maximumf>, %207, %cst_88 [1] : vector<8x64xf32> to vector<8xf32>
    %209 = vector.shape_cast %208 : vector<8xf32> to vector<8x1xf32>
    %210 = vector.broadcast %209 : vector<8x1xf32> to vector<8x64xf32>
    %211 = arith.subf %207, %210 : vector<8x64xf32>
    %212 = math.exp %211 : vector<8x64xf32>
    %cst_89 = arith.constant dense<0.000000e+00> : vector<8xf32>
    %213 = vector.multi_reduction <add>, %212, %cst_89 [1] : vector<8x64xf32> to vector<8xf32>
    %214 = vector.shape_cast %213 : vector<8xf32> to vector<8x1xf32>
    %215 = tpu.reciprocal %214 {approx = true} : vector<8x1xf32> -> vector<8x1xf32>
    %216 = vector.broadcast %215 : vector<8x1xf32> to vector<8x64xf32>
    %217 = arith.mulf %212, %216 : vector<8x64xf32>
    %218 = arith.truncf %217 : vector<8x64xf32> to vector<8x64xbf16>
    %219 = vector.extract_strided_slice %156 {offsets = [0, 16], sizes = [64, 8], strides = [1, 1]} : vector<64x32xf32> to vector<64x8xf32>
    %220 = arith.truncf %219 : vector<64x8xf32> to vector<64x8xbf16>
    %cst_90 = arith.constant dense<0.000000e+00> : vector<8x8xf32>
    %221 = tpu.matmul %218, %220, %cst_90 {dimension_numbers = #tpu.dot_dimension_numbers<[1], [0], [0], [1], [0, 0, 1, 1], [], []>} : vector<8x64xbf16>, vector<64x8xbf16>, vector<8x8xf32> -> vector<8x8xf32>
    %c0_91 = arith.constant 0 : index
    %c16_92 = arith.constant 16 : index
    %222 = vector.load %arg34[%c0_91, %c16_92] : memref<8x32xf32, #tpu.memory_space<vmem>>, vector<8x8xf32>
    tpu.vector_store %arg34[%c0_91, %c16_92], %221 {strides = array<i32>} : memref<8x32xf32, #tpu.memory_space<vmem>>, vector<8x8xf32>,
    %223 = vector.extract_strided_slice %143 {offsets = [0, 24], sizes = [8, 8], strides = [1, 1]} : vector<8x32xf32> to vector<8x8xf32>
    %224 = arith.truncf %223 : vector<8x8xf32> to vector<8x8xbf16>
    %225 = vector.extract_strided_slice %150 {offsets = [0, 24], sizes = [64, 8], strides = [1, 1]} : vector<64x32xf32> to vector<64x8xf32>
    %226 = arith.truncf %225 : vector<64x8xf32> to vector<64x8xbf16>
    %cst_93 = arith.constant dense<0.000000e+00> : vector<8x64xf32>
    %227 = tpu.matmul %224, %226, %cst_93 {dimension_numbers = #tpu.dot_dimension_numbers<[1], [1], [0], [0], [0, 0, 1, 0], [], []>} : vector<8x8xbf16>, vector<64x8xbf16>, vector<8x64xf32> -> vector<8x64xf32>
    %228 = vector.broadcast %9 : vector<1x64xf32> to vector<8x64xf32>
    %229 = arith.addf %227, %228 : vector<8x64xf32>
    %cst_94 = arith.constant dense<0xFF800000> : vector<8xf32>
    %230 = vector.multi_reduction <maximumf>, %229, %cst_94 [1] : vector<8x64xf32> to vector<8xf32>
    %231 = vector.shape_cast %230 : vector<8xf32> to vector<8x1xf32>
    %232 = vector.broadcast %231 : vector<8x1xf32> to vector<8x64xf32>
    %233 = arith.subf %229, %232 : vector<8x64xf32>
    %234 = math.exp %233 : vector<8x64xf32>
    %cst_95 = arith.constant dense<0.000000e+00> : vector<8xf32>
    %235 = vector.multi_reduction <add>, %234, %cst_95 [1] : vector<8x64xf32> to vector<8xf32>
    %236 = vector.shape_cast %235 : vector<8xf32> to vector<8x1xf32>
    %237 = tpu.reciprocal %236 {approx = true} : vector<8x1xf32> -> vector<8x1xf32>
    %238 = vector.broadcast %237 : vector<8x1xf32> to vector<8x64xf32>
    %239 = arith.mulf %234, %238 : vector<8x64xf32>
    %240 = arith.truncf %239 : vector<8x64xf32> to vector<8x64xbf16>
    %241 = vector.extract_strided_slice %156 {offsets = [0, 24], sizes = [64, 8], strides = [1, 1]} : vector<64x32xf32> to vector<64x8xf32>
    %242 = arith.truncf %241 : vector<64x8xf32> to vector<64x8xbf16>
    %cst_96 = arith.constant dense<0.000000e+00> : vector<8x8xf32>
    %243 = tpu.matmul %240, %242, %cst_96 {dimension_numbers = #tpu.dot_dimension_numbers<[1], [0], [0], [1], [0, 0, 1, 1], [], []>} : vector<8x64xbf16>, vector<64x8xbf16>, vector<8x8xf32> -> vector<8x8xf32>
    %c0_97 = arith.constant 0 : index
    %c24_98 = arith.constant 24 : index
    %244 = vector.load %arg34[%c0_97, %c24_98] : memref<8x32xf32, #tpu.memory_space<vmem>>, vector<8x8xf32>
    tpu.vector_store %arg34[%c0_97, %c24_98], %243 {strides = array<i32>} : memref<8x32xf32, #tpu.memory_space<vmem>>, vector<8x8xf32>,
    %c0_99 = arith.constant 0 : index
    %c0_100 = arith.constant 0 : index
    %245 = vector.load %arg34[%c0_99, %c0_100] : memref<8x32xf32, #tpu.memory_space<vmem>>, vector<8x32xf32>
    %246 = arith.truncf %245 : vector<8x32xf32> to vector<8x32xbf16>
    %c0_101 = arith.constant 0 : index
    %c0_102 = arith.constant 0 : index
    %247 = vector.load %arg20[%c0_101, %c0_102] : memref<32x32xbf16, #tpu.memory_space<vmem>>, vector<32x32xbf16>
    %cst_103 = arith.constant dense<0.000000e+00> : vector<8x32xf32>
    %248 = tpu.matmul %246, %247, %cst_103 {dimension_numbers = #tpu.dot_dimension_numbers<[1], [0], [0], [1], [0, 0, 1, 1], [], []>} : vector<8x32xbf16>, vector<32x32xbf16>, vector<8x32xf32> -> vector<8x32xf32>
    %c0_104 = arith.constant 0 : index
    %c0_105 = arith.constant 0 : index
    %249 = vector.load %arg21[%c0_104, %c0_105] : memref<1x32xf32, #tpu.memory_space<vmem>>, vector<1x32xf32>
    %250 = vector.broadcast %249 : vector<1x32xf32> to vector<8x32xf32>
    %251 = arith.addf %248, %250 : vector<8x32xf32>
    %252 = arith.addf %136, %251 : vector<8x32xf32>
    %c0_106 = arith.constant 0 : index
    %c0_107 = arith.constant 0 : index
    %253 = vector.load %arg22[%c0_106, %c0_107] : memref<1x32xf32, #tpu.memory_space<vmem>>, vector<1x32xf32>
    %c0_108 = arith.constant 0 : index
    %c0_109 = arith.constant 0 : index
    %254 = vector.load %arg23[%c0_108, %c0_109] : memref<1x32xf32, #tpu.memory_space<vmem>>, vector<1x32xf32>
    %cst_110 = arith.constant dense<0.000000e+00> : vector<8xf32>
    %255 = vector.multi_reduction <add>, %252, %cst_110 [1] : vector<8x32xf32> to vector<8xf32>
    %256 = vector.shape_cast %255 : vector<8xf32> to vector<8x1xf32>
    %cst_111 = arith.constant 3.200000e+01 : f32
    %257 = vector.broadcast %cst_111 : f32 to vector<8x1xf32>
    %258 = arith.divf %256, %257 : vector<8x1xf32>
    %259 = vector.broadcast %258 : vector<8x1xf32> to vector<8x32xf32>
    %260 = arith.subf %252, %259 : vector<8x32xf32>
    %261 = arith.mulf %260, %260 : vector<8x32xf32>
    %cst_112 = arith.constant dense<0.000000e+00> : vector<8xf32>
    %262 = vector.multi_reduction <add>, %261, %cst_112 [1] : vector<8x32xf32> to vector<8xf32>
    %263 = vector.shape_cast %262 : vector<8xf32> to vector<8x1xf32>
    %cst_113 = arith.constant 3.200000e+01 : f32
    %264 = vector.broadcast %cst_113 : f32 to vector<8x1xf32>
    %265 = arith.divf %263, %264 : vector<8x1xf32>
    %266 = vector.broadcast %258 : vector<8x1xf32> to vector<8x32xf32>
    %267 = arith.subf %252, %266 : vector<8x32xf32>
    %cst_114 = arith.constant 9.99999974E-6 : f32
    %268 = vector.broadcast %cst_114 : f32 to vector<8x1xf32>
    %269 = arith.addf %265, %268 : vector<8x1xf32>
    %270 = math.rsqrt %269 : vector<8x1xf32>
    %271 = vector.broadcast %270 : vector<8x1xf32> to vector<8x32xf32>
    %272 = arith.mulf %267, %271 : vector<8x32xf32>
    %273 = vector.broadcast %253 : vector<1x32xf32> to vector<8x32xf32>
    %274 = arith.mulf %272, %273 : vector<8x32xf32>
    %275 = vector.broadcast %254 : vector<1x32xf32> to vector<8x32xf32>
    %276 = arith.addf %274, %275 : vector<8x32xf32>
    %277 = arith.truncf %276 : vector<8x32xf32> to vector<8x32xbf16>
    %c0_115 = arith.constant 0 : index
    %c0_116 = arith.constant 0 : index
    %278 = vector.load %arg24[%c0_115, %c0_116] : memref<32x64xbf16, #tpu.memory_space<vmem>>, vector<32x64xbf16>
    %cst_117 = arith.constant dense<0.000000e+00> : vector<8x64xf32>
    %279 = tpu.matmul %277, %278, %cst_117 {dimension_numbers = #tpu.dot_dimension_numbers<[1], [0], [0], [1], [0, 0, 1, 1], [], []>} : vector<8x32xbf16>, vector<32x64xbf16>, vector<8x64xf32> -> vector<8x64xf32>
    %c0_118 = arith.constant 0 : index
    %c0_119 = arith.constant 0 : index
    %280 = vector.load %arg25[%c0_118, %c0_119] : memref<1x64xf32, #tpu.memory_space<vmem>>, vector<1x64xf32>
    %281 = vector.broadcast %280 : vector<1x64xf32> to vector<8x64xf32>
    %282 = arith.addf %279, %281 : vector<8x64xf32>
    %cst_120 = arith.constant 0.000000e+00 : f32
    %283 = vector.broadcast %cst_120 : f32 to vector<8x64xf32>
    %284 = arith.maximumf %282, %283 : vector<8x64xf32>
    %285 = arith.truncf %284 : vector<8x64xf32> to vector<8x64xbf16>
    %c0_121 = arith.constant 0 : index
    %c0_122 = arith.constant 0 : index
    %286 = vector.load %arg26[%c0_121, %c0_122] : memref<64x32xbf16, #tpu.memory_space<vmem>>, vector<64x32xbf16>
    %cst_123 = arith.constant dense<0.000000e+00> : vector<8x32xf32>
    %287 = tpu.matmul %285, %286, %cst_123 {dimension_numbers = #tpu.dot_dimension_numbers<[1], [0], [0], [1], [0, 0, 1, 1], [], []>} : vector<8x64xbf16>, vector<64x32xbf16>, vector<8x32xf32> -> vector<8x32xf32>
    %c0_124 = arith.constant 0 : index
    %c0_125 = arith.constant 0 : index
    %288 = vector.load %arg27[%c0_124, %c0_125] : memref<1x32xf32, #tpu.memory_space<vmem>>, vector<1x32xf32>
    %289 = vector.broadcast %288 : vector<1x32xf32> to vector<8x32xf32>
    %290 = arith.addf %287, %289 : vector<8x32xf32>
    %291 = arith.addf %276, %290 : vector<8x32xf32>
    %c0_126 = arith.constant 0 : index
    %c0_127 = arith.constant 0 : index
    %292 = vector.load %arg28[%c0_126, %c0_127] : memref<1x32xf32, #tpu.memory_space<vmem>>, vector<1x32xf32>
    %c0_128 = arith.constant 0 : index
    %c0_129 = arith.constant 0 : index
    %293 = vector.load %arg29[%c0_128, %c0_129] : memref<1x32xf32, #tpu.memory_space<vmem>>, vector<1x32xf32>
    %cst_130 = arith.constant dense<0.000000e+00> : vector<8xf32>
    %294 = vector.multi_reduction <add>, %291, %cst_130 [1] : vector<8x32xf32> to vector<8xf32>
    %295 = vector.shape_cast %294 : vector<8xf32> to vector<8x1xf32>
    %cst_131 = arith.constant 3.200000e+01 : f32
    %296 = vector.broadcast %cst_131 : f32 to vector<8x1xf32>
    %297 = arith.divf %295, %296 : vector<8x1xf32>
    %298 = vector.broadcast %297 : vector<8x1xf32> to vector<8x32xf32>
    %299 = arith.subf %291, %298 : vector<8x32xf32>
    %300 = arith.mulf %299, %299 : vector<8x32xf32>
    %cst_132 = arith.constant dense<0.000000e+00> : vector<8xf32>
    %301 = vector.multi_reduction <add>, %300, %cst_132 [1] : vector<8x32xf32> to vector<8xf32>
    %302 = vector.shape_cast %301 : vector<8xf32> to vector<8x1xf32>
    %cst_133 = arith.constant 3.200000e+01 : f32
    %303 = vector.broadcast %cst_133 : f32 to vector<8x1xf32>
    %304 = arith.divf %302, %303 : vector<8x1xf32>
    %305 = vector.broadcast %297 : vector<8x1xf32> to vector<8x32xf32>
    %306 = arith.subf %291, %305 : vector<8x32xf32>
    %cst_134 = arith.constant 9.99999974E-6 : f32
    %307 = vector.broadcast %cst_134 : f32 to vector<8x1xf32>
    %308 = arith.addf %304, %307 : vector<8x1xf32>
    %309 = math.rsqrt %308 : vector<8x1xf32>
    %310 = vector.broadcast %309 : vector<8x1xf32> to vector<8x32xf32>
    %311 = arith.mulf %306, %310 : vector<8x32xf32>
    %312 = vector.broadcast %292 : vector<1x32xf32> to vector<8x32xf32>
    %313 = arith.mulf %311, %312 : vector<8x32xf32>
    %314 = vector.broadcast %293 : vector<1x32xf32> to vector<8x32xf32>
    %315 = arith.addf %313, %314 : vector<8x32xf32>
    %c0_135 = arith.constant 0 : index
    %c0_136 = arith.constant 0 : index
    %c0_137 = arith.constant 0 : index
    %316 = vector.load %arg32[%c0_135, %c0_136, %c0_137] : memref<1x8x32xf32, #tpu.memory_space<vmem>>, vector<1x8x32xf32>
    %317 = vector.shape_cast %316 : vector<1x8x32xf32> to vector<8x32xf32>
    %318 = vector.shape_cast %315 : vector<8x32xf32> to vector<1x8x32xf32>
    tpu.vector_store %arg32[%c0_135, %c0_136, %c0_137], %318 {strides = array<i32>} : memref<1x8x32xf32, #tpu.memory_space<vmem>>, vector<1x8x32xf32>,
    %c0_138 = arith.constant 0 : index
    %c0_139 = arith.constant 0 : index
    %319 = vector.load %arg30[%c0_138, %c0_139] : memref<1x32xf32, #tpu.memory_space<vmem>>, vector<1x32xf32>
    %c0_140 = arith.constant 0 : index
    %c0_141 = arith.constant 0 : index
    %320 = vector.load %arg31[%c0_140, %c0_141] : memref<1x32xf32, #tpu.memory_space<vmem>>, vector<1x32xf32>
    %cst_142 = arith.constant dense<0.000000e+00> : vector<8xf32>
    %321 = vector.multi_reduction <add>, %315, %cst_142 [1] : vector<8x32xf32> to vector<8xf32>
    %322 = vector.shape_cast %321 : vector<8xf32> to vector<8x1xf32>
    %cst_143 = arith.constant 3.200000e+01 : f32
    %323 = vector.broadcast %cst_143 : f32 to vector<8x1xf32>
    %324 = arith.divf %322, %323 : vector<8x1xf32>
    %325 = vector.broadcast %324 : vector<8x1xf32> to vector<8x32xf32>
    %326 = arith.subf %315, %325 : vector<8x32xf32>
    %327 = arith.mulf %326, %326 : vector<8x32xf32>
    %cst_144 = arith.constant dense<0.000000e+00> : vector<8xf32>
    %328 = vector.multi_reduction <add>, %327, %cst_144 [1] : vector<8x32xf32> to vector<8xf32>
    %329 = vector.shape_cast %328 : vector<8xf32> to vector<8x1xf32>
    %cst_145 = arith.constant 3.200000e+01 : f32
    %330 = vector.broadcast %cst_145 : f32 to vector<8x1xf32>
    %331 = arith.divf %329, %330 : vector<8x1xf32>
    %332 = vector.broadcast %324 : vector<8x1xf32> to vector<8x32xf32>
    %333 = arith.subf %315, %332 : vector<8x32xf32>
    %cst_146 = arith.constant 9.99999974E-6 : f32
    %334 = vector.broadcast %cst_146 : f32 to vector<8x1xf32>
    %335 = arith.addf %331, %334 : vector<8x1xf32>
    %336 = math.rsqrt %335 : vector<8x1xf32>
    %337 = vector.broadcast %336 : vector<8x1xf32> to vector<8x32xf32>
    %338 = arith.mulf %333, %337 : vector<8x32xf32>
    %339 = vector.broadcast %319 : vector<1x32xf32> to vector<8x32xf32>
    %340 = arith.mulf %338, %339 : vector<8x32xf32>
    %341 = vector.broadcast %320 : vector<1x32xf32> to vector<8x32xf32>
    %342 = arith.addf %340, %341 : vector<8x32xf32>
    %c0_147 = arith.constant 0 : index
    %c0_148 = arith.constant 0 : index
    %c0_149 = arith.constant 0 : index
    %343 = vector.load %arg33[%c0_147, %c0_148, %c0_149] : memref<1x8x32xf32, #tpu.memory_space<vmem>>, vector<1x8x32xf32>
    %344 = vector.shape_cast %343 : vector<1x8x32xf32> to vector<8x32xf32>
    %345 = vector.shape_cast %342 : vector<8x32xf32> to vector<1x8x32xf32>
    tpu.vector_store %arg33[%c0_147, %c0_148, %c0_149], %345 {strides = array<i32>} : memref<1x8x32xf32, #tpu.memory_space<vmem>>, vector<1x8x32xf32>,
    return
  }
  func.func @transform_0(%arg0: i32) -> (i32, i32, i32) {
    %c0_i32 = arith.constant 0 : i32
    %c0_i32_0 = arith.constant 0 : i32
    %c0_i32_1 = arith.constant 0 : i32
    return %arg0, %c0_i32, %c0_i32_0 : i32, i32, i32
  }
  func.func @transform_1(%arg0: i32) -> (i32, i32, i32) {
    %c0_i32 = arith.constant 0 : i32
    %c0_i32_0 = arith.constant 0 : i32
    %c0_i32_1 = arith.constant 0 : i32
    %c0_i32_2 = arith.constant 0 : i32
    return %c0_i32, %c0_i32_0, %c0_i32_1 : i32, i32, i32
  }
  func.func @transform_2(%arg0: i32) -> (i32, i32, i32) {
    %c0_i32 = arith.constant 0 : i32
    %c0_i32_0 = arith.constant 0 : i32
    %c0_i32_1 = arith.constant 0 : i32
    return %arg0, %c0_i32, %c0_i32_0 : i32, i32, i32
  }
  func.func @transform_3(%arg0: i32) -> (i32, i32, i32) {
    %c0_i32 = arith.constant 0 : i32
    %c0_i32_0 = arith.constant 0 : i32
    %c0_i32_1 = arith.constant 0 : i32
    return %arg0, %c0_i32, %c0_i32_0 : i32, i32, i32
  }
  func.func @transform_4(%arg0: i32) -> (i32, i32, i32) {
    %c0_i32 = arith.constant 0 : i32
    %c0_i32_0 = arith.constant 0 : i32
    %c0_i32_1 = arith.constant 0 : i32
    return %arg0, %c0_i32, %c0_i32_0 : i32, i32, i32
  }
  func.func @transform_5(%arg0: i32) -> (i32, i32) {
    %c0_i32 = arith.constant 0 : i32
    %c0_i32_0 = arith.constant 0 : i32
    %c0_i32_1 = arith.constant 0 : i32
    return %c0_i32, %c0_i32_0 : i32, i32
  }
  func.func @transform_6(%arg0: i32) -> (i32, i32) {
    %c0_i32 = arith.constant 0 : i32
    %c0_i32_0 = arith.constant 0 : i32
    %c0_i32_1 = arith.constant 0 : i32
    return %c0_i32, %c0_i32_0 : i32, i32
  }
  func.func @transform_7(%arg0: i32) -> (i32, i32) {
    %c0_i32 = arith.constant 0 : i32
    %c0_i32_0 = arith.constant 0 : i32
    %c0_i32_1 = arith.constant 0 : i32
    return %c0_i32, %c0_i32_0 : i32, i32
  }
  func.func @transform_8(%arg0: i32) -> (i32, i32) {
    %c0_i32 = arith.constant 0 : i32
    %c0_i32_0 = arith.constant 0 : i32
    %c0_i32_1 = arith.constant 0 : i32
    return %c0_i32, %c0_i32_0 : i32, i32
  }
  func.func @transform_9(%arg0: i32) -> (i32, i32) {
    %c0_i32 = arith.constant 0 : i32
    %c0_i32_0 = arith.constant 0 : i32
    %c0_i32_1 = arith.constant 0 : i32
    return %c0_i32, %c0_i32_0 : i32, i32
  }
  func.func @transform_10(%arg0: i32) -> (i32, i32) {
    %c0_i32 = arith.constant 0 : i32
    %c0_i32_0 = arith.constant 0 : i32
    %c0_i32_1 = arith.constant 0 : i32
    return %c0_i32, %c0_i32_0 : i32, i32
  }
  func.func @transform_11(%arg0: i32) -> (i32, i32) {
    %c0_i32 = arith.constant 0 : i32
    %c0_i32_0 = arith.constant 0 : i32
    %c0_i32_1 = arith.constant 0 : i32
    return %c0_i32, %c0_i32_0 : i32, i32
  }
  func.func @transform_12(%arg0: i32) -> (i32, i32) {
    %c0_i32 = arith.constant 0 : i32
    %c0_i32_0 = arith.constant 0 : i32
    %c0_i32_1 = arith.constant 0 : i32
    return %c0_i32, %c0_i32_0 : i32, i32
  }
  func.func @transform_13(%arg0: i32) -> (i32, i32) {
    %c0_i32 = arith.constant 0 : i32
    %c0_i32_0 = arith.constant 0 : i32
    %c0_i32_1 = arith.constant 0 : i32
    return %c0_i32, %c0_i32_0 : i32, i32
  }
  func.func @transform_14(%arg0: i32) -> (i32, i32) {
    %c0_i32 = arith.constant 0 : i32
    %c0_i32_0 = arith.constant 0 : i32
    %c0_i32_1 = arith.constant 0 : i32
    return %c0_i32, %c0_i32_0 : i32, i32
  }
  func.func @transform_15(%arg0: i32) -> (i32, i32) {
    %c0_i32 = arith.constant 0 : i32
    %c0_i32_0 = arith.constant 0 : i32
    %c0_i32_1 = arith.constant 0 : i32
    return %c0_i32, %c0_i32_0 : i32, i32
  }
  func.func @transform_16(%arg0: i32) -> (i32, i32) {
    %c0_i32 = arith.constant 0 : i32
    %c0_i32_0 = arith.constant 0 : i32
    %c0_i32_1 = arith.constant 0 : i32
    return %c0_i32, %c0_i32_0 : i32, i32
  }
  func.func @transform_17(%arg0: i32) -> (i32, i32) {
    %c0_i32 = arith.constant 0 : i32
    %c0_i32_0 = arith.constant 0 : i32
    %c0_i32_1 = arith.constant 0 : i32
    return %c0_i32, %c0_i32_0 : i32, i32
  }
  func.func @transform_18(%arg0: i32) -> (i32, i32) {
    %c0_i32 = arith.constant 0 : i32
    %c0_i32_0 = arith.constant 0 : i32
    %c0_i32_1 = arith.constant 0 : i32
    return %c0_i32, %c0_i32_0 : i32, i32
  }
  func.func @transform_19(%arg0: i32) -> (i32, i32) {
    %c0_i32 = arith.constant 0 : i32
    %c0_i32_0 = arith.constant 0 : i32
    %c0_i32_1 = arith.constant 0 : i32
    return %c0_i32, %c0_i32_0 : i32, i32
  }
  func.func @transform_20(%arg0: i32) -> (i32, i32) {
    %c0_i32 = arith.constant 0 : i32
    %c0_i32_0 = arith.constant 0 : i32
    %c0_i32_1 = arith.constant 0 : i32
    return %c0_i32, %c0_i32_0 : i32, i32
  }
  func.func @transform_21(%arg0: i32) -> (i32, i32) {
    %c0_i32 = arith.constant 0 : i32
    %c0_i32_0 = arith.constant 0 : i32
    %c0_i32_1 = arith.constant 0 : i32
    return %c0_i32, %c0_i32_0 : i32, i32
  }
  func.func @transform_22(%arg0: i32) -> (i32, i32) {
    %c0_i32 = arith.constant 0 : i32
    %c0_i32_0 = arith.constant 0 : i32
    %c0_i32_1 = arith.constant 0 : i32
    return %c0_i32, %c0_i32_0 : i32, i32
  }
  func.func @transform_23(%arg0: i32) -> (i32, i32) {
    %c0_i32 = arith.constant 0 : i32
    %c0_i32_0 = arith.constant 0 : i32
    %c0_i32_1 = arith.constant 0 : i32
    return %c0_i32, %c0_i32_0 : i32, i32
  }
  func.func @transform_24(%arg0: i32) -> (i32, i32) {
    %c0_i32 = arith.constant 0 : i32
    %c0_i32_0 = arith.constant 0 : i32
    %c0_i32_1 = arith.constant 0 : i32
    return %c0_i32, %c0_i32_0 : i32, i32
  }
  func.func @transform_25(%arg0: i32) -> (i32, i32) {
    %c0_i32 = arith.constant 0 : i32
    %c0_i32_0 = arith.constant 0 : i32
    %c0_i32_1 = arith.constant 0 : i32
    return %c0_i32, %c0_i32_0 : i32, i32
  }
  func.func @transform_26(%arg0: i32) -> (i32, i32) {
    %c0_i32 = arith.constant 0 : i32
    %c0_i32_0 = arith.constant 0 : i32
    %c0_i32_1 = arith.constant 0 : i32
    return %c0_i32, %c0_i32_0 : i32, i32
  }
  func.func @transform_27(%arg0: i32) -> (i32, i32) {
    %c0_i32 = arith.constant 0 : i32
    %c0_i32_0 = arith.constant 0 : i32
    %c0_i32_1 = arith.constant 0 : i32
    return %c0_i32, %c0_i32_0 : i32, i32
  }
  func.func @transform_28(%arg0: i32) -> (i32, i32) {
    %c0_i32 = arith.constant 0 : i32
    %c0_i32_0 = arith.constant 0 : i32
    %c0_i32_1 = arith.constant 0 : i32
    return %c0_i32, %c0_i32_0 : i32, i32
  }
  func.func @transform_29(%arg0: i32) -> (i32, i32) {
    %c0_i32 = arith.constant 0 : i32
    %c0_i32_0 = arith.constant 0 : i32
    %c0_i32_1 = arith.constant 0 : i32
    return %c0_i32, %c0_i32_0 : i32, i32
  }
  func.func @transform_30(%arg0: i32) -> (i32, i32) {
    %c0_i32 = arith.constant 0 : i32
    %c0_i32_0 = arith.constant 0 : i32
    %c0_i32_1 = arith.constant 0 : i32
    return %c0_i32, %c0_i32_0 : i32, i32
  }
  func.func @transform_31(%arg0: i32) -> (i32, i32, i32) {
    %c0_i32 = arith.constant 0 : i32
    %c0_i32_0 = arith.constant 0 : i32
    %c0_i32_1 = arith.constant 0 : i32
    return %arg0, %c0_i32, %c0_i32_0 : i32, i32, i32
  }
  func.func @transform_32(%arg0: i32) -> (i32, i32, i32) {
    %c0_i32 = arith.constant 0 : i32
    %c0_i32_0 = arith.constant 0 : i32
    %c0_i32_1 = arith.constant 0 : i32
    return %arg0, %c0_i32, %c0_i32_0 : i32, i32, i32
  }
}

module attributes {stable_mosaic.version = 11 : i64} {
  func.func @_heads_kernel(%arg0: i32, %arg1: memref<1x16x32xf32, #tpu.memory_space<vmem>>, %arg2: memref<32x101xbf16, #tpu.memory_space<vmem>>, %arg3: memref<1x101xf32, #tpu.memory_space<vmem>>, %arg4: memref<32x32xbf16, #tpu.memory_space<vmem>>, %arg5: memref<1x32xf32, #tpu.memory_space<vmem>>, %arg6: memref<32x4xbf16, #tpu.memory_space<vmem>>, %arg7: memref<1x4xf32, #tpu.memory_space<vmem>>, %arg8: memref<1x16x9xf32, #tpu.memory_space<vmem>>, %arg9: memref<1x2x8x8xf32, #tpu.memory_space<vmem>>) attributes {dimension_semantics = [#tpu.dimension_semantics<parallel>], iteration_bounds = array<i64: 2>, scalar_prefetch = 0 : i64, scratch_operands = 0 : i64, tpu.core_type = #tpu.core_type<tc>, window_params = [{transform_indices = @transform_0, window_bounds = array<i64: 1, 16, 32>}, {pipeline_mode = #tpu.pipeline_mode<synchronous>, transform_indices = @transform_1, window_bounds = array<i64: 32, 101>}, {pipeline_mode = #tpu.pipeline_mode<synchronous>, transform_indices = @transform_2, window_bounds = array<i64: 1, 101>}, {pipeline_mode = #tpu.pipeline_mode<synchronous>, transform_indices = @transform_3, window_bounds = array<i64: 32, 32>}, {pipeline_mode = #tpu.pipeline_mode<synchronous>, transform_indices = @transform_4, window_bounds = array<i64: 1, 32>}, {pipeline_mode = #tpu.pipeline_mode<synchronous>, transform_indices = @transform_5, window_bounds = array<i64: 32, 4>}, {pipeline_mode = #tpu.pipeline_mode<synchronous>, transform_indices = @transform_6, window_bounds = array<i64: 1, 4>}, {transform_indices = @transform_7, window_bounds = array<i64: 1, 16, 9>}, {transform_indices = @transform_8, window_bounds = array<i64: 1, 2, 8, 8>}]} {
    %c0 = arith.constant 0 : index
    %c0_0 = arith.constant 0 : index
    %c0_1 = arith.constant 0 : index
    %0 = vector.load %arg1[%c0, %c0_0, %c0_1] : memref<1x16x32xf32, #tpu.memory_space<vmem>>, vector<1x16x32xf32>
    %1 = vector.shape_cast %0 : vector<1x16x32xf32> to vector<16x32xf32>
    %2 = arith.truncf %1 : vector<16x32xf32> to vector<16x32xbf16>
    %c0_2 = arith.constant 0 : index
    %c0_3 = arith.constant 0 : index
    %3 = vector.load %arg2[%c0_2, %c0_3] : memref<32x101xbf16, #tpu.memory_space<vmem>>, vector<32x101xbf16>
    %cst = arith.constant dense<0.000000e+00> : vector<16x101xf32>
    %4 = tpu.matmul %2, %3, %cst {dimension_numbers = #tpu.dot_dimension_numbers<[1], [0], [0], [1], [0, 0, 1, 1], [], []>} : vector<16x32xbf16>, vector<32x101xbf16>, vector<16x101xf32> -> vector<16x101xf32>
    %c0_4 = arith.constant 0 : index
    %c0_5 = arith.constant 0 : index
    %5 = vector.load %arg3[%c0_4, %c0_5] : memref<1x101xf32, #tpu.memory_space<vmem>>, vector<1x101xf32>
    %6 = vector.broadcast %5 : vector<1x101xf32> to vector<16x101xf32>
    %7 = arith.addf %4, %6 : vector<16x101xf32>
    %8 = vector.extract_strided_slice %7 {offsets = [0, 0], sizes = [16, 32], strides = [1, 1]} : vector<16x101xf32> to vector<16x32xf32>
    %cst_6 = arith.constant 0.000000e+00 : f32
    %9 = vector.broadcast %cst_6 : f32 to vector<16x32xf32>
    %10 = arith.maximumf %8, %9 : vector<16x32xf32>
    %11 = vector.extract_strided_slice %7 {offsets = [0, 32], sizes = [16, 32], strides = [1, 1]} : vector<16x101xf32> to vector<16x32xf32>
    %12 = vector.extract_strided_slice %7 {offsets = [0, 64], sizes = [16, 32], strides = [1, 1]} : vector<16x101xf32> to vector<16x32xf32>
    %13 = vector.extract_strided_slice %7 {offsets = [0, 96], sizes = [16, 5], strides = [1, 1]} : vector<16x101xf32> to vector<16x5xf32>
    %14 = arith.truncf %10 : vector<16x32xf32> to vector<16x32xbf16>
    %c0_7 = arith.constant 0 : index
    %c0_8 = arith.constant 0 : index
    %15 = vector.load %arg4[%c0_7, %c0_8] : memref<32x32xbf16, #tpu.memory_space<vmem>>, vector<32x32xbf16>
    %cst_9 = arith.constant dense<0.000000e+00> : vector<16x32xf32>
    %16 = tpu.matmul %14, %15, %cst_9 {dimension_numbers = #tpu.dot_dimension_numbers<[1], [0], [0], [1], [0, 0, 1, 1], [], []>} : vector<16x32xbf16>, vector<32x32xbf16>, vector<16x32xf32> -> vector<16x32xf32>
    %c0_10 = arith.constant 0 : index
    %c0_11 = arith.constant 0 : index
    %17 = vector.load %arg5[%c0_10, %c0_11] : memref<1x32xf32, #tpu.memory_space<vmem>>, vector<1x32xf32>
    %18 = vector.broadcast %17 : vector<1x32xf32> to vector<16x32xf32>
    %19 = arith.addf %16, %18 : vector<16x32xf32>
    %cst_12 = arith.constant 0.000000e+00 : f32
    %20 = vector.broadcast %cst_12 : f32 to vector<16x32xf32>
    %21 = arith.maximumf %19, %20 : vector<16x32xf32>
    %22 = arith.truncf %21 : vector<16x32xf32> to vector<16x32xbf16>
    %c0_13 = arith.constant 0 : index
    %c0_14 = arith.constant 0 : index
    %23 = vector.load %arg6[%c0_13, %c0_14] : memref<32x4xbf16, #tpu.memory_space<vmem>>, vector<32x4xbf16>
    %cst_15 = arith.constant dense<0.000000e+00> : vector<16x4xf32>
    %24 = tpu.matmul %22, %23, %cst_15 {dimension_numbers = #tpu.dot_dimension_numbers<[1], [0], [0], [1], [0, 0, 1, 1], [], []>} : vector<16x32xbf16>, vector<32x4xbf16>, vector<16x4xf32> -> vector<16x4xf32>
    %c0_16 = arith.constant 0 : index
    %c0_17 = arith.constant 0 : index
    %25 = vector.load %arg7[%c0_16, %c0_17] : memref<1x4xf32, #tpu.memory_space<vmem>>, vector<1x4xf32>
    %26 = vector.broadcast %25 : vector<1x4xf32> to vector<16x4xf32>
    %27 = arith.addf %24, %26 : vector<16x4xf32>
    %28 = arith.negf %27 : vector<16x4xf32>
    %29 = math.exp %28 : vector<16x4xf32>
    %cst_18 = arith.constant 1.000000e+00 : f32
    %30 = vector.broadcast %cst_18 : f32 to vector<16x4xf32>
    %31 = arith.addf %30, %29 : vector<16x4xf32>
    %32 = arith.divf %30, %31 : vector<16x4xf32>
    %c0_19 = arith.constant 0 : index
    %c0_20 = arith.constant 0 : index
    %c0_21 = arith.constant 0 : index
    %33 = vector.load %arg8[%c0_19, %c0_20, %c0_21] : memref<1x16x9xf32, #tpu.memory_space<vmem>>, vector<1x16x5xf32>
    %34 = vector.shape_cast %33 : vector<1x16x5xf32> to vector<16x5xf32>
    %35 = vector.shape_cast %13 : vector<16x5xf32> to vector<1x16x5xf32>
    tpu.vector_store %arg8[%c0_19, %c0_20, %c0_21], %35 {strides = array<i32>} : memref<1x16x9xf32, #tpu.memory_space<vmem>>, vector<1x16x5xf32>,
    %c0_22 = arith.constant 0 : index
    %c0_23 = arith.constant 0 : index
    %c5 = arith.constant 5 : index
    %36 = vector.load %arg8[%c0_22, %c0_23, %c5] : memref<1x16x9xf32, #tpu.memory_space<vmem>>, vector<1x16x4xf32>
    %37 = vector.shape_cast %36 : vector<1x16x4xf32> to vector<16x4xf32>
    %38 = vector.shape_cast %32 : vector<16x4xf32> to vector<1x16x4xf32>
    tpu.vector_store %arg8[%c0_22, %c0_23, %c5], %38 {strides = array<i32>} : memref<1x16x9xf32, #tpu.memory_space<vmem>>, vector<1x16x4xf32>,
    %39 = vector.shape_cast %11 : vector<16x32xf32> to vector<2x8x32xf32>
    %40 = arith.truncf %39 : vector<2x8x32xf32> to vector<2x8x32xbf16>
    %41 = vector.shape_cast %12 : vector<16x32xf32> to vector<2x8x32xf32>
    %42 = arith.truncf %41 : vector<2x8x32xf32> to vector<2x8x32xbf16>
    "tpu.trace_start"() <{level = 10 : i32, message = "bqd,bkd->bqk"}> : () -> ()
    %cst_24 = arith.constant dense<0.000000e+00> : vector<2x8x8xf32>
    %43 = tpu.matmul %40, %42, %cst_24 {dimension_numbers = #tpu.dot_dimension_numbers<[2], [2], [1], [1], [0, 0, 0, 1, 1, 1], [0], [0]>} : vector<2x8x32xbf16>, vector<2x8x32xbf16>, vector<2x8x8xf32> -> vector<2x8x8xf32>
    "tpu.trace_stop"() : () -> ()
    %c0_25 = arith.constant 0 : index
    %c0_26 = arith.constant 0 : index
    %c0_27 = arith.constant 0 : index
    %c0_28 = arith.constant 0 : index
    %44 = vector.load %arg9[%c0_25, %c0_26, %c0_27, %c0_28] : memref<1x2x8x8xf32, #tpu.memory_space<vmem>>, vector<1x2x8x8xf32>
    %45 = vector.shape_cast %44 : vector<1x2x8x8xf32> to vector<2x8x8xf32>
    %46 = vector.shape_cast %43 : vector<2x8x8xf32> to vector<1x2x8x8xf32>
    tpu.vector_store %arg9[%c0_25, %c0_26, %c0_27, %c0_28], %46 {strides = array<i32>} : memref<1x2x8x8xf32, #tpu.memory_space<vmem>>, vector<1x2x8x8xf32>,
    return
  }
  func.func @transform_0(%arg0: i32) -> (i32, i32, i32) {
    %c0_i32 = arith.constant 0 : i32
    %c0_i32_0 = arith.constant 0 : i32
    %c0_i32_1 = arith.constant 0 : i32
    return %arg0, %c0_i32, %c0_i32_0 : i32, i32, i32
  }
  func.func @transform_1(%arg0: i32) -> (i32, i32) {
    %c0_i32 = arith.constant 0 : i32
    %c0_i32_0 = arith.constant 0 : i32
    %c0_i32_1 = arith.constant 0 : i32
    return %c0_i32, %c0_i32_0 : i32, i32
  }
  func.func @transform_2(%arg0: i32) -> (i32, i32) {
    %c0_i32 = arith.constant 0 : i32
    %c0_i32_0 = arith.constant 0 : i32
    %c0_i32_1 = arith.constant 0 : i32
    return %c0_i32, %c0_i32_0 : i32, i32
  }
  func.func @transform_3(%arg0: i32) -> (i32, i32) {
    %c0_i32 = arith.constant 0 : i32
    %c0_i32_0 = arith.constant 0 : i32
    %c0_i32_1 = arith.constant 0 : i32
    return %c0_i32, %c0_i32_0 : i32, i32
  }
  func.func @transform_4(%arg0: i32) -> (i32, i32) {
    %c0_i32 = arith.constant 0 : i32
    %c0_i32_0 = arith.constant 0 : i32
    %c0_i32_1 = arith.constant 0 : i32
    return %c0_i32, %c0_i32_0 : i32, i32
  }
  func.func @transform_5(%arg0: i32) -> (i32, i32) {
    %c0_i32 = arith.constant 0 : i32
    %c0_i32_0 = arith.constant 0 : i32
    %c0_i32_1 = arith.constant 0 : i32
    return %c0_i32, %c0_i32_0 : i32, i32
  }
  func.func @transform_6(%arg0: i32) -> (i32, i32) {
    %c0_i32 = arith.constant 0 : i32
    %c0_i32_0 = arith.constant 0 : i32
    %c0_i32_1 = arith.constant 0 : i32
    return %c0_i32, %c0_i32_0 : i32, i32
  }
  func.func @transform_7(%arg0: i32) -> (i32, i32, i32) {
    %c0_i32 = arith.constant 0 : i32
    %c0_i32_0 = arith.constant 0 : i32
    %c0_i32_1 = arith.constant 0 : i32
    return %arg0, %c0_i32, %c0_i32_0 : i32, i32, i32
  }
  func.func @transform_8(%arg0: i32) -> (i32, i32, i32, i32) {
    %c0_i32 = arith.constant 0 : i32
    %c0_i32_0 = arith.constant 0 : i32
    %c0_i32_1 = arith.constant 0 : i32
    %c0_i32_2 = arith.constant 0 : i32
    return %arg0, %c0_i32, %c0_i32_0, %c0_i32_1 : i32, i32, i32, i32
  }
}

</mosaic_0001>

<llo_original>
// kernel: graphdetr_forward.6
$region0: #{graphdetr_forward.6}
  #allocation0 [shape = 'u32[]', space=smem, size = 0x4, offset = 0x4, fixed_abs, tag = 'smem constant byte address 0x4 - core index']
  #allocation1 [shape = 'u32[72,128]{1,0:T(1,128)}', space=vmem, size = 0x9000, scoped, tag = 'internal scratch']
  %s0 = inlined_call_operand.vmem [shape: f32[128,48], index: 0, kind: input, shape index: {}]
  %s1 = inlined_call_operand.vmem [shape: bf16[48,16], index: 1, kind: input, shape index: {}]
  %s2 = inlined_call_operand.vmem [shape: f32[1,16], index: 2, kind: input, shape index: {}]
  %s3 = inlined_call_operand.vmem [shape: bf16[16,32], index: 3, kind: input, shape index: {}]
  %s4 = inlined_call_operand.vmem [shape: f32[1,32], index: 4, kind: input, shape index: {}]
  %s5 = inlined_call_operand.vmem [shape: f32[128,32], index: 5, kind: output, shape index: {}]
  %s6 = sld [smem:[#allocation0]]
  $region30: #{graphdetr_forward.6} parent=0
    _
  %s8 = ssub.s32 1, %s6
  %s9 = scalar_select 0, %s8, %s6
  // Predicated region
  $region2: #{graphdetr_forward.6} parent=0 // pred_check
    _
  $region3: #{graphdetr_forward.6} parent=0 // pred_check_branch
    %11 = sbr.rel (0) target = $region5
  $region4: #{graphdetr_forward.6} parent=0 // pred_region
    _
  $region5: #{graphdetr_forward.6} parent=0 // pred_fallthru
    _
  // Predicated region
  $region6: #{graphdetr_forward.6} parent=0 // pred_check
    _
  $region7: #{graphdetr_forward.6} parent=0 // pred_check_branch
    %13 = sbr.rel (0) target = $region9
  $region8: #{graphdetr_forward.6} parent=0 // pred_region
    _
  $region9: #{graphdetr_forward.6} parent=0 // pred_fallthru
    _
  // Predicated region
  $region10: #{graphdetr_forward.6} parent=0 // pred_check
    _
  $region11: #{graphdetr_forward.6} parent=0 // pred_check_branch
    %15 = sbr.rel (0) target = $region13
  $region12: #{graphdetr_forward.6} parent=0 // pred_region
    _
  $region13: #{graphdetr_forward.6} parent=0 // pred_fallthru
    _
  // Predicated region
  $region14: #{graphdetr_forward.6} parent=0 // pred_check
    _
  $region15: #{graphdetr_forward.6} parent=0 // pred_check_branch
    %17 = sbr.rel (0) target = $region17
  $region16: #{graphdetr_forward.6} parent=0 // pred_region
    _
  $region17: #{graphdetr_forward.6} parent=0 // pred_fallthru
    _
  // Predicated region
  $region18: #{graphdetr_forward.6} parent=0 // pred_check
    _
  $region19: #{graphdetr_forward.6} parent=0 // pred_check_branch
    %19 = sbr.rel (0) target = $region21
  $region20: #{graphdetr_forward.6} parent=0 // pred_region
    _
  $region21: #{graphdetr_forward.6} parent=0 // pred_fallthru
    _
  %v21 = vld [vmem:[%s0] sm:$0xff]
  %v22 = vld [vmem:[%s0 + $0x8] sm:$0xff]
  %v23 = vld [vmem:[%s0 + $0x10] sm:$0xff]
  %v24 = vld [vmem:[%s0 + $0x18] sm:$0xff]
  %v25 = vld [vmem:[%s0 + $0x20] sm:$0xff]
  %v26 = vld [vmem:[%s0 + $0x28] sm:$0xff]
  %v27 = vld [vmem:[%s0 + $0x30] sm:$0xff]
  %v28 = vld [vmem:[%s0 + $0x38] sm:$0xff]
  %v29 = vld [vmem:[%s0 + $0x40] sm:$0xff]
  %v30 = vld [vmem:[%s0 + $0x48] sm:$0xff]
  %v31 = vld [vmem:[%s0 + $0x50] sm:$0xff]
  %v32 = vld [vmem:[%s0 + $0x58] sm:$0xff]
  %v33 = vld [vmem:[%s0 + $0x60] sm:$0xff]
  %v34 = vld [vmem:[%s0 + $0x68] sm:$0xff]
  %v35 = vld [vmem:[%s0 + $0x70] sm:$0xff]
  %v36 = vld [vmem:[%s0 + $0x78] sm:$0xff]
  %v37 = vpack.c.bf16 %v22, %v21
  %v38 = vpack.c.bf16 %v24, %v23
  %v39 = vpack.c.bf16 %v26, %v25
  %v40 = vpack.c.bf16 %v28, %v27
  %v41 = vpack.c.bf16 %v30, %v29
  %v42 = vpack.c.bf16 %v32, %v31
  %v43 = vpack.c.bf16 %v34, %v33
  %v44 = vpack.c.bf16 %v36, %v35
  %v45 = vld [vmem:[%s1] sm:$0xf]
  %v46 = vld [vmem:[%s1 + $0x4] sm:$0xf]
  %v47 = vld [vmem:[%s1 + $0x8] sm:$0xf]
  %v48 = vld [vmem:[%s1 + $0xc] sm:$0xf]
  %v49 = vld [vmem:[%s1 + $0x10] sm:$0xf]
  %v50 = vld [vmem:[%s1 + $0x14] sm:$0xf]
  %v51 = vld [vmem:[%s2] sm:$0x1]
  %v53 = vperm.slane %v51, 0
  %v61 = vunpack.c.l.b16 %v45
  %v62 = vunpack.c.l.b16 %v46
  %v63 = vunpack.c.l.b16 %v47
  %v64 = vunpack.c.l.b16 %v48
  %v65 = vunpack.c.l.b16 %v49
  %v66 = vunpack.c.l.b16 %v50
  %v67 = vpack.c.b16 %v62, %v61
  %v68 = vpack.c.b16 %v64, %v63
  %v69 = vpack.c.b16 %v66, %v65
  %vm73 = vcmask 392192
  %v75 = vsel %vm73, %v37, 0
  %v78 = vsel %vm73, %v38, 0
  %v81 = vsel %vm73, %v39, 0
  %v84 = vsel %vm73, %v40, 0
  %v87 = vsel %vm73, %v41, 0
  %v90 = vsel %vm73, %v42, 0
  %v93 = vsel %vm73, %v43, 0
  %v96 = vsel %vm73, %v44, 0
  %98 = vmatpush.bf16.msra.mxu0 0
  %99 = vmatpush.bf16.msra.mxu0 0
  %100 = vmatpush.bf16.msra.mxu0 0
  %101 = vmatpush.bf16.msra.mxu0 0
  %102 = vmatpush.bf16.msra.mxu0 0
  %103 = vmatpush.bf16.msra.mxu0 %v69
  %104 = vmatpush.bf16.msra.mxu0 %v68
  %105 = vmatpush.bf16.msra.mxu0 %v67
  %106 = vmatmul.bf16.gmra.mxu0 %v75
  %v107 = vpop.f32.mrf.mxu0
  %v108 = vadd.f32 %v53, %v107
  %v109 = vpop.f32.mrf.mxu0
  %v110 = vadd.f32 %v53, %v109
  %111 = vmatmul.bf16.gmra.mxu0 %v78
  %v112 = vpop.f32.mrf.mxu0
  %v113 = vadd.f32 %v53, %v112
  %v114 = vpop.f32.mrf.mxu0
  %v115 = vadd.f32 %v53, %v114
  %116 = vmatmul.bf16.gmra.mxu0 %v81
  %v117 = vpop.f32.mrf.mxu0
  %v118 = vadd.f32 %v53, %v117
  %v119 = vpop.f32.mrf.mxu0
  %v120 = vadd.f32 %v53, %v119
  %121 = vmatmul.bf16.gmra.mxu0 %v84
  %v122 = vpop.f32.mrf.mxu0
  %v123 = vadd.f32 %v53, %v122
  %v124 = vpop.f32.mrf.mxu0
  %v125 = vadd.f32 %v53, %v124
  %126 = vmatmul.bf16.gmra.mxu0 %v87
  %v127 = vpop.f32.mrf.mxu0
  %v128 = vadd.f32 %v53, %v127
  %v129 = vpop.f32.mrf.mxu0
  %v130 = vadd.f32 %v53, %v129
  %131 = vmatmul.bf16.gmra.mxu0 %v90
  %v132 = vpop.f32.mrf.mxu0
  %v133 = vadd.f32 %v53, %v132
  %v134 = vpop.f32.mrf.mxu0
  %v135 = vadd.f32 %v53, %v134
  %136 = vmatmul.bf16.gmra.mxu0 %v93
  %v137 = vpop.f32.mrf.mxu0
  %v138 = vadd.f32 %v53, %v137
  %v139 = vpop.f32.mrf.mxu0
  %v140 = vadd.f32 %v53, %v139
  %141 = vmatmul.bf16.gmra.mxu0 %v96
  %v142 = vpop.f32.mrf.mxu0
  %v143 = vadd.f32 %v53, %v142
  %v144 = vpop.f32.mrf.mxu0
  %v145 = vadd.f32 %v53, %v144
  %146 = vdwg.mxu0
  %v147 = vmax.f32 %v108, 0.0
  %v148 = vmax.f32 %v110, 0.0
  %v149 = vmax.f32 %v113, 0.0
  %v150 = vmax.f32 %v115, 0.0
  %v151 = vmax.f32 %v118, 0.0
  %v152 = vmax.f32 %v120, 0.0
  %v153 = vmax.f32 %v123, 0.0
  %v154 = vmax.f32 %v125, 0.0
  %v155 = vmax.f32 %v128, 0.0
  %v156 = vmax.f32 %v130, 0.0
  %v157 = vmax.f32 %v133, 0.0
  %v158 = vmax.f32 %v135, 0.0
  %v159 = vmax.f32 %v138, 0.0
  %v160 = vmax.f32 %v140, 0.0
  %v161 = vmax.f32 %v143, 0.0
  %v162 = vmax.f32 %v145, 0.0
  %v163 = vpack.c.bf16 %v148, %v147
  %v164 = vpack.c.bf16 %v150, %v149
  %v165 = vpack.c.bf16 %v152, %v151
  %v166 = vpack.c.bf16 %v154, %v153
  %v167 = vpack.c.bf16 %v156, %v155
  %v168 = vpack.c.bf16 %v158, %v157
  %v169 = vpack.c.bf16 %v160, %v159
  %v170 = vpack.c.bf16 %v162, %v161
  %v171 = vld [vmem:[%s3] sm:$0xf]
  %v172 = vld [vmem:[%s3 + $0x4] sm:$0xf]
  %v173 = vld [vmem:[%s4] sm:$0x1]
  %v175 = vperm.slane %v173, 0
  %v179 = vunpack.c.l.b16 %v171
  %v180 = vunpack.c.l.b16 %v172
  %v181 = vpack.c.b16 %v180, %v179
  %vm183 = vcmask 130048
  %v185 = vsel %vm183, %v163, 0
  %v188 = vsel %vm183, %v164, 0
  %v191 = vsel %vm183, %v165, 0
  %v194 = vsel %vm183, %v166, 0
  %v197 = vsel %vm183, %v167, 0
  %v200 = vsel %vm183, %v168, 0
  %v203 = vsel %vm183, %v169, 0
  %v206 = vsel %vm183, %v170, 0
  %208 = vmatpush.bf16.msra.mxu0 0
  %209 = vmatpush.bf16.msra.mxu0 0
  %210 = vmatpush.bf16.msra.mxu0 0
  %211 = vmatpush.bf16.msra.mxu0 0
  %212 = vmatpush.bf16.msra.mxu0 0
  %213 = vmatpush.bf16.msra.mxu0 0
  %214 = vmatpush.bf16.msra.mxu0 0
  %215 = vmatpush.bf16.msra.mxu0 %v181
  %216 = vmatmul.bf16.gmra.mxu0 %v185
  %v217 = vpop.f32.mrf.mxu0
  %v218 = vadd.f32 %v175, %v217
  %v219 = vpop.f32.mrf.mxu0
  %v220 = vadd.f32 %v175, %v219
  %221 = vmatmul.bf16.gmra.mxu0 %v188
  %v222 = vpop.f32.mrf.mxu0
  %v223 = vadd.f32 %v175, %v222
  %v224 = vpop.f32.mrf.mxu0
  %v225 = vadd.f32 %v175, %v224
  %226 = vmatmul.bf16.gmra.mxu0 %v191
  %v227 = vpop.f32.mrf.mxu0
  %v228 = vadd.f32 %v175, %v227
  %v229 = vpop.f32.mrf.mxu0
  %v230 = vadd.f32 %v175, %v229
  %231 = vmatmul.bf16.gmra.mxu0 %v194
  %v232 = vpop.f32.mrf.mxu0
  %v233 = vadd.f32 %v175, %v232
  %v234 = vpop.f32.mrf.mxu0
  %v235 = vadd.f32 %v175, %v234
  %236 = vmatmul.bf16.gmra.mxu0 %v197
  %v237 = vpop.f32.mrf.mxu0
  %v238 = vadd.f32 %v175, %v237
  %v239 = vpop.f32.mrf.mxu0
  %v240 = vadd.f32 %v175, %v239
  %241 = vmatmul.bf16.gmra.mxu0 %v200
  %v242 = vpop.f32.mrf.mxu0
  %v243 = vadd.f32 %v175, %v242
  %v244 = vpop.f32.mrf.mxu0
  %v245 = vadd.f32 %v175, %v244
  %246 = vmatmul.bf16.gmra.mxu0 %v203
  %v247 = vpop.f32.mrf.mxu0
  %v248 = vadd.f32 %v175, %v247
  %v249 = vpop.f32.mrf.mxu0
  %v250 = vadd.f32 %v175, %v249
  %251 = vmatmul.bf16.gmra.mxu0 %v206
  %v252 = vpop.f32.mrf.mxu0
  %v253 = vadd.f32 %v175, %v252
  %v254 = vpop.f32.mrf.mxu0
  %v255 = vadd.f32 %v175, %v254
  %256 = vdwg.mxu0
  %vm257 = vcmask 261120
  %258 = vst.msk [vmem:[%s5] sm:$0xff] %vm257, %v218
  %259 = vst.msk [vmem:[%s5 + $0x8] sm:$0xff] %vm257, %v220
  %260 = vst.msk [vmem:[%s5 + $0x10] sm:$0xff] %vm257, %v223
  %261 = vst.msk [vmem:[%s5 + $0x18] sm:$0xff] %vm257, %v225
  %262 = vst.msk [vmem:[%s5 + $0x20] sm:$0xff] %vm257, %v228
  %263 = vst.msk [vmem:[%s5 + $0x28] sm:$0xff] %vm257, %v230
  %264 = vst.msk [vmem:[%s5 + $0x30] sm:$0xff] %vm257, %v233
  %265 = vst.msk [vmem:[%s5 + $0x38] sm:$0xff] %vm257, %v235
  %266 = vst.msk [vmem:[%s5 + $0x40] sm:$0xff] %vm257, %v238
  %267 = vst.msk [vmem:[%s5 + $0x48] sm:$0xff] %vm257, %v240
  %268 = vst.msk [vmem:[%s5 + $0x50] sm:$0xff] %vm257, %v243
  %269 = vst.msk [vmem:[%s5 + $0x58] sm:$0xff] %vm257, %v245
  %270 = vst.msk [vmem:[%s5 + $0x60] sm:$0xff] %vm257, %v248
  %271 = vst.msk [vmem:[%s5 + $0x68] sm:$0xff] %vm257, %v250
  %272 = vst.msk [vmem:[%s5 + $0x70] sm:$0xff] %vm257, %v253
  %273 = vst.msk [vmem:[%s5 + $0x78] sm:$0xff] %vm257, %v255
  // Predicated region
  $region22: #{graphdetr_forward.6} parent=0 // pred_check
    _
  $region23: #{graphdetr_forward.6} parent=0 // pred_check_branch
    %275 = sbr.rel (0) target = $region25
  $region24: #{graphdetr_forward.6} parent=0 // pred_region
    _
  $region25: #{graphdetr_forward.6} parent=0 // pred_fallthru
    _
  // Predicated region
  $region26: #{graphdetr_forward.6} parent=0 // pred_check
    _
  $region27: #{graphdetr_forward.6} parent=0 // pred_check_branch
    %277 = sbr.rel (0) target = $region29
  $region28: #{graphdetr_forward.6} parent=0 // pred_region
    _
  $region29: #{graphdetr_forward.6} parent=0 // pred_fallthru
    _

// kernel: graphdetr_forward.11
$region0: #{graphdetr_forward.11}
  #allocation0 [shape = 'u32[]', space=smem, size = 0x4, offset = 0x4, fixed_abs, tag = 'smem constant byte address 0x4 - core index']
  #allocation1 [shape = 'u32[72,128]{1,0:T(1,128)}', space=vmem, size = 0x9000, scoped, tag = 'internal scratch']
  %s0 = inlined_call_operand.vmem [shape: f32[2,16,32], index: 0, kind: input, shape index: {}]
  %s1 = inlined_call_operand.vmem [shape: bf16[32,101], index: 1, kind: input, shape index: {}]
  %s2 = inlined_call_operand.vmem [shape: f32[1,101], index: 2, kind: input, shape index: {}]
  %s3 = inlined_call_operand.vmem [shape: bf16[32,32], index: 3, kind: input, shape index: {}]
  %s4 = inlined_call_operand.vmem [shape: f32[1,32], index: 4, kind: input, shape index: {}]
  %s5 = inlined_call_operand.vmem [shape: bf16[32,4], index: 5, kind: input, shape index: {}]
  %s6 = inlined_call_operand.vmem [shape: f32[1,4], index: 6, kind: input, shape index: {}]
  %s7 = inlined_call_operand.vmem [shape: f32[2,16,9], index: 7, kind: output, shape index: {0}]
  %s8 = inlined_call_operand.vmem [shape: f32[2,2,8,8], index: 8, kind: output, shape index: {1}]
  %9 = xla_tuple %s7, %s8
  %s10 = sld [smem:[#allocation0]]
  $region69: #{graphdetr_forward.11} parent=0
    _
  %s12 = ssub.s32 1, %s10
  %s13 = scalar_select 0, %s12, %s10
  loop: start=0, step=1, limit=4
  $region2: #{graphdetr_forward.11} parent=0 // loop_pre_header
    _
  $region3: #{graphdetr_forward.11} parent=0 // loop_header
    %s15 = sphi 0, %s19
    %p16 = scmp.ge.s32.totalorder %s15, 4
    %s25 = sphi 0, %s27
    %s28 = sphi 0, %s25
    %s29 = sphi 0, %s28
    %s45 = sphi 0, %s29
    %s49 = sphi 0, %s49
    %s51 = sphi 0, %s49
    %s52 = sphi 0, %s51
    %s66 = sphi 0, %s52
    %s70 = sphi 0, %s70
    %s72 = sphi 0, %s70
    %s73 = sphi 0, %s72
    %s87 = sphi 0, %s73
    %s91 = sphi 0, %s91
    %s93 = sphi 0, %s91
    %s94 = sphi 0, %s93
    %s108 = sphi 0, %s94
    %s112 = sphi 0, %s112
    %s114 = sphi 0, %s112
    %s115 = sphi 0, %s114
    %s129 = sphi 0, %s115
    %s133 = sphi 0, %s133
    %s135 = sphi 0, %s133
    %s136 = sphi 0, %s135
    %s150 = sphi 0, %s136
    %s154 = sphi 0, %s154
    %s156 = sphi 0, %s154
    %s157 = sphi 0, %s156
    %s171 = sphi 0, %s157
    %s177 = sphi 0, %s179
    %s180 = sphi 0, %s177
    %s181 = sphi 0, %s180
    %s197 = sphi 0, %s181
    %s203 = sphi 0, %s205
    %s206 = sphi 0, %s203
    %s207 = sphi 0, %s206
    %s223 = sphi 0, %s207
  $region4: #{graphdetr_forward.11} parent=0 // loop_header_branch
    %18 = sbr.rel (%p16) target = $region8
  $region5: #{graphdetr_forward.11} parent=0 // loop_body
    %s20 = ssub.s32 %s15, 1
    %s21 = ssub.s32 %s15, 2
    %s22 = sadd.s32 %s15, 1
    %s23 = ssub.s32 %s15, %s22
    %p24 = scmp.eq.s32.totalorder %s23, 0
    %s26 = sadd.s32 %s25, 1
    %s27 = scalar_select %p24, %s25, %s26
    %p30 = pneg %p24
    %p31 = scmp.eq.s32.totalorder %s15, 1
    %p32 = por %p30, %p31
    %p33 = scmp.ne.s32.totalorder %s25, %s28
    %p34 = scmp.eq.s32.totalorder %s15, 0
    %p35 = por %p33, %p34
    %p36 = scmp.ne.s32.totalorder %s25, %s28
    %p37 = scmp.eq.s32.totalorder %s20, 1
    %p38 = por %p36, %p37
    %p39 = scmp.ne.s32.totalorder %s28, %s29
    %p40 = scmp.eq.s32.totalorder %s20, 0
    %p41 = por %p39, %p40
    %p42 = scmp.ne.s32.totalorder %s28, %s29
    %p43 = scmp.eq.s32.totalorder %s21, 1
    %p44 = por %p42, %p43
    %p46 = scmp.ne.s32.totalorder %s29, %s45
    %p47 = scmp.eq.s32.totalorder %s21, 0
    %p48 = por %p46, %p47
    %s50 = sadd.s32 %s49, 1
    %p53 = scmp.eq.s32.totalorder %s15, 1
    %p54 = scmp.ne.s32.totalorder %s49, %s51
    %p55 = scmp.eq.s32.totalorder %s15, 0
    %p56 = por %p54, %p55
    %p57 = scmp.ne.s32.totalorder %s49, %s51
    %p58 = scmp.eq.s32.totalorder %s20, 1
    %p59 = por %p57, %p58
    %p60 = scmp.ne.s32.totalorder %s51, %s52
    %p61 = scmp.eq.s32.totalorder %s20, 0
    %p62 = por %p60, %p61
    %p63 = scmp.ne.s32.totalorder %s51, %s52
    %p64 = scmp.eq.s32.totalorder %s21, 1
    %p65 = por %p63, %p64
    %p67 = scmp.ne.s32.totalorder %s52, %s66
    %p68 = scmp.eq.s32.totalorder %s21, 0
    %p69 = por %p67, %p68
    %s71 = sadd.s32 %s70, 1
    %p74 = scmp.eq.s32.totalorder %s15, 1
    %p75 = scmp.ne.s32.totalorder %s70, %s72
    %p76 = scmp.eq.s32.totalorder %s15, 0
    %p77 = por %p75, %p76
    %p78 = scmp.ne.s32.totalorder %s70, %s72
    %p79 = scmp.eq.s32.totalorder %s20, 1
    %p80 = por %p78, %p79
    %p81 = scmp.ne.s32.totalorder %s72, %s73
    %p82 = scmp.eq.s32.totalorder %s20, 0
    %p83 = por %p81, %p82
    %p84 = scmp.ne.s32.totalorder %s72, %s73
    %p85 = scmp.eq.s32.totalorder %s21, 1
    %p86 = por %p84, %p85
    %p88 = scmp.ne.s32.totalorder %s73, %s87
    %p89 = scmp.eq.s32.totalorder %s21, 0
    %p90 = por %p88, %p89
    %s92 = sadd.s32 %s91, 1
    %p95 = scmp.eq.s32.totalorder %s15, 1
    %p96 = scmp.ne.s32.totalorder %s91, %s93
    %p97 = scmp.eq.s32.totalorder %s15, 0
    %p98 = por %p96, %p97
    %p99 = scmp.ne.s32.totalorder %s91, %s93
    %p100 = scmp.eq.s32.totalorder %s20, 1
    %p101 = por %p99, %p100
    %p102 = scmp.ne.s32.totalorder %s93, %s94
    %p103 = scmp.eq.s32.totalorder %s20, 0
    %p104 = por %p102, %p103
    %p105 = scmp.ne.s32.totalorder %s93, %s94
    %p106 = scmp.eq.s32.totalorder %s21, 1
    %p107 = por %p105, %p106
    %p109 = scmp.ne.s32.totalorder %s94, %s108
    %p110 = scmp.eq.s32.totalorder %s21, 0
    %p111 = por %p109, %p110
    %s113 = sadd.s32 %s112, 1
    %p116 = scmp.eq.s32.totalorder %s15, 1
    %p117 = scmp.ne.s32.totalorder %s112, %s114
    %p118 = scmp.eq.s32.totalorder %s15, 0
    %p119 = por %p117, %p118
    %p120 = scmp.ne.s32.totalorder %s112, %s114
    %p121 = scmp.eq.s32.totalorder %s20, 1
    %p122 = por %p120, %p121
    %p123 = scmp.ne.s32.totalorder %s114, %s115
    %p124 = scmp.eq.s32.totalorder %s20, 0
    %p125 = por %p123, %p124
    %p126 = scmp.ne.s32.totalorder %s114, %s115
    %p127 = scmp.eq.s32.totalorder %s21, 1
    %p128 = por %p126, %p127
    %p130 = scmp.ne.s32.totalorder %s115, %s129
    %p131 = scmp.eq.s32.totalorder %s21, 0
    %p132 = por %p130, %p131
    %s134 = sadd.s32 %s133, 1
    %p137 = scmp.eq.s32.totalorder %s15, 1
    %p138 = scmp.ne.s32.totalorder %s133, %s135
    %p139 = scmp.eq.s32.totalorder %s15, 0
    %p140 = por %p138, %p139
    %p141 = scmp.ne.s32.totalorder %s133, %s135
    %p142 = scmp.eq.s32.totalorder %s20, 1
    %p143 = por %p141, %p142
    %p144 = scmp.ne.s32.totalorder %s135, %s136
    %p145 = scmp.eq.s32.totalorder %s20, 0
    %p146 = por %p144, %p145
    %p147 = scmp.ne.s32.totalorder %s135, %s136
    %p148 = scmp.eq.s32.totalorder %s21, 1
    %p149 = por %p147, %p148
    %p151 = scmp.ne.s32.totalorder %s136, %s150
    %p152 = scmp.eq.s32.totalorder %s21, 0
    %p153 = por %p151, %p152
    %s155 = sadd.s32 %s154, 1
    %p158 = scmp.eq.s32.totalorder %s15, 1
    %p159 = scmp.ne.s32.totalorder %s154, %s156
    %p160 = scmp.eq.s32.totalorder %s15, 0
    %p161 = por %p159, %p160
    %p162 = scmp.ne.s32.totalorder %s154, %s156
    %p163 = scmp.eq.s32.totalorder %s20, 1
    %p164 = por %p162, %p163
    %p165 = scmp.ne.s32.totalorder %s156, %s157
    %p166 = scmp.eq.s32.totalorder %s20, 0
    %p167 = por %p165, %p166
    %p168 = scmp.ne.s32.totalorder %s156, %s157
    %p169 = scmp.eq.s32.totalorder %s21, 1
    %p170 = por %p168, %p169
    %p172 = scmp.ne.s32.totalorder %s157, %s171
    %p173 = scmp.eq.s32.totalorder %s21, 0
    %p174 = por %p172, %p173
    %s175 = ssub.s32 %s15, %s22
    %p176 = scmp.eq.s32.totalorder %s175, 0
    %s178 = sadd.s32 %s177, 1
    %s179 = scalar_select %p176, %s177, %s178
    %p182 = pneg %p176
    %p183 = scmp.eq.s32.totalorder %s15, 1
    %p184 = por %p182, %p183
    %p185 = scmp.ne.s32.totalorder %s177, %s180
    %p186 = scmp.eq.s32.totalorder %s15, 0
    %p187 = por %p185, %p186
    %p188 = scmp.ne.s32.totalorder %s177, %s180
    %p189 = scmp.eq.s32.totalorder %s20, 1
    %p190 = por %p188, %p189
    %p191 = scmp.ne.s32.totalorder %s180, %s181
    %p192 = scmp.eq.s32.totalorder %s20, 0
    %p193 = por %p191, %p192
    %p194 = scmp.ne.s32.totalorder %s180, %s181
    %p195 = scmp.eq.s32.totalorder %s21, 1
    %p196 = por %p194, %p195
    %p198 = scmp.ne.s32.totalorder %s181, %s197
    %p199 = scmp.eq.s32.totalorder %s21, 0
    %p200 = por %p198, %p199
    %s201 = ssub.s32 %s15, %s22
    %p202 = scmp.eq.s32.totalorder %s201, 0
    %s204 = sadd.s32 %s203, 1
    %s205 = scalar_select %p202, %s203, %s204
    %p208 = pneg %p202
    %p209 = scmp.eq.s32.totalorder %s15, 1
    %p210 = por %p208, %p209
    %p211 = scmp.ne.s32.totalorder %s203, %s206
    %p212 = scmp.eq.s32.totalorder %s15, 0
    %p213 = por %p211, %p212
    %p214 = scmp.ne.s32.totalorder %s203, %s206
    %p215 = scmp.eq.s32.totalorder %s20, 1
    %p216 = por %p214, %p215
    %p217 = scmp.ne.s32.totalorder %s206, %s207
    %p218 = scmp.eq.s32.totalorder %s20, 0
    %p219 = por %p217, %p218
    %p220 = scmp.ne.s32.totalorder %s206, %s207
    %p221 = scmp.eq.s32.totalorder %s21, 1
    %p222 = por %p220, %p221
    %p224 = scmp.ne.s32.totalorder %s207, %s223
    %p225 = scmp.eq.s32.totalorder %s21, 0
    %p226 = por %p224, %p225
    %p227 = scmp.le.s32.totalorder 1, %s15
    %p228 = scmp.lt.s32.totalorder %s15, 3
    %p229 = pnand %p227, %p228
    %p230 = pneg %p229
    // Predicated region
    $region9: #{graphdetr_forward.11} parent=5 // pred_check
      _
    $region10: #{graphdetr_forward.11} parent=5 // pred_check_branch
      %232 = sbr.rel (%p229) target = $region12
    $region11: #{graphdetr_forward.11} parent=5 // pred_region
      %s233 = ssub.s32 %s15, 1
      // Predicated region
      $region13: #{graphdetr_forward.11} parent=11 // pred_check
        %p234 = pneg %p62
      $region14: #{graphdetr_forward.11} parent=11 // pred_check_branch
        %236 = sbr.rel (%p234) target = $region16
      $region15: #{graphdetr_forward.11} parent=11 // pred_region
        _
      $region16: #{graphdetr_forward.11} parent=11 // pred_fallthru
        _
      // Predicated region
      $region17: #{graphdetr_forward.11} parent=11 // pred_check
        %p237 = pneg %p83
      $region18: #{graphdetr_forward.11} parent=11 // pred_check_branch
        %239 = sbr.rel (%p237) target = $region20
      $region19: #{graphdetr_forward.11} parent=11 // pred_region
        _
      $region20: #{graphdetr_forward.11} parent=11 // pred_fallthru
        _
      // Predicated region
      $region21: #{graphdetr_forward.11} parent=11 // pred_check
        %p240 = pneg %p104
      $region22: #{graphdetr_forward.11} parent=11 // pred_check_branch
        %242 = sbr.rel (%p240) target = $region24
      $region23: #{graphdetr_forward.11} parent=11 // pred_region
        _
      $region24: #{graphdetr_forward.11} parent=11 // pred_fallthru
        _
      // Predicated region
      $region25: #{graphdetr_forward.11} parent=11 // pred_check
        %p243 = pneg %p125
      $region26: #{graphdetr_forward.11} parent=11 // pred_check_branch
        %245 = sbr.rel (%p243) target = $region28
      $region27: #{graphdetr_forward.11} parent=11 // pred_region
        _
      $region28: #{graphdetr_forward.11} parent=11 // pred_fallthru
        _
      // Predicated region
      $region29: #{graphdetr_forward.11} parent=11 // pred_check
        %p246 = pneg %p146
      $region30: #{graphdetr_forward.11} parent=11 // pred_check_branch
        %248 = sbr.rel (%p246) target = $region32
      $region31: #{graphdetr_forward.11} parent=11 // pred_region
        _
      $region32: #{graphdetr_forward.11} parent=11 // pred_fallthru
        _
      // Predicated region
      $region33: #{graphdetr_forward.11} parent=11 // pred_check
        %p249 = pneg %p167
      $region34: #{graphdetr_forward.11} parent=11 // pred_check_branch
        %251 = sbr.rel (%p249) target = $region36
      $region35: #{graphdetr_forward.11} parent=11 // pred_region
        _
      $region36: #{graphdetr_forward.11} parent=11 // pred_fallthru
        _
    $region12: #{graphdetr_forward.11} parent=5 // pred_fallthru
      _
    %p252 = scmp.lt.s32.totalorder %s15, 2
    // Predicated region
    $region37: #{graphdetr_forward.11} parent=5 // pred_check
      %p253 = pneg %p252
    $region38: #{graphdetr_forward.11} parent=5 // pred_check_branch
      %255 = sbr.rel (%p253) target = $region40
    $region39: #{graphdetr_forward.11} parent=5 // pred_region
      // Predicated region
      $region41: #{graphdetr_forward.11} parent=39 // pred_check
        %p256 = pneg %p35
      $region42: #{graphdetr_forward.11} parent=39 // pred_check_branch
        %258 = sbr.rel (%p256) target = $region44
      $region43: #{graphdetr_forward.11} parent=39 // pred_region
        %p259 = scmp.lt.s32.totalorder %s15, 1
        %s260 = scalar_select %p259, %s15, 1
        %s261 = smul.addr %s260, 2
        %s262 = smul.addr %s261, 8
        %s263 = scalar_lea.vmem %s0, %s262
      $region44: #{graphdetr_forward.11} parent=39 // pred_fallthru
        _
    $region40: #{graphdetr_forward.11} parent=5 // pred_fallthru
      _
    %p264 = scmp.le.s32.totalorder 1, %s15
    %p265 = scmp.lt.s32.totalorder %s15, 3
    %p266 = pnand %p264, %p265
    %p267 = pneg %p266
    // Predicated region
    $region45: #{graphdetr_forward.11} parent=5 // pred_check
      _
    $region46: #{graphdetr_forward.11} parent=5 // pred_check_branch
      %269 = sbr.rel (%p266) target = $region48
    $region47: #{graphdetr_forward.11} parent=5 // pred_region
      %s270 = ssub.s32 %s15, 1
      %p271 = scmp.lt.s32.totalorder %s20, 1
      %s272 = scalar_select %p271, %s20, 1
      %s273 = smul.addr %s272, 2
      %s274 = smul.addr %s273, 8
      %s275 = scalar_lea.vmem %s0, %s274
      %p276 = pneg %p41
      %p277 = pneg %p38
      %p278 = pneg %p62
      %p279 = pneg %p59
      %p280 = pneg %p83
      %p281 = pneg %p80
      %p282 = pneg %p104
      %p283 = pneg %p101
      %p284 = pneg %p125
      %p285 = pneg %p122
      %p286 = pneg %p146
      %p287 = pneg %p143
      %p288 = pneg %p167
      %p289 = pneg %p164
      %p290 = pneg %p193
      %p291 = pneg %p190
      %p292 = scmp.lt.s32.totalorder %s20, 1
      %s293 = scalar_select %p292, %s20, 1
      %s294 = smul.addr %s293, 2
      %s295 = smul.addr %s294, 8
      %s296 = scalar_lea.vmem %s7, %s295
      %p297 = pneg %p219
      %p298 = pneg %p216
      %p299 = scmp.lt.s32.totalorder %s20, 1
      %s300 = scalar_select %p299, %s20, 1
      %s301 = smul.addr %s300, 2
      %s302 = smul.addr %s301, 8
      %s303 = scalar_lea.vmem %s8, %s302
      %p304 = scmp.lt.s32.totalorder %s20, 1
      %s305 = scalar_select %p304, %s20, 1
      %s306 = smul.addr %s305, 2
      %s307 = smul.addr %s306, 8
      %s308 = scalar_lea.vmem %s0, %s307
      %p309 = scmp.lt.s32.totalorder %s20, 1
      %s310 = scalar_select %p309, %s20, 1
      %s311 = smul.addr %s310, 2
      %s312 = smul.addr %s311, 8
      %s313 = scalar_lea.vmem %s7, %s312
      %p314 = scmp.lt.s32.totalorder %s20, 1
      %s315 = scalar_select %p314, %s20, 1
      %s316 = smul.addr %s315, 2
      %s317 = smul.addr %s316, 8
      %s318 = scalar_lea.vmem %s8, %s317
      %v320 = vld [vmem:[%s308] sm:$0xff]
      %v321 = vld [vmem:[%s308 + $0x8] sm:$0xff]
      %v322 = vpack.c.bf16 %v321, %v320
      %v323 = vld [vmem:[%s1] sm:$0xf]
      %v324 = vld [vmem:[%s1 + $0x4] sm:$0xf]
      %v325 = vld [vmem:[%s1 + $0x8] sm:$0xf]
      %v326 = vld [vmem:[%s1 + $0xc] sm:$0xf]
      %v327 = vld [vmem:[%s2] sm:$0x1]
      %v329 = vperm.slane %v327, 0
      %v335 = vunpack.c.l.b16 %v323
      %v336 = vunpack.c.l.b16 %v324
      %v337 = vunpack.c.l.b16 %v325
      %v338 = vunpack.c.l.b16 %v326
      %v339 = vpack.c.b16 %v336, %v335
      %v340 = vpack.c.b16 %v338, %v337
      %vm343 = vcmask 261120
      %v345 = vsel %vm343, %v322, 0
      %347 = vmatpush.bf16.msra.mxu0 0
      %348 = vmatpush.bf16.msra.mxu0 0
      %349 = vmatpush.bf16.msra.mxu0 0
      %350 = vmatpush.bf16.msra.mxu0 0
      %351 = vmatpush.bf16.msra.mxu0 0
      %352 = vmatpush.bf16.msra.mxu0 0
      %353 = vmatpush.bf16.msra.mxu0 %v340
      %354 = vmatpush.bf16.msra.mxu0 %v339
      %355 = vmatmul.bf16.gmra.mxu0 %v345
      %v356 = vpop.f32.mrf.mxu0
      %v357 = vadd.f32 %v329, %v356
      %v358 = vpop.f32.mrf.mxu0
      %v359 = vadd.f32 %v329, %v358
      %360 = vdwg.mxu0
      %v361 = vmax.f32 %v357, 0.0
      %v362 = vmax.f32 %v359, 0.0
      %v363 = vpack.c.bf16 %v362, %v361
      %v364 = vld [vmem:[%s3] sm:$0xf]
      %v365 = vld [vmem:[%s3 + $0x4] sm:$0xf]
      %v366 = vld [vmem:[%s3 + $0x8] sm:$0xf]
      %v367 = vld [vmem:[%s3 + $0xc] sm:$0xf]
      %v368 = vld [vmem:[%s4] sm:$0x1]
      %v370 = vperm.slane %v368, 0
      %v376 = vunpack.c.l.b16 %v364
      %v377 = vunpack.c.l.b16 %v365
      %v378 = vunpack.c.l.b16 %v366
      %v379 = vunpack.c.l.b16 %v367
      %v380 = vpack.c.b16 %v377, %v376
      %v381 = vpack.c.b16 %v379, %v378
      %v385 = vsel %vm343, %v363, 0
      %387 = vmatpush.bf16.msra.mxu0 0
      %388 = vmatpush.bf16.msra.mxu0 0
      %389 = vmatpush.bf16.msra.mxu0 0
      %390 = vmatpush.bf16.msra.mxu0 0
      %391 = vmatpush.bf16.msra.mxu0 0
      %392 = vmatpush.bf16.msra.mxu0 0
      %393 = vmatpush.bf16.msra.mxu0 %v381
      %394 = vmatpush.bf16.msra.mxu0 %v380
      %395 = vmatmul.bf16.gmra.mxu0 %v385
      %v396 = vpop.f32.mrf.mxu0
      %v397 = vadd.f32 %v370, %v396
      %v398 = vpop.f32.mrf.mxu0
      %v399 = vadd.f32 %v370, %v398
      %400 = vdwg.mxu0
      %v401 = vmax.f32 %v397, 0.0
      %v402 = vmax.f32 %v399, 0.0
      %v403 = vpack.c.bf16 %v402, %v401
      %v404 = vld [vmem:[%s5] sm:$0xf]
      %v405 = vld [vmem:[%s5 + $0x4] sm:$0xf]
      %v406 = vld [vmem:[%s5 + $0x8] sm:$0xf]
      %v407 = vld [vmem:[%s5 + $0xc] sm:$0xf]
      %v408 = vld [vmem:[%s6] sm:$0x1]
      %v410 = vperm.slane %v408, 0
      %v416 = vunpack.c.l.b16 %v404
      %v417 = vunpack.c.l.b16 %v405
      %v418 = vunpack.c.l.b16 %v406
      %v419 = vunpack.c.l.b16 %v407
      %v420 = vpack.c.b16 %v417, %v416
      %v421 = vpack.c.b16 %v419, %v418
      %v425 = vsel %vm343, %v403, 0
      %427 = vmatpush.bf16.msra.mxu0 0
      %428 = vmatpush.bf16.msra.mxu0 0
      %429 = vmatpush.bf16.msra.mxu0 0
      %430 = vmatpush.bf16.msra.mxu0 0
      %431 = vmatpush.bf16.msra.mxu0 0
      %432 = vmatpush.bf16.msra.mxu0 0
      %433 = vmatpush.bf16.msra.mxu0 %v421
      %434 = vmatpush.bf16.msra.mxu0 %v420
      %435 = vmatmul.bf16.gmra.mxu0 %v425
      %v436 = vpop.f32.mrf.mxu0
      %v437 = vadd.f32 %v410, %v436
      %v438 = vpop.f32.mrf.mxu0
      %v439 = vadd.f32 %v410, %v438
      %440 = vdwg.mxu0
      %v441 = vxor.u32 %v437, 2147483648
      %v442 = vxor.u32 %v439, 2147483648
      %v443 = vmul.f32 %v441, 1.442695
      %v444 = vpow.pop %v443
      %v445 = vmul.f32 %v442, 1.442695
      %v446 = vpow.pop %v445
      %v447 = vadd.f32 %v444, 1.0
      %v448 = vadd.f32 %v446, 1.0
      %v449 = vrcp.pop %v447
      %v450 = vmul.f32 %v447, %v449
      %v451 = vsub.f32 1.0, %v450
      %v452 = vmul.f32 %v449, %v451
      %v453 = vadd.f32 %v449, %v452
      %vm454 = vweird.f32 %v447
      %vm455 = vweird.f32 %v449
      %vm456 = vmor %vm454, %vm455
      %v457 = vsel %vm456, %v449, %v453
      %v458 = vand.u32 2147483647, %v447
      %vm459 = vcmp.eq.f32.partialorder %v458, 8.507059e+37
      %v460 = vand.u32 %v447, 2147483648
      %v461 = vor.u32 1.1754944e-38, %v460
      %v462 = vsel %vm459, %v461, %v457
      %v463 = vmul.f32 1.0, %v462
      %v464 = vrcp.pop %v448
      %v465 = vmul.f32 %v448, %v464
      %v466 = vsub.f32 1.0, %v465
      %v467 = vmul.f32 %v464, %v466
      %v468 = vadd.f32 %v464, %v467
      %vm469 = vweird.f32 %v448
      %vm470 = vweird.f32 %v464
      %vm471 = vmor %vm469, %vm470
      %v472 = vsel %vm471, %v464, %v468
      %v473 = vand.u32 2147483647, %v448
      %vm474 = vcmp.eq.f32.partialorder %v473, 8.507059e+37
      %v475 = vand.u32 %v448, 2147483648
      %v476 = vor.u32 1.1754944e-38, %v475
      %v477 = vsel %vm474, %v476, %v472
      %v478 = vmul.f32 1.0, %v477
      %481 = vrot.lane.b32.xlu0 %v357, 32
      %v482 = vpop.permute.xlu0 %481
      %483 = vrot.lane.b32.xlu0 %v359, 32
      %v484 = vpop.permute.xlu0 %483
      %vm487 = vcmask 39936
      %488 = vst.msk [vmem:[%s313] sm:$0xff] %vm487, %v482
      %489 = vst.msk [vmem:[%s313 + $0x8] sm:$0xff] %vm487, %v484
      %492 = vrot.lane.b32.xlu0 %v463, 5
      %v493 = vpop.permute.xlu0 %492
      %494 = vrot.lane.b32.xlu0 %v478, 5
      %v495 = vpop.permute.xlu0 %494
      %vm498 = vcmask 72744
      %499 = vst.msk [vmem:[%s313] sm:$0xff] %vm498, %v493
      %500 = vst.msk [vmem:[%s313 + $0x8] sm:$0xff] %vm498, %v495
      %v501 = vpack.c.bf16 %v357, %v357
      %v502 = vpack.c.bf16 %v359, %v359
      %v504 = vunpack.c.l.b16 %v501
      %v505 = vpack.c.b16 %v504, %v504
      %506 = vrot.lane.b32.xlu0 %v505, 96
      %v507 = vpop.permute.xlu0 %506
      %508 = vrot.lane.b32.xlu0 %v505, 64
      %v509 = vpop.permute.xlu0 %508
      %v511 = vsel %vm343, %v507, 0
      %v514 = vsel %vm343, %v509, 0
      %516 = vmatpush.bf16.xpose.msra.mxu0 0
      %517 = vmatpush.bf16.xpose.msra.mxu0 0
      %518 = vmatpush.bf16.xpose.msra.mxu0 0
      %519 = vmatpush.bf16.xpose.msra.mxu0 0
      %520 = vmatpush.bf16.xpose.msra.mxu0 0
      %521 = vmatpush.bf16.xpose.msra.mxu0 0
      %522 = vmatpush.bf16.xpose.msra.mxu0 0
      %523 = vmatpush.bf16.xpose.msra.mxu0 %v514
      %524 = vmatmul.bf16.gmra.mxu0 %v511
      %v525 = vpop.f32.mrf.mxu0
      %v526 = vadd.f32 0.0, %v525
      %v527 = vpop.f32.mrf.mxu0
      %528 = vdwg.mxu0
      %v530 = vunpack.c.l.b16 %v502
      %v531 = vpack.c.b16 %v530, %v530
      %532 = vrot.lane.b32.xlu0 %v531, 96
      %v533 = vpop.permute.xlu0 %532
      %534 = vrot.lane.b32.xlu0 %v531, 64
      %v535 = vpop.permute.xlu0 %534
      %v537 = vsel %vm343, %v533, 0
      %v540 = vsel %vm343, %v535, 0
      %542 = vmatpush.bf16.xpose.msra.mxu0 0
      %543 = vmatpush.bf16.xpose.msra.mxu0 0
      %544 = vmatpush.bf16.xpose.msra.mxu0 0
      %545 = vmatpush.bf16.xpose.msra.mxu0 0
      %546 = vmatpush.bf16.xpose.msra.mxu0 0
      %547 = vmatpush.bf16.xpose.msra.mxu0 0
      %548 = vmatpush.bf16.xpose.msra.mxu0 0
      %549 = vmatpush.bf16.xpose.msra.mxu0 %v540
      %550 = vmatmul.bf16.gmra.mxu0 %v537
      %v551 = vpop.f32.mrf.mxu0
      %v552 = vadd.f32 0.0, %v551
      %v553 = vpop.f32.mrf.mxu0
      %554 = vdwg.mxu0
      %vm555 = vcmask 64512
      %556 = vst.msk [vmem:[%s318] sm:$0xff] %vm555, %v526
      %557 = vst.msk [vmem:[%s318 + $0x8] sm:$0xff] %vm555, %v552
      %p558 = scmp.lt.s32.totalorder %s20, 1
      %s559 = scalar_select %p558, %s20, 1
      %s560 = smul.addr %s559, 2
      %s561 = smul.addr %s560, 8
      %s562 = scalar_lea.vmem %s7, %s561
      %p563 = scmp.lt.s32.totalorder %s20, 1
      %s564 = scalar_select %p563, %s20, 1
      %s565 = smul.addr %s564, 2
      %s566 = smul.addr %s565, 8
      %s567 = scalar_lea.vmem %s8, %s566
      // Predicated region
      $region49: #{graphdetr_forward.11} parent=47 // pred_check
        %p568 = pneg %p190
      $region50: #{graphdetr_forward.11} parent=47 // pred_check_branch
        %570 = sbr.rel (%p568) target = $region52
      $region51: #{graphdetr_forward.11} parent=47 // pred_region
        _
      $region52: #{graphdetr_forward.11} parent=47 // pred_fallthru
        _
      // Predicated region
      $region53: #{graphdetr_forward.11} parent=47 // pred_check
        %p571 = pneg %p216
      $region54: #{graphdetr_forward.11} parent=47 // pred_check_branch
        %573 = sbr.rel (%p571) target = $region56
      $region55: #{graphdetr_forward.11} parent=47 // pred_region
        _
      $region56: #{graphdetr_forward.11} parent=47 // pred_fallthru
        _
    $region48: #{graphdetr_forward.11} parent=5 // pred_fallthru
      _
    %p574 = scmp.le.s32.totalorder 2, %s15
    // Predicated region
    $region57: #{graphdetr_forward.11} parent=5 // pred_check
      %p575 = pneg %p574
    $region58: #{graphdetr_forward.11} parent=5 // pred_check_branch
      %577 = sbr.rel (%p575) target = $region60
    $region59: #{graphdetr_forward.11} parent=5 // pred_region
      %s578 = ssub.s32 %s15, 2
      // Predicated region
      $region61: #{graphdetr_forward.11} parent=59 // pred_check
        %p579 = pneg %p196
      $region62: #{graphdetr_forward.11} parent=59 // pred_check_branch
        %581 = sbr.rel (%p579) target = $region64
      $region63: #{graphdetr_forward.11} parent=59 // pred_region
        %p582 = scmp.lt.s32.totalorder %s21, 1
        %s583 = scalar_select %p582, %s21, 1
        %s584 = smul.addr %s583, 2
        %s585 = smul.addr %s584, 8
        %s586 = scalar_lea.vmem %s7, %s585
      $region64: #{graphdetr_forward.11} parent=59 // pred_fallthru
        _
      // Predicated region
      $region65: #{graphdetr_forward.11} parent=59 // pred_check
        %p587 = pneg %p222
      $region66: #{graphdetr_forward.11} parent=59 // pred_check_branch
        %589 = sbr.rel (%p587) target = $region68
      $region67: #{graphdetr_forward.11} parent=59 // pred_region
        %p590 = scmp.lt.s32.totalorder %s21, 1
        %s591 = scalar_select %p590, %s21, 1
        %s592 = smul.addr %s591, 2
        %s593 = smul.addr %s592, 8
        %s594 = scalar_lea.vmem %s8, %s593
      $region68: #{graphdetr_forward.11} parent=59 // pred_fallthru
        _
    $region60: #{graphdetr_forward.11} parent=5 // pred_fallthru
      _
  $region6: #{graphdetr_forward.11} parent=0 // loop_footer
    %s19 = sadd.s32 1, %s15
  $region7: #{graphdetr_forward.11} parent=0 // loop_footer_branch
    %14 = sbr.rel target = $region3
  $region8: #{graphdetr_forward.11} parent=0 // loop_exit
    _

// kernel: graphdetr_forward.7
$region0: #{graphdetr_forward.7}
  #allocation0 [shape = 'u32[]', space=smem, size = 0x4, offset = 0x4, fixed_abs, tag = 'smem constant byte address 0x4 - core index']
  #allocation1 [shape = 'u32[72,128]{1,0:T(1,128)}', space=vmem, size = 0x9000, scoped, tag = 'internal scratch']
  #allocation2 [shape = 'f32[64,32]{1,0:T(8,128)}', space=vmem, size = 0x8000, scoped, tag = 'scratch operand']
  %s0 = inlined_call_operand.vmem [shape: f32[2,64,32], index: 0, kind: input, shape index: {}]
  %s1 = inlined_call_operand.vmem [shape: f32[2,64,32], index: 1, kind: input, shape index: {}]
  %s2 = inlined_call_operand.vmem [shape: f32[2,1,64], index: 2, kind: input, shape index: {}]
  %s3 = inlined_call_operand.vmem [shape: bf16[32,64], index: 3, kind: input, shape index: {}]
  %s4 = inlined_call_operand.vmem [shape: f32[1,64], index: 4, kind: input, shape index: {}]
  %s5 = inlined_call_operand.vmem [shape: bf16[32,32], index: 5, kind: input, shape index: {}]
  %s6 = inlined_call_operand.vmem [shape: f32[1,32], index: 6, kind: input, shape index: {}]
  %s7 = inlined_call_operand.vmem [shape: bf16[32,32], index: 7, kind: input, shape index: {}]
  %s8 = inlined_call_operand.vmem [shape: f32[1,32], index: 8, kind: input, shape index: {}]
  %s9 = inlined_call_operand.vmem [shape: f32[1,32], index: 9, kind: input, shape index: {}]
  %s10 = inlined_call_operand.vmem [shape: f32[1,32], index: 10, kind: input, shape index: {}]
  %s11 = inlined_call_operand.vmem [shape: bf16[32,64], index: 11, kind: input, shape index: {}]
  %s12 = inlined_call_operand.vmem [shape: f32[1,64], index: 12, kind: input, shape index: {}]
  %s13 = inlined_call_operand.vmem [shape: bf16[64,32], index: 13, kind: input, shape index: {}]
  %s14 = inlined_call_operand.vmem [shape: f32[1,32], index: 14, kind: input, shape index: {}]
  %s15 = inlined_call_operand.vmem [shape: f32[1,32], index: 15, kind: input, shape index: {}]
  %s16 = inlined_call_operand.vmem [shape: f32[1,32], index: 16, kind: input, shape index: {}]
  %s17 = inlined_call_operand.vmem [shape: f32[2,64,32], index: 17, kind: output, shape index: {}]
  %s18 = sld [smem:[#allocation0]]
  $region101: #{graphdetr_forward.7} parent=0
    _
  %s20 = ssub.s32 1, %s18
  %s21 = scalar_select 0, %s20, %s18
  loop: start=0, step=1, limit=4
  $region2: #{graphdetr_forward.7} parent=0 // loop_pre_header
    _
  $region3: #{graphdetr_forward.7} parent=0 // loop_header
    %s23 = sphi 0, %s27
    %p24 = scmp.ge.s32.totalorder %s23, 4
    %s33 = sphi 0, %s35
    %s36 = sphi 0, %s33
    %s37 = sphi 0, %s36
    %s53 = sphi 0, %s37
    %s59 = sphi 0, %s61
    %s62 = sphi 0, %s59
    %s63 = sphi 0, %s62
    %s79 = sphi 0, %s63
    %s85 = sphi 0, %s87
    %s88 = sphi 0, %s85
    %s89 = sphi 0, %s88
    %s105 = sphi 0, %s89
    %s109 = sphi 0, %s109
    %s111 = sphi 0, %s109
    %s112 = sphi 0, %s111
    %s126 = sphi 0, %s112
    %s130 = sphi 0, %s130
    %s132 = sphi 0, %s130
    %s133 = sphi 0, %s132
    %s147 = sphi 0, %s133
    %s151 = sphi 0, %s151
    %s153 = sphi 0, %s151
    %s154 = sphi 0, %s153
    %s168 = sphi 0, %s154
    %s172 = sphi 0, %s172
    %s174 = sphi 0, %s172
    %s175 = sphi 0, %s174
    %s189 = sphi 0, %s175
    %s193 = sphi 0, %s193
    %s195 = sphi 0, %s193
    %s196 = sphi 0, %s195
    %s210 = sphi 0, %s196
    %s214 = sphi 0, %s214
    %s216 = sphi 0, %s214
    %s217 = sphi 0, %s216
    %s231 = sphi 0, %s217
    %s235 = sphi 0, %s235
    %s237 = sphi 0, %s235
    %s238 = sphi 0, %s237
    %s252 = sphi 0, %s238
    %s256 = sphi 0, %s256
    %s258 = sphi 0, %s256
    %s259 = sphi 0, %s258
    %s273 = sphi 0, %s259
    %s277 = sphi 0, %s277
    %s279 = sphi 0, %s277
    %s280 = sphi 0, %s279
    %s294 = sphi 0, %s280
    %s298 = sphi 0, %s298
    %s300 = sphi 0, %s298
    %s301 = sphi 0, %s300
    %s315 = sphi 0, %s301
    %s319 = sphi 0, %s319
    %s321 = sphi 0, %s319
    %s322 = sphi 0, %s321
    %s336 = sphi 0, %s322
    %s340 = sphi 0, %s340
    %s342 = sphi 0, %s340
    %s343 = sphi 0, %s342
    %s357 = sphi 0, %s343
    %s361 = sphi 0, %s361
    %s363 = sphi 0, %s361
    %s364 = sphi 0, %s363
    %s378 = sphi 0, %s364
    %s382 = sphi 0, %s382
    %s384 = sphi 0, %s382
    %s385 = sphi 0, %s384
    %s399 = sphi 0, %s385
    %s405 = sphi 0, %s407
    %s408 = sphi 0, %s405
    %s409 = sphi 0, %s408
    %s425 = sphi 0, %s409
  $region4: #{graphdetr_forward.7} parent=0 // loop_header_branch
    %26 = sbr.rel (%p24) target = $region8
  $region5: #{graphdetr_forward.7} parent=0 // loop_body
    %s28 = ssub.s32 %s23, 1
    %s29 = ssub.s32 %s23, 2
    %s30 = sadd.s32 %s23, 1
    %s31 = ssub.s32 %s23, %s30
    %p32 = scmp.eq.s32.totalorder %s31, 0
    %s34 = sadd.s32 %s33, 1
    %s35 = scalar_select %p32, %s33, %s34
    %p38 = pneg %p32
    %p39 = scmp.eq.s32.totalorder %s23, 1
    %p40 = por %p38, %p39
    %p41 = scmp.ne.s32.totalorder %s33, %s36
    %p42 = scmp.eq.s32.totalorder %s23, 0
    %p43 = por %p41, %p42
    %p44 = scmp.ne.s32.totalorder %s33, %s36
    %p45 = scmp.eq.s32.totalorder %s28, 1
    %p46 = por %p44, %p45
    %p47 = scmp.ne.s32.totalorder %s36, %s37
    %p48 = scmp.eq.s32.totalorder %s28, 0
    %p49 = por %p47, %p48
    %p50 = scmp.ne.s32.totalorder %s36, %s37
    %p51 = scmp.eq.s32.totalorder %s29, 1
    %p52 = por %p50, %p51
    %p54 = scmp.ne.s32.totalorder %s37, %s53
    %p55 = scmp.eq.s32.totalorder %s29, 0
    %p56 = por %p54, %p55
    %s57 = ssub.s32 %s23, %s30
    %p58 = scmp.eq.s32.totalorder %s57, 0
    %s60 = sadd.s32 %s59, 1
    %s61 = scalar_select %p58, %s59, %s60
    %p64 = pneg %p58
    %p65 = scmp.eq.s32.totalorder %s23, 1
    %p66 = por %p64, %p65
    %p67 = scmp.ne.s32.totalorder %s59, %s62
    %p68 = scmp.eq.s32.totalorder %s23, 0
    %p69 = por %p67, %p68
    %p70 = scmp.ne.s32.totalorder %s59, %s62
    %p71 = scmp.eq.s32.totalorder %s28, 1
    %p72 = por %p70, %p71
    %p73 = scmp.ne.s32.totalorder %s62, %s63
    %p74 = scmp.eq.s32.totalorder %s28, 0
    %p75 = por %p73, %p74
    %p76 = scmp.ne.s32.totalorder %s62, %s63
    %p77 = scmp.eq.s32.totalorder %s29, 1
    %p78 = por %p76, %p77
    %p80 = scmp.ne.s32.totalorder %s63, %s79
    %p81 = scmp.eq.s32.totalorder %s29, 0
    %p82 = por %p80, %p81
    %s83 = ssub.s32 %s23, %s30
    %p84 = scmp.eq.s32.totalorder %s83, 0
    %s86 = sadd.s32 %s85, 1
    %s87 = scalar_select %p84, %s85, %s86
    %p90 = pneg %p84
    %p91 = scmp.eq.s32.totalorder %s23, 1
    %p92 = por %p90, %p91
    %p93 = scmp.ne.s32.totalorder %s85, %s88
    %p94 = scmp.eq.s32.totalorder %s23, 0
    %p95 = por %p93, %p94
    %p96 = scmp.ne.s32.totalorder %s85, %s88
    %p97 = scmp.eq.s32.totalorder %s28, 1
    %p98 = por %p96, %p97
    %p99 = scmp.ne.s32.totalorder %s88, %s89
    %p100 = scmp.eq.s32.totalorder %s28, 0
    %p101 = por %p99, %p100
    %p102 = scmp.ne.s32.totalorder %s88, %s89
    %p103 = scmp.eq.s32.totalorder %s29, 1
    %p104 = por %p102, %p103
    %p106 = scmp.ne.s32.totalorder %s89, %s105
    %p107 = scmp.eq.s32.totalorder %s29, 0
    %p108 = por %p106, %p107
    %s110 = sadd.s32 %s109, 1
    %p113 = scmp.eq.s32.totalorder %s23, 1
    %p114 = scmp.ne.s32.totalorder %s109, %s111
    %p115 = scmp.eq.s32.totalorder %s23, 0
    %p116 = por %p114, %p115
    %p117 = scmp.ne.s32.totalorder %s109, %s111
    %p118 = scmp.eq.s32.totalorder %s28, 1
    %p119 = por %p117, %p118
    %p120 = scmp.ne.s32.totalorder %s111, %s112
    %p121 = scmp.eq.s32.totalorder %s28, 0
    %p122 = por %p120, %p121
    %p123 = scmp.ne.s32.totalorder %s111, %s112
    %p124 = scmp.eq.s32.totalorder %s29, 1
    %p125 = por %p123, %p124
    %p127 = scmp.ne.s32.totalorder %s112, %s126
    %p128 = scmp.eq.s32.totalorder %s29, 0
    %p129 = por %p127, %p128
    %s131 = sadd.s32 %s130, 1
    %p134 = scmp.eq.s32.totalorder %s23, 1
    %p135 = scmp.ne.s32.totalorder %s130, %s132
    %p136 = scmp.eq.s32.totalorder %s23, 0
    %p137 = por %p135, %p136
    %p138 = scmp.ne.s32.totalorder %s130, %s132
    %p139 = scmp.eq.s32.totalorder %s28, 1
    %p140 = por %p138, %p139
    %p141 = scmp.ne.s32.totalorder %s132, %s133
    %p142 = scmp.eq.s32.totalorder %s28, 0
    %p143 = por %p141, %p142
    %p144 = scmp.ne.s32.totalorder %s132, %s133
    %p145 = scmp.eq.s32.totalorder %s29, 1
    %p146 = por %p144, %p145
    %p148 = scmp.ne.s32.totalorder %s133, %s147
    %p149 = scmp.eq.s32.totalorder %s29, 0
    %p150 = por %p148, %p149
    %s152 = sadd.s32 %s151, 1
    %p155 = scmp.eq.s32.totalorder %s23, 1
    %p156 = scmp.ne.s32.totalorder %s151, %s153
    %p157 = scmp.eq.s32.totalorder %s23, 0
    %p158 = por %p156, %p157
    %p159 = scmp.ne.s32.totalorder %s151, %s153
    %p160 = scmp.eq.s32.totalorder %s28, 1
    %p161 = por %p159, %p160
    %p162 = scmp.ne.s32.totalorder %s153, %s154
    %p163 = scmp.eq.s32.totalorder %s28, 0
    %p164 = por %p162, %p163
    %p165 = scmp.ne.s32.totalorder %s153, %s154
    %p166 = scmp.eq.s32.totalorder %s29, 1
    %p167 = por %p165, %p166
    %p169 = scmp.ne.s32.totalorder %s154, %s168
    %p170 = scmp.eq.s32.totalorder %s29, 0
    %p171 = por %p169, %p170
    %s173 = sadd.s32 %s172, 1
    %p176 = scmp.eq.s32.totalorder %s23, 1
    %p177 = scmp.ne.s32.totalorder %s172, %s174
    %p178 = scmp.eq.s32.totalorder %s23, 0
    %p179 = por %p177, %p178
    %p180 = scmp.ne.s32.totalorder %s172, %s174
    %p181 = scmp.eq.s32.totalorder %s28, 1
    %p182 = por %p180, %p181
    %p183 = scmp.ne.s32.totalorder %s174, %s175
    %p184 = scmp.eq.s32.totalorder %s28, 0
    %p185 = por %p183, %p184
    %p186 = scmp.ne.s32.totalorder %s174, %s175
    %p187 = scmp.eq.s32.totalorder %s29, 1
    %p188 = por %p186, %p187
    %p190 = scmp.ne.s32.totalorder %s175, %s189
    %p191 = scmp.eq.s32.totalorder %s29, 0
    %p192 = por %p190, %p191
    %s194 = sadd.s32 %s193, 1
    %p197 = scmp.eq.s32.totalorder %s23, 1
    %p198 = scmp.ne.s32.totalorder %s193, %s195
    %p199 = scmp.eq.s32.totalorder %s23, 0
    %p200 = por %p198, %p199
    %p201 = scmp.ne.s32.totalorder %s193, %s195
    %p202 = scmp.eq.s32.totalorder %s28, 1
    %p203 = por %p201, %p202
    %p204 = scmp.ne.s32.totalorder %s195, %s196
    %p205 = scmp.eq.s32.totalorder %s28, 0
    %p206 = por %p204, %p205
    %p207 = scmp.ne.s32.totalorder %s195, %s196
    %p208 = scmp.eq.s32.totalorder %s29, 1
    %p209 = por %p207, %p208
    %p211 = scmp.ne.s32.totalorder %s196, %s210
    %p212 = scmp.eq.s32.totalorder %s29, 0
    %p213 = por %p211, %p212
    %s215 = sadd.s32 %s214, 1
    %p218 = scmp.eq.s32.totalorder %s23, 1
    %p219 = scmp.ne.s32.totalorder %s214, %s216
    %p220 = scmp.eq.s32.totalorder %s23, 0
    %p221 = por %p219, %p220
    %p222 = scmp.ne.s32.totalorder %s214, %s216
    %p223 = scmp.eq.s32.totalorder %s28, 1
    %p224 = por %p222, %p223
    %p225 = scmp.ne.s32.totalorder %s216, %s217
    %p226 = scmp.eq.s32.totalorder %s28, 0
    %p227 = por %p225, %p226
    %p228 = scmp.ne.s32.totalorder %s216, %s217
    %p229 = scmp.eq.s32.totalorder %s29, 1
    %p230 = por %p228, %p229
    %p232 = scmp.ne.s32.totalorder %s217, %s231
    %p233 = scmp.eq.s32.totalorder %s29, 0
    %p234 = por %p232, %p233
    %s236 = sadd.s32 %s235, 1
    %p239 = scmp.eq.s32.totalorder %s23, 1
    %p240 = scmp.ne.s32.totalorder %s235, %s237
    %p241 = scmp.eq.s32.totalorder %s23, 0
    %p242 = por %p240, %p241
    %p243 = scmp.ne.s32.totalorder %s235, %s237
    %p244 = scmp.eq.s32.totalorder %s28, 1
    %p245 = por %p243, %p244
    %p246 = scmp.ne.s32.totalorder %s237, %s238
    %p247 = scmp.eq.s32.totalorder %s28, 0
    %p248 = por %p246, %p247
    %p249 = scmp.ne.s32.totalorder %s237, %s238
    %p250 = scmp.eq.s32.totalorder %s29, 1
    %p251 = por %p249, %p250
    %p253 = scmp.ne.s32.totalorder %s238, %s252
    %p254 = scmp.eq.s32.totalorder %s29, 0
    %p255 = por %p253, %p254
    %s257 = sadd.s32 %s256, 1
    %p260 = scmp.eq.s32.totalorder %s23, 1
    %p261 = scmp.ne.s32.totalorder %s256, %s258
    %p262 = scmp.eq.s32.totalorder %s23, 0
    %p263 = por %p261, %p262
    %p264 = scmp.ne.s32.totalorder %s256, %s258
    %p265 = scmp.eq.s32.totalorder %s28, 1
    %p266 = por %p264, %p265
    %p267 = scmp.ne.s32.totalorder %s258, %s259
    %p268 = scmp.eq.s32.totalorder %s28, 0
    %p269 = por %p267, %p268
    %p270 = scmp.ne.s32.totalorder %s258, %s259
    %p271 = scmp.eq.s32.totalorder %s29, 1
    %p272 = por %p270, %p271
    %p274 = scmp.ne.s32.totalorder %s259, %s273
    %p275 = scmp.eq.s32.totalorder %s29, 0
    %p276 = por %p274, %p275
    %s278 = sadd.s32 %s277, 1
    %p281 = scmp.eq.s32.totalorder %s23, 1
    %p282 = scmp.ne.s32.totalorder %s277, %s279
    %p283 = scmp.eq.s32.totalorder %s23, 0
    %p284 = por %p282, %p283
    %p285 = scmp.ne.s32.totalorder %s277, %s279
    %p286 = scmp.eq.s32.totalorder %s28, 1
    %p287 = por %p285, %p286
    %p288 = scmp.ne.s32.totalorder %s279, %s280
    %p289 = scmp.eq.s32.totalorder %s28, 0
    %p290 = por %p288, %p289
    %p291 = scmp.ne.s32.totalorder %s279, %s280
    %p292 = scmp.eq.s32.totalorder %s29, 1
    %p293 = por %p291, %p292
    %p295 = scmp.ne.s32.totalorder %s280, %s294
    %p296 = scmp.eq.s32.totalorder %s29, 0
    %p297 = por %p295, %p296
    %s299 = sadd.s32 %s298, 1
    %p302 = scmp.eq.s32.totalorder %s23, 1
    %p303 = scmp.ne.s32.totalorder %s298, %s300
    %p304 = scmp.eq.s32.totalorder %s23, 0
    %p305 = por %p303, %p304
    %p306 = scmp.ne.s32.totalorder %s298, %s300
    %p307 = scmp.eq.s32.totalorder %s28, 1
    %p308 = por %p306, %p307
    %p309 = scmp.ne.s32.totalorder %s300, %s301
    %p310 = scmp.eq.s32.totalorder %s28, 0
    %p311 = por %p309, %p310
    %p312 = scmp.ne.s32.totalorder %s300, %s301
    %p313 = scmp.eq.s32.totalorder %s29, 1
    %p314 = por %p312, %p313
    %p316 = scmp.ne.s32.totalorder %s301, %s315
    %p317 = scmp.eq.s32.totalorder %s29, 0
    %p318 = por %p316, %p317
    %s320 = sadd.s32 %s319, 1
    %p323 = scmp.eq.s32.totalorder %s23, 1
    %p324 = scmp.ne.s32.totalorder %s319, %s321
    %p325 = scmp.eq.s32.totalorder %s23, 0
    %p326 = por %p324, %p325
    %p327 = scmp.ne.s32.totalorder %s319, %s321
    %p328 = scmp.eq.s32.totalorder %s28, 1
    %p329 = por %p327, %p328
    %p330 = scmp.ne.s32.totalorder %s321, %s322
    %p331 = scmp.eq.s32.totalorder %s28, 0
    %p332 = por %p330, %p331
    %p333 = scmp.ne.s32.totalorder %s321, %s322
    %p334 = scmp.eq.s32.totalorder %s29, 1
    %p335 = por %p333, %p334
    %p337 = scmp.ne.s32.totalorder %s322, %s336
    %p338 = scmp.eq.s32.totalorder %s29, 0
    %p339 = por %p337, %p338
    %s341 = sadd.s32 %s340, 1
    %p344 = scmp.eq.s32.totalorder %s23, 1
    %p345 = scmp.ne.s32.totalorder %s340, %s342
    %p346 = scmp.eq.s32.totalorder %s23, 0
    %p347 = por %p345, %p346
    %p348 = scmp.ne.s32.totalorder %s340, %s342
    %p349 = scmp.eq.s32.totalorder %s28, 1
    %p350 = por %p348, %p349
    %p351 = scmp.ne.s32.totalorder %s342, %s343
    %p352 = scmp.eq.s32.totalorder %s28, 0
    %p353 = por %p351, %p352
    %p354 = scmp.ne.s32.totalorder %s342, %s343
    %p355 = scmp.eq.s32.totalorder %s29, 1
    %p356 = por %p354, %p355
    %p358 = scmp.ne.s32.totalorder %s343, %s357
    %p359 = scmp.eq.s32.totalorder %s29, 0
    %p360 = por %p358, %p359
    %s362 = sadd.s32 %s361, 1
    %p365 = scmp.eq.s32.totalorder %s23, 1
    %p366 = scmp.ne.s32.totalorder %s361, %s363
    %p367 = scmp.eq.s32.totalorder %s23, 0
    %p368 = por %p366, %p367
    %p369 = scmp.ne.s32.totalorder %s361, %s363
    %p370 = scmp.eq.s32.totalorder %s28, 1
    %p371 = por %p369, %p370
    %p372 = scmp.ne.s32.totalorder %s363, %s364
    %p373 = scmp.eq.s32.totalorder %s28, 0
    %p374 = por %p372, %p373
    %p375 = scmp.ne.s32.totalorder %s363, %s364
    %p376 = scmp.eq.s32.totalorder %s29, 1
    %p377 = por %p375, %p376
    %p379 = scmp.ne.s32.totalorder %s364, %s378
    %p380 = scmp.eq.s32.totalorder %s29, 0
    %p381 = por %p379, %p380
    %s383 = sadd.s32 %s382, 1
    %p386 = scmp.eq.s32.totalorder %s23, 1
    %p387 = scmp.ne.s32.totalorder %s382, %s384
    %p388 = scmp.eq.s32.totalorder %s23, 0
    %p389 = por %p387, %p388
    %p390 = scmp.ne.s32.totalorder %s382, %s384
    %p391 = scmp.eq.s32.totalorder %s28, 1
    %p392 = por %p390, %p391
    %p393 = scmp.ne.s32.totalorder %s384, %s385
    %p394 = scmp.eq.s32.totalorder %s28, 0
    %p395 = por %p393, %p394
    %p396 = scmp.ne.s32.totalorder %s384, %s385
    %p397 = scmp.eq.s32.totalorder %s29, 1
    %p398 = por %p396, %p397
    %p400 = scmp.ne.s32.totalorder %s385, %s399
    %p401 = scmp.eq.s32.totalorder %s29, 0
    %p402 = por %p400, %p401
    %s403 = ssub.s32 %s23, %s30
    %p404 = scmp.eq.s32.totalorder %s403, 0
    %s406 = sadd.s32 %s405, 1
    %s407 = scalar_select %p404, %s405, %s406
    %p410 = pneg %p404
    %p411 = scmp.eq.s32.totalorder %s23, 1
    %p412 = por %p410, %p411
    %p413 = scmp.ne.s32.totalorder %s405, %s408
    %p414 = scmp.eq.s32.totalorder %s23, 0
    %p415 = por %p413, %p414
    %p416 = scmp.ne.s32.totalorder %s405, %s408
    %p417 = scmp.eq.s32.totalorder %s28, 1
    %p418 = por %p416, %p417
    %p419 = scmp.ne.s32.totalorder %s408, %s409
    %p420 = scmp.eq.s32.totalorder %s28, 0
    %p421 = por %p419, %p420
    %p422 = scmp.ne.s32.totalorder %s408, %s409
    %p423 = scmp.eq.s32.totalorder %s29, 1
    %p424 = por %p422, %p423
    %p426 = scmp.ne.s32.totalorder %s409, %s425
    %p427 = scmp.eq.s32.totalorder %s29, 0
    %p428 = por %p426, %p427
    %p429 = scmp.le.s32.totalorder 1, %s23
    %p430 = scmp.lt.s32.totalorder %s23, 3
    %p431 = pnand %p429, %p430
    %p432 = pneg %p431
    // Predicated region
    $region9: #{graphdetr_forward.7} parent=5 // pred_check
      _
    $region10: #{graphdetr_forward.7} parent=5 // pred_check_branch
      %434 = sbr.rel (%p431) target = $region12
    $region11: #{graphdetr_forward.7} parent=5 // pred_region
      %s435 = ssub.s32 %s23, 1
      // Predicated region
      $region13: #{graphdetr_forward.7} parent=11 // pred_check
        %p436 = pneg %p122
      $region14: #{graphdetr_forward.7} parent=11 // pred_check_branch
        %438 = sbr.rel (%p436) target = $region16
      $region15: #{graphdetr_forward.7} parent=11 // pred_region
        _
      $region16: #{graphdetr_forward.7} parent=11 // pred_fallthru
        _
      // Predicated region
      $region17: #{graphdetr_forward.7} parent=11 // pred_check
        %p439 = pneg %p143
      $region18: #{graphdetr_forward.7} parent=11 // pred_check_branch
        %441 = sbr.rel (%p439) target = $region20
      $region19: #{graphdetr_forward.7} parent=11 // pred_region
        _
      $region20: #{graphdetr_forward.7} parent=11 // pred_fallthru
        _
      // Predicated region
      $region21: #{graphdetr_forward.7} parent=11 // pred_check
        %p442 = pneg %p164
      $region22: #{graphdetr_forward.7} parent=11 // pred_check_branch
        %444 = sbr.rel (%p442) target = $region24
      $region23: #{graphdetr_forward.7} parent=11 // pred_region
        _
      $region24: #{graphdetr_forward.7} parent=11 // pred_fallthru
        _
      // Predicated region
      $region25: #{graphdetr_forward.7} parent=11 // pred_check
        %p445 = pneg %p185
      $region26: #{graphdetr_forward.7} parent=11 // pred_check_branch
        %447 = sbr.rel (%p445) target = $region28
      $region27: #{graphdetr_forward.7} parent=11 // pred_region
        _
      $region28: #{graphdetr_forward.7} parent=11 // pred_fallthru
        _
      // Predicated region
      $region29: #{graphdetr_forward.7} parent=11 // pred_check
        %p448 = pneg %p206
      $region30: #{graphdetr_forward.7} parent=11 // pred_check_branch
        %450 = sbr.rel (%p448) target = $region32
      $region31: #{graphdetr_forward.7} parent=11 // pred_region
        _
      $region32: #{graphdetr_forward.7} parent=11 // pred_fallthru
        _
      // Predicated region
      $region33: #{graphdetr_forward.7} parent=11 // pred_check
        %p451 = pneg %p227
      $region34: #{graphdetr_forward.7} parent=11 // pred_check_branch
        %453 = sbr.rel (%p451) target = $region36
      $region35: #{graphdetr_forward.7} parent=11 // pred_region
        _
      $region36: #{graphdetr_forward.7} parent=11 // pred_fallthru
        _
      // Predicated region
      $region37: #{graphdetr_forward.7} parent=11 // pred_check
        %p454 = pneg %p248
      $region38: #{graphdetr_forward.7} parent=11 // pred_check_branch
        %456 = sbr.rel (%p454) target = $region40
      $region39: #{graphdetr_forward.7} parent=11 // pred_region
        _
      $region40: #{graphdetr_forward.7} parent=11 // pred_fallthru
        _
      // Predicated region
      $region41: #{graphdetr_forward.7} parent=11 // pred_check
        %p457 = pneg %p269
      $region42: #{graphdetr_forward.7} parent=11 // pred_check_branch
        %459 = sbr.rel (%p457) target = $region44
      $region43: #{graphdetr_forward.7} parent=11 // pred_region
        _
      $region44: #{graphdetr_forward.7} parent=11 // pred_fallthru
        _
      // Predicated region
      $region45: #{graphdetr_forward.7} parent=11 // pred_check
        %p460 = pneg %p290
      $region46: #{graphdetr_forward.7} parent=11 // pred_check_branch
        %462 = sbr.rel (%p460) target = $region48
      $region47: #{graphdetr_forward.7} parent=11 // pred_region
        _
      $region48: #{graphdetr_forward.7} parent=11 // pred_fallthru
        _
      // Predicated region
      $region49: #{graphdetr_forward.7} parent=11 // pred_check
        %p463 = pneg %p311
      $region50: #{graphdetr_forward.7} parent=11 // pred_check_branch
        %465 = sbr.rel (%p463) target = $region52
      $region51: #{graphdetr_forward.7} parent=11 // pred_region
        _
      $region52: #{graphdetr_forward.7} parent=11 // pred_fallthru
        _
      // Predicated region
      $region53: #{graphdetr_forward.7} parent=11 // pred_check
        %p466 = pneg %p332
      $region54: #{graphdetr_forward.7} parent=11 // pred_check_branch
        %468 = sbr.rel (%p466) target = $region56
      $region55: #{graphdetr_forward.7} parent=11 // pred_region
        _
      $region56: #{graphdetr_forward.7} parent=11 // pred_fallthru
        _
      // Predicated region
      $region57: #{graphdetr_forward.7} parent=11 // pred_check
        %p469 = pneg %p353
      $region58: #{graphdetr_forward.7} parent=11 // pred_check_branch
        %471 = sbr.rel (%p469) target = $region60
      $region59: #{graphdetr_forward.7} parent=11 // pred_region
        _
      $region60: #{graphdetr_forward.7} parent=11 // pred_fallthru
        _
      // Predicated region
      $region61: #{graphdetr_forward.7} parent=11 // pred_check
        %p472 = pneg %p374
      $region62: #{graphdetr_forward.7} parent=11 // pred_check_branch
        %474 = sbr.rel (%p472) target = $region64
      $region63: #{graphdetr_forward.7} parent=11 // pred_region
        _
      $region64: #{graphdetr_forward.7} parent=11 // pred_fallthru
        _
      // Predicated region
      $region65: #{graphdetr_forward.7} parent=11 // pred_check
        %p475 = pneg %p395
      $region66: #{graphdetr_forward.7} parent=11 // pred_check_branch
        %477 = sbr.rel (%p475) target = $region68
      $region67: #{graphdetr_forward.7} parent=11 // pred_region
        _
      $region68: #{graphdetr_forward.7} parent=11 // pred_fallthru
        _
    $region12: #{graphdetr_forward.7} parent=5 // pred_fallthru
      _
    %p478 = scmp.lt.s32.totalorder %s23, 2
    // Predicated region
    $region69: #{graphdetr_forward.7} parent=5 // pred_check
      %p479 = pneg %p478
    $region70: #{graphdetr_forward.7} parent=5 // pred_check_branch
      %481 = sbr.rel (%p479) target = $region72
    $region71: #{graphdetr_forward.7} parent=5 // pred_region
      // Predicated region
      $region73: #{graphdetr_forward.7} parent=71 // pred_check
        %p482 = pneg %p43
      $region74: #{graphdetr_forward.7} parent=71 // pred_check_branch
        %484 = sbr.rel (%p482) target = $region76
      $region75: #{graphdetr_forward.7} parent=71 // pred_region
        %p485 = scmp.lt.s32.totalorder %s23, 1
        %s486 = scalar_select %p485, %s23, 1
        %s487 = smul.addr %s486, 8
        %s488 = smul.addr %s487, 8
        %s489 = scalar_lea.vmem %s0, %s488
      $region76: #{graphdetr_forward.7} parent=71 // pred_fallthru
        _
      // Predicated region
      $region77: #{graphdetr_forward.7} parent=71 // pred_check
        %p490 = pneg %p69
      $region78: #{graphdetr_forward.7} parent=71 // pred_check_branch
        %492 = sbr.rel (%p490) target = $region80
      $region79: #{graphdetr_forward.7} parent=71 // pred_region
        %p493 = scmp.lt.s32.totalorder %s23, 1
        %s494 = scalar_select %p493, %s23, 1
        %s495 = smul.addr %s494, 8
        %s496 = smul.addr %s495, 8
        %s497 = scalar_lea.vmem %s1, %s496
      $region80: #{graphdetr_forward.7} parent=71 // pred_fallthru
        _
      // Predicated region
      $region81: #{graphdetr_forward.7} parent=71 // pred_check
        %p498 = pneg %p95
      $region82: #{graphdetr_forward.7} parent=71 // pred_check_branch
        %500 = sbr.rel (%p498) target = $region84
      $region83: #{graphdetr_forward.7} parent=71 // pred_region
        %p501 = scmp.lt.s32.totalorder %s23, 1
        %s502 = scalar_select %p501, %s23, 1
        %s503 = scalar_lea.vmem %s2, %s502
      $region84: #{graphdetr_forward.7} parent=71 // pred_fallthru
        _
    $region72: #{graphdetr_forward.7} parent=5 // pred_fallthru
      _
    %p504 = scmp.le.s32.totalorder 1, %s23
    %p505 = scmp.lt.s32.totalorder %s23, 3
    %p506 = pnand %p504, %p505
    %p507 = pneg %p506
    // Predicated region
    $region85: #{graphdetr_forward.7} parent=5 // pred_check
      _
    $region86: #{graphdetr_forward.7} parent=5 // pred_check_branch
      %509 = sbr.rel (%p506) target = $region88
    $region87: #{graphdetr_forward.7} parent=5 // pred_region
      %s510 = ssub.s32 %s23, 1
      %p511 = scmp.lt.s32.totalorder %s28, 1
      %s512 = scalar_select %p511, %s28, 1
      %s513 = smul.addr %s512, 8
      %s514 = smul.addr %s513, 8
      %s515 = scalar_lea.vmem %s0, %s514
      %p516 = pneg %p49
      %p517 = pneg %p46
      %p518 = scmp.lt.s32.totalorder %s28, 1
      %s519 = scalar_select %p518, %s28, 1
      %s520 = smul.addr %s519, 8
      %s521 = smul.addr %s520, 8
      %s522 = scalar_lea.vmem %s1, %s521
      %p523 = pneg %p75
      %p524 = pneg %p72
      %p525 = scmp.lt.s32.totalorder %s28, 1
      %s526 = scalar_select %p525, %s28, 1
      %s527 = scalar_lea.vmem %s2, %s526
      %p528 = pneg %p101
      %p529 = pneg %p98
      %p530 = pneg %p122
      %p531 = pneg %p119
      %p532 = pneg %p143
      %p533 = pneg %p140
      %p534 = pneg %p164
      %p535 = pneg %p161
      %p536 = pneg %p185
      %p537 = pneg %p182
      %p538 = pneg %p206
      %p539 = pneg %p203
      %p540 = pneg %p227
      %p541 = pneg %p224
      %p542 = pneg %p248
      %p543 = pneg %p245
      %p544 = pneg %p269
      %p545 = pneg %p266
      %p546 = pneg %p290
      %p547 = pneg %p287
      %p548 = pneg %p311
      %p549 = pneg %p308
      %p550 = pneg %p332
      %p551 = pneg %p329
      %p552 = pneg %p353
      %p553 = pneg %p350
      %p554 = pneg %p374
      %p555 = pneg %p371
      %p556 = pneg %p395
      %p557 = pneg %p392
      %p558 = pneg %p421
      %p559 = pneg %p418
      %p560 = scmp.lt.s32.totalorder %s28, 1
      %s561 = scalar_select %p560, %s28, 1
      %s562 = smul.addr %s561, 8
      %s563 = smul.addr %s562, 8
      %s564 = scalar_lea.vmem %s17, %s563
      %p565 = scmp.lt.s32.totalorder %s28, 1
      %s566 = scalar_select %p565, %s28, 1
      %s567 = smul.addr %s566, 8
      %s568 = smul.addr %s567, 8
      %s569 = scalar_lea.vmem %s0, %s568
      %p570 = scmp.lt.s32.totalorder %s28, 1
      %s571 = scalar_select %p570, %s28, 1
      %s572 = smul.addr %s571, 8
      %s573 = smul.addr %s572, 8
      %s574 = scalar_lea.vmem %s1, %s573
      %p575 = scmp.lt.s32.totalorder %s28, 1
      %s576 = scalar_select %p575, %s28, 1
      %s577 = scalar_lea.vmem %s2, %s576
      %p578 = scmp.lt.s32.totalorder %s28, 1
      %s579 = scalar_select %p578, %s28, 1
      %s580 = smul.addr %s579, 8
      %s581 = smul.addr %s580, 8
      %s582 = scalar_lea.vmem %s17, %s581
      %v584 = vld [vmem:[%s569] sm:$0xff]
      %v585 = vld [vmem:[%s569 + $0x8] sm:$0xff]
      %v586 = vld [vmem:[%s569 + $0x10] sm:$0xff]
      %v587 = vld [vmem:[%s569 + $0x18] sm:$0xff]
      %v588 = vld [vmem:[%s569 + $0x20] sm:$0xff]
      %v589 = vld [vmem:[%s569 + $0x28] sm:$0xff]
      %v590 = vld [vmem:[%s569 + $0x30] sm:$0xff]
      %v591 = vld [vmem:[%s569 + $0x38] sm:$0xff]
      %v592 = vld [vmem:[%s574] sm:$0xff]
      %v593 = vld [vmem:[%s574 + $0x8] sm:$0xff]
      %v594 = vld [vmem:[%s574 + $0x10] sm:$0xff]
      %v595 = vld [vmem:[%s574 + $0x18] sm:$0xff]
      %v596 = vld [vmem:[%s574 + $0x20] sm:$0xff]
      %v597 = vld [vmem:[%s574 + $0x28] sm:$0xff]
      %v598 = vld [vmem:[%s574 + $0x30] sm:$0xff]
      %v599 = vld [vmem:[%s574 + $0x38] sm:$0xff]
      %v600 = vld [vmem:[%s577] sm:$0x1]
      %v601 = vadd.f32 %v584, %v592
      %v602 = vadd.f32 %v585, %v593
      %v603 = vadd.f32 %v586, %v594
      %v604 = vadd.f32 %v587, %v595
      %v605 = vadd.f32 %v588, %v596
      %v606 = vadd.f32 %v589, %v597
      %v607 = vadd.f32 %v590, %v598
      %v608 = vadd.f32 %v591, %v599
      %v609 = vpack.c.bf16 %v602, %v601
      %v610 = vpack.c.bf16 %v604, %v603
      %v611 = vpack.c.bf16 %v606, %v605
      %v612 = vpack.c.bf16 %v608, %v607
      %v613 = vld [vmem:[%s3] sm:$0xf]
      %v614 = vld [vmem:[%s3 + $0x4] sm:$0xf]
      %v615 = vld [vmem:[%s3 + $0x8] sm:$0xf]
      %v616 = vld [vmem:[%s3 + $0xc] sm:$0xf]
      %v617 = vld [vmem:[%s4] sm:$0x1]
      %v619 = vperm.slane %v617, 0
      %v625 = vunpack.c.l.b16 %v613
      %v626 = vunpack.c.l.b16 %v614
      %v627 = vunpack.c.l.b16 %v615
      %v628 = vunpack.c.l.b16 %v616
      %v629 = vpack.c.b16 %v626, %v625
      %v630 = vpack.c.b16 %v628, %v627
      %vm633 = vcmask 261120
      %v635 = vsel %vm633, %v609, 0
      %v638 = vsel %vm633, %v610, 0
      %v641 = vsel %vm633, %v611, 0
      %v644 = vsel %vm633, %v612, 0
      %646 = vmatpush.bf16.msra.mxu0 0
      %647 = vmatpush.bf16.msra.mxu0 0
      %648 = vmatpush.bf16.msra.mxu0 0
      %649 = vmatpush.bf16.msra.mxu0 0
      %650 = vmatpush.bf16.msra.mxu0 0
      %651 = vmatpush.bf16.msra.mxu0 0
      %652 = vmatpush.bf16.msra.mxu0 %v630
      %653 = vmatpush.bf16.msra.mxu0 %v629
      %654 = vmatmul.bf16.gmra.mxu0 %v635
      %v655 = vpop.f32.mrf.mxu0
      %v656 = vadd.f32 %v619, %v655
      %v657 = vpop.f32.mrf.mxu0
      %v658 = vadd.f32 %v619, %v657
      %659 = vmatmul.bf16.gmra.mxu0 %v638
      %v660 = vpop.f32.mrf.mxu0
      %v661 = vadd.f32 %v619, %v660
      %v662 = vpop.f32.mrf.mxu0
      %v663 = vadd.f32 %v619, %v662
      %664 = vmatmul.bf16.gmra.mxu0 %v641
      %v665 = vpop.f32.mrf.mxu0
      %v666 = vadd.f32 %v619, %v665
      %v667 = vpop.f32.mrf.mxu0
      %v668 = vadd.f32 %v619, %v667
      %669 = vmatmul.bf16.gmra.mxu0 %v644
      %v670 = vpop.f32.mrf.mxu0
      %v671 = vadd.f32 %v619, %v670
      %v672 = vpop.f32.mrf.mxu0
      %v673 = vadd.f32 %v619, %v672
      %674 = vdwg.mxu0
      %v675 = vpack.c.bf16 %v585, %v584
      %v676 = vpack.c.bf16 %v587, %v586
      %v677 = vpack.c.bf16 %v589, %v588
      %v678 = vpack.c.bf16 %v591, %v590
      %v679 = vld [vmem:[%s5] sm:$0xf]
      %v680 = vld [vmem:[%s5 + $0x4] sm:$0xf]
      %v681 = vld [vmem:[%s5 + $0x8] sm:$0xf]
      %v682 = vld [vmem:[%s5 + $0xc] sm:$0xf]
      %v683 = vld [vmem:[%s6] sm:$0x1]
      %v685 = vperm.slane %v683, 0
      %v691 = vunpack.c.l.b16 %v679
      %v692 = vunpack.c.l.b16 %v680
      %v693 = vunpack.c.l.b16 %v681
      %v694 = vunpack.c.l.b16 %v682
      %v695 = vpack.c.b16 %v692, %v691
      %v696 = vpack.c.b16 %v694, %v693
      %v700 = vsel %vm633, %v675, 0
      %v703 = vsel %vm633, %v676, 0
      %v706 = vsel %vm633, %v677, 0
      %v709 = vsel %vm633, %v678, 0
      %711 = vmatpush.bf16.msra.mxu0 0
      %712 = vmatpush.bf16.msra.mxu0 0
      %713 = vmatpush.bf16.msra.mxu0 0
      %714 = vmatpush.bf16.msra.mxu0 0
      %715 = vmatpush.bf16.msra.mxu0 0
      %716 = vmatpush.bf16.msra.mxu0 0
      %717 = vmatpush.bf16.msra.mxu0 %v696
      %718 = vmatpush.bf16.msra.mxu0 %v695
      %719 = vmatmul.bf16.gmra.mxu0 %v700
      %v720 = vpop.f32.mrf.mxu0
      %v721 = vadd.f32 %v685, %v720
      %v722 = vpop.f32.mrf.mxu0
      %v723 = vadd.f32 %v685, %v722
      %724 = vmatmul.bf16.gmra.mxu0 %v703
      %v725 = vpop.f32.mrf.mxu0
      %v726 = vadd.f32 %v685, %v725
      %v727 = vpop.f32.mrf.mxu0
      %v728 = vadd.f32 %v685, %v727
      %729 = vmatmul.bf16.gmra.mxu0 %v706
      %v730 = vpop.f32.mrf.mxu0
      %v731 = vadd.f32 %v685, %v730
      %v732 = vpop.f32.mrf.mxu0
      %v733 = vadd.f32 %v685, %v732
      %734 = vmatmul.bf16.gmra.mxu0 %v709
      %v735 = vpop.f32.mrf.mxu0
      %v736 = vadd.f32 %v685, %v735
      %v737 = vpop.f32.mrf.mxu0
      %v738 = vadd.f32 %v685, %v737
      %739 = vdwg.mxu0
      %v740 = vpack.c.bf16 %v658, %v656
      %v741 = vpack.c.bf16 %v663, %v661
      %v742 = vpack.c.bf16 %v668, %v666
      %v743 = vpack.c.bf16 %v673, %v671
      %v745 = vperm.slane %v600, 0
      %751 = vrot.lane.b32.xlu0 %v740, 96
      %v752 = vpop.permute.xlu0 %751
      %753 = vrot.lane.b32.xlu0 %v741, 96
      %v754 = vpop.permute.xlu0 %753
      %755 = vrot.lane.b32.xlu0 %v742, 96
      %v756 = vpop.permute.xlu0 %755
      %757 = vrot.lane.b32.xlu0 %v743, 96
      %v758 = vpop.permute.xlu0 %757
      %vm759 = vcmask 64512
      %v761 = vsel %vm759, %v740, 0
      %v764 = vsel %vm759, %v741, 0
      %v767 = vsel %vm759, %v742, 0
      %v770 = vsel %vm759, %v743, 0
      %v773 = vsel %vm759, %v752, 0
      %v776 = vsel %vm759, %v754, 0
      %v779 = vsel %vm759, %v756, 0
      %v782 = vsel %vm759, %v758, 0
      %784 = vmatpush.bf16.xpose.msra.mxu0 0
      %785 = vmatpush.bf16.xpose.msra.mxu0 0
      %786 = vmatpush.bf16.xpose.msra.mxu0 0
      %787 = vmatpush.bf16.xpose.msra.mxu0 0
      %788 = vmatpush.bf16.xpose.msra.mxu0 %v782
      %789 = vmatpush.bf16.xpose.msra.mxu0 %v779
      %790 = vmatpush.bf16.xpose.msra.mxu0 %v776
      %791 = vmatpush.bf16.xpose.msra.mxu0 %v773
      %792 = vmatmul.bf16.gmra.mxu0 %v761
      %v793 = vpop.f32.mrf.mxu0
      %v794 = vadd.f32 %v745, %v793
      %v795 = vpop.f32.mrf.mxu0
      %v796 = vadd.f32 %v745, %v795
      %797 = vmatmul.bf16.gmra.mxu0 %v764
      %v798 = vpop.f32.mrf.mxu0
      %v799 = vadd.f32 %v745, %v798
      %v800 = vpop.f32.mrf.mxu0
      %v801 = vadd.f32 %v745, %v800
      %802 = vmatmul.bf16.gmra.mxu0 %v767
      %v803 = vpop.f32.mrf.mxu0
      %v804 = vadd.f32 %v745, %v803
      %v805 = vpop.f32.mrf.mxu0
      %v806 = vadd.f32 %v745, %v805
      %807 = vmatmul.bf16.gmra.mxu0 %v770
      %v808 = vpop.f32.mrf.mxu0
      %v809 = vadd.f32 %v745, %v808
      %v810 = vpop.f32.mrf.mxu0
      %v811 = vadd.f32 %v745, %v810
      %812 = vdwg.mxu0
      %vm813 = vcmask 523264
      %v814 = vsel %vm813, %v794, -inf
      %815 = vmax.xlane.f32.xlu0 %v814
      %v816 = vpop.xlane.xlu0 %815
      %v817 = vsel %vm813, %v796, -inf
      %818 = vmax.xlane.f32.xlu0 %v817
      %v819 = vpop.xlane.xlu0 %818
      %v820 = vsel %vm813, %v799, -inf
      %821 = vmax.xlane.f32.xlu0 %v820
      %v822 = vpop.xlane.xlu0 %821
      %v823 = vsel %vm813, %v801, -inf
      %824 = vmax.xlane.f32.xlu0 %v823
      %v825 = vpop.xlane.xlu0 %824
      %v826 = vsel %vm813, %v804, -inf
      %827 = vmax.xlane.f32.xlu0 %v826
      %v828 = vpop.xlane.xlu0 %827
      %v829 = vsel %vm813, %v806, -inf
      %830 = vmax.xlane.f32.xlu0 %v829
      %v831 = vpop.xlane.xlu0 %830
      %v832 = vsel %vm813, %v809, -inf
      %833 = vmax.xlane.f32.xlu0 %v832
      %v834 = vpop.xlane.xlu0 %833
      %v835 = vsel %vm813, %v811, -inf
      %836 = vmax.xlane.f32.xlu0 %v835
      %v837 = vpop.xlane.xlu0 %836
      %v838 = vsub.f32 %v794, %v816
      %v839 = vsub.f32 %v796, %v819
      %v840 = vsub.f32 %v799, %v822
      %v841 = vsub.f32 %v801, %v825
      %v842 = vsub.f32 %v804, %v828
      %v843 = vsub.f32 %v806, %v831
      %v844 = vsub.f32 %v809, %v834
      %v845 = vsub.f32 %v811, %v837
      %v846 = vmul.f32 %v838, 1.442695
      %v847 = vpow.pop %v846
      %v848 = vmul.f32 %v839, 1.442695
      %v849 = vpow.pop %v848
      %v850 = vmul.f32 %v840, 1.442695
      %v851 = vpow.pop %v850
      %v852 = vmul.f32 %v841, 1.442695
      %v853 = vpow.pop %v852
      %v854 = vmul.f32 %v842, 1.442695
      %v855 = vpow.pop %v854
      %v856 = vmul.f32 %v843, 1.442695
      %v857 = vpow.pop %v856
      %v858 = vmul.f32 %v844, 1.442695
      %v859 = vpow.pop %v858
      %v860 = vmul.f32 %v845, 1.442695
      %v861 = vpow.pop %v860
      %v862 = vsel %vm813, %v847, 0.0
      %863 = vadd.xlane.f32.xlu0 %v862
      %v864 = vpop.xlane.xlu0 %863
      %v865 = vsel %vm813, %v849, 0.0
      %866 = vadd.xlane.f32.xlu0 %v865
      %v867 = vpop.xlane.xlu0 %866
      %v868 = vsel %vm813, %v851, 0.0
      %869 = vadd.xlane.f32.xlu0 %v868
      %v870 = vpop.xlane.xlu0 %869
      %v871 = vsel %vm813, %v853, 0.0
      %872 = vadd.xlane.f32.xlu0 %v871
      %v873 = vpop.xlane.xlu0 %872
      %v874 = vsel %vm813, %v855, 0.0
      %875 = vadd.xlane.f32.xlu0 %v874
      %v876 = vpop.xlane.xlu0 %875
      %v877 = vsel %vm813, %v857, 0.0
      %878 = vadd.xlane.f32.xlu0 %v877
      %v879 = vpop.xlane.xlu0 %878
      %v880 = vsel %vm813, %v859, 0.0
      %881 = vadd.xlane.f32.xlu0 %v880
      %v882 = vpop.xlane.xlu0 %881
      %v883 = vsel %vm813, %v861, 0.0
      %884 = vadd.xlane.f32.xlu0 %v883
      %v885 = vpop.xlane.xlu0 %884
      %v886 = vrcp.pop %v864
      %v887 = vrcp.pop %v867
      %v888 = vrcp.pop %v870
      %v889 = vrcp.pop %v873
      %v890 = vrcp.pop %v876
      %v891 = vrcp.pop %v879
      %v892 = vrcp.pop %v882
      %v893 = vrcp.pop %v885
      %v894 = vmul.f32 %v847, %v886
      %v895 = vmul.f32 %v849, %v887
      %v896 = vmul.f32 %v851, %v888
      %v897 = vmul.f32 %v853, %v889
      %v898 = vmul.f32 %v855, %v890
      %v899 = vmul.f32 %v857, %v891
      %v900 = vmul.f32 %v859, %v892
      %v901 = vmul.f32 %v861, %v893
      %v902 = vpack.c.bf16 %v895, %v894
      %v903 = vpack.c.bf16 %v897, %v896
      %v904 = vpack.c.bf16 %v899, %v898
      %v905 = vpack.c.bf16 %v901, %v900
      %v906 = vpack.c.bf16 %v723, %v721
      %v907 = vpack.c.bf16 %v728, %v726
      %v908 = vpack.c.bf16 %v733, %v731
      %v909 = vpack.c.bf16 %v738, %v736
      %v911 = vsel %vm813, %v902, 0
      %v914 = vsel %vm813, %v903, 0
      %v917 = vsel %vm813, %v904, 0
      %v920 = vsel %vm813, %v905, 0
      %922 = vmatpush.bf16.msra.mxu0 0
      %923 = vmatpush.bf16.msra.mxu0 0
      %924 = vmatpush.bf16.msra.mxu0 0
      %925 = vmatpush.bf16.msra.mxu0 0
      %926 = vmatpush.bf16.msra.mxu0 %v909
      %927 = vmatpush.bf16.msra.mxu0 %v908
      %928 = vmatpush.bf16.msra.mxu0 %v907
      %929 = vmatpush.bf16.msra.mxu0 %v906
      %930 = vmatmul.bf16.gmra.mxu0 %v911
      %v931 = vpop.f32.mrf.mxu0
      %v932 = vadd.f32 0.0, %v931
      %v933 = vpop.f32.mrf.mxu0
      %v934 = vadd.f32 0.0, %v933
      %935 = vmatmul.bf16.gmra.mxu0 %v914
      %v936 = vpop.f32.mrf.mxu0
      %v937 = vadd.f32 0.0, %v936
      %v938 = vpop.f32.mrf.mxu0
      %v939 = vadd.f32 0.0, %v938
      %940 = vmatmul.bf16.gmra.mxu0 %v917
      %v941 = vpop.f32.mrf.mxu0
      %v942 = vadd.f32 0.0, %v941
      %v943 = vpop.f32.mrf.mxu0
      %v944 = vadd.f32 0.0, %v943
      %945 = vmatmul.bf16.gmra.mxu0 %v920
      %v946 = vpop.f32.mrf.mxu0
      %v947 = vadd.f32 0.0, %v946
      %v948 = vpop.f32.mrf.mxu0
      %v949 = vadd.f32 0.0, %v948
      %950 = vdwg.mxu0
      %951 = vst.msk [vmem:[#allocation2] sm:$0xff] %vm759, %v932
      %952 = vst.msk [vmem:[#allocation2 + $0x8] sm:$0xff] %vm759, %v934
      %953 = vst.msk [vmem:[#allocation2 + $0x10] sm:$0xff] %vm759, %v937
      %954 = vst.msk [vmem:[#allocation2 + $0x18] sm:$0xff] %vm759, %v939
      %955 = vst.msk [vmem:[#allocation2 + $0x20] sm:$0xff] %vm759, %v942
      %956 = vst.msk [vmem:[#allocation2 + $0x28] sm:$0xff] %vm759, %v944
      %957 = vst.msk [vmem:[#allocation2 + $0x30] sm:$0xff] %vm759, %v947
      %958 = vst.msk [vmem:[#allocation2 + $0x38] sm:$0xff] %vm759, %v949
      %959 = vrot.lane.b32.xlu0 %v740, 120
      %v960 = vpop.permute.xlu0 %959
      %961 = vrot.lane.b32.xlu0 %v741, 120
      %v962 = vpop.permute.xlu0 %961
      %963 = vrot.lane.b32.xlu0 %v742, 120
      %v964 = vpop.permute.xlu0 %963
      %965 = vrot.lane.b32.xlu0 %v743, 120
      %v966 = vpop.permute.xlu0 %965
      %967 = vrot.lane.b32.xlu0 %v740, 88
      %v968 = vpop.permute.xlu0 %967
      %969 = vrot.lane.b32.xlu0 %v741, 88
      %v970 = vpop.permute.xlu0 %969
      %971 = vrot.lane.b32.xlu0 %v742, 88
      %v972 = vpop.permute.xlu0 %971
      %973 = vrot.lane.b32.xlu0 %v743, 88
      %v974 = vpop.permute.xlu0 %973
      %v976 = vsel %vm759, %v960, 0
      %v979 = vsel %vm759, %v962, 0
      %v982 = vsel %vm759, %v964, 0
      %v985 = vsel %vm759, %v966, 0
      %v988 = vsel %vm759, %v968, 0
      %v991 = vsel %vm759, %v970, 0
      %v994 = vsel %vm759, %v972, 0
      %v997 = vsel %vm759, %v974, 0
      %999 = vmatpush.bf16.xpose.msra.mxu0 0
      %1000 = vmatpush.bf16.xpose.msra.mxu0 0
      %1001 = vmatpush.bf16.xpose.msra.mxu0 0
      %1002 = vmatpush.bf16.xpose.msra.mxu0 0
      %1003 = vmatpush.bf16.xpose.msra.mxu0 %v997
      %1004 = vmatpush.bf16.xpose.msra.mxu0 %v994
      %1005 = vmatpush.bf16.xpose.msra.mxu0 %v991
      %1006 = vmatpush.bf16.xpose.msra.mxu0 %v988
      %1007 = vmatmul.bf16.gmra.mxu0 %v976
      %v1008 = vpop.f32.mrf.mxu0
      %v1009 = vadd.f32 %v745, %v1008
      %v1010 = vpop.f32.mrf.mxu0
      %v1011 = vadd.f32 %v745, %v1010
      %1012 = vmatmul.bf16.gmra.mxu0 %v979
      %v1013 = vpop.f32.mrf.mxu0
      %v1014 = vadd.f32 %v745, %v1013
      %v1015 = vpop.f32.mrf.mxu0
      %v1016 = vadd.f32 %v745, %v1015
      %1017 = vmatmul.bf16.gmra.mxu0 %v982
      %v1018 = vpop.f32.mrf.mxu0
      %v1019 = vadd.f32 %v745, %v1018
      %v1020 = vpop.f32.mrf.mxu0
      %v1021 = vadd.f32 %v745, %v1020
      %1022 = vmatmul.bf16.gmra.mxu0 %v985
      %v1023 = vpop.f32.mrf.mxu0
      %v1024 = vadd.f32 %v745, %v1023
      %v1025 = vpop.f32.mrf.mxu0
      %v1026 = vadd.f32 %v745, %v1025
      %1027 = vdwg.mxu0
      %v1028 = vsel %vm813, %v1009, -inf
      %1029 = vmax.xlane.f32.xlu0 %v1028
      %v1030 = vpop.xlane.xlu0 %1029
      %v1031 = vsel %vm813, %v1011, -inf
      %1032 = vmax.xlane.f32.xlu0 %v1031
      %v1033 = vpop.xlane.xlu0 %1032
      %v1034 = vsel %vm813, %v1014, -inf
      %1035 = vmax.xlane.f32.xlu0 %v1034
      %v1036 = vpop.xlane.xlu0 %1035
      %v1037 = vsel %vm813, %v1016, -inf
      %1038 = vmax.xlane.f32.xlu0 %v1037
      %v1039 = vpop.xlane.xlu0 %1038
      %v1040 = vsel %vm813, %v1019, -inf
      %1041 = vmax.xlane.f32.xlu0 %v1040
      %v1042 = vpop.xlane.xlu0 %1041
      %v1043 = vsel %vm813, %v1021, -inf
      %1044 = vmax.xlane.f32.xlu0 %v1043
      %v1045 = vpop.xlane.xlu0 %1044
      %v1046 = vsel %vm813, %v1024, -inf
      %1047 = vmax.xlane.f32.xlu0 %v1046
      %v1048 = vpop.xlane.xlu0 %1047
      %v1049 = vsel %vm813, %v1026, -inf
      %1050 = vmax.xlane.f32.xlu0 %v1049
      %v1051 = vpop.xlane.xlu0 %1050
      %v1052 = vsub.f32 %v1009, %v1030
      %v1053 = vsub.f32 %v1011, %v1033
      %v1054 = vsub.f32 %v1014, %v1036
      %v1055 = vsub.f32 %v1016, %v1039
      %v1056 = vsub.f32 %v1019, %v1042
      %v1057 = vsub.f32 %v1021, %v1045
      %v1058 = vsub.f32 %v1024, %v1048
      %v1059 = vsub.f32 %v1026, %v1051
      %v1060 = vmul.f32 %v1052, 1.442695
      %v1061 = vpow.pop %v1060
      %v1062 = vmul.f32 %v1053, 1.442695
      %v1063 = vpow.pop %v1062
      %v1064 = vmul.f32 %v1054, 1.442695
      %v1065 = vpow.pop %v1064
      %v1066 = vmul.f32 %v1055, 1.442695
      %v1067 = vpow.pop %v1066
      %v1068 = vmul.f32 %v1056, 1.442695
      %v1069 = vpow.pop %v1068
      %v1070 = vmul.f32 %v1057, 1.442695
      %v1071 = vpow.pop %v1070
      %v1072 = vmul.f32 %v1058, 1.442695
      %v1073 = vpow.pop %v1072
      %v1074 = vmul.f32 %v1059, 1.442695
      %v1075 = vpow.pop %v1074
      %v1076 = vsel %vm813, %v1061, 0.0
      %1077 = vadd.xlane.f32.xlu0 %v1076
      %v1078 = vpop.xlane.xlu0 %1077
      %v1079 = vsel %vm813, %v1063, 0.0
      %1080 = vadd.xlane.f32.xlu0 %v1079
      %v1081 = vpop.xlane.xlu0 %1080
      %v1082 = vsel %vm813, %v1065, 0.0
      %1083 = vadd.xlane.f32.xlu0 %v1082
      %v1084 = vpop.xlane.xlu0 %1083
      %v1085 = vsel %vm813, %v1067, 0.0
      %1086 = vadd.xlane.f32.xlu0 %v1085
      %v1087 = vpop.xlane.xlu0 %1086
      %v1088 = vsel %vm813, %v1069, 0.0
      %1089 = vadd.xlane.f32.xlu0 %v1088
      %v1090 = vpop.xlane.xlu0 %1089
      %v1091 = vsel %vm813, %v1071, 0.0
      %1092 = vadd.xlane.f32.xlu0 %v1091
      %v1093 = vpop.xlane.xlu0 %1092
      %v1094 = vsel %vm813, %v1073, 0.0
      %1095 = vadd.xlane.f32.xlu0 %v1094
      %v1096 = vpop.xlane.xlu0 %1095
      %v1097 = vsel %vm813, %v1075, 0.0
      %1098 = vadd.xlane.f32.xlu0 %v1097
      %v1099 = vpop.xlane.xlu0 %1098
      %v1100 = vrcp.pop %v1078
      %v1101 = vrcp.pop %v1081
      %v1102 = vrcp.pop %v1084
      %v1103 = vrcp.pop %v1087
      %v1104 = vrcp.pop %v1090
      %v1105 = vrcp.pop %v1093
      %v1106 = vrcp.pop %v1096
      %v1107 = vrcp.pop %v1099
      %v1108 = vmul.f32 %v1061, %v1100
      %v1109 = vmul.f32 %v1063, %v1101
      %v1110 = vmul.f32 %v1065, %v1102
      %v1111 = vmul.f32 %v1067, %v1103
      %v1112 = vmul.f32 %v1069, %v1104
      %v1113 = vmul.f32 %v1071, %v1105
      %v1114 = vmul.f32 %v1073, %v1106
      %v1115 = vmul.f32 %v1075, %v1107
      %v1116 = vpack.c.bf16 %v1109, %v1108
      %v1117 = vpack.c.bf16 %v1111, %v1110
      %v1118 = vpack.c.bf16 %v1113, %v1112
      %v1119 = vpack.c.bf16 %v1115, %v1114
      %1124 = vrot.lane.b32.xlu0 %v906, 120
      %v1125 = vpop.permute.xlu0 %1124
      %1126 = vrot.lane.b32.xlu0 %v907, 120
      %v1127 = vpop.permute.xlu0 %1126
      %1128 = vrot.lane.b32.xlu0 %v908, 120
      %v1129 = vpop.permute.xlu0 %1128
      %1130 = vrot.lane.b32.xlu0 %v909, 120
      %v1131 = vpop.permute.xlu0 %1130
      %v1137 = vsel %vm813, %v1116, 0
      %v1140 = vsel %vm813, %v1117, 0
      %v1143 = vsel %vm813, %v1118, 0
      %v1146 = vsel %vm813, %v1119, 0
      %1148 = vmatpush.bf16.msra.mxu0 0
      %1149 = vmatpush.bf16.msra.mxu0 0
      %1150 = vmatpush.bf16.msra.mxu0 0
      %1151 = vmatpush.bf16.msra.mxu0 0
      %1152 = vmatpush.bf16.msra.mxu0 %v1131
      %1153 = vmatpush.bf16.msra.mxu0 %v1129
      %1154 = vmatpush.bf16.msra.mxu0 %v1127
      %1155 = vmatpush.bf16.msra.mxu0 %v1125
      %1156 = vmatmul.bf16.gmra.mxu0 %v1137
      %v1157 = vpop.f32.mrf.mxu0
      %v1158 = vadd.f32 0.0, %v1157
      %v1159 = vpop.f32.mrf.mxu0
      %v1160 = vadd.f32 0.0, %v1159
      %1161 = vmatmul.bf16.gmra.mxu0 %v1140
      %v1162 = vpop.f32.mrf.mxu0
      %v1163 = vadd.f32 0.0, %v1162
      %v1164 = vpop.f32.mrf.mxu0
      %v1165 = vadd.f32 0.0, %v1164
      %1166 = vmatmul.bf16.gmra.mxu0 %v1143
      %v1167 = vpop.f32.mrf.mxu0
      %v1168 = vadd.f32 0.0, %v1167
      %v1169 = vpop.f32.mrf.mxu0
      %v1170 = vadd.f32 0.0, %v1169
      %1171 = vmatmul.bf16.gmra.mxu0 %v1146
      %v1172 = vpop.f32.mrf.mxu0
      %v1173 = vadd.f32 0.0, %v1172
      %v1174 = vpop.f32.mrf.mxu0
      %v1175 = vadd.f32 0.0, %v1174
      %1176 = vdwg.mxu0
      %1185 = vrot.lane.b32.xlu0 %v1158, 8
      %v1186 = vpop.permute.xlu0 %1185
      %1187 = vrot.lane.b32.xlu0 %v1160, 8
      %v1188 = vpop.permute.xlu0 %1187
      %1189 = vrot.lane.b32.xlu0 %v1163, 8
      %v1190 = vpop.permute.xlu0 %1189
      %1191 = vrot.lane.b32.xlu0 %v1165, 8
      %v1192 = vpop.permute.xlu0 %1191
      %1193 = vrot.lane.b32.xlu0 %v1168, 8
      %v1194 = vpop.permute.xlu0 %1193
      %1195 = vrot.lane.b32.xlu0 %v1170, 8
      %v1196 = vpop.permute.xlu0 %1195
      %1197 = vrot.lane.b32.xlu0 %v1173, 8
      %v1198 = vpop.permute.xlu0 %1197
      %1199 = vrot.lane.b32.xlu0 %v1175, 8
      %v1200 = vpop.permute.xlu0 %1199
      %vm1209 = vcmask 130112
      %1210 = vst.msk [vmem:[#allocation2] sm:$0xff] %vm1209, %v1186
      %1211 = vst.msk [vmem:[#allocation2 + $0x8] sm:$0xff] %vm1209, %v1188
      %1212 = vst.msk [vmem:[#allocation2 + $0x10] sm:$0xff] %vm1209, %v1190
      %1213 = vst.msk [vmem:[#allocation2 + $0x18] sm:$0xff] %vm1209, %v1192
      %1214 = vst.msk [vmem:[#allocation2 + $0x20] sm:$0xff] %vm1209, %v1194
      %1215 = vst.msk [vmem:[#allocation2 + $0x28] sm:$0xff] %vm1209, %v1196
      %1216 = vst.msk [vmem:[#allocation2 + $0x30] sm:$0xff] %vm1209, %v1198
      %1217 = vst.msk [vmem:[#allocation2 + $0x38] sm:$0xff] %vm1209, %v1200
      %1218 = vrot.lane.b32.xlu0 %v740, 112
      %v1219 = vpop.permute.xlu0 %1218
      %1220 = vrot.lane.b32.xlu0 %v741, 112
      %v1221 = vpop.permute.xlu0 %1220
      %1222 = vrot.lane.b32.xlu0 %v742, 112
      %v1223 = vpop.permute.xlu0 %1222
      %1224 = vrot.lane.b32.xlu0 %v743, 112
      %v1225 = vpop.permute.xlu0 %1224
      %1226 = vrot.lane.b32.xlu0 %v740, 80
      %v1227 = vpop.permute.xlu0 %1226
      %1228 = vrot.lane.b32.xlu0 %v741, 80
      %v1229 = vpop.permute.xlu0 %1228
      %1230 = vrot.lane.b32.xlu0 %v742, 80
      %v1231 = vpop.permute.xlu0 %1230
      %1232 = vrot.lane.b32.xlu0 %v743, 80
      %v1233 = vpop.permute.xlu0 %1232
      %v1235 = vsel %vm759, %v1219, 0
      %v1238 = vsel %vm759, %v1221, 0
      %v1241 = vsel %vm759, %v1223, 0
      %v1244 = vsel %vm759, %v1225, 0
      %v1247 = vsel %vm759, %v1227, 0
      %v1250 = vsel %vm759, %v1229, 0
      %v1253 = vsel %vm759, %v1231, 0
      %v1256 = vsel %vm759, %v1233, 0
      %1258 = vmatpush.bf16.xpose.msra.mxu0 0
      %1259 = vmatpush.bf16.xpose.msra.mxu0 0
      %1260 = vmatpush.bf16.xpose.msra.mxu0 0
      %1261 = vmatpush.bf16.xpose.msra.mxu0 0
      %1262 = vmatpush.bf16.xpose.msra.mxu0 %v1256
      %1263 = vmatpush.bf16.xpose.msra.mxu0 %v1253
      %1264 = vmatpush.bf16.xpose.msra.mxu0 %v1250
      %1265 = vmatpush.bf16.xpose.msra.mxu0 %v1247
      %1266 = vmatmul.bf16.gmra.mxu0 %v1235
      %v1267 = vpop.f32.mrf.mxu0
      %v1268 = vadd.f32 %v745, %v1267
      %v1269 = vpop.f32.mrf.mxu0
      %v1270 = vadd.f32 %v745, %v1269
      %1271 = vmatmul.bf16.gmra.mxu0 %v1238
      %v1272 = vpop.f32.mrf.mxu0
      %v1273 = vadd.f32 %v745, %v1272
      %v1274 = vpop.f32.mrf.mxu0
      %v1275 = vadd.f32 %v745, %v1274
      %1276 = vmatmul.bf16.gmra.mxu0 %v1241
      %v1277 = vpop.f32.mrf.mxu0
      %v1278 = vadd.f32 %v745, %v1277
      %v1279 = vpop.f32.mrf.mxu0
      %v1280 = vadd.f32 %v745, %v1279
      %1281 = vmatmul.bf16.gmra.mxu0 %v1244
      %v1282 = vpop.f32.mrf.mxu0
      %v1283 = vadd.f32 %v745, %v1282
      %v1284 = vpop.f32.mrf.mxu0
      %v1285 = vadd.f32 %v745, %v1284
      %1286 = vdwg.mxu0
      %v1287 = vsel %vm813, %v1268, -inf
      %1288 = vmax.xlane.f32.xlu0 %v1287
      %v1289 = vpop.xlane.xlu0 %1288
      %v1290 = vsel %vm813, %v1270, -inf
      %1291 = vmax.xlane.f32.xlu0 %v1290
      %v1292 = vpop.xlane.xlu0 %1291
      %v1293 = vsel %vm813, %v1273, -inf
      %1294 = vmax.xlane.f32.xlu0 %v1293
      %v1295 = vpop.xlane.xlu0 %1294
      %v1296 = vsel %vm813, %v1275, -inf
      %1297 = vmax.xlane.f32.xlu0 %v1296
      %v1298 = vpop.xlane.xlu0 %1297
      %v1299 = vsel %vm813, %v1278, -inf
      %1300 = vmax.xlane.f32.xlu0 %v1299
      %v1301 = vpop.xlane.xlu0 %1300
      %v1302 = vsel %vm813, %v1280, -inf
      %1303 = vmax.xlane.f32.xlu0 %v1302
      %v1304 = vpop.xlane.xlu0 %1303
      %v1305 = vsel %vm813, %v1283, -inf
      %1306 = vmax.xlane.f32.xlu0 %v1305
      %v1307 = vpop.xlane.xlu0 %1306
      %v1308 = vsel %vm813, %v1285, -inf
      %1309 = vmax.xlane.f32.xlu0 %v1308
      %v1310 = vpop.xlane.xlu0 %1309
      %v1311 = vsub.f32 %v1268, %v1289
      %v1312 = vsub.f32 %v1270, %v1292
      %v1313 = vsub.f32 %v1273, %v1295
      %v1314 = vsub.f32 %v1275, %v1298
      %v1315 = vsub.f32 %v1278, %v1301
      %v1316 = vsub.f32 %v1280, %v1304
      %v1317 = vsub.f32 %v1283, %v1307
      %v1318 = vsub.f32 %v1285, %v1310
      %v1319 = vmul.f32 %v1311, 1.442695
      %v1320 = vpow.pop %v1319
      %v1321 = vmul.f32 %v1312, 1.442695
      %v1322 = vpow.pop %v1321
      %v1323 = vmul.f32 %v1313, 1.442695
      %v1324 = vpow.pop %v1323
      %v1325 = vmul.f32 %v1314, 1.442695
      %v1326 = vpow.pop %v1325
      %v1327 = vmul.f32 %v1315, 1.442695
      %v1328 = vpow.pop %v1327
      %v1329 = vmul.f32 %v1316, 1.442695
      %v1330 = vpow.pop %v1329
      %v1331 = vmul.f32 %v1317, 1.442695
      %v1332 = vpow.pop %v1331
      %v1333 = vmul.f32 %v1318, 1.442695
      %v1334 = vpow.pop %v1333
      %v1335 = vsel %vm813, %v1320, 0.0
      %1336 = vadd.xlane.f32.xlu0 %v1335
      %v1337 = vpop.xlane.xlu0 %1336
      %v1338 = vsel %vm813, %v1322, 0.0
      %1339 = vadd.xlane.f32.xlu0 %v1338
      %v1340 = vpop.xlane.xlu0 %1339
      %v1341 = vsel %vm813, %v1324, 0.0
      %1342 = vadd.xlane.f32.xlu0 %v1341
      %v1343 = vpop.xlane.xlu0 %1342
      %v1344 = vsel %vm813, %v1326, 0.0
      %1345 = vadd.xlane.f32.xlu0 %v1344
      %v1346 = vpop.xlane.xlu0 %1345
      %v1347 = vsel %vm813, %v1328, 0.0
      %1348 = vadd.xlane.f32.xlu0 %v1347
      %v1349 = vpop.xlane.xlu0 %1348
      %v1350 = vsel %vm813, %v1330, 0.0
      %1351 = vadd.xlane.f32.xlu0 %v1350
      %v1352 = vpop.xlane.xlu0 %1351
      %v1353 = vsel %vm813, %v1332, 0.0
      %1354 = vadd.xlane.f32.xlu0 %v1353
      %v1355 = vpop.xlane.xlu0 %1354
      %v1356 = vsel %vm813, %v1334, 0.0
      %1357 = vadd.xlane.f32.xlu0 %v1356
      %v1358 = vpop.xlane.xlu0 %1357
      %v1359 = vrcp.pop %v1337
      %v1360 = vrcp.pop %v1340
      %v1361 = vrcp.pop %v1343
      %v1362 = vrcp.pop %v1346
      %v1363 = vrcp.pop %v1349
      %v1364 = vrcp.pop %v1352
      %v1365 = vrcp.pop %v1355
      %v1366 = vrcp.pop %v1358
      %v1367 = vmul.f32 %v1320, %v1359
      %v1368 = vmul.f32 %v1322, %v1360
      %v1369 = vmul.f32 %v1324, %v1361
      %v1370 = vmul.f32 %v1326, %v1362
      %v1371 = vmul.f32 %v1328, %v1363
      %v1372 = vmul.f32 %v1330, %v1364
      %v1373 = vmul.f32 %v1332, %v1365
      %v1374 = vmul.f32 %v1334, %v1366
      %v1375 = vpack.c.bf16 %v1368, %v1367
      %v1376 = vpack.c.bf16 %v1370, %v1369
      %v1377 = vpack.c.bf16 %v1372, %v1371
      %v1378 = vpack.c.bf16 %v1374, %v1373
      %1379 = vrot.lane.b32.xlu0 %v906, 112
      %v1380 = vpop.permute.xlu0 %1379
      %1381 = vrot.lane.b32.xlu0 %v907, 112
      %v1382 = vpop.permute.xlu0 %1381
      %1383 = vrot.lane.b32.xlu0 %v908, 112
      %v1384 = vpop.permute.xlu0 %1383
      %1385 = vrot.lane.b32.xlu0 %v909, 112
      %v1386 = vpop.permute.xlu0 %1385
      %v1392 = vsel %vm813, %v1375, 0
      %v1395 = vsel %vm813, %v1376, 0
      %v1398 = vsel %vm813, %v1377, 0
      %v1401 = vsel %vm813, %v1378, 0
      %1403 = vmatpush.bf16.msra.mxu0 0
      %1404 = vmatpush.bf16.msra.mxu0 0
      %1405 = vmatpush.bf16.msra.mxu0 0
      %1406 = vmatpush.bf16.msra.mxu0 0
      %1407 = vmatpush.bf16.msra.mxu0 %v1386
      %1408 = vmatpush.bf16.msra.mxu0 %v1384
      %1409 = vmatpush.bf16.msra.mxu0 %v1382
      %1410 = vmatpush.bf16.msra.mxu0 %v1380
      %1411 = vmatmul.bf16.gmra.mxu0 %v1392
      %v1412 = vpop.f32.mrf.mxu0
      %v1413 = vadd.f32 0.0, %v1412
      %v1414 = vpop.f32.mrf.mxu0
      %v1415 = vadd.f32 0.0, %v1414
      %1416 = vmatmul.bf16.gmra.mxu0 %v1395
      %v1417 = vpop.f32.mrf.mxu0
      %v1418 = vadd.f32 0.0, %v1417
      %v1419 = vpop.f32.mrf.mxu0
      %v1420 = vadd.f32 0.0, %v1419
      %1421 = vmatmul.bf16.gmra.mxu0 %v1398
      %v1422 = vpop.f32.mrf.mxu0
      %v1423 = vadd.f32 0.0, %v1422
      %v1424 = vpop.f32.mrf.mxu0
      %v1425 = vadd.f32 0.0, %v1424
      %1426 = vmatmul.bf16.gmra.mxu0 %v1401
      %v1427 = vpop.f32.mrf.mxu0
      %v1428 = vadd.f32 0.0, %v1427
      %v1429 = vpop.f32.mrf.mxu0
      %v1430 = vadd.f32 0.0, %v1429
      %1431 = vdwg.mxu0
      %1440 = vrot.lane.b32.xlu0 %v1413, 16
      %v1441 = vpop.permute.xlu0 %1440
      %1442 = vrot.lane.b32.xlu0 %v1415, 16
      %v1443 = vpop.permute.xlu0 %1442
      %1444 = vrot.lane.b32.xlu0 %v1418, 16
      %v1445 = vpop.permute.xlu0 %1444
      %1446 = vrot.lane.b32.xlu0 %v1420, 16
      %v1447 = vpop.permute.xlu0 %1446
      %1448 = vrot.lane.b32.xlu0 %v1423, 16
      %v1449 = vpop.permute.xlu0 %1448
      %1450 = vrot.lane.b32.xlu0 %v1425, 16
      %v1451 = vpop.permute.xlu0 %1450
      %1452 = vrot.lane.b32.xlu0 %v1428, 16
      %v1453 = vpop.permute.xlu0 %1452
      %1454 = vrot.lane.b32.xlu0 %v1430, 16
      %v1455 = vpop.permute.xlu0 %1454
      %vm1464 = vcmask 195712
      %1465 = vst.msk [vmem:[#allocation2] sm:$0xff] %vm1464, %v1441
      %1466 = vst.msk [vmem:[#allocation2 + $0x8] sm:$0xff] %vm1464, %v1443
      %1467 = vst.msk [vmem:[#allocation2 + $0x10] sm:$0xff] %vm1464, %v1445
      %1468 = vst.msk [vmem:[#allocation2 + $0x18] sm:$0xff] %vm1464, %v1447
      %1469 = vst.msk [vmem:[#allocation2 + $0x20] sm:$0xff] %vm1464, %v1449
      %1470 = vst.msk [vmem:[#allocation2 + $0x28] sm:$0xff] %vm1464, %v1451
      %1471 = vst.msk [vmem:[#allocation2 + $0x30] sm:$0xff] %vm1464, %v1453
      %1472 = vst.msk [vmem:[#allocation2 + $0x38] sm:$0xff] %vm1464, %v1455
      %1473 = vrot.lane.b32.xlu0 %v740, 104
      %v1474 = vpop.permute.xlu0 %1473
      %1475 = vrot.lane.b32.xlu0 %v741, 104
      %v1476 = vpop.permute.xlu0 %1475
      %1477 = vrot.lane.b32.xlu0 %v742, 104
      %v1478 = vpop.permute.xlu0 %1477
      %1479 = vrot.lane.b32.xlu0 %v743, 104
      %v1480 = vpop.permute.xlu0 %1479
      %1481 = vrot.lane.b32.xlu0 %v740, 72
      %v1482 = vpop.permute.xlu0 %1481
      %1483 = vrot.lane.b32.xlu0 %v741, 72
      %v1484 = vpop.permute.xlu0 %1483
      %1485 = vrot.lane.b32.xlu0 %v742, 72
      %v1486 = vpop.permute.xlu0 %1485
      %1487 = vrot.lane.b32.xlu0 %v743, 72
      %v1488 = vpop.permute.xlu0 %1487
      %v1490 = vsel %vm759, %v1474, 0
      %v1493 = vsel %vm759, %v1476, 0
      %v1496 = vsel %vm759, %v1478, 0
      %v1499 = vsel %vm759, %v1480, 0
      %v1502 = vsel %vm759, %v1482, 0
      %v1505 = vsel %vm759, %v1484, 0
      %v1508 = vsel %vm759, %v1486, 0
      %v1511 = vsel %vm759, %v1488, 0
      %1513 = vmatpush.bf16.xpose.msra.mxu0 0
      %1514 = vmatpush.bf16.xpose.msra.mxu0 0
      %1515 = vmatpush.bf16.xpose.msra.mxu0 0
      %1516 = vmatpush.bf16.xpose.msra.mxu0 0
      %1517 = vmatpush.bf16.xpose.msra.mxu0 %v1511
      %1518 = vmatpush.bf16.xpose.msra.mxu0 %v1508
      %1519 = vmatpush.bf16.xpose.msra.mxu0 %v1505
      %1520 = vmatpush.bf16.xpose.msra.mxu0 %v1502
      %1521 = vmatmul.bf16.gmra.mxu0 %v1490
      %v1522 = vpop.f32.mrf.mxu0
      %v1523 = vadd.f32 %v745, %v1522
      %v1524 = vpop.f32.mrf.mxu0
      %v1525 = vadd.f32 %v745, %v1524
      %1526 = vmatmul.bf16.gmra.mxu0 %v1493
      %v1527 = vpop.f32.mrf.mxu0
      %v1528 = vadd.f32 %v745, %v1527
      %v1529 = vpop.f32.mrf.mxu0
      %v1530 = vadd.f32 %v745, %v1529
      %1531 = vmatmul.bf16.gmra.mxu0 %v1496
      %v1532 = vpop.f32.mrf.mxu0
      %v1533 = vadd.f32 %v745, %v1532
      %v1534 = vpop.f32.mrf.mxu0
      %v1535 = vadd.f32 %v745, %v1534
      %1536 = vmatmul.bf16.gmra.mxu0 %v1499
      %v1537 = vpop.f32.mrf.mxu0
      %v1538 = vadd.f32 %v745, %v1537
      %v1539 = vpop.f32.mrf.mxu0
      %v1540 = vadd.f32 %v745, %v1539
      %1541 = vdwg.mxu0
      %v1542 = vsel %vm813, %v1523, -inf
      %1543 = vmax.xlane.f32.xlu0 %v1542
      %v1544 = vpop.xlane.xlu0 %1543
      %v1545 = vsel %vm813, %v1525, -inf
      %1546 = vmax.xlane.f32.xlu0 %v1545
      %v1547 = vpop.xlane.xlu0 %1546
      %v1548 = vsel %vm813, %v1528, -inf
      %1549 = vmax.xlane.f32.xlu0 %v1548
      %v1550 = vpop.xlane.xlu0 %1549
      %v1551 = vsel %vm813, %v1530, -inf
      %1552 = vmax.xlane.f32.xlu0 %v1551
      %v1553 = vpop.xlane.xlu0 %1552
      %v1554 = vsel %vm813, %v1533, -inf
      %1555 = vmax.xlane.f32.xlu0 %v1554
      %v1556 = vpop.xlane.xlu0 %1555
      %v1557 = vsel %vm813, %v1535, -inf
      %1558 = vmax.xlane.f32.xlu0 %v1557
      %v1559 = vpop.xlane.xlu0 %1558
      %v1560 = vsel %vm813, %v1538, -inf
      %1561 = vmax.xlane.f32.xlu0 %v1560
      %v1562 = vpop.xlane.xlu0 %1561
      %v1563 = vsel %vm813, %v1540, -inf
      %1564 = vmax.xlane.f32.xlu0 %v1563
      %v1565 = vpop.xlane.xlu0 %1564
      %v1566 = vsub.f32 %v1523, %v1544
      %v1567 = vsub.f32 %v1525, %v1547
      %v1568 = vsub.f32 %v1528, %v1550
      %v1569 = vsub.f32 %v1530, %v1553
      %v1570 = vsub.f32 %v1533, %v1556
      %v1571 = vsub.f32 %v1535, %v1559
      %v1572 = vsub.f32 %v1538, %v1562
      %v1573 = vsub.f32 %v1540, %v1565
      %v1574 = vmul.f32 %v1566, 1.442695
      %v1575 = vpow.pop %v1574
      %v1576 = vmul.f32 %v1567, 1.442695
      %v1577 = vpow.pop %v1576
      %v1578 = vmul.f32 %v1568, 1.442695
      %v1579 = vpow.pop %v1578
      %v1580 = vmul.f32 %v1569, 1.442695
      %v1581 = vpow.pop %v1580
      %v1582 = vmul.f32 %v1570, 1.442695
      %v1583 = vpow.pop %v1582
      %v1584 = vmul.f32 %v1571, 1.442695
      %v1585 = vpow.pop %v1584
      %v1586 = vmul.f32 %v1572, 1.442695
      %v1587 = vpow.pop %v1586
      %v1588 = vmul.f32 %v1573, 1.442695
      %v1589 = vpow.pop %v1588
      %v1590 = vsel %vm813, %v1575, 0.0
      %1591 = vadd.xlane.f32.xlu0 %v1590
      %v1592 = vpop.xlane.xlu0 %1591
      %v1593 = vsel %vm813, %v1577, 0.0
      %1594 = vadd.xlane.f32.xlu0 %v1593
      %v1595 = vpop.xlane.xlu0 %1594
      %v1596 = vsel %vm813, %v1579, 0.0
      %1597 = vadd.xlane.f32.xlu0 %v1596
      %v1598 = vpop.xlane.xlu0 %1597
      %v1599 = vsel %vm813, %v1581, 0.0
      %1600 = vadd.xlane.f32.xlu0 %v1599
      %v1601 = vpop.xlane.xlu0 %1600
      %v1602 = vsel %vm813, %v1583, 0.0
      %1603 = vadd.xlane.f32.xlu0 %v1602
      %v1604 = vpop.xlane.xlu0 %1603
      %v1605 = vsel %vm813, %v1585, 0.0
      %1606 = vadd.xlane.f32.xlu0 %v1605
      %v1607 = vpop.xlane.xlu0 %1606
      %v1608 = vsel %vm813, %v1587, 0.0
      %1609 = vadd.xlane.f32.xlu0 %v1608
      %v1610 = vpop.xlane.xlu0 %1609
      %v1611 = vsel %vm813, %v1589, 0.0
      %1612 = vadd.xlane.f32.xlu0 %v1611
      %v1613 = vpop.xlane.xlu0 %1612
      %v1614 = vrcp.pop %v1592
      %v1615 = vrcp.pop %v1595
      %v1616 = vrcp.pop %v1598
      %v1617 = vrcp.pop %v1601
      %v1618 = vrcp.pop %v1604
      %v1619 = vrcp.pop %v1607
      %v1620 = vrcp.pop %v1610
      %v1621 = vrcp.pop %v1613
      %v1622 = vmul.f32 %v1575, %v1614
      %v1623 = vmul.f32 %v1577, %v1615
      %v1624 = vmul.f32 %v1579, %v1616
      %v1625 = vmul.f32 %v1581, %v1617
      %v1626 = vmul.f32 %v1583, %v1618
      %v1627 = vmul.f32 %v1585, %v1619
      %v1628 = vmul.f32 %v1587, %v1620
      %v1629 = vmul.f32 %v1589, %v1621
      %v1630 = vpack.c.bf16 %v1623, %v1622
      %v1631 = vpack.c.bf16 %v1625, %v1624
      %v1632 = vpack.c.bf16 %v1627, %v1626
      %v1633 = vpack.c.bf16 %v1629, %v1628
      %1634 = vrot.lane.b32.xlu0 %v906, 104
      %v1635 = vpop.permute.xlu0 %1634
      %1636 = vrot.lane.b32.xlu0 %v907, 104
      %v1637 = vpop.permute.xlu0 %1636
      %1638 = vrot.lane.b32.xlu0 %v908, 104
      %v1639 = vpop.permute.xlu0 %1638
      %1640 = vrot.lane.b32.xlu0 %v909, 104
      %v1641 = vpop.permute.xlu0 %1640
      %v1647 = vsel %vm813, %v1630, 0
      %v1650 = vsel %vm813, %v1631, 0
      %v1653 = vsel %vm813, %v1632, 0
      %v1656 = vsel %vm813, %v1633, 0
      %1658 = vmatpush.bf16.msra.mxu0 0
      %1659 = vmatpush.bf16.msra.mxu0 0
      %1660 = vmatpush.bf16.msra.mxu0 0
      %1661 = vmatpush.bf16.msra.mxu0 0
      %1662 = vmatpush.bf16.msra.mxu0 %v1641
      %1663 = vmatpush.bf16.msra.mxu0 %v1639
      %1664 = vmatpush.bf16.msra.mxu0 %v1637
      %1665 = vmatpush.bf16.msra.mxu0 %v1635
      %1666 = vmatmul.bf16.gmra.mxu0 %v1647
      %v1667 = vpop.f32.mrf.mxu0
      %v1668 = vadd.f32 0.0, %v1667
      %v1669 = vpop.f32.mrf.mxu0
      %v1670 = vadd.f32 0.0, %v1669
      %1671 = vmatmul.bf16.gmra.mxu0 %v1650
      %v1672 = vpop.f32.mrf.mxu0
      %v1673 = vadd.f32 0.0, %v1672
      %v1674 = vpop.f32.mrf.mxu0
      %v1675 = vadd.f32 0.0, %v1674
      %1676 = vmatmul.bf16.gmra.mxu0 %v1653
      %v1677 = vpop.f32.mrf.mxu0
      %v1678 = vadd.f32 0.0, %v1677
      %v1679 = vpop.f32.mrf.mxu0
      %v1680 = vadd.f32 0.0, %v1679
      %1681 = vmatmul.bf16.gmra.mxu0 %v1656
      %v1682 = vpop.f32.mrf.mxu0
      %v1683 = vadd.f32 0.0, %v1682
      %v1684 = vpop.f32.mrf.mxu0
      %v1685 = vadd.f32 0.0, %v1684
      %1686 = vdwg.mxu0
      %1695 = vrot.lane.b32.xlu0 %v1668, 24
      %v1696 = vpop.permute.xlu0 %1695
      %1697 = vrot.lane.b32.xlu0 %v1670, 24
      %v1698 = vpop.permute.xlu0 %1697
      %1699 = vrot.lane.b32.xlu0 %v1673, 24
      %v1700 = vpop.permute.xlu0 %1699
      %1701 = vrot.lane.b32.xlu0 %v1675, 24
      %v1702 = vpop.permute.xlu0 %1701
      %1703 = vrot.lane.b32.xlu0 %v1678, 24
      %v1704 = vpop.permute.xlu0 %1703
      %1705 = vrot.lane.b32.xlu0 %v1680, 24
      %v1706 = vpop.permute.xlu0 %1705
      %1707 = vrot.lane.b32.xlu0 %v1683, 24
      %v1708 = vpop.permute.xlu0 %1707
      %1709 = vrot.lane.b32.xlu0 %v1685, 24
      %v1710 = vpop.permute.xlu0 %1709
      %vm1719 = vcmask 261312
      %1720 = vst.msk [vmem:[#allocation2] sm:$0xff] %vm1719, %v1696
      %1721 = vst.msk [vmem:[#allocation2 + $0x8] sm:$0xff] %vm1719, %v1698
      %1722 = vst.msk [vmem:[#allocation2 + $0x10] sm:$0xff] %vm1719, %v1700
      %1723 = vst.msk [vmem:[#allocation2 + $0x18] sm:$0xff] %vm1719, %v1702
      %1724 = vst.msk [vmem:[#allocation2 + $0x20] sm:$0xff] %vm1719, %v1704
      %1725 = vst.msk [vmem:[#allocation2 + $0x28] sm:$0xff] %vm1719, %v1706
      %1726 = vst.msk [vmem:[#allocation2 + $0x30] sm:$0xff] %vm1719, %v1708
      %1727 = vst.msk [vmem:[#allocation2 + $0x38] sm:$0xff] %vm1719, %v1710
      %v1728 = vld [vmem:[#allocation2] sm:$0xff]
      %v1729 = vld [vmem:[#allocation2 + $0x8] sm:$0xff]
      %v1730 = vld [vmem:[#allocation2 + $0x10] sm:$0xff]
      %v1731 = vld [vmem:[#allocation2 + $0x18] sm:$0xff]
      %v1732 = vld [vmem:[#allocation2 + $0x20] sm:$0xff]
      %v1733 = vld [vmem:[#allocation2 + $0x28] sm:$0xff]
      %v1734 = vld [vmem:[#allocation2 + $0x30] sm:$0xff]
      %v1735 = vld [vmem:[#allocation2 + $0x38] sm:$0xff]
      %v1736 = vpack.c.bf16 %v1729, %v1728
      %v1737 = vpack.c.bf16 %v1731, %v1730
      %v1738 = vpack.c.bf16 %v1733, %v1732
      %v1739 = vpack.c.bf16 %v1735, %v1734
      %v1740 = vld [vmem:[%s7] sm:$0xf]
      %v1741 = vld [vmem:[%s7 + $0x4] sm:$0xf]
      %v1742 = vld [vmem:[%s7 + $0x8] sm:$0xf]
      %v1743 = vld [vmem:[%s7 + $0xc] sm:$0xf]
      %v1744 = vld [vmem:[%s8] sm:$0x1]
      %v1746 = vperm.slane %v1744, 0
      %v1752 = vunpack.c.l.b16 %v1740
      %v1753 = vunpack.c.l.b16 %v1741
      %v1754 = vunpack.c.l.b16 %v1742
      %v1755 = vunpack.c.l.b16 %v1743
      %v1756 = vpack.c.b16 %v1753, %v1752
      %v1757 = vpack.c.b16 %v1755, %v1754
      %v1761 = vsel %vm633, %v1736, 0
      %v1764 = vsel %vm633, %v1737, 0
      %v1767 = vsel %vm633, %v1738, 0
      %v1770 = vsel %vm633, %v1739, 0
      %1772 = vmatpush.bf16.msra.mxu0 0
      %1773 = vmatpush.bf16.msra.mxu0 0
      %1774 = vmatpush.bf16.msra.mxu0 0
      %1775 = vmatpush.bf16.msra.mxu0 0
      %1776 = vmatpush.bf16.msra.mxu0 0
      %1777 = vmatpush.bf16.msra.mxu0 0
      %1778 = vmatpush.bf16.msra.mxu0 %v1757
      %1779 = vmatpush.bf16.msra.mxu0 %v1756
      %1780 = vmatmul.bf16.gmra.mxu0 %v1761
      %v1781 = vpop.f32.mrf.mxu0
      %v1782 = vadd.f32 %v1746, %v1781
      %v1783 = vpop.f32.mrf.mxu0
      %v1784 = vadd.f32 %v1746, %v1783
      %1785 = vmatmul.bf16.gmra.mxu0 %v1764
      %v1786 = vpop.f32.mrf.mxu0
      %v1787 = vadd.f32 %v1746, %v1786
      %v1788 = vpop.f32.mrf.mxu0
      %v1789 = vadd.f32 %v1746, %v1788
      %1790 = vmatmul.bf16.gmra.mxu0 %v1767
      %v1791 = vpop.f32.mrf.mxu0
      %v1792 = vadd.f32 %v1746, %v1791
      %v1793 = vpop.f32.mrf.mxu0
      %v1794 = vadd.f32 %v1746, %v1793
      %1795 = vmatmul.bf16.gmra.mxu0 %v1770
      %v1796 = vpop.f32.mrf.mxu0
      %v1797 = vadd.f32 %v1746, %v1796
      %v1798 = vpop.f32.mrf.mxu0
      %v1799 = vadd.f32 %v1746, %v1798
      %1800 = vdwg.mxu0
      %v1801 = vadd.f32 %v584, %v1782
      %v1802 = vadd.f32 %v585, %v1784
      %v1803 = vadd.f32 %v586, %v1787
      %v1804 = vadd.f32 %v587, %v1789
      %v1805 = vadd.f32 %v588, %v1792
      %v1806 = vadd.f32 %v589, %v1794
      %v1807 = vadd.f32 %v590, %v1797
      %v1808 = vadd.f32 %v591, %v1799
      %v1809 = vld [vmem:[%s9] sm:$0x1]
      %v1810 = vld [vmem:[%s10] sm:$0x1]
      %v1811 = vsel %vm633, %v1801, 0.0
      %1812 = vadd.xlane.f32.xlu0 %v1811
      %v1813 = vpop.xlane.xlu0 %1812
      %v1814 = vsel %vm633, %v1802, 0.0
      %1815 = vadd.xlane.f32.xlu0 %v1814
      %v1816 = vpop.xlane.xlu0 %1815
      %v1817 = vsel %vm633, %v1803, 0.0
      %1818 = vadd.xlane.f32.xlu0 %v1817
      %v1819 = vpop.xlane.xlu0 %1818
      %v1820 = vsel %vm633, %v1804, 0.0
      %1821 = vadd.xlane.f32.xlu0 %v1820
      %v1822 = vpop.xlane.xlu0 %1821
      %v1823 = vsel %vm633, %v1805, 0.0
      %1824 = vadd.xlane.f32.xlu0 %v1823
      %v1825 = vpop.xlane.xlu0 %1824
      %v1826 = vsel %vm633, %v1806, 0.0
      %1827 = vadd.xlane.f32.xlu0 %v1826
      %v1828 = vpop.xlane.xlu0 %1827
      %v1829 = vsel %vm633, %v1807, 0.0
      %1830 = vadd.xlane.f32.xlu0 %v1829
      %v1831 = vpop.xlane.xlu0 %1830
      %v1832 = vsel %vm633, %v1808, 0.0
      %1833 = vadd.xlane.f32.xlu0 %v1832
      %v1834 = vpop.xlane.xlu0 %1833
      %v1835 = vrcp.pop 32.0
      %v1836 = vmul.f32 32.0, %v1835
      %v1837 = vsub.f32 1.0, %v1836
      %v1838 = vmul.f32 %v1835, %v1837
      %v1839 = vadd.f32 %v1835, %v1838
      %vm1840 = vweird.f32 %v1835
      %v1841 = vsel %vm1840, %v1835, %v1839
      %v1842 = vmul.f32 %v1813, %v1841
      %v1843 = vmul.f32 %v1816, %v1841
      %v1844 = vmul.f32 %v1819, %v1841
      %v1845 = vmul.f32 %v1822, %v1841
      %v1846 = vmul.f32 %v1825, %v1841
      %v1847 = vmul.f32 %v1828, %v1841
      %v1848 = vmul.f32 %v1831, %v1841
      %v1849 = vmul.f32 %v1834, %v1841
      %v1850 = vsub.f32 %v1801, %v1842
      %v1851 = vsub.f32 %v1802, %v1843
      %v1852 = vsub.f32 %v1803, %v1844
      %v1853 = vsub.f32 %v1804, %v1845
      %v1854 = vsub.f32 %v1805, %v1846
      %v1855 = vsub.f32 %v1806, %v1847
      %v1856 = vsub.f32 %v1807, %v1848
      %v1857 = vsub.f32 %v1808, %v1849
      %v1858 = vmul.f32 %v1850, %v1850
      %v1859 = vmul.f32 %v1851, %v1851
      %v1860 = vmul.f32 %v1852, %v1852
      %v1861 = vmul.f32 %v1853, %v1853
      %v1862 = vmul.f32 %v1854, %v1854
      %v1863 = vmul.f32 %v1855, %v1855
      %v1864 = vmul.f32 %v1856, %v1856
      %v1865 = vmul.f32 %v1857, %v1857
      %v1866 = vsel %vm633, %v1858, 0.0
      %1867 = vadd.xlane.f32.xlu0 %v1866
      %v1868 = vpop.xlane.xlu0 %1867
      %v1869 = vsel %vm633, %v1859, 0.0
      %1870 = vadd.xlane.f32.xlu0 %v1869
      %v1871 = vpop.xlane.xlu0 %1870
      %v1872 = vsel %vm633, %v1860, 0.0
      %1873 = vadd.xlane.f32.xlu0 %v1872
      %v1874 = vpop.xlane.xlu0 %1873
      %v1875 = vsel %vm633, %v1861, 0.0
      %1876 = vadd.xlane.f32.xlu0 %v1875
      %v1877 = vpop.xlane.xlu0 %1876
      %v1878 = vsel %vm633, %v1862, 0.0
      %1879 = vadd.xlane.f32.xlu0 %v1878
      %v1880 = vpop.xlane.xlu0 %1879
      %v1881 = vsel %vm633, %v1863, 0.0
      %1882 = vadd.xlane.f32.xlu0 %v1881
      %v1883 = vpop.xlane.xlu0 %1882
      %v1884 = vsel %vm633, %v1864, 0.0
      %1885 = vadd.xlane.f32.xlu0 %v1884
      %v1886 = vpop.xlane.xlu0 %1885
      %v1887 = vsel %vm633, %v1865, 0.0
      %1888 = vadd.xlane.f32.xlu0 %v1887
      %v1889 = vpop.xlane.xlu0 %1888
      %v1890 = vmul.f32 %v1868, %v1841
      %v1891 = vmul.f32 %v1871, %v1841
      %v1892 = vmul.f32 %v1874, %v1841
      %v1893 = vmul.f32 %v1877, %v1841
      %v1894 = vmul.f32 %v1880, %v1841
      %v1895 = vmul.f32 %v1883, %v1841
      %v1896 = vmul.f32 %v1886, %v1841
      %v1897 = vmul.f32 %v1889, %v1841
      %v1898 = vadd.f32 %v1890, 1e-05
      %v1899 = vadd.f32 %v1891, 1e-05
      %v1900 = vadd.f32 %v1892, 1e-05
      %v1901 = vadd.f32 %v1893, 1e-05
      %v1902 = vadd.f32 %v1894, 1e-05
      %v1903 = vadd.f32 %v1895, 1e-05
      %v1904 = vadd.f32 %v1896, 1e-05
      %v1905 = vadd.f32 %v1897, 1e-05
      %v1906 = vrsqrt.pop %v1898
      %v1907 = vmul.f32 %v1906, %v1898
      %v1908 = vmul.f32 %v1907, %v1906
      %v1909 = vmul.f32 0.5, %v1908
      %v1910 = vsub.f32 1.5, %v1909
      %v1911 = vmul.f32 %v1906, %v1910
      %vm1912 = vweird.f32 %v1898
      %vm1913 = vweird.f32 %v1906
      %vm1914 = vmor %vm1912, %vm1913
      %v1915 = vsel %vm1914, %v1906, %v1911
      %v1916 = vrsqrt.pop %v1899
      %v1917 = vmul.f32 %v1916, %v1899
      %v1918 = vmul.f32 %v1917, %v1916
      %v1919 = vmul.f32 0.5, %v1918
      %v1920 = vsub.f32 1.5, %v1919
      %v1921 = vmul.f32 %v1916, %v1920
      %vm1922 = vweird.f32 %v1899
      %vm1923 = vweird.f32 %v1916
      %vm1924 = vmor %vm1922, %vm1923
      %v1925 = vsel %vm1924, %v1916, %v1921
      %v1926 = vrsqrt.pop %v1900
      %v1927 = vmul.f32 %v1926, %v1900
      %v1928 = vmul.f32 %v1927, %v1926
      %v1929 = vmul.f32 0.5, %v1928
      %v1930 = vsub.f32 1.5, %v1929
      %v1931 = vmul.f32 %v1926, %v1930
      %vm1932 = vweird.f32 %v1900
      %vm1933 = vweird.f32 %v1926
      %vm1934 = vmor %vm1932, %vm1933
      %v1935 = vsel %vm1934, %v1926, %v1931
      %v1936 = vrsqrt.pop %v1901
      %v1937 = vmul.f32 %v1936, %v1901
      %v1938 = vmul.f32 %v1937, %v1936
      %v1939 = vmul.f32 0.5, %v1938
      %v1940 = vsub.f32 1.5, %v1939
      %v1941 = vmul.f32 %v1936, %v1940
      %vm1942 = vweird.f32 %v1901
      %vm1943 = vweird.f32 %v1936
      %vm1944 = vmor %vm1942, %vm1943
      %v1945 = vsel %vm1944, %v1936, %v1941
      %v1946 = vrsqrt.pop %v1902
      %v1947 = vmul.f32 %v1946, %v1902
      %v1948 = vmul.f32 %v1947, %v1946
      %v1949 = vmul.f32 0.5, %v1948
      %v1950 = vsub.f32 1.5, %v1949
      %v1951 = vmul.f32 %v1946, %v1950
      %vm1952 = vweird.f32 %v1902
      %vm1953 = vweird.f32 %v1946
      %vm1954 = vmor %vm1952, %vm1953
      %v1955 = vsel %vm1954, %v1946, %v1951
      %v1956 = vrsqrt.pop %v1903
      %v1957 = vmul.f32 %v1956, %v1903
      %v1958 = vmul.f32 %v1957, %v1956
      %v1959 = vmul.f32 0.5, %v1958
      %v1960 = vsub.f32 1.5, %v1959
      %v1961 = vmul.f32 %v1956, %v1960
      %vm1962 = vweird.f32 %v1903
      %vm1963 = vweird.f32 %v1956
      %vm1964 = vmor %vm1962, %vm1963
      %v1965 = vsel %vm1964, %v1956, %v1961
      %v1966 = vrsqrt.pop %v1904
      %v1967 = vmul.f32 %v1966, %v1904
      %v1968 = vmul.f32 %v1967, %v1966
      %v1969 = vmul.f32 0.5, %v1968
      %v1970 = vsub.f32 1.5, %v1969
      %v1971 = vmul.f32 %v1966, %v1970
      %vm1972 = vweird.f32 %v1904
      %vm1973 = vweird.f32 %v1966
      %vm1974 = vmor %vm1972, %vm1973
      %v1975 = vsel %vm1974, %v1966, %v1971
      %v1976 = vrsqrt.pop %v1905
      %v1977 = vmul.f32 %v1976, %v1905
      %v1978 = vmul.f32 %v1977, %v1976
      %v1979 = vmul.f32 0.5, %v1978
      %v1980 = vsub.f32 1.5, %v1979
      %v1981 = vmul.f32 %v1976, %v1980
      %vm1982 = vweird.f32 %v1905
      %vm1983 = vweird.f32 %v1976
      %vm1984 = vmor %vm1982, %vm1983
      %v1985 = vsel %vm1984, %v1976, %v1981
      %v1986 = vmul.f32 %v1850, %v1915
      %v1987 = vmul.f32 %v1851, %v1925
      %v1988 = vmul.f32 %v1852, %v1935
      %v1989 = vmul.f32 %v1853, %v1945
      %v1990 = vmul.f32 %v1854, %v1955
      %v1991 = vmul.f32 %v1855, %v1965
      %v1992 = vmul.f32 %v1856, %v1975
      %v1993 = vmul.f32 %v1857, %v1985
      %v1995 = vperm.slane %v1809, 0
      %v1997 = vmul.f32 %v1986, %v1995
      %v1998 = vmul.f32 %v1987, %v1995
      %v1999 = vmul.f32 %v1988, %v1995
      %v2000 = vmul.f32 %v1989, %v1995
      %v2001 = vmul.f32 %v1990, %v1995
      %v2002 = vmul.f32 %v1991, %v1995
      %v2003 = vmul.f32 %v1992, %v1995
      %v2004 = vmul.f32 %v1993, %v1995
      %v2006 = vperm.slane %v1810, 0
      %v2008 = vadd.f32 %v1997, %v2006
      %v2009 = vadd.f32 %v1998, %v2006
      %v2010 = vadd.f32 %v1999, %v2006
      %v2011 = vadd.f32 %v2000, %v2006
      %v2012 = vadd.f32 %v2001, %v2006
      %v2013 = vadd.f32 %v2002, %v2006
      %v2014 = vadd.f32 %v2003, %v2006
      %v2015 = vadd.f32 %v2004, %v2006
      %v2016 = vpack.c.bf16 %v2009, %v2008
      %v2017 = vpack.c.bf16 %v2011, %v2010
      %v2018 = vpack.c.bf16 %v2013, %v2012
      %v2019 = vpack.c.bf16 %v2015, %v2014
      %v2020 = vld [vmem:[%s11] sm:$0xf]
      %v2021 = vld [vmem:[%s11 + $0x4] sm:$0xf]
      %v2022 = vld [vmem:[%s11 + $0x8] sm:$0xf]
      %v2023 = vld [vmem:[%s11 + $0xc] sm:$0xf]
      %v2024 = vld [vmem:[%s12] sm:$0x1]
      %v2026 = vperm.slane %v2024, 0
      %v2032 = vunpack.c.l.b16 %v2020
      %v2033 = vunpack.c.l.b16 %v2021
      %v2034 = vunpack.c.l.b16 %v2022
      %v2035 = vunpack.c.l.b16 %v2023
      %v2036 = vpack.c.b16 %v2033, %v2032
      %v2037 = vpack.c.b16 %v2035, %v2034
      %v2041 = vsel %vm633, %v2016, 0
      %v2044 = vsel %vm633, %v2017, 0
      %v2047 = vsel %vm633, %v2018, 0
      %v2050 = vsel %vm633, %v2019, 0
      %2052 = vmatpush.bf16.msra.mxu0 0
      %2053 = vmatpush.bf16.msra.mxu0 0
      %2054 = vmatpush.bf16.msra.mxu0 0
      %2055 = vmatpush.bf16.msra.mxu0 0
      %2056 = vmatpush.bf16.msra.mxu0 0
      %2057 = vmatpush.bf16.msra.mxu0 0
      %2058 = vmatpush.bf16.msra.mxu0 %v2037
      %2059 = vmatpush.bf16.msra.mxu0 %v2036
      %2060 = vmatmul.bf16.gmra.mxu0 %v2041
      %v2061 = vpop.f32.mrf.mxu0
      %v2062 = vadd.f32 %v2026, %v2061
      %v2063 = vpop.f32.mrf.mxu0
      %v2064 = vadd.f32 %v2026, %v2063
      %2065 = vmatmul.bf16.gmra.mxu0 %v2044
      %v2066 = vpop.f32.mrf.mxu0
      %v2067 = vadd.f32 %v2026, %v2066
      %v2068 = vpop.f32.mrf.mxu0
      %v2069 = vadd.f32 %v2026, %v2068
      %2070 = vmatmul.bf16.gmra.mxu0 %v2047
      %v2071 = vpop.f32.mrf.mxu0
      %v2072 = vadd.f32 %v2026, %v2071
      %v2073 = vpop.f32.mrf.mxu0
      %v2074 = vadd.f32 %v2026, %v2073
      %2075 = vmatmul.bf16.gmra.mxu0 %v2050
      %v2076 = vpop.f32.mrf.mxu0
      %v2077 = vadd.f32 %v2026, %v2076
      %v2078 = vpop.f32.mrf.mxu0
      %v2079 = vadd.f32 %v2026, %v2078
      %2080 = vdwg.mxu0
      %v2081 = vmax.f32 %v2062, 0.0
      %v2082 = vmax.f32 %v2064, 0.0
      %v2083 = vmax.f32 %v2067, 0.0
      %v2084 = vmax.f32 %v2069, 0.0
      %v2085 = vmax.f32 %v2072, 0.0
      %v2086 = vmax.f32 %v2074, 0.0
      %v2087 = vmax.f32 %v2077, 0.0
      %v2088 = vmax.f32 %v2079, 0.0
      %v2089 = vpack.c.bf16 %v2082, %v2081
      %v2090 = vpack.c.bf16 %v2084, %v2083
      %v2091 = vpack.c.bf16 %v2086, %v2085
      %v2092 = vpack.c.bf16 %v2088, %v2087
      %v2093 = vld [vmem:[%s13] sm:$0xf]
      %v2094 = vld [vmem:[%s13 + $0x4] sm:$0xf]
      %v2095 = vld [vmem:[%s13 + $0x8] sm:$0xf]
      %v2096 = vld [vmem:[%s13 + $0xc] sm:$0xf]
      %v2097 = vld [vmem:[%s13 + $0x10] sm:$0xf]
      %v2098 = vld [vmem:[%s13 + $0x14] sm:$0xf]
      %v2099 = vld [vmem:[%s13 + $0x18] sm:$0xf]
      %v2100 = vld [vmem:[%s13 + $0x1c] sm:$0xf]
      %v2101 = vld [vmem:[%s14] sm:$0x1]
      %v2103 = vperm.slane %v2101, 0
      %v2113 = vunpack.c.l.b16 %v2093
      %v2114 = vunpack.c.l.b16 %v2094
      %v2115 = vunpack.c.l.b16 %v2095
      %v2116 = vunpack.c.l.b16 %v2096
      %v2117 = vunpack.c.l.b16 %v2097
      %v2118 = vunpack.c.l.b16 %v2098
      %v2119 = vunpack.c.l.b16 %v2099
      %v2120 = vunpack.c.l.b16 %v2100
      %v2121 = vpack.c.b16 %v2114, %v2113
      %v2122 = vpack.c.b16 %v2116, %v2115
      %v2123 = vpack.c.b16 %v2118, %v2117
      %v2124 = vpack.c.b16 %v2120, %v2119
      %v2130 = vsel %vm813, %v2089, 0
      %v2133 = vsel %vm813, %v2090, 0
      %v2136 = vsel %vm813, %v2091, 0
      %v2139 = vsel %vm813, %v2092, 0
      %2141 = vmatpush.bf16.msra.mxu0 0
      %2142 = vmatpush.bf16.msra.mxu0 0
      %2143 = vmatpush.bf16.msra.mxu0 0
      %2144 = vmatpush.bf16.msra.mxu0 0
      %2145 = vmatpush.bf16.msra.mxu0 %v2124
      %2146 = vmatpush.bf16.msra.mxu0 %v2123
      %2147 = vmatpush.bf16.msra.mxu0 %v2122
      %2148 = vmatpush.bf16.msra.mxu0 %v2121
      %2149 = vmatmul.bf16.gmra.mxu0 %v2130
      %v2150 = vpop.f32.mrf.mxu0
      %v2151 = vadd.f32 %v2103, %v2150
      %v2152 = vpop.f32.mrf.mxu0
      %v2153 = vadd.f32 %v2103, %v2152
      %2154 = vmatmul.bf16.gmra.mxu0 %v2133
      %v2155 = vpop.f32.mrf.mxu0
      %v2156 = vadd.f32 %v2103, %v2155
      %v2157 = vpop.f32.mrf.mxu0
      %v2158 = vadd.f32 %v2103, %v2157
      %2159 = vmatmul.bf16.gmra.mxu0 %v2136
      %v2160 = vpop.f32.mrf.mxu0
      %v2161 = vadd.f32 %v2103, %v2160
      %v2162 = vpop.f32.mrf.mxu0
      %v2163 = vadd.f32 %v2103, %v2162
      %2164 = vmatmul.bf16.gmra.mxu0 %v2139
      %v2165 = vpop.f32.mrf.mxu0
      %v2166 = vadd.f32 %v2103, %v2165
      %v2167 = vpop.f32.mrf.mxu0
      %v2168 = vadd.f32 %v2103, %v2167
      %2169 = vdwg.mxu0
      %v2170 = vadd.f32 %v2008, %v2151
      %v2171 = vadd.f32 %v2009, %v2153
      %v2172 = vadd.f32 %v2010, %v2156
      %v2173 = vadd.f32 %v2011, %v2158
      %v2174 = vadd.f32 %v2012, %v2161
      %v2175 = vadd.f32 %v2013, %v2163
      %v2176 = vadd.f32 %v2014, %v2166
      %v2177 = vadd.f32 %v2015, %v2168
      %v2178 = vld [vmem:[%s15] sm:$0x1]
      %v2179 = vld [vmem:[%s16] sm:$0x1]
      %v2180 = vsel %vm633, %v2170, 0.0
      %2181 = vadd.xlane.f32.xlu0 %v2180
      %v2182 = vpop.xlane.xlu0 %2181
      %v2183 = vsel %vm633, %v2171, 0.0
      %2184 = vadd.xlane.f32.xlu0 %v2183
      %v2185 = vpop.xlane.xlu0 %2184
      %v2186 = vsel %vm633, %v2172, 0.0
      %2187 = vadd.xlane.f32.xlu0 %v2186
      %v2188 = vpop.xlane.xlu0 %2187
      %v2189 = vsel %vm633, %v2173, 0.0
      %2190 = vadd.xlane.f32.xlu0 %v2189
      %v2191 = vpop.xlane.xlu0 %2190
      %v2192 = vsel %vm633, %v2174, 0.0
      %2193 = vadd.xlane.f32.xlu0 %v2192
      %v2194 = vpop.xlane.xlu0 %2193
      %v2195 = vsel %vm633, %v2175, 0.0
      %2196 = vadd.xlane.f32.xlu0 %v2195
      %v2197 = vpop.xlane.xlu0 %2196
      %v2198 = vsel %vm633, %v2176, 0.0
      %2199 = vadd.xlane.f32.xlu0 %v2198
      %v2200 = vpop.xlane.xlu0 %2199
      %v2201 = vsel %vm633, %v2177, 0.0
      %2202 = vadd.xlane.f32.xlu0 %v2201
      %v2203 = vpop.xlane.xlu0 %2202
      %v2204 = vmul.f32 %v2182, %v1841
      %v2205 = vmul.f32 %v2185, %v1841
      %v2206 = vmul.f32 %v2188, %v1841
      %v2207 = vmul.f32 %v2191, %v1841
      %v2208 = vmul.f32 %v2194, %v1841
      %v2209 = vmul.f32 %v2197, %v1841
      %v2210 = vmul.f32 %v2200, %v1841
      %v2211 = vmul.f32 %v2203, %v1841
      %v2212 = vsub.f32 %v2170, %v2204
      %v2213 = vsub.f32 %v2171, %v2205
      %v2214 = vsub.f32 %v2172, %v2206
      %v2215 = vsub.f32 %v2173, %v2207
      %v2216 = vsub.f32 %v2174, %v2208
      %v2217 = vsub.f32 %v2175, %v2209
      %v2218 = vsub.f32 %v2176, %v2210
      %v2219 = vsub.f32 %v2177, %v2211
      %v2220 = vmul.f32 %v2212, %v2212
      %v2221 = vmul.f32 %v2213, %v2213
      %v2222 = vmul.f32 %v2214, %v2214
      %v2223 = vmul.f32 %v2215, %v2215
      %v2224 = vmul.f32 %v2216, %v2216
      %v2225 = vmul.f32 %v2217, %v2217
      %v2226 = vmul.f32 %v2218, %v2218
      %v2227 = vmul.f32 %v2219, %v2219
      %v2228 = vsel %vm633, %v2220, 0.0
      %2229 = vadd.xlane.f32.xlu0 %v2228
      %v2230 = vpop.xlane.xlu0 %2229
      %v2231 = vsel %vm633, %v2221, 0.0
      %2232 = vadd.xlane.f32.xlu0 %v2231
      %v2233 = vpop.xlane.xlu0 %2232
      %v2234 = vsel %vm633, %v2222, 0.0
      %2235 = vadd.xlane.f32.xlu0 %v2234
      %v2236 = vpop.xlane.xlu0 %2235
      %v2237 = vsel %vm633, %v2223, 0.0
      %2238 = vadd.xlane.f32.xlu0 %v2237
      %v2239 = vpop.xlane.xlu0 %2238
      %v2240 = vsel %vm633, %v2224, 0.0
      %2241 = vadd.xlane.f32.xlu0 %v2240
      %v2242 = vpop.xlane.xlu0 %2241
      %v2243 = vsel %vm633, %v2225, 0.0
      %2244 = vadd.xlane.f32.xlu0 %v2243
      %v2245 = vpop.xlane.xlu0 %2244
      %v2246 = vsel %vm633, %v2226, 0.0
      %2247 = vadd.xlane.f32.xlu0 %v2246
      %v2248 = vpop.xlane.xlu0 %2247
      %v2249 = vsel %vm633, %v2227, 0.0
      %2250 = vadd.xlane.f32.xlu0 %v2249
      %v2251 = vpop.xlane.xlu0 %2250
      %v2252 = vmul.f32 %v2230, %v1841
      %v2253 = vmul.f32 %v2233, %v1841
      %v2254 = vmul.f32 %v2236, %v1841
      %v2255 = vmul.f32 %v2239, %v1841
      %v2256 = vmul.f32 %v2242, %v1841
      %v2257 = vmul.f32 %v2245, %v1841
      %v2258 = vmul.f32 %v2248, %v1841
      %v2259 = vmul.f32 %v2251, %v1841
      %v2260 = vadd.f32 %v2252, 1e-05
      %v2261 = vadd.f32 %v2253, 1e-05
      %v2262 = vadd.f32 %v2254, 1e-05
      %v2263 = vadd.f32 %v2255, 1e-05
      %v2264 = vadd.f32 %v2256, 1e-05
      %v2265 = vadd.f32 %v2257, 1e-05
      %v2266 = vadd.f32 %v2258, 1e-05
      %v2267 = vadd.f32 %v2259, 1e-05
      %v2268 = vrsqrt.pop %v2260
      %v2269 = vmul.f32 %v2268, %v2260
      %v2270 = vmul.f32 %v2269, %v2268
      %v2271 = vmul.f32 0.5, %v2270
      %v2272 = vsub.f32 1.5, %v2271
      %v2273 = vmul.f32 %v2268, %v2272
      %vm2274 = vweird.f32 %v2260
      %vm2275 = vweird.f32 %v2268
      %vm2276 = vmor %vm2274, %vm2275
      %v2277 = vsel %vm2276, %v2268, %v2273
      %v2278 = vrsqrt.pop %v2261
      %v2279 = vmul.f32 %v2278, %v2261
      %v2280 = vmul.f32 %v2279, %v2278
      %v2281 = vmul.f32 0.5, %v2280
      %v2282 = vsub.f32 1.5, %v2281
      %v2283 = vmul.f32 %v2278, %v2282
      %vm2284 = vweird.f32 %v2261
      %vm2285 = vweird.f32 %v2278
      %vm2286 = vmor %vm2284, %vm2285
      %v2287 = vsel %vm2286, %v2278, %v2283
      %v2288 = vrsqrt.pop %v2262
      %v2289 = vmul.f32 %v2288, %v2262
      %v2290 = vmul.f32 %v2289, %v2288
      %v2291 = vmul.f32 0.5, %v2290
      %v2292 = vsub.f32 1.5, %v2291
      %v2293 = vmul.f32 %v2288, %v2292
      %vm2294 = vweird.f32 %v2262
      %vm2295 = vweird.f32 %v2288
      %vm2296 = vmor %vm2294, %vm2295
      %v2297 = vsel %vm2296, %v2288, %v2293
      %v2298 = vrsqrt.pop %v2263
      %v2299 = vmul.f32 %v2298, %v2263
      %v2300 = vmul.f32 %v2299, %v2298
      %v2301 = vmul.f32 0.5, %v2300
      %v2302 = vsub.f32 1.5, %v2301
      %v2303 = vmul.f32 %v2298, %v2302
      %vm2304 = vweird.f32 %v2263
      %vm2305 = vweird.f32 %v2298
      %vm2306 = vmor %vm2304, %vm2305
      %v2307 = vsel %vm2306, %v2298, %v2303
      %v2308 = vrsqrt.pop %v2264
      %v2309 = vmul.f32 %v2308, %v2264
      %v2310 = vmul.f32 %v2309, %v2308
      %v2311 = vmul.f32 0.5, %v2310
      %v2312 = vsub.f32 1.5, %v2311
      %v2313 = vmul.f32 %v2308, %v2312
      %vm2314 = vweird.f32 %v2264
      %vm2315 = vweird.f32 %v2308
      %vm2316 = vmor %vm2314, %vm2315
      %v2317 = vsel %vm2316, %v2308, %v2313
      %v2318 = vrsqrt.pop %v2265
      %v2319 = vmul.f32 %v2318, %v2265
      %v2320 = vmul.f32 %v2319, %v2318
      %v2321 = vmul.f32 0.5, %v2320
      %v2322 = vsub.f32 1.5, %v2321
      %v2323 = vmul.f32 %v2318, %v2322
      %vm2324 = vweird.f32 %v2265
      %vm2325 = vweird.f32 %v2318
      %vm2326 = vmor %vm2324, %vm2325
      %v2327 = vsel %vm2326, %v2318, %v2323
      %v2328 = vrsqrt.pop %v2266
      %v2329 = vmul.f32 %v2328, %v2266
      %v2330 = vmul.f32 %v2329, %v2328
      %v2331 = vmul.f32 0.5, %v2330
      %v2332 = vsub.f32 1.5, %v2331
      %v2333 = vmul.f32 %v2328, %v2332
      %vm2334 = vweird.f32 %v2266
      %vm2335 = vweird.f32 %v2328
      %vm2336 = vmor %vm2334, %vm2335
      %v2337 = vsel %vm2336, %v2328, %v2333
      %v2338 = vrsqrt.pop %v2267
      %v2339 = vmul.f32 %v2338, %v2267
      %v2340 = vmul.f32 %v2339, %v2338
      %v2341 = vmul.f32 0.5, %v2340
      %v2342 = vsub.f32 1.5, %v2341
      %v2343 = vmul.f32 %v2338, %v2342
      %vm2344 = vweird.f32 %v2267
      %vm2345 = vweird.f32 %v2338
      %vm2346 = vmor %vm2344, %vm2345
      %v2347 = vsel %vm2346, %v2338, %v2343
      %v2348 = vmul.f32 %v2212, %v2277
      %v2349 = vmul.f32 %v2213, %v2287
      %v2350 = vmul.f32 %v2214, %v2297
      %v2351 = vmul.f32 %v2215, %v2307
      %v2352 = vmul.f32 %v2216, %v2317
      %v2353 = vmul.f32 %v2217, %v2327
      %v2354 = vmul.f32 %v2218, %v2337
      %v2355 = vmul.f32 %v2219, %v2347
      %v2357 = vperm.slane %v2178, 0
      %v2359 = vmul.f32 %v2348, %v2357
      %v2360 = vmul.f32 %v2349, %v2357
      %v2361 = vmul.f32 %v2350, %v2357
      %v2362 = vmul.f32 %v2351, %v2357
      %v2363 = vmul.f32 %v2352, %v2357
      %v2364 = vmul.f32 %v2353, %v2357
      %v2365 = vmul.f32 %v2354, %v2357
      %v2366 = vmul.f32 %v2355, %v2357
      %v2368 = vperm.slane %v2179, 0
      %v2370 = vadd.f32 %v2359, %v2368
      %v2371 = vadd.f32 %v2360, %v2368
      %v2372 = vadd.f32 %v2361, %v2368
      %v2373 = vadd.f32 %v2362, %v2368
      %v2374 = vadd.f32 %v2363, %v2368
      %v2375 = vadd.f32 %v2364, %v2368
      %v2376 = vadd.f32 %v2365, %v2368
      %v2377 = vadd.f32 %v2366, %v2368
      %2378 = vst.msk [vmem:[%s582] sm:$0xff] %vm633, %v2370
      %2379 = vst.msk [vmem:[%s582 + $0x8] sm:$0xff] %vm633, %v2371
      %2380 = vst.msk [vmem:[%s582 + $0x10] sm:$0xff] %vm633, %v2372
      %2381 = vst.msk [vmem:[%s582 + $0x18] sm:$0xff] %vm633, %v2373
      %2382 = vst.msk [vmem:[%s582 + $0x20] sm:$0xff] %vm633, %v2374
      %2383 = vst.msk [vmem:[%s582 + $0x28] sm:$0xff] %vm633, %v2375
      %2384 = vst.msk [vmem:[%s582 + $0x30] sm:$0xff] %vm633, %v2376
      %2385 = vst.msk [vmem:[%s582 + $0x38] sm:$0xff] %vm633, %v2377
      %p2386 = scmp.lt.s32.totalorder %s28, 1
      %s2387 = scalar_select %p2386, %s28, 1
      %s2388 = smul.addr %s2387, 8
      %s2389 = smul.addr %s2388, 8
      %s2390 = scalar_lea.vmem %s17, %s2389
      // Predicated region
      $region89: #{graphdetr_forward.7} parent=87 // pred_check
        %p2391 = pneg %p418
      $region90: #{graphdetr_forward.7} parent=87 // pred_check_branch
        %2393 = sbr.rel (%p2391) target = $region92
      $region91: #{graphdetr_forward.7} parent=87 // pred_region
        _
      $region92: #{graphdetr_forward.7} parent=87 // pred_fallthru
        _
    $region88: #{graphdetr_forward.7} parent=5 // pred_fallthru
      _
    %p2394 = scmp.le.s32.totalorder 2, %s23
    // Predicated region
    $region93: #{graphdetr_forward.7} parent=5 // pred_check
      %p2395 = pneg %p2394
    $region94: #{graphdetr_forward.7} parent=5 // pred_check_branch
      %2397 = sbr.rel (%p2395) target = $region96
    $region95: #{graphdetr_forward.7} parent=5 // pred_region
      %s2398 = ssub.s32 %s23, 2
      // Predicated region
      $region97: #{graphdetr_forward.7} parent=95 // pred_check
        %p2399 = pneg %p424
      $region98: #{graphdetr_forward.7} parent=95 // pred_check_branch
        %2401 = sbr.rel (%p2399) target = $region100
      $region99: #{graphdetr_forward.7} parent=95 // pred_region
        %p2402 = scmp.lt.s32.totalorder %s29, 1
        %s2403 = scalar_select %p2402, %s29, 1
        %s2404 = smul.addr %s2403, 8
        %s2405 = smul.addr %s2404, 8
        %s2406 = scalar_lea.vmem %s17, %s2405
      $region100: #{graphdetr_forward.7} parent=95 // pred_fallthru
        _
    $region96: #{graphdetr_forward.7} parent=5 // pred_fallthru
      _
  $region6: #{graphdetr_forward.7} parent=0 // loop_footer
    %s27 = sadd.s32 1, %s23
  $region7: #{graphdetr_forward.7} parent=0 // loop_footer_branch
    %22 = sbr.rel target = $region3
  $region8: #{graphdetr_forward.7} parent=0 // loop_exit
    _

// kernel: graphdetr_forward.9
$region0: #{graphdetr_forward.9}
  #allocation0 [shape = 'u32[]', space=smem, size = 0x4, offset = 0x4, fixed_abs, tag = 'smem constant byte address 0x4 - core index']
  #allocation1 [shape = 'u32[72,128]{1,0:T(1,128)}', space=vmem, size = 0x9000, scoped, tag = 'internal scratch']
  #allocation2 [shape = 'f32[8,32]{1,0:T(8,128)}', space=vmem, size = 0x1000, scoped, tag = 'scratch operand']
  %s0 = inlined_call_operand.smem [shape: u32[33], index: -1, kind: input, shape index: {}]
  %s1 = sld [smem:[%s0]]
  %s2 = scalar_lea.smem %s0, 1
  %s3 = sld [smem:[%s2]]
  %s4 = scalar_lea.smem %s0, 2
  %s5 = sld [smem:[%s4]]
  %s6 = scalar_lea.smem %s0, 3
  %s7 = sld [smem:[%s6]]
  %s8 = scalar_lea.smem %s0, 4
  %s9 = sld [smem:[%s8]]
  %s10 = scalar_lea.smem %s0, 5
  %s11 = sld [smem:[%s10]]
  %s12 = scalar_lea.smem %s0, 6
  %s13 = sld [smem:[%s12]]
  %s14 = scalar_lea.smem %s0, 7
  %s15 = sld [smem:[%s14]]
  %s16 = scalar_lea.smem %s0, 8
  %s17 = sld [smem:[%s16]]
  %s18 = scalar_lea.smem %s0, 9
  %s19 = sld [smem:[%s18]]
  %s20 = scalar_lea.smem %s0, 10
  %s21 = sld [smem:[%s20]]
  %s22 = scalar_lea.smem %s0, 11
  %s23 = sld [smem:[%s22]]
  %s24 = scalar_lea.smem %s0, 12
  %s25 = sld [smem:[%s24]]
  %s26 = scalar_lea.smem %s0, 13
  %s27 = sld [smem:[%s26]]
  %s28 = scalar_lea.smem %s0, 14
  %s29 = sld [smem:[%s28]]
  %s30 = scalar_lea.smem %s0, 15
  %s31 = sld [smem:[%s30]]
  %s32 = scalar_lea.smem %s0, 16
  %s33 = sld [smem:[%s32]]
  %s34 = scalar_lea.smem %s0, 17
  %s35 = sld [smem:[%s34]]
  %s36 = scalar_lea.smem %s0, 18
  %s37 = sld [smem:[%s36]]
  %s38 = scalar_lea.smem %s0, 19
  %s39 = sld [smem:[%s38]]
  %s40 = scalar_lea.smem %s0, 20
  %s41 = sld [smem:[%s40]]
  %s42 = scalar_lea.smem %s0, 21
  %s43 = sld [smem:[%s42]]
  %s44 = scalar_lea.smem %s0, 22
  %s45 = sld [smem:[%s44]]
  %s46 = scalar_lea.smem %s0, 23
  %s47 = sld [smem:[%s46]]
  %s48 = scalar_lea.smem %s0, 24
  %s49 = sld [smem:[%s48]]
  %s50 = scalar_lea.smem %s0, 25
  %s51 = sld [smem:[%s50]]
  %s52 = scalar_lea.smem %s0, 26
  %s53 = sld [smem:[%s52]]
  %s54 = scalar_lea.smem %s0, 27
  %s55 = sld [smem:[%s54]]
  %s56 = scalar_lea.smem %s0, 28
  %s57 = sld [smem:[%s56]]
  %s58 = scalar_lea.smem %s0, 29
  %s59 = sld [smem:[%s58]]
  %s60 = scalar_lea.smem %s0, 30
  %s61 = sld [smem:[%s60]]
  %s62 = scalar_lea.smem %s0, 31
  %s63 = sld [smem:[%s62]]
  %s64 = scalar_lea.smem %s0, 32
  %s65 = sld [smem:[%s64]]
  %66 = xla_tuple %s63, %s65
  %s67 = sld [smem:[#allocation0]]
  $region165: #{graphdetr_forward.9} parent=0
    _
  %s69 = ssub.s32 1, %s67
  %s70 = scalar_select 0, %s69, %s67
  loop: start=0, step=1, limit=4
  $region2: #{graphdetr_forward.9} parent=0 // loop_pre_header
    _
  $region3: #{graphdetr_forward.9} parent=0 // loop_header
    %s72 = sphi 0, %s76
    %p73 = scmp.ge.s32.totalorder %s72, 4
    %s82 = sphi 0, %s84
    %s85 = sphi 0, %s82
    %s86 = sphi 0, %s85
    %s102 = sphi 0, %s86
    %s106 = sphi 0, %s106
    %s108 = sphi 0, %s106
    %s109 = sphi 0, %s108
    %s123 = sphi 0, %s109
    %s129 = sphi 0, %s131
    %s132 = sphi 0, %s129
    %s133 = sphi 0, %s132
    %s149 = sphi 0, %s133
    %s155 = sphi 0, %s157
    %s158 = sphi 0, %s155
    %s159 = sphi 0, %s158
    %s175 = sphi 0, %s159
    %s181 = sphi 0, %s183
    %s184 = sphi 0, %s181
    %s185 = sphi 0, %s184
    %s201 = sphi 0, %s185
    %s205 = sphi 0, %s205
    %s207 = sphi 0, %s205
    %s208 = sphi 0, %s207
    %s222 = sphi 0, %s208
    %s226 = sphi 0, %s226
    %s228 = sphi 0, %s226
    %s229 = sphi 0, %s228
    %s243 = sphi 0, %s229
    %s247 = sphi 0, %s247
    %s249 = sphi 0, %s247
    %s250 = sphi 0, %s249
    %s264 = sphi 0, %s250
    %s268 = sphi 0, %s268
    %s270 = sphi 0, %s268
    %s271 = sphi 0, %s270
    %s285 = sphi 0, %s271
    %s289 = sphi 0, %s289
    %s291 = sphi 0, %s289
    %s292 = sphi 0, %s291
    %s306 = sphi 0, %s292
    %s310 = sphi 0, %s310
    %s312 = sphi 0, %s310
    %s313 = sphi 0, %s312
    %s327 = sphi 0, %s313
    %s331 = sphi 0, %s331
    %s333 = sphi 0, %s331
    %s334 = sphi 0, %s333
    %s348 = sphi 0, %s334
    %s352 = sphi 0, %s352
    %s354 = sphi 0, %s352
    %s355 = sphi 0, %s354
    %s369 = sphi 0, %s355
    %s373 = sphi 0, %s373
    %s375 = sphi 0, %s373
    %s376 = sphi 0, %s375
    %s390 = sphi 0, %s376
    %s394 = sphi 0, %s394
    %s396 = sphi 0, %s394
    %s397 = sphi 0, %s396
    %s411 = sphi 0, %s397
    %s415 = sphi 0, %s415
    %s417 = sphi 0, %s415
    %s418 = sphi 0, %s417
    %s432 = sphi 0, %s418
    %s436 = sphi 0, %s436
    %s438 = sphi 0, %s436
    %s439 = sphi 0, %s438
    %s453 = sphi 0, %s439
    %s457 = sphi 0, %s457
    %s459 = sphi 0, %s457
    %s460 = sphi 0, %s459
    %s474 = sphi 0, %s460
    %s478 = sphi 0, %s478
    %s480 = sphi 0, %s478
    %s481 = sphi 0, %s480
    %s495 = sphi 0, %s481
    %s499 = sphi 0, %s499
    %s501 = sphi 0, %s499
    %s502 = sphi 0, %s501
    %s516 = sphi 0, %s502
    %s520 = sphi 0, %s520
    %s522 = sphi 0, %s520
    %s523 = sphi 0, %s522
    %s537 = sphi 0, %s523
    %s541 = sphi 0, %s541
    %s543 = sphi 0, %s541
    %s544 = sphi 0, %s543
    %s558 = sphi 0, %s544
    %s562 = sphi 0, %s562
    %s564 = sphi 0, %s562
    %s565 = sphi 0, %s564
    %s579 = sphi 0, %s565
    %s583 = sphi 0, %s583
    %s585 = sphi 0, %s583
    %s586 = sphi 0, %s585
    %s600 = sphi 0, %s586
    %s604 = sphi 0, %s604
    %s606 = sphi 0, %s604
    %s607 = sphi 0, %s606
    %s621 = sphi 0, %s607
    %s625 = sphi 0, %s625
    %s627 = sphi 0, %s625
    %s628 = sphi 0, %s627
    %s642 = sphi 0, %s628
    %s646 = sphi 0, %s646
    %s648 = sphi 0, %s646
    %s649 = sphi 0, %s648
    %s663 = sphi 0, %s649
    %s667 = sphi 0, %s667
    %s669 = sphi 0, %s667
    %s670 = sphi 0, %s669
    %s684 = sphi 0, %s670
    %s688 = sphi 0, %s688
    %s690 = sphi 0, %s688
    %s691 = sphi 0, %s690
    %s705 = sphi 0, %s691
    %s709 = sphi 0, %s709
    %s711 = sphi 0, %s709
    %s712 = sphi 0, %s711
    %s726 = sphi 0, %s712
    %s730 = sphi 0, %s730
    %s732 = sphi 0, %s730
    %s733 = sphi 0, %s732
    %s747 = sphi 0, %s733
    %s753 = sphi 0, %s755
    %s756 = sphi 0, %s753
    %s757 = sphi 0, %s756
    %s773 = sphi 0, %s757
    %s779 = sphi 0, %s781
    %s782 = sphi 0, %s779
    %s783 = sphi 0, %s782
    %s799 = sphi 0, %s783
  $region4: #{graphdetr_forward.9} parent=0 // loop_header_branch
    %75 = sbr.rel (%p73) target = $region8
  $region5: #{graphdetr_forward.9} parent=0 // loop_body
    %s77 = ssub.s32 %s72, 1
    %s78 = ssub.s32 %s72, 2
    %s79 = sadd.s32 %s72, 1
    %s80 = ssub.s32 %s72, %s79
    %p81 = scmp.eq.s32.totalorder %s80, 0
    %s83 = sadd.s32 %s82, 1
    %s84 = scalar_select %p81, %s82, %s83
    %p87 = pneg %p81
    %p88 = scmp.eq.s32.totalorder %s72, 1
    %p89 = por %p87, %p88
    %p90 = scmp.ne.s32.totalorder %s82, %s85
    %p91 = scmp.eq.s32.totalorder %s72, 0
    %p92 = por %p90, %p91
    %p93 = scmp.ne.s32.totalorder %s82, %s85
    %p94 = scmp.eq.s32.totalorder %s77, 1
    %p95 = por %p93, %p94
    %p96 = scmp.ne.s32.totalorder %s85, %s86
    %p97 = scmp.eq.s32.totalorder %s77, 0
    %p98 = por %p96, %p97
    %p99 = scmp.ne.s32.totalorder %s85, %s86
    %p100 = scmp.eq.s32.totalorder %s78, 1
    %p101 = por %p99, %p100
    %p103 = scmp.ne.s32.totalorder %s86, %s102
    %p104 = scmp.eq.s32.totalorder %s78, 0
    %p105 = por %p103, %p104
    %s107 = sadd.s32 %s106, 1
    %p110 = scmp.eq.s32.totalorder %s72, 1
    %p111 = scmp.ne.s32.totalorder %s106, %s108
    %p112 = scmp.eq.s32.totalorder %s72, 0
    %p113 = por %p111, %p112
    %p114 = scmp.ne.s32.totalorder %s106, %s108
    %p115 = scmp.eq.s32.totalorder %s77, 1
    %p116 = por %p114, %p115
    %p117 = scmp.ne.s32.totalorder %s108, %s109
    %p118 = scmp.eq.s32.totalorder %s77, 0
    %p119 = por %p117, %p118
    %p120 = scmp.ne.s32.totalorder %s108, %s109
    %p121 = scmp.eq.s32.totalorder %s78, 1
    %p122 = por %p120, %p121
    %p124 = scmp.ne.s32.totalorder %s109, %s123
    %p125 = scmp.eq.s32.totalorder %s78, 0
    %p126 = por %p124, %p125
    %s127 = ssub.s32 %s72, %s79
    %p128 = scmp.eq.s32.totalorder %s127, 0
    %s130 = sadd.s32 %s129, 1
    %s131 = scalar_select %p128, %s129, %s130
    %p134 = pneg %p128
    %p135 = scmp.eq.s32.totalorder %s72, 1
    %p136 = por %p134, %p135
    %p137 = scmp.ne.s32.totalorder %s129, %s132
    %p138 = scmp.eq.s32.totalorder %s72, 0
    %p139 = por %p137, %p138
    %p140 = scmp.ne.s32.totalorder %s129, %s132
    %p141 = scmp.eq.s32.totalorder %s77, 1
    %p142 = por %p140, %p141
    %p143 = scmp.ne.s32.totalorder %s132, %s133
    %p144 = scmp.eq.s32.totalorder %s77, 0
    %p145 = por %p143, %p144
    %p146 = scmp.ne.s32.totalorder %s132, %s133
    %p147 = scmp.eq.s32.totalorder %s78, 1
    %p148 = por %p146, %p147
    %p150 = scmp.ne.s32.totalorder %s133, %s149
    %p151 = scmp.eq.s32.totalorder %s78, 0
    %p152 = por %p150, %p151
    %s153 = ssub.s32 %s72, %s79
    %p154 = scmp.eq.s32.totalorder %s153, 0
    %s156 = sadd.s32 %s155, 1
    %s157 = scalar_select %p154, %s155, %s156
    %p160 = pneg %p154
    %p161 = scmp.eq.s32.totalorder %s72, 1
    %p162 = por %p160, %p161
    %p163 = scmp.ne.s32.totalorder %s155, %s158
    %p164 = scmp.eq.s32.totalorder %s72, 0
    %p165 = por %p163, %p164
    %p166 = scmp.ne.s32.totalorder %s155, %s158
    %p167 = scmp.eq.s32.totalorder %s77, 1
    %p168 = por %p166, %p167
    %p169 = scmp.ne.s32.totalorder %s158, %s159
    %p170 = scmp.eq.s32.totalorder %s77, 0
    %p171 = por %p169, %p170
    %p172 = scmp.ne.s32.totalorder %s158, %s159
    %p173 = scmp.eq.s32.totalorder %s78, 1
    %p174 = por %p172, %p173
    %p176 = scmp.ne.s32.totalorder %s159, %s175
    %p177 = scmp.eq.s32.totalorder %s78, 0
    %p178 = por %p176, %p177
    %s179 = ssub.s32 %s72, %s79
    %p180 = scmp.eq.s32.totalorder %s179, 0
    %s182 = sadd.s32 %s181, 1
    %s183 = scalar_select %p180, %s181, %s182
    %p186 = pneg %p180
    %p187 = scmp.eq.s32.totalorder %s72, 1
    %p188 = por %p186, %p187
    %p189 = scmp.ne.s32.totalorder %s181, %s184
    %p190 = scmp.eq.s32.totalorder %s72, 0
    %p191 = por %p189, %p190
    %p192 = scmp.ne.s32.totalorder %s181, %s184
    %p193 = scmp.eq.s32.totalorder %s77, 1
    %p194 = por %p192, %p193
    %p195 = scmp.ne.s32.totalorder %s184, %s185
    %p196 = scmp.eq.s32.totalorder %s77, 0
    %p197 = por %p195, %p196
    %p198 = scmp.ne.s32.totalorder %s184, %s185
    %p199 = scmp.eq.s32.totalorder %s78, 1
    %p200 = por %p198, %p199
    %p202 = scmp.ne.s32.totalorder %s185, %s201
    %p203 = scmp.eq.s32.totalorder %s78, 0
    %p204 = por %p202, %p203
    %s206 = sadd.s32 %s205, 1
    %p209 = scmp.eq.s32.totalorder %s72, 1
    %p210 = scmp.ne.s32.totalorder %s205, %s207
    %p211 = scmp.eq.s32.totalorder %s72, 0
    %p212 = por %p210, %p211
    %p213 = scmp.ne.s32.totalorder %s205, %s207
    %p214 = scmp.eq.s32.totalorder %s77, 1
    %p215 = por %p213, %p214
    %p216 = scmp.ne.s32.totalorder %s207, %s208
    %p217 = scmp.eq.s32.totalorder %s77, 0
    %p218 = por %p216, %p217
    %p219 = scmp.ne.s32.totalorder %s207, %s208
    %p220 = scmp.eq.s32.totalorder %s78, 1
    %p221 = por %p219, %p220
    %p223 = scmp.ne.s32.totalorder %s208, %s222
    %p224 = scmp.eq.s32.totalorder %s78, 0
    %p225 = por %p223, %p224
    %s227 = sadd.s32 %s226, 1
    %p230 = scmp.eq.s32.totalorder %s72, 1
    %p231 = scmp.ne.s32.totalorder %s226, %s228
    %p232 = scmp.eq.s32.totalorder %s72, 0
    %p233 = por %p231, %p232
    %p234 = scmp.ne.s32.totalorder %s226, %s228
    %p235 = scmp.eq.s32.totalorder %s77, 1
    %p236 = por %p234, %p235
    %p237 = scmp.ne.s32.totalorder %s228, %s229
    %p238 = scmp.eq.s32.totalorder %s77, 0
    %p239 = por %p237, %p238
    %p240 = scmp.ne.s32.totalorder %s228, %s229
    %p241 = scmp.eq.s32.totalorder %s78, 1
    %p242 = por %p240, %p241
    %p244 = scmp.ne.s32.totalorder %s229, %s243
    %p245 = scmp.eq.s32.totalorder %s78, 0
    %p246 = por %p244, %p245
    %s248 = sadd.s32 %s247, 1
    %p251 = scmp.eq.s32.totalorder %s72, 1
    %p252 = scmp.ne.s32.totalorder %s247, %s249
    %p253 = scmp.eq.s32.totalorder %s72, 0
    %p254 = por %p252, %p253
    %p255 = scmp.ne.s32.totalorder %s247, %s249
    %p256 = scmp.eq.s32.totalorder %s77, 1
    %p257 = por %p255, %p256
    %p258 = scmp.ne.s32.totalorder %s249, %s250
    %p259 = scmp.eq.s32.totalorder %s77, 0
    %p260 = por %p258, %p259
    %p261 = scmp.ne.s32.totalorder %s249, %s250
    %p262 = scmp.eq.s32.totalorder %s78, 1
    %p263 = por %p261, %p262
    %p265 = scmp.ne.s32.totalorder %s250, %s264
    %p266 = scmp.eq.s32.totalorder %s78, 0
    %p267 = por %p265, %p266
    %s269 = sadd.s32 %s268, 1
    %p272 = scmp.eq.s32.totalorder %s72, 1
    %p273 = scmp.ne.s32.totalorder %s268, %s270
    %p274 = scmp.eq.s32.totalorder %s72, 0
    %p275 = por %p273, %p274
    %p276 = scmp.ne.s32.totalorder %s268, %s270
    %p277 = scmp.eq.s32.totalorder %s77, 1
    %p278 = por %p276, %p277
    %p279 = scmp.ne.s32.totalorder %s270, %s271
    %p280 = scmp.eq.s32.totalorder %s77, 0
    %p281 = por %p279, %p280
    %p282 = scmp.ne.s32.totalorder %s270, %s271
    %p283 = scmp.eq.s32.totalorder %s78, 1
    %p284 = por %p282, %p283
    %p286 = scmp.ne.s32.totalorder %s271, %s285
    %p287 = scmp.eq.s32.totalorder %s78, 0
    %p288 = por %p286, %p287
    %s290 = sadd.s32 %s289, 1
    %p293 = scmp.eq.s32.totalorder %s72, 1
    %p294 = scmp.ne.s32.totalorder %s289, %s291
    %p295 = scmp.eq.s32.totalorder %s72, 0
    %p296 = por %p294, %p295
    %p297 = scmp.ne.s32.totalorder %s289, %s291
    %p298 = scmp.eq.s32.totalorder %s77, 1
    %p299 = por %p297, %p298
    %p300 = scmp.ne.s32.totalorder %s291, %s292
    %p301 = scmp.eq.s32.totalorder %s77, 0
    %p302 = por %p300, %p301
    %p303 = scmp.ne.s32.totalorder %s291, %s292
    %p304 = scmp.eq.s32.totalorder %s78, 1
    %p305 = por %p303, %p304
    %p307 = scmp.ne.s32.totalorder %s292, %s306
    %p308 = scmp.eq.s32.totalorder %s78, 0
    %p309 = por %p307, %p308
    %s311 = sadd.s32 %s310, 1
    %p314 = scmp.eq.s32.totalorder %s72, 1
    %p315 = scmp.ne.s32.totalorder %s310, %s312
    %p316 = scmp.eq.s32.totalorder %s72, 0
    %p317 = por %p315, %p316
    %p318 = scmp.ne.s32.totalorder %s310, %s312
    %p319 = scmp.eq.s32.totalorder %s77, 1
    %p320 = por %p318, %p319
    %p321 = scmp.ne.s32.totalorder %s312, %s313
    %p322 = scmp.eq.s32.totalorder %s77, 0
    %p323 = por %p321, %p322
    %p324 = scmp.ne.s32.totalorder %s312, %s313
    %p325 = scmp.eq.s32.totalorder %s78, 1
    %p326 = por %p324, %p325
    %p328 = scmp.ne.s32.totalorder %s313, %s327
    %p329 = scmp.eq.s32.totalorder %s78, 0
    %p330 = por %p328, %p329
    %s332 = sadd.s32 %s331, 1
    %p335 = scmp.eq.s32.totalorder %s72, 1
    %p336 = scmp.ne.s32.totalorder %s331, %s333
    %p337 = scmp.eq.s32.totalorder %s72, 0
    %p338 = por %p336, %p337
    %p339 = scmp.ne.s32.totalorder %s331, %s333
    %p340 = scmp.eq.s32.totalorder %s77, 1
    %p341 = por %p339, %p340
    %p342 = scmp.ne.s32.totalorder %s333, %s334
    %p343 = scmp.eq.s32.totalorder %s77, 0
    %p344 = por %p342, %p343
    %p345 = scmp.ne.s32.totalorder %s333, %s334
    %p346 = scmp.eq.s32.totalorder %s78, 1
    %p347 = por %p345, %p346
    %p349 = scmp.ne.s32.totalorder %s334, %s348
    %p350 = scmp.eq.s32.totalorder %s78, 0
    %p351 = por %p349, %p350
    %s353 = sadd.s32 %s352, 1
    %p356 = scmp.eq.s32.totalorder %s72, 1
    %p357 = scmp.ne.s32.totalorder %s352, %s354
    %p358 = scmp.eq.s32.totalorder %s72, 0
    %p359 = por %p357, %p358
    %p360 = scmp.ne.s32.totalorder %s352, %s354
    %p361 = scmp.eq.s32.totalorder %s77, 1
    %p362 = por %p360, %p361
    %p363 = scmp.ne.s32.totalorder %s354, %s355
    %p364 = scmp.eq.s32.totalorder %s77, 0
    %p365 = por %p363, %p364
    %p366 = scmp.ne.s32.totalorder %s354, %s355
    %p367 = scmp.eq.s32.totalorder %s78, 1
    %p368 = por %p366, %p367
    %p370 = scmp.ne.s32.totalorder %s355, %s369
    %p371 = scmp.eq.s32.totalorder %s78, 0
    %p372 = por %p370, %p371
    %s374 = sadd.s32 %s373, 1
    %p377 = scmp.eq.s32.totalorder %s72, 1
    %p378 = scmp.ne.s32.totalorder %s373, %s375
    %p379 = scmp.eq.s32.totalorder %s72, 0
    %p380 = por %p378, %p379
    %p381 = scmp.ne.s32.totalorder %s373, %s375
    %p382 = scmp.eq.s32.totalorder %s77, 1
    %p383 = por %p381, %p382
    %p384 = scmp.ne.s32.totalorder %s375, %s376
    %p385 = scmp.eq.s32.totalorder %s77, 0
    %p386 = por %p384, %p385
    %p387 = scmp.ne.s32.totalorder %s375, %s376
    %p388 = scmp.eq.s32.totalorder %s78, 1
    %p389 = por %p387, %p388
    %p391 = scmp.ne.s32.totalorder %s376, %s390
    %p392 = scmp.eq.s32.totalorder %s78, 0
    %p393 = por %p391, %p392
    %s395 = sadd.s32 %s394, 1
    %p398 = scmp.eq.s32.totalorder %s72, 1
    %p399 = scmp.ne.s32.totalorder %s394, %s396
    %p400 = scmp.eq.s32.totalorder %s72, 0
    %p401 = por %p399, %p400
    %p402 = scmp.ne.s32.totalorder %s394, %s396
    %p403 = scmp.eq.s32.totalorder %s77, 1
    %p404 = por %p402, %p403
    %p405 = scmp.ne.s32.totalorder %s396, %s397
    %p406 = scmp.eq.s32.totalorder %s77, 0
    %p407 = por %p405, %p406
    %p408 = scmp.ne.s32.totalorder %s396, %s397
    %p409 = scmp.eq.s32.totalorder %s78, 1
    %p410 = por %p408, %p409
    %p412 = scmp.ne.s32.totalorder %s397, %s411
    %p413 = scmp.eq.s32.totalorder %s78, 0
    %p414 = por %p412, %p413
    %s416 = sadd.s32 %s415, 1
    %p419 = scmp.eq.s32.totalorder %s72, 1
    %p420 = scmp.ne.s32.totalorder %s415, %s417
    %p421 = scmp.eq.s32.totalorder %s72, 0
    %p422 = por %p420, %p421
    %p423 = scmp.ne.s32.totalorder %s415, %s417
    %p424 = scmp.eq.s32.totalorder %s77, 1
    %p425 = por %p423, %p424
    %p426 = scmp.ne.s32.totalorder %s417, %s418
    %p427 = scmp.eq.s32.totalorder %s77, 0
    %p428 = por %p426, %p427
    %p429 = scmp.ne.s32.totalorder %s417, %s418
    %p430 = scmp.eq.s32.totalorder %s78, 1
    %p431 = por %p429, %p430
    %p433 = scmp.ne.s32.totalorder %s418, %s432
    %p434 = scmp.eq.s32.totalorder %s78, 0
    %p435 = por %p433, %p434
    %s437 = sadd.s32 %s436, 1
    %p440 = scmp.eq.s32.totalorder %s72, 1
    %p441 = scmp.ne.s32.totalorder %s436, %s438
    %p442 = scmp.eq.s32.totalorder %s72, 0
    %p443 = por %p441, %p442
    %p444 = scmp.ne.s32.totalorder %s436, %s438
    %p445 = scmp.eq.s32.totalorder %s77, 1
    %p446 = por %p444, %p445
    %p447 = scmp.ne.s32.totalorder %s438, %s439
    %p448 = scmp.eq.s32.totalorder %s77, 0
    %p449 = por %p447, %p448
    %p450 = scmp.ne.s32.totalorder %s438, %s439
    %p451 = scmp.eq.s32.totalorder %s78, 1
    %p452 = por %p450, %p451
    %p454 = scmp.ne.s32.totalorder %s439, %s453
    %p455 = scmp.eq.s32.totalorder %s78, 0
    %p456 = por %p454, %p455
    %s458 = sadd.s32 %s457, 1
    %p461 = scmp.eq.s32.totalorder %s72, 1
    %p462 = scmp.ne.s32.totalorder %s457, %s459
    %p463 = scmp.eq.s32.totalorder %s72, 0
    %p464 = por %p462, %p463
    %p465 = scmp.ne.s32.totalorder %s457, %s459
    %p466 = scmp.eq.s32.totalorder %s77, 1
    %p467 = por %p465, %p466
    %p468 = scmp.ne.s32.totalorder %s459, %s460
    %p469 = scmp.eq.s32.totalorder %s77, 0
    %p470 = por %p468, %p469
    %p471 = scmp.ne.s32.totalorder %s459, %s460
    %p472 = scmp.eq.s32.totalorder %s78, 1
    %p473 = por %p471, %p472
    %p475 = scmp.ne.s32.totalorder %s460, %s474
    %p476 = scmp.eq.s32.totalorder %s78, 0
    %p477 = por %p475, %p476
    %s479 = sadd.s32 %s478, 1
    %p482 = scmp.eq.s32.totalorder %s72, 1
    %p483 = scmp.ne.s32.totalorder %s478, %s480
    %p484 = scmp.eq.s32.totalorder %s72, 0
    %p485 = por %p483, %p484
    %p486 = scmp.ne.s32.totalorder %s478, %s480
    %p487 = scmp.eq.s32.totalorder %s77, 1
    %p488 = por %p486, %p487
    %p489 = scmp.ne.s32.totalorder %s480, %s481
    %p490 = scmp.eq.s32.totalorder %s77, 0
    %p491 = por %p489, %p490
    %p492 = scmp.ne.s32.totalorder %s480, %s481
    %p493 = scmp.eq.s32.totalorder %s78, 1
    %p494 = por %p492, %p493
    %p496 = scmp.ne.s32.totalorder %s481, %s495
    %p497 = scmp.eq.s32.totalorder %s78, 0
    %p498 = por %p496, %p497
    %s500 = sadd.s32 %s499, 1
    %p503 = scmp.eq.s32.totalorder %s72, 1
    %p504 = scmp.ne.s32.totalorder %s499, %s501
    %p505 = scmp.eq.s32.totalorder %s72, 0
    %p506 = por %p504, %p505
    %p507 = scmp.ne.s32.totalorder %s499, %s501
    %p508 = scmp.eq.s32.totalorder %s77, 1
    %p509 = por %p507, %p508
    %p510 = scmp.ne.s32.totalorder %s501, %s502
    %p511 = scmp.eq.s32.totalorder %s77, 0
    %p512 = por %p510, %p511
    %p513 = scmp.ne.s32.totalorder %s501, %s502
    %p514 = scmp.eq.s32.totalorder %s78, 1
    %p515 = por %p513, %p514
    %p517 = scmp.ne.s32.totalorder %s502, %s516
    %p518 = scmp.eq.s32.totalorder %s78, 0
    %p519 = por %p517, %p518
    %s521 = sadd.s32 %s520, 1
    %p524 = scmp.eq.s32.totalorder %s72, 1
    %p525 = scmp.ne.s32.totalorder %s520, %s522
    %p526 = scmp.eq.s32.totalorder %s72, 0
    %p527 = por %p525, %p526
    %p528 = scmp.ne.s32.totalorder %s520, %s522
    %p529 = scmp.eq.s32.totalorder %s77, 1
    %p530 = por %p528, %p529
    %p531 = scmp.ne.s32.totalorder %s522, %s523
    %p532 = scmp.eq.s32.totalorder %s77, 0
    %p533 = por %p531, %p532
    %p534 = scmp.ne.s32.totalorder %s522, %s523
    %p535 = scmp.eq.s32.totalorder %s78, 1
    %p536 = por %p534, %p535
    %p538 = scmp.ne.s32.totalorder %s523, %s537
    %p539 = scmp.eq.s32.totalorder %s78, 0
    %p540 = por %p538, %p539
    %s542 = sadd.s32 %s541, 1
    %p545 = scmp.eq.s32.totalorder %s72, 1
    %p546 = scmp.ne.s32.totalorder %s541, %s543
    %p547 = scmp.eq.s32.totalorder %s72, 0
    %p548 = por %p546, %p547
    %p549 = scmp.ne.s32.totalorder %s541, %s543
    %p550 = scmp.eq.s32.totalorder %s77, 1
    %p551 = por %p549, %p550
    %p552 = scmp.ne.s32.totalorder %s543, %s544
    %p553 = scmp.eq.s32.totalorder %s77, 0
    %p554 = por %p552, %p553
    %p555 = scmp.ne.s32.totalorder %s543, %s544
    %p556 = scmp.eq.s32.totalorder %s78, 1
    %p557 = por %p555, %p556
    %p559 = scmp.ne.s32.totalorder %s544, %s558
    %p560 = scmp.eq.s32.totalorder %s78, 0
    %p561 = por %p559, %p560
    %s563 = sadd.s32 %s562, 1
    %p566 = scmp.eq.s32.totalorder %s72, 1
    %p567 = scmp.ne.s32.totalorder %s562, %s564
    %p568 = scmp.eq.s32.totalorder %s72, 0
    %p569 = por %p567, %p568
    %p570 = scmp.ne.s32.totalorder %s562, %s564
    %p571 = scmp.eq.s32.totalorder %s77, 1
    %p572 = por %p570, %p571
    %p573 = scmp.ne.s32.totalorder %s564, %s565
    %p574 = scmp.eq.s32.totalorder %s77, 0
    %p575 = por %p573, %p574
    %p576 = scmp.ne.s32.totalorder %s564, %s565
    %p577 = scmp.eq.s32.totalorder %s78, 1
    %p578 = por %p576, %p577
    %p580 = scmp.ne.s32.totalorder %s565, %s579
    %p581 = scmp.eq.s32.totalorder %s78, 0
    %p582 = por %p580, %p581
    %s584 = sadd.s32 %s583, 1
    %p587 = scmp.eq.s32.totalorder %s72, 1
    %p588 = scmp.ne.s32.totalorder %s583, %s585
    %p589 = scmp.eq.s32.totalorder %s72, 0
    %p590 = por %p588, %p589
    %p591 = scmp.ne.s32.totalorder %s583, %s585
    %p592 = scmp.eq.s32.totalorder %s77, 1
    %p593 = por %p591, %p592
    %p594 = scmp.ne.s32.totalorder %s585, %s586
    %p595 = scmp.eq.s32.totalorder %s77, 0
    %p596 = por %p594, %p595
    %p597 = scmp.ne.s32.totalorder %s585, %s586
    %p598 = scmp.eq.s32.totalorder %s78, 1
    %p599 = por %p597, %p598
    %p601 = scmp.ne.s32.totalorder %s586, %s600
    %p602 = scmp.eq.s32.totalorder %s78, 0
    %p603 = por %p601, %p602
    %s605 = sadd.s32 %s604, 1
    %p608 = scmp.eq.s32.totalorder %s72, 1
    %p609 = scmp.ne.s32.totalorder %s604, %s606
    %p610 = scmp.eq.s32.totalorder %s72, 0
    %p611 = por %p609, %p610
    %p612 = scmp.ne.s32.totalorder %s604, %s606
    %p613 = scmp.eq.s32.totalorder %s77, 1
    %p614 = por %p612, %p613
    %p615 = scmp.ne.s32.totalorder %s606, %s607
    %p616 = scmp.eq.s32.totalorder %s77, 0
    %p617 = por %p615, %p616
    %p618 = scmp.ne.s32.totalorder %s606, %s607
    %p619 = scmp.eq.s32.totalorder %s78, 1
    %p620 = por %p618, %p619
    %p622 = scmp.ne.s32.totalorder %s607, %s621
    %p623 = scmp.eq.s32.totalorder %s78, 0
    %p624 = por %p622, %p623
    %s626 = sadd.s32 %s625, 1
    %p629 = scmp.eq.s32.totalorder %s72, 1
    %p630 = scmp.ne.s32.totalorder %s625, %s627
    %p631 = scmp.eq.s32.totalorder %s72, 0
    %p632 = por %p630, %p631
    %p633 = scmp.ne.s32.totalorder %s625, %s627
    %p634 = scmp.eq.s32.totalorder %s77, 1
    %p635 = por %p633, %p634
    %p636 = scmp.ne.s32.totalorder %s627, %s628
    %p637 = scmp.eq.s32.totalorder %s77, 0
    %p638 = por %p636, %p637
    %p639 = scmp.ne.s32.totalorder %s627, %s628
    %p640 = scmp.eq.s32.totalorder %s78, 1
    %p641 = por %p639, %p640
    %p643 = scmp.ne.s32.totalorder %s628, %s642
    %p644 = scmp.eq.s32.totalorder %s78, 0
    %p645 = por %p643, %p644
    %s647 = sadd.s32 %s646, 1
    %p650 = scmp.eq.s32.totalorder %s72, 1
    %p651 = scmp.ne.s32.totalorder %s646, %s648
    %p652 = scmp.eq.s32.totalorder %s72, 0
    %p653 = por %p651, %p652
    %p654 = scmp.ne.s32.totalorder %s646, %s648
    %p655 = scmp.eq.s32.totalorder %s77, 1
    %p656 = por %p654, %p655
    %p657 = scmp.ne.s32.totalorder %s648, %s649
    %p658 = scmp.eq.s32.totalorder %s77, 0
    %p659 = por %p657, %p658
    %p660 = scmp.ne.s32.totalorder %s648, %s649
    %p661 = scmp.eq.s32.totalorder %s78, 1
    %p662 = por %p660, %p661
    %p664 = scmp.ne.s32.totalorder %s649, %s663
    %p665 = scmp.eq.s32.totalorder %s78, 0
    %p666 = por %p664, %p665
    %s668 = sadd.s32 %s667, 1
    %p671 = scmp.eq.s32.totalorder %s72, 1
    %p672 = scmp.ne.s32.totalorder %s667, %s669
    %p673 = scmp.eq.s32.totalorder %s72, 0
    %p674 = por %p672, %p673
    %p675 = scmp.ne.s32.totalorder %s667, %s669
    %p676 = scmp.eq.s32.totalorder %s77, 1
    %p677 = por %p675, %p676
    %p678 = scmp.ne.s32.totalorder %s669, %s670
    %p679 = scmp.eq.s32.totalorder %s77, 0
    %p680 = por %p678, %p679
    %p681 = scmp.ne.s32.totalorder %s669, %s670
    %p682 = scmp.eq.s32.totalorder %s78, 1
    %p683 = por %p681, %p682
    %p685 = scmp.ne.s32.totalorder %s670, %s684
    %p686 = scmp.eq.s32.totalorder %s78, 0
    %p687 = por %p685, %p686
    %s689 = sadd.s32 %s688, 1
    %p692 = scmp.eq.s32.totalorder %s72, 1
    %p693 = scmp.ne.s32.totalorder %s688, %s690
    %p694 = scmp.eq.s32.totalorder %s72, 0
    %p695 = por %p693, %p694
    %p696 = scmp.ne.s32.totalorder %s688, %s690
    %p697 = scmp.eq.s32.totalorder %s77, 1
    %p698 = por %p696, %p697
    %p699 = scmp.ne.s32.totalorder %s690, %s691
    %p700 = scmp.eq.s32.totalorder %s77, 0
    %p701 = por %p699, %p700
    %p702 = scmp.ne.s32.totalorder %s690, %s691
    %p703 = scmp.eq.s32.totalorder %s78, 1
    %p704 = por %p702, %p703
    %p706 = scmp.ne.s32.totalorder %s691, %s705
    %p707 = scmp.eq.s32.totalorder %s78, 0
    %p708 = por %p706, %p707
    %s710 = sadd.s32 %s709, 1
    %p713 = scmp.eq.s32.totalorder %s72, 1
    %p714 = scmp.ne.s32.totalorder %s709, %s711
    %p715 = scmp.eq.s32.totalorder %s72, 0
    %p716 = por %p714, %p715
    %p717 = scmp.ne.s32.totalorder %s709, %s711
    %p718 = scmp.eq.s32.totalorder %s77, 1
    %p719 = por %p717, %p718
    %p720 = scmp.ne.s32.totalorder %s711, %s712
    %p721 = scmp.eq.s32.totalorder %s77, 0
    %p722 = por %p720, %p721
    %p723 = scmp.ne.s32.totalorder %s711, %s712
    %p724 = scmp.eq.s32.totalorder %s78, 1
    %p725 = por %p723, %p724
    %p727 = scmp.ne.s32.totalorder %s712, %s726
    %p728 = scmp.eq.s32.totalorder %s78, 0
    %p729 = por %p727, %p728
    %s731 = sadd.s32 %s730, 1
    %p734 = scmp.eq.s32.totalorder %s72, 1
    %p735 = scmp.ne.s32.totalorder %s730, %s732
    %p736 = scmp.eq.s32.totalorder %s72, 0
    %p737 = por %p735, %p736
    %p738 = scmp.ne.s32.totalorder %s730, %s732
    %p739 = scmp.eq.s32.totalorder %s77, 1
    %p740 = por %p738, %p739
    %p741 = scmp.ne.s32.totalorder %s732, %s733
    %p742 = scmp.eq.s32.totalorder %s77, 0
    %p743 = por %p741, %p742
    %p744 = scmp.ne.s32.totalorder %s732, %s733
    %p745 = scmp.eq.s32.totalorder %s78, 1
    %p746 = por %p744, %p745
    %p748 = scmp.ne.s32.totalorder %s733, %s747
    %p749 = scmp.eq.s32.totalorder %s78, 0
    %p750 = por %p748, %p749
    %s751 = ssub.s32 %s72, %s79
    %p752 = scmp.eq.s32.totalorder %s751, 0
    %s754 = sadd.s32 %s753, 1
    %s755 = scalar_select %p752, %s753, %s754
    %p758 = pneg %p752
    %p759 = scmp.eq.s32.totalorder %s72, 1
    %p760 = por %p758, %p759
    %p761 = scmp.ne.s32.totalorder %s753, %s756
    %p762 = scmp.eq.s32.totalorder %s72, 0
    %p763 = por %p761, %p762
    %p764 = scmp.ne.s32.totalorder %s753, %s756
    %p765 = scmp.eq.s32.totalorder %s77, 1
    %p766 = por %p764, %p765
    %p767 = scmp.ne.s32.totalorder %s756, %s757
    %p768 = scmp.eq.s32.totalorder %s77, 0
    %p769 = por %p767, %p768
    %p770 = scmp.ne.s32.totalorder %s756, %s757
    %p771 = scmp.eq.s32.totalorder %s78, 1
    %p772 = por %p770, %p771
    %p774 = scmp.ne.s32.totalorder %s757, %s773
    %p775 = scmp.eq.s32.totalorder %s78, 0
    %p776 = por %p774, %p775
    %s777 = ssub.s32 %s72, %s79
    %p778 = scmp.eq.s32.totalorder %s777, 0
    %s780 = sadd.s32 %s779, 1
    %s781 = scalar_select %p778, %s779, %s780
    %p784 = pneg %p778
    %p785 = scmp.eq.s32.totalorder %s72, 1
    %p786 = por %p784, %p785
    %p787 = scmp.ne.s32.totalorder %s779, %s782
    %p788 = scmp.eq.s32.totalorder %s72, 0
    %p789 = por %p787, %p788
    %p790 = scmp.ne.s32.totalorder %s779, %s782
    %p791 = scmp.eq.s32.totalorder %s77, 1
    %p792 = por %p790, %p791
    %p793 = scmp.ne.s32.totalorder %s782, %s783
    %p794 = scmp.eq.s32.totalorder %s77, 0
    %p795 = por %p793, %p794
    %p796 = scmp.ne.s32.totalorder %s782, %s783
    %p797 = scmp.eq.s32.totalorder %s78, 1
    %p798 = por %p796, %p797
    %p800 = scmp.ne.s32.totalorder %s783, %s799
    %p801 = scmp.eq.s32.totalorder %s78, 0
    %p802 = por %p800, %p801
    %p803 = scmp.le.s32.totalorder 1, %s72
    %p804 = scmp.lt.s32.totalorder %s72, 3
    %p805 = pnand %p803, %p804
    %p806 = pneg %p805
    // Predicated region
    $region9: #{graphdetr_forward.9} parent=5 // pred_check
      _
    $region10: #{graphdetr_forward.9} parent=5 // pred_check_branch
      %808 = sbr.rel (%p805) target = $region12
    $region11: #{graphdetr_forward.9} parent=5 // pred_region
      %s809 = ssub.s32 %s72, 1
      // Predicated region
      $region13: #{graphdetr_forward.9} parent=11 // pred_check
        %p810 = pneg %p119
      $region14: #{graphdetr_forward.9} parent=11 // pred_check_branch
        %812 = sbr.rel (%p810) target = $region16
      $region15: #{graphdetr_forward.9} parent=11 // pred_region
        _
      $region16: #{graphdetr_forward.9} parent=11 // pred_fallthru
        _
      // Predicated region
      $region17: #{graphdetr_forward.9} parent=11 // pred_check
        %p813 = pneg %p218
      $region18: #{graphdetr_forward.9} parent=11 // pred_check_branch
        %815 = sbr.rel (%p813) target = $region20
      $region19: #{graphdetr_forward.9} parent=11 // pred_region
        _
      $region20: #{graphdetr_forward.9} parent=11 // pred_fallthru
        _
      // Predicated region
      $region21: #{graphdetr_forward.9} parent=11 // pred_check
        %p816 = pneg %p239
      $region22: #{graphdetr_forward.9} parent=11 // pred_check_branch
        %818 = sbr.rel (%p816) target = $region24
      $region23: #{graphdetr_forward.9} parent=11 // pred_region
        _
      $region24: #{graphdetr_forward.9} parent=11 // pred_fallthru
        _
      // Predicated region
      $region25: #{graphdetr_forward.9} parent=11 // pred_check
        %p819 = pneg %p260
      $region26: #{graphdetr_forward.9} parent=11 // pred_check_branch
        %821 = sbr.rel (%p819) target = $region28
      $region27: #{graphdetr_forward.9} parent=11 // pred_region
        _
      $region28: #{graphdetr_forward.9} parent=11 // pred_fallthru
        _
      // Predicated region
      $region29: #{graphdetr_forward.9} parent=11 // pred_check
        %p822 = pneg %p281
      $region30: #{graphdetr_forward.9} parent=11 // pred_check_branch
        %824 = sbr.rel (%p822) target = $region32
      $region31: #{graphdetr_forward.9} parent=11 // pred_region
        _
      $region32: #{graphdetr_forward.9} parent=11 // pred_fallthru
        _
      // Predicated region
      $region33: #{graphdetr_forward.9} parent=11 // pred_check
        %p825 = pneg %p302
      $region34: #{graphdetr_forward.9} parent=11 // pred_check_branch
        %827 = sbr.rel (%p825) target = $region36
      $region35: #{graphdetr_forward.9} parent=11 // pred_region
        _
      $region36: #{graphdetr_forward.9} parent=11 // pred_fallthru
        _
      // Predicated region
      $region37: #{graphdetr_forward.9} parent=11 // pred_check
        %p828 = pneg %p323
      $region38: #{graphdetr_forward.9} parent=11 // pred_check_branch
        %830 = sbr.rel (%p828) target = $region40
      $region39: #{graphdetr_forward.9} parent=11 // pred_region
        _
      $region40: #{graphdetr_forward.9} parent=11 // pred_fallthru
        _
      // Predicated region
      $region41: #{graphdetr_forward.9} parent=11 // pred_check
        %p831 = pneg %p344
      $region42: #{graphdetr_forward.9} parent=11 // pred_check_branch
        %833 = sbr.rel (%p831) target = $region44
      $region43: #{graphdetr_forward.9} parent=11 // pred_region
        _
      $region44: #{graphdetr_forward.9} parent=11 // pred_fallthru
        _
      // Predicated region
      $region45: #{graphdetr_forward.9} parent=11 // pred_check
        %p834 = pneg %p365
      $region46: #{graphdetr_forward.9} parent=11 // pred_check_branch
        %836 = sbr.rel (%p834) target = $region48
      $region47: #{graphdetr_forward.9} parent=11 // pred_region
        _
      $region48: #{graphdetr_forward.9} parent=11 // pred_fallthru
        _
      // Predicated region
      $region49: #{graphdetr_forward.9} parent=11 // pred_check
        %p837 = pneg %p386
      $region50: #{graphdetr_forward.9} parent=11 // pred_check_branch
        %839 = sbr.rel (%p837) target = $region52
      $region51: #{graphdetr_forward.9} parent=11 // pred_region
        _
      $region52: #{graphdetr_forward.9} parent=11 // pred_fallthru
        _
      // Predicated region
      $region53: #{graphdetr_forward.9} parent=11 // pred_check
        %p840 = pneg %p407
      $region54: #{graphdetr_forward.9} parent=11 // pred_check_branch
        %842 = sbr.rel (%p840) target = $region56
      $region55: #{graphdetr_forward.9} parent=11 // pred_region
        _
      $region56: #{graphdetr_forward.9} parent=11 // pred_fallthru
        _
      // Predicated region
      $region57: #{graphdetr_forward.9} parent=11 // pred_check
        %p843 = pneg %p428
      $region58: #{graphdetr_forward.9} parent=11 // pred_check_branch
        %845 = sbr.rel (%p843) target = $region60
      $region59: #{graphdetr_forward.9} parent=11 // pred_region
        _
      $region60: #{graphdetr_forward.9} parent=11 // pred_fallthru
        _
      // Predicated region
      $region61: #{graphdetr_forward.9} parent=11 // pred_check
        %p846 = pneg %p449
      $region62: #{graphdetr_forward.9} parent=11 // pred_check_branch
        %848 = sbr.rel (%p846) target = $region64
      $region63: #{graphdetr_forward.9} parent=11 // pred_region
        _
      $region64: #{graphdetr_forward.9} parent=11 // pred_fallthru
        _
      // Predicated region
      $region65: #{graphdetr_forward.9} parent=11 // pred_check
        %p849 = pneg %p470
      $region66: #{graphdetr_forward.9} parent=11 // pred_check_branch
        %851 = sbr.rel (%p849) target = $region68
      $region67: #{graphdetr_forward.9} parent=11 // pred_region
        _
      $region68: #{graphdetr_forward.9} parent=11 // pred_fallthru
        _
      // Predicated region
      $region69: #{graphdetr_forward.9} parent=11 // pred_check
        %p852 = pneg %p491
      $region70: #{graphdetr_forward.9} parent=11 // pred_check_branch
        %854 = sbr.rel (%p852) target = $region72
      $region71: #{graphdetr_forward.9} parent=11 // pred_region
        _
      $region72: #{graphdetr_forward.9} parent=11 // pred_fallthru
        _
      // Predicated region
      $region73: #{graphdetr_forward.9} parent=11 // pred_check
        %p855 = pneg %p512
      $region74: #{graphdetr_forward.9} parent=11 // pred_check_branch
        %857 = sbr.rel (%p855) target = $region76
      $region75: #{graphdetr_forward.9} parent=11 // pred_region
        _
      $region76: #{graphdetr_forward.9} parent=11 // pred_fallthru
        _
      // Predicated region
      $region77: #{graphdetr_forward.9} parent=11 // pred_check
        %p858 = pneg %p533
      $region78: #{graphdetr_forward.9} parent=11 // pred_check_branch
        %860 = sbr.rel (%p858) target = $region80
      $region79: #{graphdetr_forward.9} parent=11 // pred_region
        _
      $region80: #{graphdetr_forward.9} parent=11 // pred_fallthru
        _
      // Predicated region
      $region81: #{graphdetr_forward.9} parent=11 // pred_check
        %p861 = pneg %p554
      $region82: #{graphdetr_forward.9} parent=11 // pred_check_branch
        %863 = sbr.rel (%p861) target = $region84
      $region83: #{graphdetr_forward.9} parent=11 // pred_region
        _
      $region84: #{graphdetr_forward.9} parent=11 // pred_fallthru
        _
      // Predicated region
      $region85: #{graphdetr_forward.9} parent=11 // pred_check
        %p864 = pneg %p575
      $region86: #{graphdetr_forward.9} parent=11 // pred_check_branch
        %866 = sbr.rel (%p864) target = $region88
      $region87: #{graphdetr_forward.9} parent=11 // pred_region
        _
      $region88: #{graphdetr_forward.9} parent=11 // pred_fallthru
        _
      // Predicated region
      $region89: #{graphdetr_forward.9} parent=11 // pred_check
        %p867 = pneg %p596
      $region90: #{graphdetr_forward.9} parent=11 // pred_check_branch
        %869 = sbr.rel (%p867) target = $region92
      $region91: #{graphdetr_forward.9} parent=11 // pred_region
        _
      $region92: #{graphdetr_forward.9} parent=11 // pred_fallthru
        _
      // Predicated region
      $region93: #{graphdetr_forward.9} parent=11 // pred_check
        %p870 = pneg %p617
      $region94: #{graphdetr_forward.9} parent=11 // pred_check_branch
        %872 = sbr.rel (%p870) target = $region96
      $region95: #{graphdetr_forward.9} parent=11 // pred_region
        _
      $region96: #{graphdetr_forward.9} parent=11 // pred_fallthru
        _
      // Predicated region
      $region97: #{graphdetr_forward.9} parent=11 // pred_check
        %p873 = pneg %p638
      $region98: #{graphdetr_forward.9} parent=11 // pred_check_branch
        %875 = sbr.rel (%p873) target = $region100
      $region99: #{graphdetr_forward.9} parent=11 // pred_region
        _
      $region100: #{graphdetr_forward.9} parent=11 // pred_fallthru
        _
      // Predicated region
      $region101: #{graphdetr_forward.9} parent=11 // pred_check
        %p876 = pneg %p659
      $region102: #{graphdetr_forward.9} parent=11 // pred_check_branch
        %878 = sbr.rel (%p876) target = $region104
      $region103: #{graphdetr_forward.9} parent=11 // pred_region
        _
      $region104: #{graphdetr_forward.9} parent=11 // pred_fallthru
        _
      // Predicated region
      $region105: #{graphdetr_forward.9} parent=11 // pred_check
        %p879 = pneg %p680
      $region106: #{graphdetr_forward.9} parent=11 // pred_check_branch
        %881 = sbr.rel (%p879) target = $region108
      $region107: #{graphdetr_forward.9} parent=11 // pred_region
        _
      $region108: #{graphdetr_forward.9} parent=11 // pred_fallthru
        _
      // Predicated region
      $region109: #{graphdetr_forward.9} parent=11 // pred_check
        %p882 = pneg %p701
      $region110: #{graphdetr_forward.9} parent=11 // pred_check_branch
        %884 = sbr.rel (%p882) target = $region112
      $region111: #{graphdetr_forward.9} parent=11 // pred_region
        _
      $region112: #{graphdetr_forward.9} parent=11 // pred_fallthru
        _
      // Predicated region
      $region113: #{graphdetr_forward.9} parent=11 // pred_check
        %p885 = pneg %p722
      $region114: #{graphdetr_forward.9} parent=11 // pred_check_branch
        %887 = sbr.rel (%p885) target = $region116
      $region115: #{graphdetr_forward.9} parent=11 // pred_region
        _
      $region116: #{graphdetr_forward.9} parent=11 // pred_fallthru
        _
      // Predicated region
      $region117: #{graphdetr_forward.9} parent=11 // pred_check
        %p888 = pneg %p743
      $region118: #{graphdetr_forward.9} parent=11 // pred_check_branch
        %890 = sbr.rel (%p888) target = $region120
      $region119: #{graphdetr_forward.9} parent=11 // pred_region
        _
      $region120: #{graphdetr_forward.9} parent=11 // pred_fallthru
        _
    $region12: #{graphdetr_forward.9} parent=5 // pred_fallthru
      _
    %p891 = scmp.lt.s32.totalorder %s72, 2
    // Predicated region
    $region121: #{graphdetr_forward.9} parent=5 // pred_check
      %p892 = pneg %p891
    $region122: #{graphdetr_forward.9} parent=5 // pred_check_branch
      %894 = sbr.rel (%p892) target = $region124
    $region123: #{graphdetr_forward.9} parent=5 // pred_region
      // Predicated region
      $region125: #{graphdetr_forward.9} parent=123 // pred_check
        %p895 = pneg %p92
      $region126: #{graphdetr_forward.9} parent=123 // pred_check_branch
        %897 = sbr.rel (%p895) target = $region128
      $region127: #{graphdetr_forward.9} parent=123 // pred_region
        %p898 = scmp.lt.s32.totalorder %s72, 1
        %s899 = scalar_select %p898, %s72, 1
        %s900 = smul.addr %s899, 8
        %s901 = scalar_lea.vmem %s1, %s900
      $region128: #{graphdetr_forward.9} parent=123 // pred_fallthru
        _
      // Predicated region
      $region129: #{graphdetr_forward.9} parent=123 // pred_check
        %p902 = pneg %p139
      $region130: #{graphdetr_forward.9} parent=123 // pred_check_branch
        %904 = sbr.rel (%p902) target = $region132
      $region131: #{graphdetr_forward.9} parent=123 // pred_region
        %p905 = scmp.lt.s32.totalorder %s72, 1
        %s906 = scalar_select %p905, %s72, 1
        %s907 = smul.addr %s906, 8
        %s908 = smul.addr %s907, 8
        %s909 = scalar_lea.vmem %s5, %s908
      $region132: #{graphdetr_forward.9} parent=123 // pred_fallthru
        _
      // Predicated region
      $region133: #{graphdetr_forward.9} parent=123 // pred_check
        %p910 = pneg %p165
      $region134: #{graphdetr_forward.9} parent=123 // pred_check_branch
        %912 = sbr.rel (%p910) target = $region136
      $region135: #{graphdetr_forward.9} parent=123 // pred_region
        %p913 = scmp.lt.s32.totalorder %s72, 1
        %s914 = scalar_select %p913, %s72, 1
        %s915 = smul.addr %s914, 8
        %s916 = smul.addr %s915, 8
        %s917 = scalar_lea.vmem %s7, %s916
      $region136: #{graphdetr_forward.9} parent=123 // pred_fallthru
        _
      // Predicated region
      $region137: #{graphdetr_forward.9} parent=123 // pred_check
        %p918 = pneg %p191
      $region138: #{graphdetr_forward.9} parent=123 // pred_check_branch
        %920 = sbr.rel (%p918) target = $region140
      $region139: #{graphdetr_forward.9} parent=123 // pred_region
        %p921 = scmp.lt.s32.totalorder %s72, 1
        %s922 = scalar_select %p921, %s72, 1
        %s923 = scalar_lea.vmem %s9, %s922
      $region140: #{graphdetr_forward.9} parent=123 // pred_fallthru
        _
    $region124: #{graphdetr_forward.9} parent=5 // pred_fallthru
      _
    %p924 = scmp.le.s32.totalorder 1, %s72
    %p925 = scmp.lt.s32.totalorder %s72, 3
    %p926 = pnand %p924, %p925
    %p927 = pneg %p926
    // Predicated region
    $region141: #{graphdetr_forward.9} parent=5 // pred_check
      _
    $region142: #{graphdetr_forward.9} parent=5 // pred_check_branch
      %929 = sbr.rel (%p926) target = $region144
    $region143: #{graphdetr_forward.9} parent=5 // pred_region
      %s930 = ssub.s32 %s72, 1
      %p931 = scmp.lt.s32.totalorder %s77, 1
      %s932 = scalar_select %p931, %s77, 1
      %s933 = smul.addr %s932, 8
      %s934 = scalar_lea.vmem %s1, %s933
      %p935 = pneg %p98
      %p936 = pneg %p95
      %p937 = pneg %p119
      %p938 = pneg %p116
      %p939 = scmp.lt.s32.totalorder %s77, 1
      %s940 = scalar_select %p939, %s77, 1
      %s941 = smul.addr %s940, 8
      %s942 = smul.addr %s941, 8
      %s943 = scalar_lea.vmem %s5, %s942
      %p944 = pneg %p145
      %p945 = pneg %p142
      %p946 = scmp.lt.s32.totalorder %s77, 1
      %s947 = scalar_select %p946, %s77, 1
      %s948 = smul.addr %s947, 8
      %s949 = smul.addr %s948, 8
      %s950 = scalar_lea.vmem %s7, %s949
      %p951 = pneg %p171
      %p952 = pneg %p168
      %p953 = scmp.lt.s32.totalorder %s77, 1
      %s954 = scalar_select %p953, %s77, 1
      %s955 = scalar_lea.vmem %s9, %s954
      %p956 = pneg %p197
      %p957 = pneg %p194
      %p958 = pneg %p218
      %p959 = pneg %p215
      %p960 = pneg %p239
      %p961 = pneg %p236
      %p962 = pneg %p260
      %p963 = pneg %p257
      %p964 = pneg %p281
      %p965 = pneg %p278
      %p966 = pneg %p302
      %p967 = pneg %p299
      %p968 = pneg %p323
      %p969 = pneg %p320
      %p970 = pneg %p344
      %p971 = pneg %p341
      %p972 = pneg %p365
      %p973 = pneg %p362
      %p974 = pneg %p386
      %p975 = pneg %p383
      %p976 = pneg %p407
      %p977 = pneg %p404
      %p978 = pneg %p428
      %p979 = pneg %p425
      %p980 = pneg %p449
      %p981 = pneg %p446
      %p982 = pneg %p470
      %p983 = pneg %p467
      %p984 = pneg %p491
      %p985 = pneg %p488
      %p986 = pneg %p512
      %p987 = pneg %p509
      %p988 = pneg %p533
      %p989 = pneg %p530
      %p990 = pneg %p554
      %p991 = pneg %p551
      %p992 = pneg %p575
      %p993 = pneg %p572
      %p994 = pneg %p596
      %p995 = pneg %p593
      %p996 = pneg %p617
      %p997 = pneg %p614
      %p998 = pneg %p638
      %p999 = pneg %p635
      %p1000 = pneg %p659
      %p1001 = pneg %p656
      %p1002 = pneg %p680
      %p1003 = pneg %p677
      %p1004 = pneg %p701
      %p1005 = pneg %p698
      %p1006 = pneg %p722
      %p1007 = pneg %p719
      %p1008 = pneg %p743
      %p1009 = pneg %p740
      %p1010 = pneg %p769
      %p1011 = pneg %p766
      %p1012 = scmp.lt.s32.totalorder %s77, 1
      %s1013 = scalar_select %p1012, %s77, 1
      %s1014 = smul.addr %s1013, 8
      %s1015 = scalar_lea.vmem %s63, %s1014
      %p1016 = pneg %p795
      %p1017 = pneg %p792
      %p1018 = scmp.lt.s32.totalorder %s77, 1
      %s1019 = scalar_select %p1018, %s77, 1
      %s1020 = smul.addr %s1019, 8
      %s1021 = scalar_lea.vmem %s65, %s1020
      %p1022 = scmp.lt.s32.totalorder %s77, 1
      %s1023 = scalar_select %p1022, %s77, 1
      %s1024 = smul.addr %s1023, 8
      %s1025 = scalar_lea.vmem %s1, %s1024
      %p1026 = scmp.lt.s32.totalorder %s77, 1
      %s1027 = scalar_select %p1026, %s77, 1
      %s1028 = smul.addr %s1027, 8
      %s1029 = smul.addr %s1028, 8
      %s1030 = scalar_lea.vmem %s5, %s1029
      %p1031 = scmp.lt.s32.totalorder %s77, 1
      %s1032 = scalar_select %p1031, %s77, 1
      %s1033 = smul.addr %s1032, 8
      %s1034 = smul.addr %s1033, 8
      %s1035 = scalar_lea.vmem %s7, %s1034
      %p1036 = scmp.lt.s32.totalorder %s77, 1
      %s1037 = scalar_select %p1036, %s77, 1
      %s1038 = scalar_lea.vmem %s9, %s1037
      %p1039 = scmp.lt.s32.totalorder %s77, 1
      %s1040 = scalar_select %p1039, %s77, 1
      %s1041 = smul.addr %s1040, 8
      %s1042 = scalar_lea.vmem %s63, %s1041
      %p1043 = scmp.lt.s32.totalorder %s77, 1
      %s1044 = scalar_select %p1043, %s77, 1
      %s1045 = smul.addr %s1044, 8
      %s1046 = scalar_lea.vmem %s65, %s1045
      %v1048 = vld [vmem:[%s1025] sm:$0xff]
      %v1049 = vld [vmem:[%s3] sm:$0xff]
      %v1050 = vld [vmem:[%s1030] sm:$0xff]
      %v1051 = vld [vmem:[%s1030 + $0x8] sm:$0xff]
      %v1052 = vld [vmem:[%s1030 + $0x10] sm:$0xff]
      %v1053 = vld [vmem:[%s1030 + $0x18] sm:$0xff]
      %v1054 = vld [vmem:[%s1030 + $0x20] sm:$0xff]
      %v1055 = vld [vmem:[%s1030 + $0x28] sm:$0xff]
      %v1056 = vld [vmem:[%s1030 + $0x30] sm:$0xff]
      %v1057 = vld [vmem:[%s1030 + $0x38] sm:$0xff]
      %v1058 = vld [vmem:[%s1035] sm:$0xff]
      %v1059 = vld [vmem:[%s1035 + $0x8] sm:$0xff]
      %v1060 = vld [vmem:[%s1035 + $0x10] sm:$0xff]
      %v1061 = vld [vmem:[%s1035 + $0x18] sm:$0xff]
      %v1062 = vld [vmem:[%s1035 + $0x20] sm:$0xff]
      %v1063 = vld [vmem:[%s1035 + $0x28] sm:$0xff]
      %v1064 = vld [vmem:[%s1035 + $0x30] sm:$0xff]
      %v1065 = vld [vmem:[%s1035 + $0x38] sm:$0xff]
      %v1066 = vld [vmem:[%s1038] sm:$0x1]
      %v1067 = vadd.f32 %v1048, %v1049
      %v1068 = vpack.c.bf16 %v1067, %v1067
      %v1069 = vld [vmem:[%s11] sm:$0xf]
      %v1070 = vld [vmem:[%s11 + $0x4] sm:$0xf]
      %v1071 = vld [vmem:[%s11 + $0x8] sm:$0xf]
      %v1072 = vld [vmem:[%s11 + $0xc] sm:$0xf]
      %v1073 = vld [vmem:[%s13] sm:$0x1]
      %v1075 = vperm.slane %v1073, 0
      %v1081 = vunpack.c.l.b16 %v1069
      %v1082 = vunpack.c.l.b16 %v1070
      %v1083 = vunpack.c.l.b16 %v1071
      %v1084 = vunpack.c.l.b16 %v1072
      %v1085 = vpack.c.b16 %v1082, %v1081
      %v1086 = vpack.c.b16 %v1084, %v1083
      %vm1089 = vcmask 261120
      %v1091 = vsel %vm1089, %v1068, 0
      %1093 = vmatpush.bf16.msra.mxu0 0
      %1094 = vmatpush.bf16.msra.mxu0 0
      %1095 = vmatpush.bf16.msra.mxu0 0
      %1096 = vmatpush.bf16.msra.mxu0 0
      %1097 = vmatpush.bf16.msra.mxu0 0
      %1098 = vmatpush.bf16.msra.mxu0 0
      %1099 = vmatpush.bf16.msra.mxu0 %v1086
      %1100 = vmatpush.bf16.msra.mxu0 %v1085
      %1101 = vmatmul.bf16.gmra.mxu0 %v1091
      %v1102 = vpop.f32.mrf.mxu0
      %v1103 = vadd.f32 %v1075, %v1102
      %v1104 = vpop.f32.mrf.mxu0
      %1105 = vdwg.mxu0
      %v1106 = vpack.c.bf16 %v1048, %v1048
      %v1107 = vld [vmem:[%s15] sm:$0xf]
      %v1108 = vld [vmem:[%s15 + $0x4] sm:$0xf]
      %v1109 = vld [vmem:[%s15 + $0x8] sm:$0xf]
      %v1110 = vld [vmem:[%s15 + $0xc] sm:$0xf]
      %v1111 = vld [vmem:[%s17] sm:$0x1]
      %v1113 = vperm.slane %v1111, 0
      %v1119 = vunpack.c.l.b16 %v1107
      %v1120 = vunpack.c.l.b16 %v1108
      %v1121 = vunpack.c.l.b16 %v1109
      %v1122 = vunpack.c.l.b16 %v1110
      %v1123 = vpack.c.b16 %v1120, %v1119
      %v1124 = vpack.c.b16 %v1122, %v1121
      %v1128 = vsel %vm1089, %v1106, 0
      %1130 = vmatpush.bf16.msra.mxu0 0
      %1131 = vmatpush.bf16.msra.mxu0 0
      %1132 = vmatpush.bf16.msra.mxu0 0
      %1133 = vmatpush.bf16.msra.mxu0 0
      %1134 = vmatpush.bf16.msra.mxu0 0
      %1135 = vmatpush.bf16.msra.mxu0 0
      %1136 = vmatpush.bf16.msra.mxu0 %v1124
      %1137 = vmatpush.bf16.msra.mxu0 %v1123
      %1138 = vmatmul.bf16.gmra.mxu0 %v1128
      %v1139 = vpop.f32.mrf.mxu0
      %v1140 = vadd.f32 %v1113, %v1139
      %v1141 = vpop.f32.mrf.mxu0
      %1142 = vdwg.mxu0
      %v1143 = vpack.c.bf16 %v1103, %v1103
      %1145 = vrot.lane.b32.xlu0 %v1143, 96
      %v1146 = vpop.permute.xlu0 %1145
      %vm1147 = vcmask 64512
      %v1149 = vsel %vm1147, %v1143, 0
      %v1152 = vsel %vm1147, %v1146, 0
      %1154 = vmatpush.bf16.xpose.msra.mxu0 0
      %1155 = vmatpush.bf16.xpose.msra.mxu0 0
      %1156 = vmatpush.bf16.xpose.msra.mxu0 0
      %1157 = vmatpush.bf16.xpose.msra.mxu0 0
      %1158 = vmatpush.bf16.xpose.msra.mxu0 0
      %1159 = vmatpush.bf16.xpose.msra.mxu0 0
      %1160 = vmatpush.bf16.xpose.msra.mxu0 0
      %1161 = vmatpush.bf16.xpose.msra.mxu0 %v1152
      %1162 = vmatmul.bf16.gmra.mxu0 %v1149
      %v1163 = vpop.f32.mrf.mxu0
      %v1164 = vadd.f32 0.0, %v1163
      %v1165 = vpop.f32.mrf.mxu0
      %1166 = vdwg.mxu0
      %v1167 = vsel %vm1147, %v1164, -inf
      %1168 = vmax.xlane.f32.xlu0 %v1167
      %v1169 = vpop.xlane.xlu0 %1168
      %v1170 = vsub.f32 %v1164, %v1169
      %v1171 = vmul.f32 %v1170, 1.442695
      %v1172 = vpow.pop %v1171
      %v1173 = vsel %vm1147, %v1172, 0.0
      %1174 = vadd.xlane.f32.xlu0 %v1173
      %v1175 = vpop.xlane.xlu0 %1174
      %v1176 = vrcp.pop %v1175
      %v1177 = vmul.f32 %v1172, %v1176
      %v1178 = vpack.c.bf16 %v1177, %v1177
      %v1179 = vpack.c.bf16 %v1140, %v1140
      %v1181 = vsel %vm1147, %v1178, 0
      %vm1183 = vcmask 1043456
      %v1185 = vsel %vm1183, %v1179, 0
      %1187 = vmatpush.bf16.msra.mxu0 0
      %1188 = vmatpush.bf16.msra.mxu0 0
      %1189 = vmatpush.bf16.msra.mxu0 0
      %1190 = vmatpush.bf16.msra.mxu0 0
      %1191 = vmatpush.bf16.msra.mxu0 0
      %1192 = vmatpush.bf16.msra.mxu0 0
      %1193 = vmatpush.bf16.msra.mxu0 0
      %1194 = vmatpush.bf16.msra.mxu0 %v1185
      %1195 = vmatmul.bf16.gmra.mxu0 %v1181
      %v1196 = vpop.f32.mrf.mxu0
      %v1197 = vadd.f32 0.0, %v1196
      %v1198 = vpop.f32.mrf.mxu0
      %1199 = vdwg.mxu0
      %1200 = vst.msk [vmem:[#allocation2] sm:$0xff] %vm1147, %v1197
      %1201 = vrot.lane.b32.xlu0 %v1143, 120
      %v1202 = vpop.permute.xlu0 %1201
      %1203 = vrot.lane.b32.xlu0 %v1143, 88
      %v1204 = vpop.permute.xlu0 %1203
      %v1206 = vsel %vm1147, %v1202, 0
      %v1209 = vsel %vm1147, %v1204, 0
      %1211 = vmatpush.bf16.xpose.msra.mxu0 0
      %1212 = vmatpush.bf16.xpose.msra.mxu0 0
      %1213 = vmatpush.bf16.xpose.msra.mxu0 0
      %1214 = vmatpush.bf16.xpose.msra.mxu0 0
      %1215 = vmatpush.bf16.xpose.msra.mxu0 0
      %1216 = vmatpush.bf16.xpose.msra.mxu0 0
      %1217 = vmatpush.bf16.xpose.msra.mxu0 0
      %1218 = vmatpush.bf16.xpose.msra.mxu0 %v1209
      %1219 = vmatmul.bf16.gmra.mxu0 %v1206
      %v1220 = vpop.f32.mrf.mxu0
      %v1221 = vadd.f32 0.0, %v1220
      %v1222 = vpop.f32.mrf.mxu0
      %1223 = vdwg.mxu0
      %v1224 = vsel %vm1147, %v1221, -inf
      %1225 = vmax.xlane.f32.xlu0 %v1224
      %v1226 = vpop.xlane.xlu0 %1225
      %v1227 = vsub.f32 %v1221, %v1226
      %v1228 = vmul.f32 %v1227, 1.442695
      %v1229 = vpow.pop %v1228
      %v1230 = vsel %vm1147, %v1229, 0.0
      %1231 = vadd.xlane.f32.xlu0 %v1230
      %v1232 = vpop.xlane.xlu0 %1231
      %v1233 = vrcp.pop %v1232
      %v1234 = vmul.f32 %v1229, %v1233
      %v1235 = vpack.c.bf16 %v1234, %v1234
      %1237 = vrot.lane.b32.xlu0 %v1179, 120
      %v1238 = vpop.permute.xlu0 %1237
      %v1240 = vsel %vm1147, %v1235, 0
      %v1243 = vsel %vm1183, %v1238, 0
      %1245 = vmatpush.bf16.msra.mxu0 0
      %1246 = vmatpush.bf16.msra.mxu0 0
      %1247 = vmatpush.bf16.msra.mxu0 0
      %1248 = vmatpush.bf16.msra.mxu0 0
      %1249 = vmatpush.bf16.msra.mxu0 0
      %1250 = vmatpush.bf16.msra.mxu0 0
      %1251 = vmatpush.bf16.msra.mxu0 0
      %1252 = vmatpush.bf16.msra.mxu0 %v1243
      %1253 = vmatmul.bf16.gmra.mxu0 %v1240
      %v1254 = vpop.f32.mrf.mxu0
      %v1255 = vadd.f32 0.0, %v1254
      %v1256 = vpop.f32.mrf.mxu0
      %1257 = vdwg.mxu0
      %1259 = vrot.lane.b32.xlu0 %v1255, 8
      %v1260 = vpop.permute.xlu0 %1259
      %vm1262 = vcmask 130112
      %1263 = vst.msk [vmem:[#allocation2] sm:$0xff] %vm1262, %v1260
      %1264 = vrot.lane.b32.xlu0 %v1143, 112
      %v1265 = vpop.permute.xlu0 %1264
      %1266 = vrot.lane.b32.xlu0 %v1143, 80
      %v1267 = vpop.permute.xlu0 %1266
      %v1269 = vsel %vm1147, %v1265, 0
      %v1272 = vsel %vm1147, %v1267, 0
      %1274 = vmatpush.bf16.xpose.msra.mxu0 0
      %1275 = vmatpush.bf16.xpose.msra.mxu0 0
      %1276 = vmatpush.bf16.xpose.msra.mxu0 0
      %1277 = vmatpush.bf16.xpose.msra.mxu0 0
      %1278 = vmatpush.bf16.xpose.msra.mxu0 0
      %1279 = vmatpush.bf16.xpose.msra.mxu0 0
      %1280 = vmatpush.bf16.xpose.msra.mxu0 0
      %1281 = vmatpush.bf16.xpose.msra.mxu0 %v1272
      %1282 = vmatmul.bf16.gmra.mxu0 %v1269
      %v1283 = vpop.f32.mrf.mxu0
      %v1284 = vadd.f32 0.0, %v1283
      %v1285 = vpop.f32.mrf.mxu0
      %1286 = vdwg.mxu0
      %v1287 = vsel %vm1147, %v1284, -inf
      %1288 = vmax.xlane.f32.xlu0 %v1287
      %v1289 = vpop.xlane.xlu0 %1288
      %v1290 = vsub.f32 %v1284, %v1289
      %v1291 = vmul.f32 %v1290, 1.442695
      %v1292 = vpow.pop %v1291
      %v1293 = vsel %vm1147, %v1292, 0.0
      %1294 = vadd.xlane.f32.xlu0 %v1293
      %v1295 = vpop.xlane.xlu0 %1294
      %v1296 = vrcp.pop %v1295
      %v1297 = vmul.f32 %v1292, %v1296
      %v1298 = vpack.c.bf16 %v1297, %v1297
      %1299 = vrot.lane.b32.xlu0 %v1179, 112
      %v1300 = vpop.permute.xlu0 %1299
      %v1302 = vsel %vm1147, %v1298, 0
      %v1305 = vsel %vm1183, %v1300, 0
      %1307 = vmatpush.bf16.msra.mxu0 0
      %1308 = vmatpush.bf16.msra.mxu0 0
      %1309 = vmatpush.bf16.msra.mxu0 0
      %1310 = vmatpush.bf16.msra.mxu0 0
      %1311 = vmatpush.bf16.msra.mxu0 0
      %1312 = vmatpush.bf16.msra.mxu0 0
      %1313 = vmatpush.bf16.msra.mxu0 0
      %1314 = vmatpush.bf16.msra.mxu0 %v1305
      %1315 = vmatmul.bf16.gmra.mxu0 %v1302
      %v1316 = vpop.f32.mrf.mxu0
      %v1317 = vadd.f32 0.0, %v1316
      %v1318 = vpop.f32.mrf.mxu0
      %1319 = vdwg.mxu0
      %1321 = vrot.lane.b32.xlu0 %v1317, 16
      %v1322 = vpop.permute.xlu0 %1321
      %vm1324 = vcmask 195712
      %1325 = vst.msk [vmem:[#allocation2] sm:$0xff] %vm1324, %v1322
      %1326 = vrot.lane.b32.xlu0 %v1143, 104
      %v1327 = vpop.permute.xlu0 %1326
      %1328 = vrot.lane.b32.xlu0 %v1143, 72
      %v1329 = vpop.permute.xlu0 %1328
      %v1331 = vsel %vm1147, %v1327, 0
      %v1334 = vsel %vm1147, %v1329, 0
      %1336 = vmatpush.bf16.xpose.msra.mxu0 0
      %1337 = vmatpush.bf16.xpose.msra.mxu0 0
      %1338 = vmatpush.bf16.xpose.msra.mxu0 0
      %1339 = vmatpush.bf16.xpose.msra.mxu0 0
      %1340 = vmatpush.bf16.xpose.msra.mxu0 0
      %1341 = vmatpush.bf16.xpose.msra.mxu0 0
      %1342 = vmatpush.bf16.xpose.msra.mxu0 0
      %1343 = vmatpush.bf16.xpose.msra.mxu0 %v1334
      %1344 = vmatmul.bf16.gmra.mxu0 %v1331
      %v1345 = vpop.f32.mrf.mxu0
      %v1346 = vadd.f32 0.0, %v1345
      %v1347 = vpop.f32.mrf.mxu0
      %1348 = vdwg.mxu0
      %v1349 = vsel %vm1147, %v1346, -inf
      %1350 = vmax.xlane.f32.xlu0 %v1349
      %v1351 = vpop.xlane.xlu0 %1350
      %v1352 = vsub.f32 %v1346, %v1351
      %v1353 = vmul.f32 %v1352, 1.442695
      %v1354 = vpow.pop %v1353
      %v1355 = vsel %vm1147, %v1354, 0.0
      %1356 = vadd.xlane.f32.xlu0 %v1355
      %v1357 = vpop.xlane.xlu0 %1356
      %v1358 = vrcp.pop %v1357
      %v1359 = vmul.f32 %v1354, %v1358
      %v1360 = vpack.c.bf16 %v1359, %v1359
      %1361 = vrot.lane.b32.xlu0 %v1179, 104
      %v1362 = vpop.permute.xlu0 %1361
      %v1364 = vsel %vm1147, %v1360, 0
      %v1367 = vsel %vm1183, %v1362, 0
      %1369 = vmatpush.bf16.msra.mxu0 0
      %1370 = vmatpush.bf16.msra.mxu0 0
      %1371 = vmatpush.bf16.msra.mxu0 0
      %1372 = vmatpush.bf16.msra.mxu0 0
      %1373 = vmatpush.bf16.msra.mxu0 0
      %1374 = vmatpush.bf16.msra.mxu0 0
      %1375 = vmatpush.bf16.msra.mxu0 0
      %1376 = vmatpush.bf16.msra.mxu0 %v1367
      %1377 = vmatmul.bf16.gmra.mxu0 %v1364
      %v1378 = vpop.f32.mrf.mxu0
      %v1379 = vadd.f32 0.0, %v1378
      %v1380 = vpop.f32.mrf.mxu0
      %1381 = vdwg.mxu0
      %1383 = vrot.lane.b32.xlu0 %v1379, 24
      %v1384 = vpop.permute.xlu0 %1383
      %vm1386 = vcmask 261312
      %1387 = vst.msk [vmem:[#allocation2] sm:$0xff] %vm1386, %v1384
      %v1388 = vld [vmem:[#allocation2] sm:$0xff]
      %v1389 = vpack.c.bf16 %v1388, %v1388
      %v1390 = vld [vmem:[%s19] sm:$0xf]
      %v1391 = vld [vmem:[%s19 + $0x4] sm:$0xf]
      %v1392 = vld [vmem:[%s19 + $0x8] sm:$0xf]
      %v1393 = vld [vmem:[%s19 + $0xc] sm:$0xf]
      %v1394 = vld [vmem:[%s21] sm:$0x1]
      %v1396 = vperm.slane %v1394, 0
      %v1402 = vunpack.c.l.b16 %v1390
      %v1403 = vunpack.c.l.b16 %v1391
      %v1404 = vunpack.c.l.b16 %v1392
      %v1405 = vunpack.c.l.b16 %v1393
      %v1406 = vpack.c.b16 %v1403, %v1402
      %v1407 = vpack.c.b16 %v1405, %v1404
      %v1411 = vsel %vm1089, %v1389, 0
      %1413 = vmatpush.bf16.msra.mxu0 0
      %1414 = vmatpush.bf16.msra.mxu0 0
      %1415 = vmatpush.bf16.msra.mxu0 0
      %1416 = vmatpush.bf16.msra.mxu0 0
      %1417 = vmatpush.bf16.msra.mxu0 0
      %1418 = vmatpush.bf16.msra.mxu0 0
      %1419 = vmatpush.bf16.msra.mxu0 %v1407
      %1420 = vmatpush.bf16.msra.mxu0 %v1406
      %1421 = vmatmul.bf16.gmra.mxu0 %v1411
      %v1422 = vpop.f32.mrf.mxu0
      %v1423 = vadd.f32 %v1396, %v1422
      %v1424 = vpop.f32.mrf.mxu0
      %1425 = vdwg.mxu0
      %v1426 = vadd.f32 %v1048, %v1423
      %v1427 = vld [vmem:[%s23] sm:$0x1]
      %v1428 = vld [vmem:[%s25] sm:$0x1]
      %v1429 = vsel %vm1089, %v1426, 0.0
      %1430 = vadd.xlane.f32.xlu0 %v1429
      %v1431 = vpop.xlane.xlu0 %1430
      %v1432 = vrcp.pop 32.0
      %v1433 = vmul.f32 32.0, %v1432
      %v1434 = vsub.f32 1.0, %v1433
      %v1435 = vmul.f32 %v1432, %v1434
      %v1436 = vadd.f32 %v1432, %v1435
      %vm1437 = vweird.f32 %v1432
      %v1438 = vsel %vm1437, %v1432, %v1436
      %v1439 = vmul.f32 %v1431, %v1438
      %v1440 = vsub.f32 %v1426, %v1439
      %v1441 = vmul.f32 %v1440, %v1440
      %v1442 = vsel %vm1089, %v1441, 0.0
      %1443 = vadd.xlane.f32.xlu0 %v1442
      %v1444 = vpop.xlane.xlu0 %1443
      %v1445 = vmul.f32 %v1444, %v1438
      %v1446 = vadd.f32 %v1445, 1e-05
      %v1447 = vrsqrt.pop %v1446
      %v1448 = vmul.f32 %v1447, %v1446
      %v1449 = vmul.f32 %v1448, %v1447
      %v1450 = vmul.f32 0.5, %v1449
      %v1451 = vsub.f32 1.5, %v1450
      %v1452 = vmul.f32 %v1447, %v1451
      %vm1453 = vweird.f32 %v1446
      %vm1454 = vweird.f32 %v1447
      %vm1455 = vmor %vm1453, %vm1454
      %v1456 = vsel %vm1455, %v1447, %v1452
      %v1457 = vmul.f32 %v1440, %v1456
      %v1459 = vperm.slane %v1427, 0
      %v1461 = vmul.f32 %v1457, %v1459
      %v1463 = vperm.slane %v1428, 0
      %v1465 = vadd.f32 %v1461, %v1463
      %v1466 = vadd.f32 %v1465, %v1049
      %v1467 = vpack.c.bf16 %v1466, %v1466
      %v1468 = vld [vmem:[%s27] sm:$0xf]
      %v1469 = vld [vmem:[%s27 + $0x4] sm:$0xf]
      %v1470 = vld [vmem:[%s27 + $0x8] sm:$0xf]
      %v1471 = vld [vmem:[%s27 + $0xc] sm:$0xf]
      %v1472 = vld [vmem:[%s29] sm:$0x1]
      %v1474 = vperm.slane %v1472, 0
      %v1480 = vunpack.c.l.b16 %v1468
      %v1481 = vunpack.c.l.b16 %v1469
      %v1482 = vunpack.c.l.b16 %v1470
      %v1483 = vunpack.c.l.b16 %v1471
      %v1484 = vpack.c.b16 %v1481, %v1480
      %v1485 = vpack.c.b16 %v1483, %v1482
      %v1489 = vsel %vm1089, %v1467, 0
      %1491 = vmatpush.bf16.msra.mxu0 0
      %1492 = vmatpush.bf16.msra.mxu0 0
      %1493 = vmatpush.bf16.msra.mxu0 0
      %1494 = vmatpush.bf16.msra.mxu0 0
      %1495 = vmatpush.bf16.msra.mxu0 0
      %1496 = vmatpush.bf16.msra.mxu0 0
      %1497 = vmatpush.bf16.msra.mxu0 %v1485
      %1498 = vmatpush.bf16.msra.mxu0 %v1484
      %1499 = vmatmul.bf16.gmra.mxu0 %v1489
      %v1500 = vpop.f32.mrf.mxu0
      %v1501 = vadd.f32 %v1474, %v1500
      %v1502 = vpop.f32.mrf.mxu0
      %1503 = vdwg.mxu0
      %v1504 = vadd.f32 %v1050, %v1058
      %v1505 = vadd.f32 %v1051, %v1059
      %v1506 = vadd.f32 %v1052, %v1060
      %v1507 = vadd.f32 %v1053, %v1061
      %v1508 = vadd.f32 %v1054, %v1062
      %v1509 = vadd.f32 %v1055, %v1063
      %v1510 = vadd.f32 %v1056, %v1064
      %v1511 = vadd.f32 %v1057, %v1065
      %v1512 = vpack.c.bf16 %v1505, %v1504
      %v1513 = vpack.c.bf16 %v1507, %v1506
      %v1514 = vpack.c.bf16 %v1509, %v1508
      %v1515 = vpack.c.bf16 %v1511, %v1510
      %v1516 = vld [vmem:[%s31] sm:$0xf]
      %v1517 = vld [vmem:[%s31 + $0x4] sm:$0xf]
      %v1518 = vld [vmem:[%s31 + $0x8] sm:$0xf]
      %v1519 = vld [vmem:[%s31 + $0xc] sm:$0xf]
      %v1520 = vld [vmem:[%s33] sm:$0x1]
      %v1522 = vperm.slane %v1520, 0
      %v1528 = vunpack.c.l.b16 %v1516
      %v1529 = vunpack.c.l.b16 %v1517
      %v1530 = vunpack.c.l.b16 %v1518
      %v1531 = vunpack.c.l.b16 %v1519
      %v1532 = vpack.c.b16 %v1529, %v1528
      %v1533 = vpack.c.b16 %v1531, %v1530
      %v1537 = vsel %vm1089, %v1512, 0
      %v1540 = vsel %vm1089, %v1513, 0
      %v1543 = vsel %vm1089, %v1514, 0
      %v1546 = vsel %vm1089, %v1515, 0
      %1548 = vmatpush.bf16.msra.mxu0 0
      %1549 = vmatpush.bf16.msra.mxu0 0
      %1550 = vmatpush.bf16.msra.mxu0 0
      %1551 = vmatpush.bf16.msra.mxu0 0
      %1552 = vmatpush.bf16.msra.mxu0 0
      %1553 = vmatpush.bf16.msra.mxu0 0
      %1554 = vmatpush.bf16.msra.mxu0 %v1533
      %1555 = vmatpush.bf16.msra.mxu0 %v1532
      %1556 = vmatmul.bf16.gmra.mxu0 %v1537
      %v1557 = vpop.f32.mrf.mxu0
      %v1558 = vadd.f32 %v1522, %v1557
      %v1559 = vpop.f32.mrf.mxu0
      %v1560 = vadd.f32 %v1522, %v1559
      %1561 = vmatmul.bf16.gmra.mxu0 %v1540
      %v1562 = vpop.f32.mrf.mxu0
      %v1563 = vadd.f32 %v1522, %v1562
      %v1564 = vpop.f32.mrf.mxu0
      %v1565 = vadd.f32 %v1522, %v1564
      %1566 = vmatmul.bf16.gmra.mxu0 %v1543
      %v1567 = vpop.f32.mrf.mxu0
      %v1568 = vadd.f32 %v1522, %v1567
      %v1569 = vpop.f32.mrf.mxu0
      %v1570 = vadd.f32 %v1522, %v1569
      %1571 = vmatmul.bf16.gmra.mxu0 %v1546
      %v1572 = vpop.f32.mrf.mxu0
      %v1573 = vadd.f32 %v1522, %v1572
      %v1574 = vpop.f32.mrf.mxu0
      %v1575 = vadd.f32 %v1522, %v1574
      %1576 = vdwg.mxu0
      %v1577 = vpack.c.bf16 %v1051, %v1050
      %v1578 = vpack.c.bf16 %v1053, %v1052
      %v1579 = vpack.c.bf16 %v1055, %v1054
      %v1580 = vpack.c.bf16 %v1057, %v1056
      %v1581 = vld [vmem:[%s35] sm:$0xf]
      %v1582 = vld [vmem:[%s35 + $0x4] sm:$0xf]
      %v1583 = vld [vmem:[%s35 + $0x8] sm:$0xf]
      %v1584 = vld [vmem:[%s35 + $0xc] sm:$0xf]
      %v1585 = vld [vmem:[%s37] sm:$0x1]
      %v1587 = vperm.slane %v1585, 0
      %v1593 = vunpack.c.l.b16 %v1581
      %v1594 = vunpack.c.l.b16 %v1582
      %v1595 = vunpack.c.l.b16 %v1583
      %v1596 = vunpack.c.l.b16 %v1584
      %v1597 = vpack.c.b16 %v1594, %v1593
      %v1598 = vpack.c.b16 %v1596, %v1595
      %v1602 = vsel %vm1089, %v1577, 0
      %v1605 = vsel %vm1089, %v1578, 0
      %v1608 = vsel %vm1089, %v1579, 0
      %v1611 = vsel %vm1089, %v1580, 0
      %1613 = vmatpush.bf16.msra.mxu0 0
      %1614 = vmatpush.bf16.msra.mxu0 0
      %1615 = vmatpush.bf16.msra.mxu0 0
      %1616 = vmatpush.bf16.msra.mxu0 0
      %1617 = vmatpush.bf16.msra.mxu0 0
      %1618 = vmatpush.bf16.msra.mxu0 0
      %1619 = vmatpush.bf16.msra.mxu0 %v1598
      %1620 = vmatpush.bf16.msra.mxu0 %v1597
      %1621 = vmatmul.bf16.gmra.mxu0 %v1602
      %v1622 = vpop.f32.mrf.mxu0
      %v1623 = vadd.f32 %v1587, %v1622
      %v1624 = vpop.f32.mrf.mxu0
      %v1625 = vadd.f32 %v1587, %v1624
      %1626 = vmatmul.bf16.gmra.mxu0 %v1605
      %v1627 = vpop.f32.mrf.mxu0
      %v1628 = vadd.f32 %v1587, %v1627
      %v1629 = vpop.f32.mrf.mxu0
      %v1630 = vadd.f32 %v1587, %v1629
      %1631 = vmatmul.bf16.gmra.mxu0 %v1608
      %v1632 = vpop.f32.mrf.mxu0
      %v1633 = vadd.f32 %v1587, %v1632
      %v1634 = vpop.f32.mrf.mxu0
      %v1635 = vadd.f32 %v1587, %v1634
      %1636 = vmatmul.bf16.gmra.mxu0 %v1611
      %v1637 = vpop.f32.mrf.mxu0
      %v1638 = vadd.f32 %v1587, %v1637
      %v1639 = vpop.f32.mrf.mxu0
      %v1640 = vadd.f32 %v1587, %v1639
      %1641 = vdwg.mxu0
      %v1642 = vpack.c.bf16 %v1501, %v1501
      %v1643 = vpack.c.bf16 %v1560, %v1558
      %v1644 = vpack.c.bf16 %v1565, %v1563
      %v1645 = vpack.c.bf16 %v1570, %v1568
      %v1646 = vpack.c.bf16 %v1575, %v1573
      %v1648 = vperm.slane %v1066, 0
      %v1651 = vsel %vm1147, %v1642, 0
      %v1654 = vsel %vm1147, %v1643, 0
      %v1657 = vsel %vm1147, %v1644, 0
      %v1660 = vsel %vm1147, %v1645, 0
      %v1663 = vsel %vm1147, %v1646, 0
      %1665 = vmatpush.bf16.xpose.msra.mxu0 0
      %1666 = vmatpush.bf16.xpose.msra.mxu0 0
      %1667 = vmatpush.bf16.xpose.msra.mxu0 0
      %1668 = vmatpush.bf16.xpose.msra.mxu0 0
      %1669 = vmatpush.bf16.xpose.msra.mxu0 %v1663
      %1670 = vmatpush.bf16.xpose.msra.mxu0 %v1660
      %1671 = vmatpush.bf16.xpose.msra.mxu0 %v1657
      %1672 = vmatpush.bf16.xpose.msra.mxu0 %v1654
      %1673 = vmatmul.bf16.gmra.mxu0 %v1651
      %v1674 = vpop.f32.mrf.mxu0
      %v1675 = vadd.f32 %v1648, %v1674
      %v1676 = vpop.f32.mrf.mxu0
      %1677 = vdwg.mxu0
      %vm1678 = vcmask 523264
      %v1679 = vsel %vm1678, %v1675, -inf
      %1680 = vmax.xlane.f32.xlu0 %v1679
      %v1681 = vpop.xlane.xlu0 %1680
      %v1682 = vsub.f32 %v1675, %v1681
      %v1683 = vmul.f32 %v1682, 1.442695
      %v1684 = vpow.pop %v1683
      %v1685 = vsel %vm1678, %v1684, 0.0
      %1686 = vadd.xlane.f32.xlu0 %v1685
      %v1687 = vpop.xlane.xlu0 %1686
      %v1688 = vrcp.pop %v1687
      %v1689 = vmul.f32 %v1684, %v1688
      %v1690 = vpack.c.bf16 %v1689, %v1689
      %v1691 = vpack.c.bf16 %v1625, %v1623
      %v1692 = vpack.c.bf16 %v1630, %v1628
      %v1693 = vpack.c.bf16 %v1635, %v1633
      %v1694 = vpack.c.bf16 %v1640, %v1638
      %v1696 = vsel %vm1678, %v1690, 0
      %1698 = vmatpush.bf16.msra.mxu0 0
      %1699 = vmatpush.bf16.msra.mxu0 0
      %1700 = vmatpush.bf16.msra.mxu0 0
      %1701 = vmatpush.bf16.msra.mxu0 0
      %1702 = vmatpush.bf16.msra.mxu0 %v1694
      %1703 = vmatpush.bf16.msra.mxu0 %v1693
      %1704 = vmatpush.bf16.msra.mxu0 %v1692
      %1705 = vmatpush.bf16.msra.mxu0 %v1691
      %1706 = vmatmul.bf16.gmra.mxu0 %v1696
      %v1707 = vpop.f32.mrf.mxu0
      %v1708 = vadd.f32 0.0, %v1707
      %v1709 = vpop.f32.mrf.mxu0
      %1710 = vdwg.mxu0
      %1711 = vst.msk [vmem:[#allocation2] sm:$0xff] %vm1147, %v1708
      %1713 = vrot.lane.b32.xlu0 %v1642, 120
      %v1714 = vpop.permute.xlu0 %1713
      %1719 = vrot.lane.b32.xlu0 %v1643, 120
      %v1720 = vpop.permute.xlu0 %1719
      %1721 = vrot.lane.b32.xlu0 %v1644, 120
      %v1722 = vpop.permute.xlu0 %1721
      %1723 = vrot.lane.b32.xlu0 %v1645, 120
      %v1724 = vpop.permute.xlu0 %1723
      %1725 = vrot.lane.b32.xlu0 %v1646, 120
      %v1726 = vpop.permute.xlu0 %1725
      %v1728 = vsel %vm1147, %v1714, 0
      %v1731 = vsel %vm1147, %v1720, 0
      %v1734 = vsel %vm1147, %v1722, 0
      %v1737 = vsel %vm1147, %v1724, 0
      %v1740 = vsel %vm1147, %v1726, 0
      %1742 = vmatpush.bf16.xpose.msra.mxu0 0
      %1743 = vmatpush.bf16.xpose.msra.mxu0 0
      %1744 = vmatpush.bf16.xpose.msra.mxu0 0
      %1745 = vmatpush.bf16.xpose.msra.mxu0 0
      %1746 = vmatpush.bf16.xpose.msra.mxu0 %v1740
      %1747 = vmatpush.bf16.xpose.msra.mxu0 %v1737
      %1748 = vmatpush.bf16.xpose.msra.mxu0 %v1734
      %1749 = vmatpush.bf16.xpose.msra.mxu0 %v1731
      %1750 = vmatmul.bf16.gmra.mxu0 %v1728
      %v1751 = vpop.f32.mrf.mxu0
      %v1752 = vadd.f32 %v1648, %v1751
      %v1753 = vpop.f32.mrf.mxu0
      %1754 = vdwg.mxu0
      %v1755 = vsel %vm1678, %v1752, -inf
      %1756 = vmax.xlane.f32.xlu0 %v1755
      %v1757 = vpop.xlane.xlu0 %1756
      %v1758 = vsub.f32 %v1752, %v1757
      %v1759 = vmul.f32 %v1758, 1.442695
      %v1760 = vpow.pop %v1759
      %v1761 = vsel %vm1678, %v1760, 0.0
      %1762 = vadd.xlane.f32.xlu0 %v1761
      %v1763 = vpop.xlane.xlu0 %1762
      %v1764 = vrcp.pop %v1763
      %v1765 = vmul.f32 %v1760, %v1764
      %v1766 = vpack.c.bf16 %v1765, %v1765
      %1771 = vrot.lane.b32.xlu0 %v1691, 120
      %v1772 = vpop.permute.xlu0 %1771
      %1773 = vrot.lane.b32.xlu0 %v1692, 120
      %v1774 = vpop.permute.xlu0 %1773
      %1775 = vrot.lane.b32.xlu0 %v1693, 120
      %v1776 = vpop.permute.xlu0 %1775
      %1777 = vrot.lane.b32.xlu0 %v1694, 120
      %v1778 = vpop.permute.xlu0 %1777
      %v1784 = vsel %vm1678, %v1766, 0
      %1786 = vmatpush.bf16.msra.mxu0 0
      %1787 = vmatpush.bf16.msra.mxu0 0
      %1788 = vmatpush.bf16.msra.mxu0 0
      %1789 = vmatpush.bf16.msra.mxu0 0
      %1790 = vmatpush.bf16.msra.mxu0 %v1778
      %1791 = vmatpush.bf16.msra.mxu0 %v1776
      %1792 = vmatpush.bf16.msra.mxu0 %v1774
      %1793 = vmatpush.bf16.msra.mxu0 %v1772
      %1794 = vmatmul.bf16.gmra.mxu0 %v1784
      %v1795 = vpop.f32.mrf.mxu0
      %v1796 = vadd.f32 0.0, %v1795
      %v1797 = vpop.f32.mrf.mxu0
      %1798 = vdwg.mxu0
      %1800 = vrot.lane.b32.xlu0 %v1796, 8
      %v1801 = vpop.permute.xlu0 %1800
      %1803 = vst.msk [vmem:[#allocation2] sm:$0xff] %vm1262, %v1801
      %1804 = vrot.lane.b32.xlu0 %v1642, 112
      %v1805 = vpop.permute.xlu0 %1804
      %1806 = vrot.lane.b32.xlu0 %v1643, 112
      %v1807 = vpop.permute.xlu0 %1806
      %1808 = vrot.lane.b32.xlu0 %v1644, 112
      %v1809 = vpop.permute.xlu0 %1808
      %1810 = vrot.lane.b32.xlu0 %v1645, 112
      %v1811 = vpop.permute.xlu0 %1810
      %1812 = vrot.lane.b32.xlu0 %v1646, 112
      %v1813 = vpop.permute.xlu0 %1812
      %v1815 = vsel %vm1147, %v1805, 0
      %v1818 = vsel %vm1147, %v1807, 0
      %v1821 = vsel %vm1147, %v1809, 0
      %v1824 = vsel %vm1147, %v1811, 0
      %v1827 = vsel %vm1147, %v1813, 0
      %1829 = vmatpush.bf16.xpose.msra.mxu0 0
      %1830 = vmatpush.bf16.xpose.msra.mxu0 0
      %1831 = vmatpush.bf16.xpose.msra.mxu0 0
      %1832 = vmatpush.bf16.xpose.msra.mxu0 0
      %1833 = vmatpush.bf16.xpose.msra.mxu0 %v1827
      %1834 = vmatpush.bf16.xpose.msra.mxu0 %v1824
      %1835 = vmatpush.bf16.xpose.msra.mxu0 %v1821
      %1836 = vmatpush.bf16.xpose.msra.mxu0 %v1818
      %1837 = vmatmul.bf16.gmra.mxu0 %v1815
      %v1838 = vpop.f32.mrf.mxu0
      %v1839 = vadd.f32 %v1648, %v1838
      %v1840 = vpop.f32.mrf.mxu0
      %1841 = vdwg.mxu0
      %v1842 = vsel %vm1678, %v1839, -inf
      %1843 = vmax.xlane.f32.xlu0 %v1842
      %v1844 = vpop.xlane.xlu0 %1843
      %v1845 = vsub.f32 %v1839, %v1844
      %v1846 = vmul.f32 %v1845, 1.442695
      %v1847 = vpow.pop %v1846
      %v1848 = vsel %vm1678, %v1847, 0.0
      %1849 = vadd.xlane.f32.xlu0 %v1848
      %v1850 = vpop.xlane.xlu0 %1849
      %v1851 = vrcp.pop %v1850
      %v1852 = vmul.f32 %v1847, %v1851
      %v1853 = vpack.c.bf16 %v1852, %v1852
      %1854 = vrot.lane.b32.xlu0 %v1691, 112
      %v1855 = vpop.permute.xlu0 %1854
      %1856 = vrot.lane.b32.xlu0 %v1692, 112
      %v1857 = vpop.permute.xlu0 %1856
      %1858 = vrot.lane.b32.xlu0 %v1693, 112
      %v1859 = vpop.permute.xlu0 %1858
      %1860 = vrot.lane.b32.xlu0 %v1694, 112
      %v1861 = vpop.permute.xlu0 %1860
      %v1867 = vsel %vm1678, %v1853, 0
      %1869 = vmatpush.bf16.msra.mxu0 0
      %1870 = vmatpush.bf16.msra.mxu0 0
      %1871 = vmatpush.bf16.msra.mxu0 0
      %1872 = vmatpush.bf16.msra.mxu0 0
      %1873 = vmatpush.bf16.msra.mxu0 %v1861
      %1874 = vmatpush.bf16.msra.mxu0 %v1859
      %1875 = vmatpush.bf16.msra.mxu0 %v1857
      %1876 = vmatpush.bf16.msra.mxu0 %v1855
      %1877 = vmatmul.bf16.gmra.mxu0 %v1867
      %v1878 = vpop.f32.mrf.mxu0
      %v1879 = vadd.f32 0.0, %v1878
      %v1880 = vpop.f32.mrf.mxu0
      %1881 = vdwg.mxu0
      %1883 = vrot.lane.b32.xlu0 %v1879, 16
      %v1884 = vpop.permute.xlu0 %1883
      %1886 = vst.msk [vmem:[#allocation2] sm:$0xff] %vm1324, %v1884
      %1887 = vrot.lane.b32.xlu0 %v1642, 104
      %v1888 = vpop.permute.xlu0 %1887
      %1889 = vrot.lane.b32.xlu0 %v1643, 104
      %v1890 = vpop.permute.xlu0 %1889
      %1891 = vrot.lane.b32.xlu0 %v1644, 104
      %v1892 = vpop.permute.xlu0 %1891
      %1893 = vrot.lane.b32.xlu0 %v1645, 104
      %v1894 = vpop.permute.xlu0 %1893
      %1895 = vrot.lane.b32.xlu0 %v1646, 104
      %v1896 = vpop.permute.xlu0 %1895
      %v1898 = vsel %vm1147, %v1888, 0
      %v1901 = vsel %vm1147, %v1890, 0
      %v1904 = vsel %vm1147, %v1892, 0
      %v1907 = vsel %vm1147, %v1894, 0
      %v1910 = vsel %vm1147, %v1896, 0
      %1912 = vmatpush.bf16.xpose.msra.mxu0 0
      %1913 = vmatpush.bf16.xpose.msra.mxu0 0
      %1914 = vmatpush.bf16.xpose.msra.mxu0 0
      %1915 = vmatpush.bf16.xpose.msra.mxu0 0
      %1916 = vmatpush.bf16.xpose.msra.mxu0 %v1910
      %1917 = vmatpush.bf16.xpose.msra.mxu0 %v1907
      %1918 = vmatpush.bf16.xpose.msra.mxu0 %v1904
      %1919 = vmatpush.bf16.xpose.msra.mxu0 %v1901
      %1920 = vmatmul.bf16.gmra.mxu0 %v1898
      %v1921 = vpop.f32.mrf.mxu0
      %v1922 = vadd.f32 %v1648, %v1921
      %v1923 = vpop.f32.mrf.mxu0
      %1924 = vdwg.mxu0
      %v1925 = vsel %vm1678, %v1922, -inf
      %1926 = vmax.xlane.f32.xlu0 %v1925
      %v1927 = vpop.xlane.xlu0 %1926
      %v1928 = vsub.f32 %v1922, %v1927
      %v1929 = vmul.f32 %v1928, 1.442695
      %v1930 = vpow.pop %v1929
      %v1931 = vsel %vm1678, %v1930, 0.0
      %1932 = vadd.xlane.f32.xlu0 %v1931
      %v1933 = vpop.xlane.xlu0 %1932
      %v1934 = vrcp.pop %v1933
      %v1935 = vmul.f32 %v1930, %v1934
      %v1936 = vpack.c.bf16 %v1935, %v1935
      %1937 = vrot.lane.b32.xlu0 %v1691, 104
      %v1938 = vpop.permute.xlu0 %1937
      %1939 = vrot.lane.b32.xlu0 %v1692, 104
      %v1940 = vpop.permute.xlu0 %1939
      %1941 = vrot.lane.b32.xlu0 %v1693, 104
      %v1942 = vpop.permute.xlu0 %1941
      %1943 = vrot.lane.b32.xlu0 %v1694, 104
      %v1944 = vpop.permute.xlu0 %1943
      %v1950 = vsel %vm1678, %v1936, 0
      %1952 = vmatpush.bf16.msra.mxu0 0
      %1953 = vmatpush.bf16.msra.mxu0 0
      %1954 = vmatpush.bf16.msra.mxu0 0
      %1955 = vmatpush.bf16.msra.mxu0 0
      %1956 = vmatpush.bf16.msra.mxu0 %v1944
      %1957 = vmatpush.bf16.msra.mxu0 %v1942
      %1958 = vmatpush.bf16.msra.mxu0 %v1940
      %1959 = vmatpush.bf16.msra.mxu0 %v1938
      %1960 = vmatmul.bf16.gmra.mxu0 %v1950
      %v1961 = vpop.f32.mrf.mxu0
      %v1962 = vadd.f32 0.0, %v1961
      %v1963 = vpop.f32.mrf.mxu0
      %1964 = vdwg.mxu0
      %1966 = vrot.lane.b32.xlu0 %v1962, 24
      %v1967 = vpop.permute.xlu0 %1966
      %1969 = vst.msk [vmem:[#allocation2] sm:$0xff] %vm1386, %v1967
      %v1970 = vld [vmem:[#allocation2] sm:$0xff]
      %v1971 = vpack.c.bf16 %v1970, %v1970
      %v1972 = vld [vmem:[%s39] sm:$0xf]
      %v1973 = vld [vmem:[%s39 + $0x4] sm:$0xf]
      %v1974 = vld [vmem:[%s39 + $0x8] sm:$0xf]
      %v1975 = vld [vmem:[%s39 + $0xc] sm:$0xf]
      %v1976 = vld [vmem:[%s41] sm:$0x1]
      %v1978 = vperm.slane %v1976, 0
      %v1984 = vunpack.c.l.b16 %v1972
      %v1985 = vunpack.c.l.b16 %v1973
      %v1986 = vunpack.c.l.b16 %v1974
      %v1987 = vunpack.c.l.b16 %v1975
      %v1988 = vpack.c.b16 %v1985, %v1984
      %v1989 = vpack.c.b16 %v1987, %v1986
      %v1993 = vsel %vm1089, %v1971, 0
      %1995 = vmatpush.bf16.msra.mxu0 0
      %1996 = vmatpush.bf16.msra.mxu0 0
      %1997 = vmatpush.bf16.msra.mxu0 0
      %1998 = vmatpush.bf16.msra.mxu0 0
      %1999 = vmatpush.bf16.msra.mxu0 0
      %2000 = vmatpush.bf16.msra.mxu0 0
      %2001 = vmatpush.bf16.msra.mxu0 %v1989
      %2002 = vmatpush.bf16.msra.mxu0 %v1988
      %2003 = vmatmul.bf16.gmra.mxu0 %v1993
      %v2004 = vpop.f32.mrf.mxu0
      %v2005 = vadd.f32 %v1978, %v2004
      %v2006 = vpop.f32.mrf.mxu0
      %2007 = vdwg.mxu0
      %v2008 = vadd.f32 %v1465, %v2005
      %v2009 = vld [vmem:[%s43] sm:$0x1]
      %v2010 = vld [vmem:[%s45] sm:$0x1]
      %v2011 = vsel %vm1089, %v2008, 0.0
      %2012 = vadd.xlane.f32.xlu0 %v2011
      %v2013 = vpop.xlane.xlu0 %2012
      %v2014 = vmul.f32 %v2013, %v1438
      %v2015 = vsub.f32 %v2008, %v2014
      %v2016 = vmul.f32 %v2015, %v2015
      %v2017 = vsel %vm1089, %v2016, 0.0
      %2018 = vadd.xlane.f32.xlu0 %v2017
      %v2019 = vpop.xlane.xlu0 %2018
      %v2020 = vmul.f32 %v2019, %v1438
      %v2021 = vadd.f32 %v2020, 1e-05
      %v2022 = vrsqrt.pop %v2021
      %v2023 = vmul.f32 %v2022, %v2021
      %v2024 = vmul.f32 %v2023, %v2022
      %v2025 = vmul.f32 0.5, %v2024
      %v2026 = vsub.f32 1.5, %v2025
      %v2027 = vmul.f32 %v2022, %v2026
      %vm2028 = vweird.f32 %v2021
      %vm2029 = vweird.f32 %v2022
      %vm2030 = vmor %vm2028, %vm2029
      %v2031 = vsel %vm2030, %v2022, %v2027
      %v2032 = vmul.f32 %v2015, %v2031
      %v2034 = vperm.slane %v2009, 0
      %v2036 = vmul.f32 %v2032, %v2034
      %v2038 = vperm.slane %v2010, 0
      %v2040 = vadd.f32 %v2036, %v2038
      %v2041 = vpack.c.bf16 %v2040, %v2040
      %v2042 = vld [vmem:[%s47] sm:$0xf]
      %v2043 = vld [vmem:[%s47 + $0x4] sm:$0xf]
      %v2044 = vld [vmem:[%s47 + $0x8] sm:$0xf]
      %v2045 = vld [vmem:[%s47 + $0xc] sm:$0xf]
      %v2046 = vld [vmem:[%s49] sm:$0x1]
      %v2048 = vperm.slane %v2046, 0
      %v2054 = vunpack.c.l.b16 %v2042
      %v2055 = vunpack.c.l.b16 %v2043
      %v2056 = vunpack.c.l.b16 %v2044
      %v2057 = vunpack.c.l.b16 %v2045
      %v2058 = vpack.c.b16 %v2055, %v2054
      %v2059 = vpack.c.b16 %v2057, %v2056
      %v2063 = vsel %vm1089, %v2041, 0
      %2065 = vmatpush.bf16.msra.mxu0 0
      %2066 = vmatpush.bf16.msra.mxu0 0
      %2067 = vmatpush.bf16.msra.mxu0 0
      %2068 = vmatpush.bf16.msra.mxu0 0
      %2069 = vmatpush.bf16.msra.mxu0 0
      %2070 = vmatpush.bf16.msra.mxu0 0
      %2071 = vmatpush.bf16.msra.mxu0 %v2059
      %2072 = vmatpush.bf16.msra.mxu0 %v2058
      %2073 = vmatmul.bf16.gmra.mxu0 %v2063
      %v2074 = vpop.f32.mrf.mxu0
      %v2075 = vadd.f32 %v2048, %v2074
      %v2076 = vpop.f32.mrf.mxu0
      %2077 = vdwg.mxu0
      %v2078 = vmax.f32 %v2075, 0.0
      %v2079 = vpack.c.bf16 %v2078, %v2078
      %v2080 = vld [vmem:[%s51] sm:$0xf]
      %v2081 = vld [vmem:[%s51 + $0x4] sm:$0xf]
      %v2082 = vld [vmem:[%s51 + $0x8] sm:$0xf]
      %v2083 = vld [vmem:[%s51 + $0xc] sm:$0xf]
      %v2084 = vld [vmem:[%s51 + $0x10] sm:$0xf]
      %v2085 = vld [vmem:[%s51 + $0x14] sm:$0xf]
      %v2086 = vld [vmem:[%s51 + $0x18] sm:$0xf]
      %v2087 = vld [vmem:[%s51 + $0x1c] sm:$0xf]
      %v2088 = vld [vmem:[%s53] sm:$0x1]
      %v2090 = vperm.slane %v2088, 0
      %v2100 = vunpack.c.l.b16 %v2080
      %v2101 = vunpack.c.l.b16 %v2081
      %v2102 = vunpack.c.l.b16 %v2082
      %v2103 = vunpack.c.l.b16 %v2083
      %v2104 = vunpack.c.l.b16 %v2084
      %v2105 = vunpack.c.l.b16 %v2085
      %v2106 = vunpack.c.l.b16 %v2086
      %v2107 = vunpack.c.l.b16 %v2087
      %v2108 = vpack.c.b16 %v2101, %v2100
      %v2109 = vpack.c.b16 %v2103, %v2102
      %v2110 = vpack.c.b16 %v2105, %v2104
      %v2111 = vpack.c.b16 %v2107, %v2106
      %v2117 = vsel %vm1678, %v2079, 0
      %2119 = vmatpush.bf16.msra.mxu0 0
      %2120 = vmatpush.bf16.msra.mxu0 0
      %2121 = vmatpush.bf16.msra.mxu0 0
      %2122 = vmatpush.bf16.msra.mxu0 0
      %2123 = vmatpush.bf16.msra.mxu0 %v2111
      %2124 = vmatpush.bf16.msra.mxu0 %v2110
      %2125 = vmatpush.bf16.msra.mxu0 %v2109
      %2126 = vmatpush.bf16.msra.mxu0 %v2108
      %2127 = vmatmul.bf16.gmra.mxu0 %v2117
      %v2128 = vpop.f32.mrf.mxu0
      %v2129 = vadd.f32 %v2090, %v2128
      %v2130 = vpop.f32.mrf.mxu0
      %2131 = vdwg.mxu0
      %v2132 = vadd.f32 %v2040, %v2129
      %v2133 = vld [vmem:[%s55] sm:$0x1]
      %v2134 = vld [vmem:[%s57] sm:$0x1]
      %v2135 = vsel %vm1089, %v2132, 0.0
      %2136 = vadd.xlane.f32.xlu0 %v2135
      %v2137 = vpop.xlane.xlu0 %2136
      %v2138 = vmul.f32 %v2137, %v1438
      %v2139 = vsub.f32 %v2132, %v2138
      %v2140 = vmul.f32 %v2139, %v2139
      %v2141 = vsel %vm1089, %v2140, 0.0
      %2142 = vadd.xlane.f32.xlu0 %v2141
      %v2143 = vpop.xlane.xlu0 %2142
      %v2144 = vmul.f32 %v2143, %v1438
      %v2145 = vadd.f32 %v2144, 1e-05
      %v2146 = vrsqrt.pop %v2145
      %v2147 = vmul.f32 %v2146, %v2145
      %v2148 = vmul.f32 %v2147, %v2146
      %v2149 = vmul.f32 0.5, %v2148
      %v2150 = vsub.f32 1.5, %v2149
      %v2151 = vmul.f32 %v2146, %v2150
      %vm2152 = vweird.f32 %v2145
      %vm2153 = vweird.f32 %v2146
      %vm2154 = vmor %vm2152, %vm2153
      %v2155 = vsel %vm2154, %v2146, %v2151
      %v2156 = vmul.f32 %v2139, %v2155
      %v2158 = vperm.slane %v2133, 0
      %v2160 = vmul.f32 %v2156, %v2158
      %v2162 = vperm.slane %v2134, 0
      %v2164 = vadd.f32 %v2160, %v2162
      %2165 = vst.msk [vmem:[%s1042] sm:$0xff] %vm1089, %v2164
      %v2166 = vld [vmem:[%s59] sm:$0x1]
      %v2167 = vld [vmem:[%s61] sm:$0x1]
      %v2168 = vsel %vm1089, %v2164, 0.0
      %2169 = vadd.xlane.f32.xlu0 %v2168
      %v2170 = vpop.xlane.xlu0 %2169
      %v2171 = vmul.f32 %v2170, %v1438
      %v2172 = vsub.f32 %v2164, %v2171
      %v2173 = vmul.f32 %v2172, %v2172
      %v2174 = vsel %vm1089, %v2173, 0.0
      %2175 = vadd.xlane.f32.xlu0 %v2174
      %v2176 = vpop.xlane.xlu0 %2175
      %v2177 = vmul.f32 %v2176, %v1438
      %v2178 = vadd.f32 %v2177, 1e-05
      %v2179 = vrsqrt.pop %v2178
      %v2180 = vmul.f32 %v2179, %v2178
      %v2181 = vmul.f32 %v2180, %v2179
      %v2182 = vmul.f32 0.5, %v2181
      %v2183 = vsub.f32 1.5, %v2182
      %v2184 = vmul.f32 %v2179, %v2183
      %vm2185 = vweird.f32 %v2178
      %vm2186 = vweird.f32 %v2179
      %vm2187 = vmor %vm2185, %vm2186
      %v2188 = vsel %vm2187, %v2179, %v2184
      %v2189 = vmul.f32 %v2172, %v2188
      %v2191 = vperm.slane %v2166, 0
      %v2193 = vmul.f32 %v2189, %v2191
      %v2195 = vperm.slane %v2167, 0
      %v2197 = vadd.f32 %v2193, %v2195
      %2198 = vst.msk [vmem:[%s1046] sm:$0xff] %vm1089, %v2197
      %p2199 = scmp.lt.s32.totalorder %s77, 1
      %s2200 = scalar_select %p2199, %s77, 1
      %s2201 = smul.addr %s2200, 8
      %s2202 = scalar_lea.vmem %s63, %s2201
      %p2203 = scmp.lt.s32.totalorder %s77, 1
      %s2204 = scalar_select %p2203, %s77, 1
      %s2205 = smul.addr %s2204, 8
      %s2206 = scalar_lea.vmem %s65, %s2205
      // Predicated region
      $region145: #{graphdetr_forward.9} parent=143 // pred_check
        %p2207 = pneg %p766
      $region146: #{graphdetr_forward.9} parent=143 // pred_check_branch
        %2209 = sbr.rel (%p2207) target = $region148
      $region147: #{graphdetr_forward.9} parent=143 // pred_region
        _
      $region148: #{graphdetr_forward.9} parent=143 // pred_fallthru
        _
      // Predicated region
      $region149: #{graphdetr_forward.9} parent=143 // pred_check
        %p2210 = pneg %p792
      $region150: #{graphdetr_forward.9} parent=143 // pred_check_branch
        %2212 = sbr.rel (%p2210) target = $region152
      $region151: #{graphdetr_forward.9} parent=143 // pred_region
        _
      $region152: #{graphdetr_forward.9} parent=143 // pred_fallthru
        _
    $region144: #{graphdetr_forward.9} parent=5 // pred_fallthru
      _
    %p2213 = scmp.le.s32.totalorder 2, %s72
    // Predicated region
    $region153: #{graphdetr_forward.9} parent=5 // pred_check
      %p2214 = pneg %p2213
    $region154: #{graphdetr_forward.9} parent=5 // pred_check_branch
      %2216 = sbr.rel (%p2214) target = $region156
    $region155: #{graphdetr_forward.9} parent=5 // pred_region
      %s2217 = ssub.s32 %s72, 2
      // Predicated region
      $region157: #{graphdetr_forward.9} parent=155 // pred_check
        %p2218 = pneg %p772
      $region158: #{graphdetr_forward.9} parent=155 // pred_check_branch
        %2220 = sbr.rel (%p2218) target = $region160
      $region159: #{graphdetr_forward.9} parent=155 // pred_region
        %p2221 = scmp.lt.s32.totalorder %s78, 1
        %s2222 = scalar_select %p2221, %s78, 1
        %s2223 = smul.addr %s2222, 8
        %s2224 = scalar_lea.vmem %s63, %s2223
      $region160: #{graphdetr_forward.9} parent=155 // pred_fallthru
        _
      // Predicated region
      $region161: #{graphdetr_forward.9} parent=155 // pred_check
        %p2225 = pneg %p798
      $region162: #{graphdetr_forward.9} parent=155 // pred_check_branch
        %2227 = sbr.rel (%p2225) target = $region164
      $region163: #{graphdetr_forward.9} parent=155 // pred_region
        %p2228 = scmp.lt.s32.totalorder %s78, 1
        %s2229 = scalar_select %p2228, %s78, 1
        %s2230 = smul.addr %s2229, 8
        %s2231 = scalar_lea.vmem %s65, %s2230
      $region164: #{graphdetr_forward.9} parent=155 // pred_fallthru
        _
    $region156: #{graphdetr_forward.9} parent=5 // pred_fallthru
      _
  $region6: #{graphdetr_forward.9} parent=0 // loop_footer
    %s76 = sadd.s32 1, %s72
  $region7: #{graphdetr_forward.9} parent=0 // loop_footer_branch
    %71 = sbr.rel target = $region3
  $region8: #{graphdetr_forward.9} parent=0 // loop_exit
    _

// kernel: graphdetr_forward.10
$region0: #{graphdetr_forward.10}
  #allocation0 [shape = 'u32[]', space=smem, size = 0x4, offset = 0x4, fixed_abs, tag = 'smem constant byte address 0x4 - core index']
  #allocation1 [shape = 'u32[72,128]{1,0:T(1,128)}', space=vmem, size = 0x9000, scoped, tag = 'internal scratch']
  #allocation2 [shape = 'f32[8,32]{1,0:T(8,128)}', space=vmem, size = 0x1000, scoped, tag = 'scratch operand']
  %s0 = inlined_call_operand.smem [shape: u32[33], index: -1, kind: input, shape index: {}]
  %s1 = sld [smem:[%s0]]
  %s2 = scalar_lea.smem %s0, 1
  %s3 = sld [smem:[%s2]]
  %s4 = scalar_lea.smem %s0, 2
  %s5 = sld [smem:[%s4]]
  %s6 = scalar_lea.smem %s0, 3
  %s7 = sld [smem:[%s6]]
  %s8 = scalar_lea.smem %s0, 4
  %s9 = sld [smem:[%s8]]
  %s10 = scalar_lea.smem %s0, 5
  %s11 = sld [smem:[%s10]]
  %s12 = scalar_lea.smem %s0, 6
  %s13 = sld [smem:[%s12]]
  %s14 = scalar_lea.smem %s0, 7
  %s15 = sld [smem:[%s14]]
  %s16 = scalar_lea.smem %s0, 8
  %s17 = sld [smem:[%s16]]
  %s18 = scalar_lea.smem %s0, 9
  %s19 = sld [smem:[%s18]]
  %s20 = scalar_lea.smem %s0, 10
  %s21 = sld [smem:[%s20]]
  %s22 = scalar_lea.smem %s0, 11
  %s23 = sld [smem:[%s22]]
  %s24 = scalar_lea.smem %s0, 12
  %s25 = sld [smem:[%s24]]
  %s26 = scalar_lea.smem %s0, 13
  %s27 = sld [smem:[%s26]]
  %s28 = scalar_lea.smem %s0, 14
  %s29 = sld [smem:[%s28]]
  %s30 = scalar_lea.smem %s0, 15
  %s31 = sld [smem:[%s30]]
  %s32 = scalar_lea.smem %s0, 16
  %s33 = sld [smem:[%s32]]
  %s34 = scalar_lea.smem %s0, 17
  %s35 = sld [smem:[%s34]]
  %s36 = scalar_lea.smem %s0, 18
  %s37 = sld [smem:[%s36]]
  %s38 = scalar_lea.smem %s0, 19
  %s39 = sld [smem:[%s38]]
  %s40 = scalar_lea.smem %s0, 20
  %s41 = sld [smem:[%s40]]
  %s42 = scalar_lea.smem %s0, 21
  %s43 = sld [smem:[%s42]]
  %s44 = scalar_lea.smem %s0, 22
  %s45 = sld [smem:[%s44]]
  %s46 = scalar_lea.smem %s0, 23
  %s47 = sld [smem:[%s46]]
  %s48 = scalar_lea.smem %s0, 24
  %s49 = sld [smem:[%s48]]
  %s50 = scalar_lea.smem %s0, 25
  %s51 = sld [smem:[%s50]]
  %s52 = scalar_lea.smem %s0, 26
  %s53 = sld [smem:[%s52]]
  %s54 = scalar_lea.smem %s0, 27
  %s55 = sld [smem:[%s54]]
  %s56 = scalar_lea.smem %s0, 28
  %s57 = sld [smem:[%s56]]
  %s58 = scalar_lea.smem %s0, 29
  %s59 = sld [smem:[%s58]]
  %s60 = scalar_lea.smem %s0, 30
  %s61 = sld [smem:[%s60]]
  %s62 = scalar_lea.smem %s0, 31
  %s63 = sld [smem:[%s62]]
  %s64 = scalar_lea.smem %s0, 32
  %s65 = sld [smem:[%s64]]
  %66 = xla_tuple %s63, %s65
  %s67 = sld [smem:[#allocation0]]
  $region165: #{graphdetr_forward.10} parent=0
    _
  %s69 = ssub.s32 1, %s67
  %s70 = scalar_select 0, %s69, %s67
  $region1: #{graphdetr_forward.10} parent=0
    #allocation3 [shape = 'u8[8192]{0}', space=vmem, size = 0x2000, scoped, tag = 'output window, operand 0']
    #allocation4 [shape = 's32[2]{0}', space=sflag, size = 0x8, scoped, tag = 'scoped memory for graphdetr_forward.10']
    %71 = vsyncpa [#allocation4], 0
    %s72 = scalar_lea.sflag [#allocation4], 1
    %73 = vsyncpa %s72, 0
    loop: start=0, step=1, limit=4
    $region2: #{graphdetr_forward.10} parent=1 // loop_pre_header
      _
    $region3: #{graphdetr_forward.10} parent=1 // loop_header
      %s75 = sphi 0, %s79
      %p76 = scmp.ge.s32.totalorder %s75, 4
      %s85 = sphi 0, %s87
      %s88 = sphi 0, %s85
      %s89 = sphi 0, %s88
      %s105 = sphi 0, %s89
      %s109 = sphi 0, %s109
      %s111 = sphi 0, %s109
      %s112 = sphi 0, %s111
      %s126 = sphi 0, %s112
      %s132 = sphi 0, %s134
      %s135 = sphi 0, %s132
      %s136 = sphi 0, %s135
      %s152 = sphi 0, %s136
      %s158 = sphi 0, %s160
      %s161 = sphi 0, %s158
      %s162 = sphi 0, %s161
      %s178 = sphi 0, %s162
      %s184 = sphi 0, %s186
      %s187 = sphi 0, %s184
      %s188 = sphi 0, %s187
      %s204 = sphi 0, %s188
      %s208 = sphi 0, %s208
      %s210 = sphi 0, %s208
      %s211 = sphi 0, %s210
      %s225 = sphi 0, %s211
      %s229 = sphi 0, %s229
      %s231 = sphi 0, %s229
      %s232 = sphi 0, %s231
      %s246 = sphi 0, %s232
      %s250 = sphi 0, %s250
      %s252 = sphi 0, %s250
      %s253 = sphi 0, %s252
      %s267 = sphi 0, %s253
      %s271 = sphi 0, %s271
      %s273 = sphi 0, %s271
      %s274 = sphi 0, %s273
      %s288 = sphi 0, %s274
      %s292 = sphi 0, %s292
      %s294 = sphi 0, %s292
      %s295 = sphi 0, %s294
      %s309 = sphi 0, %s295
      %s313 = sphi 0, %s313
      %s315 = sphi 0, %s313
      %s316 = sphi 0, %s315
      %s330 = sphi 0, %s316
      %s334 = sphi 0, %s334
      %s336 = sphi 0, %s334
      %s337 = sphi 0, %s336
      %s351 = sphi 0, %s337
      %s355 = sphi 0, %s355
      %s357 = sphi 0, %s355
      %s358 = sphi 0, %s357
      %s372 = sphi 0, %s358
      %s376 = sphi 0, %s376
      %s378 = sphi 0, %s376
      %s379 = sphi 0, %s378
      %s393 = sphi 0, %s379
      %s397 = sphi 0, %s397
      %s399 = sphi 0, %s397
      %s400 = sphi 0, %s399
      %s414 = sphi 0, %s400
      %s418 = sphi 0, %s418
      %s420 = sphi 0, %s418
      %s421 = sphi 0, %s420
      %s435 = sphi 0, %s421
      %s439 = sphi 0, %s439
      %s441 = sphi 0, %s439
      %s442 = sphi 0, %s441
      %s456 = sphi 0, %s442
      %s460 = sphi 0, %s460
      %s462 = sphi 0, %s460
      %s463 = sphi 0, %s462
      %s477 = sphi 0, %s463
      %s481 = sphi 0, %s481
      %s483 = sphi 0, %s481
      %s484 = sphi 0, %s483
      %s498 = sphi 0, %s484
      %s502 = sphi 0, %s502
      %s504 = sphi 0, %s502
      %s505 = sphi 0, %s504
      %s519 = sphi 0, %s505
      %s523 = sphi 0, %s523
      %s525 = sphi 0, %s523
      %s526 = sphi 0, %s525
      %s540 = sphi 0, %s526
      %s544 = sphi 0, %s544
      %s546 = sphi 0, %s544
      %s547 = sphi 0, %s546
      %s561 = sphi 0, %s547
      %s565 = sphi 0, %s565
      %s567 = sphi 0, %s565
      %s568 = sphi 0, %s567
      %s582 = sphi 0, %s568
      %s586 = sphi 0, %s586
      %s588 = sphi 0, %s586
      %s589 = sphi 0, %s588
      %s603 = sphi 0, %s589
      %s607 = sphi 0, %s607
      %s609 = sphi 0, %s607
      %s610 = sphi 0, %s609
      %s624 = sphi 0, %s610
      %s628 = sphi 0, %s628
      %s630 = sphi 0, %s628
      %s631 = sphi 0, %s630
      %s645 = sphi 0, %s631
      %s649 = sphi 0, %s649
      %s651 = sphi 0, %s649
      %s652 = sphi 0, %s651
      %s666 = sphi 0, %s652
      %s670 = sphi 0, %s670
      %s672 = sphi 0, %s670
      %s673 = sphi 0, %s672
      %s687 = sphi 0, %s673
      %s691 = sphi 0, %s691
      %s693 = sphi 0, %s691
      %s694 = sphi 0, %s693
      %s708 = sphi 0, %s694
      %s712 = sphi 0, %s712
      %s714 = sphi 0, %s712
      %s715 = sphi 0, %s714
      %s729 = sphi 0, %s715
      %s733 = sphi 0, %s733
      %s735 = sphi 0, %s733
      %s736 = sphi 0, %s735
      %s750 = sphi 0, %s736
      %s756 = sphi 0, %s758
      %s759 = sphi 0, %s756
      %s760 = sphi 0, %s759
      %s776 = sphi 0, %s760
      %s782 = sphi 0, %s784
      %s785 = sphi 0, %s782
      %s786 = sphi 0, %s785
      %s802 = sphi 0, %s786
    $region4: #{graphdetr_forward.10} parent=1 // loop_header_branch
      %78 = sbr.rel (%p76) target = $region8
    $region5: #{graphdetr_forward.10} parent=1 // loop_body
      %s80 = ssub.s32 %s75, 1
      %s81 = ssub.s32 %s75, 2
      %s82 = sadd.s32 %s75, 1
      %s83 = ssub.s32 %s75, %s82
      %p84 = scmp.eq.s32.totalorder %s83, 0
      %s86 = sadd.s32 %s85, 1
      %s87 = scalar_select %p84, %s85, %s86
      %p90 = pneg %p84
      %p91 = scmp.eq.s32.totalorder %s75, 1
      %p92 = por %p90, %p91
      %p93 = scmp.ne.s32.totalorder %s85, %s88
      %p94 = scmp.eq.s32.totalorder %s75, 0
      %p95 = por %p93, %p94
      %p96 = scmp.ne.s32.totalorder %s85, %s88
      %p97 = scmp.eq.s32.totalorder %s80, 1
      %p98 = por %p96, %p97
      %p99 = scmp.ne.s32.totalorder %s88, %s89
      %p100 = scmp.eq.s32.totalorder %s80, 0
      %p101 = por %p99, %p100
      %p102 = scmp.ne.s32.totalorder %s88, %s89
      %p103 = scmp.eq.s32.totalorder %s81, 1
      %p104 = por %p102, %p103
      %p106 = scmp.ne.s32.totalorder %s89, %s105
      %p107 = scmp.eq.s32.totalorder %s81, 0
      %p108 = por %p106, %p107
      %s110 = sadd.s32 %s109, 1
      %p113 = scmp.eq.s32.totalorder %s75, 1
      %p114 = scmp.ne.s32.totalorder %s109, %s111
      %p115 = scmp.eq.s32.totalorder %s75, 0
      %p116 = por %p114, %p115
      %p117 = scmp.ne.s32.totalorder %s109, %s111
      %p118 = scmp.eq.s32.totalorder %s80, 1
      %p119 = por %p117, %p118
      %p120 = scmp.ne.s32.totalorder %s111, %s112
      %p121 = scmp.eq.s32.totalorder %s80, 0
      %p122 = por %p120, %p121
      %p123 = scmp.ne.s32.totalorder %s111, %s112
      %p124 = scmp.eq.s32.totalorder %s81, 1
      %p125 = por %p123, %p124
      %p127 = scmp.ne.s32.totalorder %s112, %s126
      %p128 = scmp.eq.s32.totalorder %s81, 0
      %p129 = por %p127, %p128
      %s130 = ssub.s32 %s75, %s82
      %p131 = scmp.eq.s32.totalorder %s130, 0
      %s133 = sadd.s32 %s132, 1
      %s134 = scalar_select %p131, %s132, %s133
      %p137 = pneg %p131
      %p138 = scmp.eq.s32.totalorder %s75, 1
      %p139 = por %p137, %p138
      %p140 = scmp.ne.s32.totalorder %s132, %s135
      %p141 = scmp.eq.s32.totalorder %s75, 0
      %p142 = por %p140, %p141
      %p143 = scmp.ne.s32.totalorder %s132, %s135
      %p144 = scmp.eq.s32.totalorder %s80, 1
      %p145 = por %p143, %p144
      %p146 = scmp.ne.s32.totalorder %s135, %s136
      %p147 = scmp.eq.s32.totalorder %s80, 0
      %p148 = por %p146, %p147
      %p149 = scmp.ne.s32.totalorder %s135, %s136
      %p150 = scmp.eq.s32.totalorder %s81, 1
      %p151 = por %p149, %p150
      %p153 = scmp.ne.s32.totalorder %s136, %s152
      %p154 = scmp.eq.s32.totalorder %s81, 0
      %p155 = por %p153, %p154
      %s156 = ssub.s32 %s75, %s82
      %p157 = scmp.eq.s32.totalorder %s156, 0
      %s159 = sadd.s32 %s158, 1
      %s160 = scalar_select %p157, %s158, %s159
      %p163 = pneg %p157
      %p164 = scmp.eq.s32.totalorder %s75, 1
      %p165 = por %p163, %p164
      %p166 = scmp.ne.s32.totalorder %s158, %s161
      %p167 = scmp.eq.s32.totalorder %s75, 0
      %p168 = por %p166, %p167
      %p169 = scmp.ne.s32.totalorder %s158, %s161
      %p170 = scmp.eq.s32.totalorder %s80, 1
      %p171 = por %p169, %p170
      %p172 = scmp.ne.s32.totalorder %s161, %s162
      %p173 = scmp.eq.s32.totalorder %s80, 0
      %p174 = por %p172, %p173
      %p175 = scmp.ne.s32.totalorder %s161, %s162
      %p176 = scmp.eq.s32.totalorder %s81, 1
      %p177 = por %p175, %p176
      %p179 = scmp.ne.s32.totalorder %s162, %s178
      %p180 = scmp.eq.s32.totalorder %s81, 0
      %p181 = por %p179, %p180
      %s182 = ssub.s32 %s75, %s82
      %p183 = scmp.eq.s32.totalorder %s182, 0
      %s185 = sadd.s32 %s184, 1
      %s186 = scalar_select %p183, %s184, %s185
      %p189 = pneg %p183
      %p190 = scmp.eq.s32.totalorder %s75, 1
      %p191 = por %p189, %p190
      %p192 = scmp.ne.s32.totalorder %s184, %s187
      %p193 = scmp.eq.s32.totalorder %s75, 0
      %p194 = por %p192, %p193
      %p195 = scmp.ne.s32.totalorder %s184, %s187
      %p196 = scmp.eq.s32.totalorder %s80, 1
      %p197 = por %p195, %p196
      %p198 = scmp.ne.s32.totalorder %s187, %s188
      %p199 = scmp.eq.s32.totalorder %s80, 0
      %p200 = por %p198, %p199
      %p201 = scmp.ne.s32.totalorder %s187, %s188
      %p202 = scmp.eq.s32.totalorder %s81, 1
      %p203 = por %p201, %p202
      %p205 = scmp.ne.s32.totalorder %s188, %s204
      %p206 = scmp.eq.s32.totalorder %s81, 0
      %p207 = por %p205, %p206
      %s209 = sadd.s32 %s208, 1
      %p212 = scmp.eq.s32.totalorder %s75, 1
      %p213 = scmp.ne.s32.totalorder %s208, %s210
      %p214 = scmp.eq.s32.totalorder %s75, 0
      %p215 = por %p213, %p214
      %p216 = scmp.ne.s32.totalorder %s208, %s210
      %p217 = scmp.eq.s32.totalorder %s80, 1
      %p218 = por %p216, %p217
      %p219 = scmp.ne.s32.totalorder %s210, %s211
      %p220 = scmp.eq.s32.totalorder %s80, 0
      %p221 = por %p219, %p220
      %p222 = scmp.ne.s32.totalorder %s210, %s211
      %p223 = scmp.eq.s32.totalorder %s81, 1
      %p224 = por %p222, %p223
      %p226 = scmp.ne.s32.totalorder %s211, %s225
      %p227 = scmp.eq.s32.totalorder %s81, 0
      %p228 = por %p226, %p227
      %s230 = sadd.s32 %s229, 1
      %p233 = scmp.eq.s32.totalorder %s75, 1
      %p234 = scmp.ne.s32.totalorder %s229, %s231
      %p235 = scmp.eq.s32.totalorder %s75, 0
      %p236 = por %p234, %p235
      %p237 = scmp.ne.s32.totalorder %s229, %s231
      %p238 = scmp.eq.s32.totalorder %s80, 1
      %p239 = por %p237, %p238
      %p240 = scmp.ne.s32.totalorder %s231, %s232
      %p241 = scmp.eq.s32.totalorder %s80, 0
      %p242 = por %p240, %p241
      %p243 = scmp.ne.s32.totalorder %s231, %s232
      %p244 = scmp.eq.s32.totalorder %s81, 1
      %p245 = por %p243, %p244
      %p247 = scmp.ne.s32.totalorder %s232, %s246
      %p248 = scmp.eq.s32.totalorder %s81, 0
      %p249 = por %p247, %p248
      %s251 = sadd.s32 %s250, 1
      %p254 = scmp.eq.s32.totalorder %s75, 1
      %p255 = scmp.ne.s32.totalorder %s250, %s252
      %p256 = scmp.eq.s32.totalorder %s75, 0
      %p257 = por %p255, %p256
      %p258 = scmp.ne.s32.totalorder %s250, %s252
      %p259 = scmp.eq.s32.totalorder %s80, 1
      %p260 = por %p258, %p259
      %p261 = scmp.ne.s32.totalorder %s252, %s253
      %p262 = scmp.eq.s32.totalorder %s80, 0
      %p263 = por %p261, %p262
      %p264 = scmp.ne.s32.totalorder %s252, %s253
      %p265 = scmp.eq.s32.totalorder %s81, 1
      %p266 = por %p264, %p265
      %p268 = scmp.ne.s32.totalorder %s253, %s267
      %p269 = scmp.eq.s32.totalorder %s81, 0
      %p270 = por %p268, %p269
      %s272 = sadd.s32 %s271, 1
      %p275 = scmp.eq.s32.totalorder %s75, 1
      %p276 = scmp.ne.s32.totalorder %s271, %s273
      %p277 = scmp.eq.s32.totalorder %s75, 0
      %p278 = por %p276, %p277
      %p279 = scmp.ne.s32.totalorder %s271, %s273
      %p280 = scmp.eq.s32.totalorder %s80, 1
      %p281 = por %p279, %p280
      %p282 = scmp.ne.s32.totalorder %s273, %s274
      %p283 = scmp.eq.s32.totalorder %s80, 0
      %p284 = por %p282, %p283
      %p285 = scmp.ne.s32.totalorder %s273, %s274
      %p286 = scmp.eq.s32.totalorder %s81, 1
      %p287 = por %p285, %p286
      %p289 = scmp.ne.s32.totalorder %s274, %s288
      %p290 = scmp.eq.s32.totalorder %s81, 0
      %p291 = por %p289, %p290
      %s293 = sadd.s32 %s292, 1
      %p296 = scmp.eq.s32.totalorder %s75, 1
      %p297 = scmp.ne.s32.totalorder %s292, %s294
      %p298 = scmp.eq.s32.totalorder %s75, 0
      %p299 = por %p297, %p298
      %p300 = scmp.ne.s32.totalorder %s292, %s294
      %p301 = scmp.eq.s32.totalorder %s80, 1
      %p302 = por %p300, %p301
      %p303 = scmp.ne.s32.totalorder %s294, %s295
      %p304 = scmp.eq.s32.totalorder %s80, 0
      %p305 = por %p303, %p304
      %p306 = scmp.ne.s32.totalorder %s294, %s295
      %p307 = scmp.eq.s32.totalorder %s81, 1
      %p308 = por %p306, %p307
      %p310 = scmp.ne.s32.totalorder %s295, %s309
      %p311 = scmp.eq.s32.totalorder %s81, 0
      %p312 = por %p310, %p311
      %s314 = sadd.s32 %s313, 1
      %p317 = scmp.eq.s32.totalorder %s75, 1
      %p318 = scmp.ne.s32.totalorder %s313, %s315
      %p319 = scmp.eq.s32.totalorder %s75, 0
      %p320 = por %p318, %p319
      %p321 = scmp.ne.s32.totalorder %s313, %s315
      %p322 = scmp.eq.s32.totalorder %s80, 1
      %p323 = por %p321, %p322
      %p324 = scmp.ne.s32.totalorder %s315, %s316
      %p325 = scmp.eq.s32.totalorder %s80, 0
      %p326 = por %p324, %p325
      %p327 = scmp.ne.s32.totalorder %s315, %s316
      %p328 = scmp.eq.s32.totalorder %s81, 1
      %p329 = por %p327, %p328
      %p331 = scmp.ne.s32.totalorder %s316, %s330
      %p332 = scmp.eq.s32.totalorder %s81, 0
      %p333 = por %p331, %p332
      %s335 = sadd.s32 %s334, 1
      %p338 = scmp.eq.s32.totalorder %s75, 1
      %p339 = scmp.ne.s32.totalorder %s334, %s336
      %p340 = scmp.eq.s32.totalorder %s75, 0
      %p341 = por %p339, %p340
      %p342 = scmp.ne.s32.totalorder %s334, %s336
      %p343 = scmp.eq.s32.totalorder %s80, 1
      %p344 = por %p342, %p343
      %p345 = scmp.ne.s32.totalorder %s336, %s337
      %p346 = scmp.eq.s32.totalorder %s80, 0
      %p347 = por %p345, %p346
      %p348 = scmp.ne.s32.totalorder %s336, %s337
      %p349 = scmp.eq.s32.totalorder %s81, 1
      %p350 = por %p348, %p349
      %p352 = scmp.ne.s32.totalorder %s337, %s351
      %p353 = scmp.eq.s32.totalorder %s81, 0
      %p354 = por %p352, %p353
      %s356 = sadd.s32 %s355, 1
      %p359 = scmp.eq.s32.totalorder %s75, 1
      %p360 = scmp.ne.s32.totalorder %s355, %s357
      %p361 = scmp.eq.s32.totalorder %s75, 0
      %p362 = por %p360, %p361
      %p363 = scmp.ne.s32.totalorder %s355, %s357
      %p364 = scmp.eq.s32.totalorder %s80, 1
      %p365 = por %p363, %p364
      %p366 = scmp.ne.s32.totalorder %s357, %s358
      %p367 = scmp.eq.s32.totalorder %s80, 0
      %p368 = por %p366, %p367
      %p369 = scmp.ne.s32.totalorder %s357, %s358
      %p370 = scmp.eq.s32.totalorder %s81, 1
      %p371 = por %p369, %p370
      %p373 = scmp.ne.s32.totalorder %s358, %s372
      %p374 = scmp.eq.s32.totalorder %s81, 0
      %p375 = por %p373, %p374
      %s377 = sadd.s32 %s376, 1
      %p380 = scmp.eq.s32.totalorder %s75, 1
      %p381 = scmp.ne.s32.totalorder %s376, %s378
      %p382 = scmp.eq.s32.totalorder %s75, 0
      %p383 = por %p381, %p382
      %p384 = scmp.ne.s32.totalorder %s376, %s378
      %p385 = scmp.eq.s32.totalorder %s80, 1
      %p386 = por %p384, %p385
      %p387 = scmp.ne.s32.totalorder %s378, %s379
      %p388 = scmp.eq.s32.totalorder %s80, 0
      %p389 = por %p387, %p388
      %p390 = scmp.ne.s32.totalorder %s378, %s379
      %p391 = scmp.eq.s32.totalorder %s81, 1
      %p392 = por %p390, %p391
      %p394 = scmp.ne.s32.totalorder %s379, %s393
      %p395 = scmp.eq.s32.totalorder %s81, 0
      %p396 = por %p394, %p395
      %s398 = sadd.s32 %s397, 1
      %p401 = scmp.eq.s32.totalorder %s75, 1
      %p402 = scmp.ne.s32.totalorder %s397, %s399
      %p403 = scmp.eq.s32.totalorder %s75, 0
      %p404 = por %p402, %p403
      %p405 = scmp.ne.s32.totalorder %s397, %s399
      %p406 = scmp.eq.s32.totalorder %s80, 1
      %p407 = por %p405, %p406
      %p408 = scmp.ne.s32.totalorder %s399, %s400
      %p409 = scmp.eq.s32.totalorder %s80, 0
      %p410 = por %p408, %p409
      %p411 = scmp.ne.s32.totalorder %s399, %s400
      %p412 = scmp.eq.s32.totalorder %s81, 1
      %p413 = por %p411, %p412
      %p415 = scmp.ne.s32.totalorder %s400, %s414
      %p416 = scmp.eq.s32.totalorder %s81, 0
      %p417 = por %p415, %p416
      %s419 = sadd.s32 %s418, 1
      %p422 = scmp.eq.s32.totalorder %s75, 1
      %p423 = scmp.ne.s32.totalorder %s418, %s420
      %p424 = scmp.eq.s32.totalorder %s75, 0
      %p425 = por %p423, %p424
      %p426 = scmp.ne.s32.totalorder %s418, %s420
      %p427 = scmp.eq.s32.totalorder %s80, 1
      %p428 = por %p426, %p427
      %p429 = scmp.ne.s32.totalorder %s420, %s421
      %p430 = scmp.eq.s32.totalorder %s80, 0
      %p431 = por %p429, %p430
      %p432 = scmp.ne.s32.totalorder %s420, %s421
      %p433 = scmp.eq.s32.totalorder %s81, 1
      %p434 = por %p432, %p433
      %p436 = scmp.ne.s32.totalorder %s421, %s435
      %p437 = scmp.eq.s32.totalorder %s81, 0
      %p438 = por %p436, %p437
      %s440 = sadd.s32 %s439, 1
      %p443 = scmp.eq.s32.totalorder %s75, 1
      %p444 = scmp.ne.s32.totalorder %s439, %s441
      %p445 = scmp.eq.s32.totalorder %s75, 0
      %p446 = por %p444, %p445
      %p447 = scmp.ne.s32.totalorder %s439, %s441
      %p448 = scmp.eq.s32.totalorder %s80, 1
      %p449 = por %p447, %p448
      %p450 = scmp.ne.s32.totalorder %s441, %s442
      %p451 = scmp.eq.s32.totalorder %s80, 0
      %p452 = por %p450, %p451
      %p453 = scmp.ne.s32.totalorder %s441, %s442
      %p454 = scmp.eq.s32.totalorder %s81, 1
      %p455 = por %p453, %p454
      %p457 = scmp.ne.s32.totalorder %s442, %s456
      %p458 = scmp.eq.s32.totalorder %s81, 0
      %p459 = por %p457, %p458
      %s461 = sadd.s32 %s460, 1
      %p464 = scmp.eq.s32.totalorder %s75, 1
      %p465 = scmp.ne.s32.totalorder %s460, %s462
      %p466 = scmp.eq.s32.totalorder %s75, 0
      %p467 = por %p465, %p466
      %p468 = scmp.ne.s32.totalorder %s460, %s462
      %p469 = scmp.eq.s32.totalorder %s80, 1
      %p470 = por %p468, %p469
      %p471 = scmp.ne.s32.totalorder %s462, %s463
      %p472 = scmp.eq.s32.totalorder %s80, 0
      %p473 = por %p471, %p472
      %p474 = scmp.ne.s32.totalorder %s462, %s463
      %p475 = scmp.eq.s32.totalorder %s81, 1
      %p476 = por %p474, %p475
      %p478 = scmp.ne.s32.totalorder %s463, %s477
      %p479 = scmp.eq.s32.totalorder %s81, 0
      %p480 = por %p478, %p479
      %s482 = sadd.s32 %s481, 1
      %p485 = scmp.eq.s32.totalorder %s75, 1
      %p486 = scmp.ne.s32.totalorder %s481, %s483
      %p487 = scmp.eq.s32.totalorder %s75, 0
      %p488 = por %p486, %p487
      %p489 = scmp.ne.s32.totalorder %s481, %s483
      %p490 = scmp.eq.s32.totalorder %s80, 1
      %p491 = por %p489, %p490
      %p492 = scmp.ne.s32.totalorder %s483, %s484
      %p493 = scmp.eq.s32.totalorder %s80, 0
      %p494 = por %p492, %p493
      %p495 = scmp.ne.s32.totalorder %s483, %s484
      %p496 = scmp.eq.s32.totalorder %s81, 1
      %p497 = por %p495, %p496
      %p499 = scmp.ne.s32.totalorder %s484, %s498
      %p500 = scmp.eq.s32.totalorder %s81, 0
      %p501 = por %p499, %p500
      %s503 = sadd.s32 %s502, 1
      %p506 = scmp.eq.s32.totalorder %s75, 1
      %p507 = scmp.ne.s32.totalorder %s502, %s504
      %p508 = scmp.eq.s32.totalorder %s75, 0
      %p509 = por %p507, %p508
      %p510 = scmp.ne.s32.totalorder %s502, %s504
      %p511 = scmp.eq.s32.totalorder %s80, 1
      %p512 = por %p510, %p511
      %p513 = scmp.ne.s32.totalorder %s504, %s505
      %p514 = scmp.eq.s32.totalorder %s80, 0
      %p515 = por %p513, %p514
      %p516 = scmp.ne.s32.totalorder %s504, %s505
      %p517 = scmp.eq.s32.totalorder %s81, 1
      %p518 = por %p516, %p517
      %p520 = scmp.ne.s32.totalorder %s505, %s519
      %p521 = scmp.eq.s32.totalorder %s81, 0
      %p522 = por %p520, %p521
      %s524 = sadd.s32 %s523, 1
      %p527 = scmp.eq.s32.totalorder %s75, 1
      %p528 = scmp.ne.s32.totalorder %s523, %s525
      %p529 = scmp.eq.s32.totalorder %s75, 0
      %p530 = por %p528, %p529
      %p531 = scmp.ne.s32.totalorder %s523, %s525
      %p532 = scmp.eq.s32.totalorder %s80, 1
      %p533 = por %p531, %p532
      %p534 = scmp.ne.s32.totalorder %s525, %s526
      %p535 = scmp.eq.s32.totalorder %s80, 0
      %p536 = por %p534, %p535
      %p537 = scmp.ne.s32.totalorder %s525, %s526
      %p538 = scmp.eq.s32.totalorder %s81, 1
      %p539 = por %p537, %p538
      %p541 = scmp.ne.s32.totalorder %s526, %s540
      %p542 = scmp.eq.s32.totalorder %s81, 0
      %p543 = por %p541, %p542
      %s545 = sadd.s32 %s544, 1
      %p548 = scmp.eq.s32.totalorder %s75, 1
      %p549 = scmp.ne.s32.totalorder %s544, %s546
      %p550 = scmp.eq.s32.totalorder %s75, 0
      %p551 = por %p549, %p550
      %p552 = scmp.ne.s32.totalorder %s544, %s546
      %p553 = scmp.eq.s32.totalorder %s80, 1
      %p554 = por %p552, %p553
      %p555 = scmp.ne.s32.totalorder %s546, %s547
      %p556 = scmp.eq.s32.totalorder %s80, 0
      %p557 = por %p555, %p556
      %p558 = scmp.ne.s32.totalorder %s546, %s547
      %p559 = scmp.eq.s32.totalorder %s81, 1
      %p560 = por %p558, %p559
      %p562 = scmp.ne.s32.totalorder %s547, %s561
      %p563 = scmp.eq.s32.totalorder %s81, 0
      %p564 = por %p562, %p563
      %s566 = sadd.s32 %s565, 1
      %p569 = scmp.eq.s32.totalorder %s75, 1
      %p570 = scmp.ne.s32.totalorder %s565, %s567
      %p571 = scmp.eq.s32.totalorder %s75, 0
      %p572 = por %p570, %p571
      %p573 = scmp.ne.s32.totalorder %s565, %s567
      %p574 = scmp.eq.s32.totalorder %s80, 1
      %p575 = por %p573, %p574
      %p576 = scmp.ne.s32.totalorder %s567, %s568
      %p577 = scmp.eq.s32.totalorder %s80, 0
      %p578 = por %p576, %p577
      %p579 = scmp.ne.s32.totalorder %s567, %s568
      %p580 = scmp.eq.s32.totalorder %s81, 1
      %p581 = por %p579, %p580
      %p583 = scmp.ne.s32.totalorder %s568, %s582
      %p584 = scmp.eq.s32.totalorder %s81, 0
      %p585 = por %p583, %p584
      %s587 = sadd.s32 %s586, 1
      %p590 = scmp.eq.s32.totalorder %s75, 1
      %p591 = scmp.ne.s32.totalorder %s586, %s588
      %p592 = scmp.eq.s32.totalorder %s75, 0
      %p593 = por %p591, %p592
      %p594 = scmp.ne.s32.totalorder %s586, %s588
      %p595 = scmp.eq.s32.totalorder %s80, 1
      %p596 = por %p594, %p595
      %p597 = scmp.ne.s32.totalorder %s588, %s589
      %p598 = scmp.eq.s32.totalorder %s80, 0
      %p599 = por %p597, %p598
      %p600 = scmp.ne.s32.totalorder %s588, %s589
      %p601 = scmp.eq.s32.totalorder %s81, 1
      %p602 = por %p600, %p601
      %p604 = scmp.ne.s32.totalorder %s589, %s603
      %p605 = scmp.eq.s32.totalorder %s81, 0
      %p606 = por %p604, %p605
      %s608 = sadd.s32 %s607, 1
      %p611 = scmp.eq.s32.totalorder %s75, 1
      %p612 = scmp.ne.s32.totalorder %s607, %s609
      %p613 = scmp.eq.s32.totalorder %s75, 0
      %p614 = por %p612, %p613
      %p615 = scmp.ne.s32.totalorder %s607, %s609
      %p616 = scmp.eq.s32.totalorder %s80, 1
      %p617 = por %p615, %p616
      %p618 = scmp.ne.s32.totalorder %s609, %s610
      %p619 = scmp.eq.s32.totalorder %s80, 0
      %p620 = por %p618, %p619
      %p621 = scmp.ne.s32.totalorder %s609, %s610
      %p622 = scmp.eq.s32.totalorder %s81, 1
      %p623 = por %p621, %p622
      %p625 = scmp.ne.s32.totalorder %s610, %s624
      %p626 = scmp.eq.s32.totalorder %s81, 0
      %p627 = por %p625, %p626
      %s629 = sadd.s32 %s628, 1
      %p632 = scmp.eq.s32.totalorder %s75, 1
      %p633 = scmp.ne.s32.totalorder %s628, %s630
      %p634 = scmp.eq.s32.totalorder %s75, 0
      %p635 = por %p633, %p634
      %p636 = scmp.ne.s32.totalorder %s628, %s630
      %p637 = scmp.eq.s32.totalorder %s80, 1
      %p638 = por %p636, %p637
      %p639 = scmp.ne.s32.totalorder %s630, %s631
      %p640 = scmp.eq.s32.totalorder %s80, 0
      %p641 = por %p639, %p640
      %p642 = scmp.ne.s32.totalorder %s630, %s631
      %p643 = scmp.eq.s32.totalorder %s81, 1
      %p644 = por %p642, %p643
      %p646 = scmp.ne.s32.totalorder %s631, %s645
      %p647 = scmp.eq.s32.totalorder %s81, 0
      %p648 = por %p646, %p647
      %s650 = sadd.s32 %s649, 1
      %p653 = scmp.eq.s32.totalorder %s75, 1
      %p654 = scmp.ne.s32.totalorder %s649, %s651
      %p655 = scmp.eq.s32.totalorder %s75, 0
      %p656 = por %p654, %p655
      %p657 = scmp.ne.s32.totalorder %s649, %s651
      %p658 = scmp.eq.s32.totalorder %s80, 1
      %p659 = por %p657, %p658
      %p660 = scmp.ne.s32.totalorder %s651, %s652
      %p661 = scmp.eq.s32.totalorder %s80, 0
      %p662 = por %p660, %p661
      %p663 = scmp.ne.s32.totalorder %s651, %s652
      %p664 = scmp.eq.s32.totalorder %s81, 1
      %p665 = por %p663, %p664
      %p667 = scmp.ne.s32.totalorder %s652, %s666
      %p668 = scmp.eq.s32.totalorder %s81, 0
      %p669 = por %p667, %p668
      %s671 = sadd.s32 %s670, 1
      %p674 = scmp.eq.s32.totalorder %s75, 1
      %p675 = scmp.ne.s32.totalorder %s670, %s672
      %p676 = scmp.eq.s32.totalorder %s75, 0
      %p677 = por %p675, %p676
      %p678 = scmp.ne.s32.totalorder %s670, %s672
      %p679 = scmp.eq.s32.totalorder %s80, 1
      %p680 = por %p678, %p679
      %p681 = scmp.ne.s32.totalorder %s672, %s673
      %p682 = scmp.eq.s32.totalorder %s80, 0
      %p683 = por %p681, %p682
      %p684 = scmp.ne.s32.totalorder %s672, %s673
      %p685 = scmp.eq.s32.totalorder %s81, 1
      %p686 = por %p684, %p685
      %p688 = scmp.ne.s32.totalorder %s673, %s687
      %p689 = scmp.eq.s32.totalorder %s81, 0
      %p690 = por %p688, %p689
      %s692 = sadd.s32 %s691, 1
      %p695 = scmp.eq.s32.totalorder %s75, 1
      %p696 = scmp.ne.s32.totalorder %s691, %s693
      %p697 = scmp.eq.s32.totalorder %s75, 0
      %p698 = por %p696, %p697
      %p699 = scmp.ne.s32.totalorder %s691, %s693
      %p700 = scmp.eq.s32.totalorder %s80, 1
      %p701 = por %p699, %p700
      %p702 = scmp.ne.s32.totalorder %s693, %s694
      %p703 = scmp.eq.s32.totalorder %s80, 0
      %p704 = por %p702, %p703
      %p705 = scmp.ne.s32.totalorder %s693, %s694
      %p706 = scmp.eq.s32.totalorder %s81, 1
      %p707 = por %p705, %p706
      %p709 = scmp.ne.s32.totalorder %s694, %s708
      %p710 = scmp.eq.s32.totalorder %s81, 0
      %p711 = por %p709, %p710
      %s713 = sadd.s32 %s712, 1
      %p716 = scmp.eq.s32.totalorder %s75, 1
      %p717 = scmp.ne.s32.totalorder %s712, %s714
      %p718 = scmp.eq.s32.totalorder %s75, 0
      %p719 = por %p717, %p718
      %p720 = scmp.ne.s32.totalorder %s712, %s714
      %p721 = scmp.eq.s32.totalorder %s80, 1
      %p722 = por %p720, %p721
      %p723 = scmp.ne.s32.totalorder %s714, %s715
      %p724 = scmp.eq.s32.totalorder %s80, 0
      %p725 = por %p723, %p724
      %p726 = scmp.ne.s32.totalorder %s714, %s715
      %p727 = scmp.eq.s32.totalorder %s81, 1
      %p728 = por %p726, %p727
      %p730 = scmp.ne.s32.totalorder %s715, %s729
      %p731 = scmp.eq.s32.totalorder %s81, 0
      %p732 = por %p730, %p731
      %s734 = sadd.s32 %s733, 1
      %p737 = scmp.eq.s32.totalorder %s75, 1
      %p738 = scmp.ne.s32.totalorder %s733, %s735
      %p739 = scmp.eq.s32.totalorder %s75, 0
      %p740 = por %p738, %p739
      %p741 = scmp.ne.s32.totalorder %s733, %s735
      %p742 = scmp.eq.s32.totalorder %s80, 1
      %p743 = por %p741, %p742
      %p744 = scmp.ne.s32.totalorder %s735, %s736
      %p745 = scmp.eq.s32.totalorder %s80, 0
      %p746 = por %p744, %p745
      %p747 = scmp.ne.s32.totalorder %s735, %s736
      %p748 = scmp.eq.s32.totalorder %s81, 1
      %p749 = por %p747, %p748
      %p751 = scmp.ne.s32.totalorder %s736, %s750
      %p752 = scmp.eq.s32.totalorder %s81, 0
      %p753 = por %p751, %p752
      %s754 = ssub.s32 %s75, %s82
      %p755 = scmp.eq.s32.totalorder %s754, 0
      %s757 = sadd.s32 %s756, 1
      %s758 = scalar_select %p755, %s756, %s757
      %p761 = pneg %p755
      %p762 = scmp.eq.s32.totalorder %s75, 1
      %p763 = por %p761, %p762
      %p764 = scmp.ne.s32.totalorder %s756, %s759
      %p765 = scmp.eq.s32.totalorder %s75, 0
      %p766 = por %p764, %p765
      %p767 = scmp.ne.s32.totalorder %s756, %s759
      %p768 = scmp.eq.s32.totalorder %s80, 1
      %p769 = por %p767, %p768
      %p770 = scmp.ne.s32.totalorder %s759, %s760
      %p771 = scmp.eq.s32.totalorder %s80, 0
      %p772 = por %p770, %p771
      %p773 = scmp.ne.s32.totalorder %s759, %s760
      %p774 = scmp.eq.s32.totalorder %s81, 1
      %p775 = por %p773, %p774
      %p777 = scmp.ne.s32.totalorder %s760, %s776
      %p778 = scmp.eq.s32.totalorder %s81, 0
      %p779 = por %p777, %p778
      %s780 = ssub.s32 %s75, %s82
      %p781 = scmp.eq.s32.totalorder %s780, 0
      %s783 = sadd.s32 %s782, 1
      %s784 = scalar_select %p781, %s782, %s783
      %p787 = pneg %p781
      %p788 = scmp.eq.s32.totalorder %s75, 1
      %p789 = por %p787, %p788
      %p790 = scmp.ne.s32.totalorder %s782, %s785
      %p791 = scmp.eq.s32.totalorder %s75, 0
      %p792 = por %p790, %p791
      %p793 = scmp.ne.s32.totalorder %s782, %s785
      %p794 = scmp.eq.s32.totalorder %s80, 1
      %p795 = por %p793, %p794
      %p796 = scmp.ne.s32.totalorder %s785, %s786
      %p797 = scmp.eq.s32.totalorder %s80, 0
      %p798 = por %p796, %p797
      %p799 = scmp.ne.s32.totalorder %s785, %s786
      %p800 = scmp.eq.s32.totalorder %s81, 1
      %p801 = por %p799, %p800
      %p803 = scmp.ne.s32.totalorder %s786, %s802
      %p804 = scmp.eq.s32.totalorder %s81, 0
      %p805 = por %p803, %p804
      %p806 = scmp.le.s32.totalorder 1, %s75
      %p807 = scmp.lt.s32.totalorder %s75, 3
      %p808 = pnand %p806, %p807
      %p809 = pneg %p808
      // Predicated region
      $region9: #{graphdetr_forward.10} parent=5 // pred_check
        _
      $region10: #{graphdetr_forward.10} parent=5 // pred_check_branch
        %811 = sbr.rel (%p808) target = $region12
      $region11: #{graphdetr_forward.10} parent=5 // pred_region
        %s812 = ssub.s32 %s75, 1
        // Predicated region
        $region13: #{graphdetr_forward.10} parent=11 // pred_check
          %p813 = pneg %p122
        $region14: #{graphdetr_forward.10} parent=11 // pred_check_branch
          %815 = sbr.rel (%p813) target = $region16
        $region15: #{graphdetr_forward.10} parent=11 // pred_region
          _
        $region16: #{graphdetr_forward.10} parent=11 // pred_fallthru
          _
        // Predicated region
        $region17: #{graphdetr_forward.10} parent=11 // pred_check
          %p816 = pneg %p221
        $region18: #{graphdetr_forward.10} parent=11 // pred_check_branch
          %818 = sbr.rel (%p816) target = $region20
        $region19: #{graphdetr_forward.10} parent=11 // pred_region
          _
        $region20: #{graphdetr_forward.10} parent=11 // pred_fallthru
          _
        // Predicated region
        $region21: #{graphdetr_forward.10} parent=11 // pred_check
          %p819 = pneg %p242
        $region22: #{graphdetr_forward.10} parent=11 // pred_check_branch
          %821 = sbr.rel (%p819) target = $region24
        $region23: #{graphdetr_forward.10} parent=11 // pred_region
          _
        $region24: #{graphdetr_forward.10} parent=11 // pred_fallthru
          _
        // Predicated region
        $region25: #{graphdetr_forward.10} parent=11 // pred_check
          %p822 = pneg %p263
        $region26: #{graphdetr_forward.10} parent=11 // pred_check_branch
          %824 = sbr.rel (%p822) target = $region28
        $region27: #{graphdetr_forward.10} parent=11 // pred_region
          _
        $region28: #{graphdetr_forward.10} parent=11 // pred_fallthru
          _
        // Predicated region
        $region29: #{graphdetr_forward.10} parent=11 // pred_check
          %p825 = pneg %p284
        $region30: #{graphdetr_forward.10} parent=11 // pred_check_branch
          %827 = sbr.rel (%p825) target = $region32
        $region31: #{graphdetr_forward.10} parent=11 // pred_region
          _
        $region32: #{graphdetr_forward.10} parent=11 // pred_fallthru
          _
        // Predicated region
        $region33: #{graphdetr_forward.10} parent=11 // pred_check
          %p828 = pneg %p305
        $region34: #{graphdetr_forward.10} parent=11 // pred_check_branch
          %830 = sbr.rel (%p828) target = $region36
        $region35: #{graphdetr_forward.10} parent=11 // pred_region
          _
        $region36: #{graphdetr_forward.10} parent=11 // pred_fallthru
          _
        // Predicated region
        $region37: #{graphdetr_forward.10} parent=11 // pred_check
          %p831 = pneg %p326
        $region38: #{graphdetr_forward.10} parent=11 // pred_check_branch
          %833 = sbr.rel (%p831) target = $region40
        $region39: #{graphdetr_forward.10} parent=11 // pred_region
          _
        $region40: #{graphdetr_forward.10} parent=11 // pred_fallthru
          _
        // Predicated region
        $region41: #{graphdetr_forward.10} parent=11 // pred_check
          %p834 = pneg %p347
        $region42: #{graphdetr_forward.10} parent=11 // pred_check_branch
          %836 = sbr.rel (%p834) target = $region44
        $region43: #{graphdetr_forward.10} parent=11 // pred_region
          _
        $region44: #{graphdetr_forward.10} parent=11 // pred_fallthru
          _
        // Predicated region
        $region45: #{graphdetr_forward.10} parent=11 // pred_check
          %p837 = pneg %p368
        $region46: #{graphdetr_forward.10} parent=11 // pred_check_branch
          %839 = sbr.rel (%p837) target = $region48
        $region47: #{graphdetr_forward.10} parent=11 // pred_region
          _
        $region48: #{graphdetr_forward.10} parent=11 // pred_fallthru
          _
        // Predicated region
        $region49: #{graphdetr_forward.10} parent=11 // pred_check
          %p840 = pneg %p389
        $region50: #{graphdetr_forward.10} parent=11 // pred_check_branch
          %842 = sbr.rel (%p840) target = $region52
        $region51: #{graphdetr_forward.10} parent=11 // pred_region
          _
        $region52: #{graphdetr_forward.10} parent=11 // pred_fallthru
          _
        // Predicated region
        $region53: #{graphdetr_forward.10} parent=11 // pred_check
          %p843 = pneg %p410
        $region54: #{graphdetr_forward.10} parent=11 // pred_check_branch
          %845 = sbr.rel (%p843) target = $region56
        $region55: #{graphdetr_forward.10} parent=11 // pred_region
          _
        $region56: #{graphdetr_forward.10} parent=11 // pred_fallthru
          _
        // Predicated region
        $region57: #{graphdetr_forward.10} parent=11 // pred_check
          %p846 = pneg %p431
        $region58: #{graphdetr_forward.10} parent=11 // pred_check_branch
          %848 = sbr.rel (%p846) target = $region60
        $region59: #{graphdetr_forward.10} parent=11 // pred_region
          _
        $region60: #{graphdetr_forward.10} parent=11 // pred_fallthru
          _
        // Predicated region
        $region61: #{graphdetr_forward.10} parent=11 // pred_check
          %p849 = pneg %p452
        $region62: #{graphdetr_forward.10} parent=11 // pred_check_branch
          %851 = sbr.rel (%p849) target = $region64
        $region63: #{graphdetr_forward.10} parent=11 // pred_region
          _
        $region64: #{graphdetr_forward.10} parent=11 // pred_fallthru
          _
        // Predicated region
        $region65: #{graphdetr_forward.10} parent=11 // pred_check
          %p852 = pneg %p473
        $region66: #{graphdetr_forward.10} parent=11 // pred_check_branch
          %854 = sbr.rel (%p852) target = $region68
        $region67: #{graphdetr_forward.10} parent=11 // pred_region
          _
        $region68: #{graphdetr_forward.10} parent=11 // pred_fallthru
          _
        // Predicated region
        $region69: #{graphdetr_forward.10} parent=11 // pred_check
          %p855 = pneg %p494
        $region70: #{graphdetr_forward.10} parent=11 // pred_check_branch
          %857 = sbr.rel (%p855) target = $region72
        $region71: #{graphdetr_forward.10} parent=11 // pred_region
          _
        $region72: #{graphdetr_forward.10} parent=11 // pred_fallthru
          _
        // Predicated region
        $region73: #{graphdetr_forward.10} parent=11 // pred_check
          %p858 = pneg %p515
        $region74: #{graphdetr_forward.10} parent=11 // pred_check_branch
          %860 = sbr.rel (%p858) target = $region76
        $region75: #{graphdetr_forward.10} parent=11 // pred_region
          _
        $region76: #{graphdetr_forward.10} parent=11 // pred_fallthru
          _
        // Predicated region
        $region77: #{graphdetr_forward.10} parent=11 // pred_check
          %p861 = pneg %p536
        $region78: #{graphdetr_forward.10} parent=11 // pred_check_branch
          %863 = sbr.rel (%p861) target = $region80
        $region79: #{graphdetr_forward.10} parent=11 // pred_region
          _
        $region80: #{graphdetr_forward.10} parent=11 // pred_fallthru
          _
        // Predicated region
        $region81: #{graphdetr_forward.10} parent=11 // pred_check
          %p864 = pneg %p557
        $region82: #{graphdetr_forward.10} parent=11 // pred_check_branch
          %866 = sbr.rel (%p864) target = $region84
        $region83: #{graphdetr_forward.10} parent=11 // pred_region
          _
        $region84: #{graphdetr_forward.10} parent=11 // pred_fallthru
          _
        // Predicated region
        $region85: #{graphdetr_forward.10} parent=11 // pred_check
          %p867 = pneg %p578
        $region86: #{graphdetr_forward.10} parent=11 // pred_check_branch
          %869 = sbr.rel (%p867) target = $region88
        $region87: #{graphdetr_forward.10} parent=11 // pred_region
          _
        $region88: #{graphdetr_forward.10} parent=11 // pred_fallthru
          _
        // Predicated region
        $region89: #{graphdetr_forward.10} parent=11 // pred_check
          %p870 = pneg %p599
        $region90: #{graphdetr_forward.10} parent=11 // pred_check_branch
          %872 = sbr.rel (%p870) target = $region92
        $region91: #{graphdetr_forward.10} parent=11 // pred_region
          _
        $region92: #{graphdetr_forward.10} parent=11 // pred_fallthru
          _
        // Predicated region
        $region93: #{graphdetr_forward.10} parent=11 // pred_check
          %p873 = pneg %p620
        $region94: #{graphdetr_forward.10} parent=11 // pred_check_branch
          %875 = sbr.rel (%p873) target = $region96
        $region95: #{graphdetr_forward.10} parent=11 // pred_region
          _
        $region96: #{graphdetr_forward.10} parent=11 // pred_fallthru
          _
        // Predicated region
        $region97: #{graphdetr_forward.10} parent=11 // pred_check
          %p876 = pneg %p641
        $region98: #{graphdetr_forward.10} parent=11 // pred_check_branch
          %878 = sbr.rel (%p876) target = $region100
        $region99: #{graphdetr_forward.10} parent=11 // pred_region
          _
        $region100: #{graphdetr_forward.10} parent=11 // pred_fallthru
          _
        // Predicated region
        $region101: #{graphdetr_forward.10} parent=11 // pred_check
          %p879 = pneg %p662
        $region102: #{graphdetr_forward.10} parent=11 // pred_check_branch
          %881 = sbr.rel (%p879) target = $region104
        $region103: #{graphdetr_forward.10} parent=11 // pred_region
          _
        $region104: #{graphdetr_forward.10} parent=11 // pred_fallthru
          _
        // Predicated region
        $region105: #{graphdetr_forward.10} parent=11 // pred_check
          %p882 = pneg %p683
        $region106: #{graphdetr_forward.10} parent=11 // pred_check_branch
          %884 = sbr.rel (%p882) target = $region108
        $region107: #{graphdetr_forward.10} parent=11 // pred_region
          _
        $region108: #{graphdetr_forward.10} parent=11 // pred_fallthru
          _
        // Predicated region
        $region109: #{graphdetr_forward.10} parent=11 // pred_check
          %p885 = pneg %p704
        $region110: #{graphdetr_forward.10} parent=11 // pred_check_branch
          %887 = sbr.rel (%p885) target = $region112
        $region111: #{graphdetr_forward.10} parent=11 // pred_region
          _
        $region112: #{graphdetr_forward.10} parent=11 // pred_fallthru
          _
        // Predicated region
        $region113: #{graphdetr_forward.10} parent=11 // pred_check
          %p888 = pneg %p725
        $region114: #{graphdetr_forward.10} parent=11 // pred_check_branch
          %890 = sbr.rel (%p888) target = $region116
        $region115: #{graphdetr_forward.10} parent=11 // pred_region
          _
        $region116: #{graphdetr_forward.10} parent=11 // pred_fallthru
          _
        // Predicated region
        $region117: #{graphdetr_forward.10} parent=11 // pred_check
          %p891 = pneg %p746
        $region118: #{graphdetr_forward.10} parent=11 // pred_check_branch
          %893 = sbr.rel (%p891) target = $region120
        $region119: #{graphdetr_forward.10} parent=11 // pred_region
          _
        $region120: #{graphdetr_forward.10} parent=11 // pred_fallthru
          _
      $region12: #{graphdetr_forward.10} parent=5 // pred_fallthru
        _
      %p894 = scmp.lt.s32.totalorder %s75, 2
      // Predicated region
      $region121: #{graphdetr_forward.10} parent=5 // pred_check
        %p895 = pneg %p894
      $region122: #{graphdetr_forward.10} parent=5 // pred_check_branch
        %897 = sbr.rel (%p895) target = $region124
      $region123: #{graphdetr_forward.10} parent=5 // pred_region
        // Predicated region
        $region125: #{graphdetr_forward.10} parent=123 // pred_check
          %p898 = pneg %p95
        $region126: #{graphdetr_forward.10} parent=123 // pred_check_branch
          %900 = sbr.rel (%p898) target = $region128
        $region127: #{graphdetr_forward.10} parent=123 // pred_region
          %p901 = scmp.lt.s32.totalorder %s75, 1
          %s902 = scalar_select %p901, %s75, 1
          %s903 = smul.addr %s902, 8
          %s904 = scalar_lea.vmem %s1, %s903
        $region128: #{graphdetr_forward.10} parent=123 // pred_fallthru
          _
        // Predicated region
        $region129: #{graphdetr_forward.10} parent=123 // pred_check
          %p905 = pneg %p142
        $region130: #{graphdetr_forward.10} parent=123 // pred_check_branch
          %907 = sbr.rel (%p905) target = $region132
        $region131: #{graphdetr_forward.10} parent=123 // pred_region
          %p908 = scmp.lt.s32.totalorder %s75, 1
          %s909 = scalar_select %p908, %s75, 1
          %s910 = smul.addr %s909, 8
          %s911 = smul.addr %s910, 8
          %s912 = scalar_lea.vmem %s5, %s911
        $region132: #{graphdetr_forward.10} parent=123 // pred_fallthru
          _
        // Predicated region
        $region133: #{graphdetr_forward.10} parent=123 // pred_check
          %p913 = pneg %p168
        $region134: #{graphdetr_forward.10} parent=123 // pred_check_branch
          %915 = sbr.rel (%p913) target = $region136
        $region135: #{graphdetr_forward.10} parent=123 // pred_region
          %p916 = scmp.lt.s32.totalorder %s75, 1
          %s917 = scalar_select %p916, %s75, 1
          %s918 = smul.addr %s917, 8
          %s919 = smul.addr %s918, 8
          %s920 = scalar_lea.vmem %s7, %s919
        $region136: #{graphdetr_forward.10} parent=123 // pred_fallthru
          _
        // Predicated region
        $region137: #{graphdetr_forward.10} parent=123 // pred_check
          %p921 = pneg %p194
        $region138: #{graphdetr_forward.10} parent=123 // pred_check_branch
          %923 = sbr.rel (%p921) target = $region140
        $region139: #{graphdetr_forward.10} parent=123 // pred_region
          %p924 = scmp.lt.s32.totalorder %s75, 1
          %s925 = scalar_select %p924, %s75, 1
          %s926 = scalar_lea.vmem %s9, %s925
        $region140: #{graphdetr_forward.10} parent=123 // pred_fallthru
          _
      $region124: #{graphdetr_forward.10} parent=5 // pred_fallthru
        _
      %p927 = scmp.le.s32.totalorder 1, %s75
      %p928 = scmp.lt.s32.totalorder %s75, 3
      %p929 = pnand %p927, %p928
      %p930 = pneg %p929
      // Predicated region
      $region141: #{graphdetr_forward.10} parent=5 // pred_check
        _
      $region142: #{graphdetr_forward.10} parent=5 // pred_check_branch
        %932 = sbr.rel (%p929) target = $region144
      $region143: #{graphdetr_forward.10} parent=5 // pred_region
        %s933 = ssub.s32 %s75, 1
        %p934 = scmp.lt.s32.totalorder %s80, 1
        %s935 = scalar_select %p934, %s80, 1
        %s936 = smul.addr %s935, 8
        %s937 = scalar_lea.vmem %s1, %s936
        %p938 = pneg %p101
        %p939 = pneg %p98
        %p940 = pneg %p122
        %p941 = pneg %p119
        %p942 = scmp.lt.s32.totalorder %s80, 1
        %s943 = scalar_select %p942, %s80, 1
        %s944 = smul.addr %s943, 8
        %s945 = smul.addr %s944, 8
        %s946 = scalar_lea.vmem %s5, %s945
        %p947 = pneg %p148
        %p948 = pneg %p145
        %p949 = scmp.lt.s32.totalorder %s80, 1
        %s950 = scalar_select %p949, %s80, 1
        %s951 = smul.addr %s950, 8
        %s952 = smul.addr %s951, 8
        %s953 = scalar_lea.vmem %s7, %s952
        %p954 = pneg %p174
        %p955 = pneg %p171
        %p956 = scmp.lt.s32.totalorder %s80, 1
        %s957 = scalar_select %p956, %s80, 1
        %s958 = scalar_lea.vmem %s9, %s957
        %p959 = pneg %p200
        %p960 = pneg %p197
        %p961 = pneg %p221
        %p962 = pneg %p218
        %p963 = pneg %p242
        %p964 = pneg %p239
        %p965 = pneg %p263
        %p966 = pneg %p260
        %p967 = pneg %p284
        %p968 = pneg %p281
        %p969 = pneg %p305
        %p970 = pneg %p302
        %p971 = pneg %p326
        %p972 = pneg %p323
        %p973 = pneg %p347
        %p974 = pneg %p344
        %p975 = pneg %p368
        %p976 = pneg %p365
        %p977 = pneg %p389
        %p978 = pneg %p386
        %p979 = pneg %p410
        %p980 = pneg %p407
        %p981 = pneg %p431
        %p982 = pneg %p428
        %p983 = pneg %p452
        %p984 = pneg %p449
        %p985 = pneg %p473
        %p986 = pneg %p470
        %p987 = pneg %p494
        %p988 = pneg %p491
        %p989 = pneg %p515
        %p990 = pneg %p512
        %p991 = pneg %p536
        %p992 = pneg %p533
        %p993 = pneg %p557
        %p994 = pneg %p554
        %p995 = pneg %p578
        %p996 = pneg %p575
        %p997 = pneg %p599
        %p998 = pneg %p596
        %p999 = pneg %p620
        %p1000 = pneg %p617
        %p1001 = pneg %p641
        %p1002 = pneg %p638
        %p1003 = pneg %p662
        %p1004 = pneg %p659
        %p1005 = pneg %p683
        %p1006 = pneg %p680
        %p1007 = pneg %p704
        %p1008 = pneg %p701
        %p1009 = pneg %p725
        %p1010 = pneg %p722
        %p1011 = pneg %p746
        %p1012 = pneg %p743
        %p1013 = pneg %p772
        %p1014 = pneg %p769
        %s1015 = sand.u32 %s759, 1
        %s1016 = scalar_lea.sflag [#allocation4], %s1015
        %s1017 = sand.u32 %s759, 1
        %s1018 = smul.addr %s1017, 8
        %s1019 = scalar_lea.vmem [#allocation3], %s1018
        %p1020 = pneg %p798
        %p1021 = pneg %p795
        %p1022 = scmp.lt.s32.totalorder %s80, 1
        %s1023 = scalar_select %p1022, %s80, 1
        %s1024 = smul.addr %s1023, 8
        %s1025 = scalar_lea.vmem %s65, %s1024
        %p1026 = scmp.lt.s32.totalorder %s80, 1
        %s1027 = scalar_select %p1026, %s80, 1
        %s1028 = smul.addr %s1027, 8
        %s1029 = scalar_lea.vmem %s1, %s1028
        %p1030 = scmp.lt.s32.totalorder %s80, 1
        %s1031 = scalar_select %p1030, %s80, 1
        %s1032 = smul.addr %s1031, 8
        %s1033 = smul.addr %s1032, 8
        %s1034 = scalar_lea.vmem %s5, %s1033
        %p1035 = scmp.lt.s32.totalorder %s80, 1
        %s1036 = scalar_select %p1035, %s80, 1
        %s1037 = smul.addr %s1036, 8
        %s1038 = smul.addr %s1037, 8
        %s1039 = scalar_lea.vmem %s7, %s1038
        %p1040 = scmp.lt.s32.totalorder %s80, 1
        %s1041 = scalar_select %p1040, %s80, 1
        %s1042 = scalar_lea.vmem %s9, %s1041
        %p1043 = scmp.lt.s32.totalorder %s80, 1
        %s1044 = scalar_select %p1043, %s80, 1
        %s1045 = smul.addr %s1044, 8
        %s1046 = scalar_lea.vmem %s65, %s1045
        %v1048 = vld [vmem:[%s1029] sm:$0xff]
        %v1049 = vld [vmem:[%s3] sm:$0xff]
        %v1050 = vld [vmem:[%s1034] sm:$0xff]
        %v1051 = vld [vmem:[%s1034 + $0x8] sm:$0xff]
        %v1052 = vld [vmem:[%s1034 + $0x10] sm:$0xff]
        %v1053 = vld [vmem:[%s1034 + $0x18] sm:$0xff]
        %v1054 = vld [vmem:[%s1034 + $0x20] sm:$0xff]
        %v1055 = vld [vmem:[%s1034 + $0x28] sm:$0xff]
        %v1056 = vld [vmem:[%s1034 + $0x30] sm:$0xff]
        %v1057 = vld [vmem:[%s1034 + $0x38] sm:$0xff]
        %v1058 = vld [vmem:[%s1039] sm:$0xff]
        %v1059 = vld [vmem:[%s1039 + $0x8] sm:$0xff]
        %v1060 = vld [vmem:[%s1039 + $0x10] sm:$0xff]
        %v1061 = vld [vmem:[%s1039 + $0x18] sm:$0xff]
        %v1062 = vld [vmem:[%s1039 + $0x20] sm:$0xff]
        %v1063 = vld [vmem:[%s1039 + $0x28] sm:$0xff]
        %v1064 = vld [vmem:[%s1039 + $0x30] sm:$0xff]
        %v1065 = vld [vmem:[%s1039 + $0x38] sm:$0xff]
        %v1066 = vld [vmem:[%s1042] sm:$0x1]
        %v1067 = vadd.f32 %v1048, %v1049
        %v1068 = vpack.c.bf16 %v1067, %v1067
        %v1069 = vld [vmem:[%s11] sm:$0xf]
        %v1070 = vld [vmem:[%s11 + $0x4] sm:$0xf]
        %v1071 = vld [vmem:[%s11 + $0x8] sm:$0xf]
        %v1072 = vld [vmem:[%s11 + $0xc] sm:$0xf]
        %v1073 = vld [vmem:[%s13] sm:$0x1]
        %v1075 = vperm.slane %v1073, 0
        %v1081 = vunpack.c.l.b16 %v1069
        %v1082 = vunpack.c.l.b16 %v1070
        %v1083 = vunpack.c.l.b16 %v1071
        %v1084 = vunpack.c.l.b16 %v1072
        %v1085 = vpack.c.b16 %v1082, %v1081
        %v1086 = vpack.c.b16 %v1084, %v1083
        %vm1089 = vcmask 261120
        %v1091 = vsel %vm1089, %v1068, 0
        %1093 = vmatpush.bf16.msra.mxu0 0
        %1094 = vmatpush.bf16.msra.mxu0 0
        %1095 = vmatpush.bf16.msra.mxu0 0
        %1096 = vmatpush.bf16.msra.mxu0 0
        %1097 = vmatpush.bf16.msra.mxu0 0
        %1098 = vmatpush.bf16.msra.mxu0 0
        %1099 = vmatpush.bf16.msra.mxu0 %v1086
        %1100 = vmatpush.bf16.msra.mxu0 %v1085
        %1101 = vmatmul.bf16.gmra.mxu0 %v1091
        %v1102 = vpop.f32.mrf.mxu0
        %v1103 = vadd.f32 %v1075, %v1102
        %v1104 = vpop.f32.mrf.mxu0
        %1105 = vdwg.mxu0
        %v1106 = vpack.c.bf16 %v1048, %v1048
        %v1107 = vld [vmem:[%s15] sm:$0xf]
        %v1108 = vld [vmem:[%s15 + $0x4] sm:$0xf]
        %v1109 = vld [vmem:[%s15 + $0x8] sm:$0xf]
        %v1110 = vld [vmem:[%s15 + $0xc] sm:$0xf]
        %v1111 = vld [vmem:[%s17] sm:$0x1]
        %v1113 = vperm.slane %v1111, 0
        %v1119 = vunpack.c.l.b16 %v1107
        %v1120 = vunpack.c.l.b16 %v1108
        %v1121 = vunpack.c.l.b16 %v1109
        %v1122 = vunpack.c.l.b16 %v1110
        %v1123 = vpack.c.b16 %v1120, %v1119
        %v1124 = vpack.c.b16 %v1122, %v1121
        %v1128 = vsel %vm1089, %v1106, 0
        %1130 = vmatpush.bf16.msra.mxu0 0
        %1131 = vmatpush.bf16.msra.mxu0 0
        %1132 = vmatpush.bf16.msra.mxu0 0
        %1133 = vmatpush.bf16.msra.mxu0 0
        %1134 = vmatpush.bf16.msra.mxu0 0
        %1135 = vmatpush.bf16.msra.mxu0 0
        %1136 = vmatpush.bf16.msra.mxu0 %v1124
        %1137 = vmatpush.bf16.msra.mxu0 %v1123
        %1138 = vmatmul.bf16.gmra.mxu0 %v1128
        %v1139 = vpop.f32.mrf.mxu0
        %v1140 = vadd.f32 %v1113, %v1139
        %v1141 = vpop.f32.mrf.mxu0
        %1142 = vdwg.mxu0
        %v1143 = vpack.c.bf16 %v1103, %v1103
        %1145 = vrot.lane.b32.xlu0 %v1143, 96
        %v1146 = vpop.permute.xlu0 %1145
        %vm1147 = vcmask 64512
        %v1149 = vsel %vm1147, %v1143, 0
        %v1152 = vsel %vm1147, %v1146, 0
        %1154 = vmatpush.bf16.xpose.msra.mxu0 0
        %1155 = vmatpush.bf16.xpose.msra.mxu0 0
        %1156 = vmatpush.bf16.xpose.msra.mxu0 0
        %1157 = vmatpush.bf16.xpose.msra.mxu0 0
        %1158 = vmatpush.bf16.xpose.msra.mxu0 0
        %1159 = vmatpush.bf16.xpose.msra.mxu0 0
        %1160 = vmatpush.bf16.xpose.msra.mxu0 0
        %1161 = vmatpush.bf16.xpose.msra.mxu0 %v1152
        %1162 = vmatmul.bf16.gmra.mxu0 %v1149
        %v1163 = vpop.f32.mrf.mxu0
        %v1164 = vadd.f32 0.0, %v1163
        %v1165 = vpop.f32.mrf.mxu0
        %1166 = vdwg.mxu0
        %v1167 = vsel %vm1147, %v1164, -inf
        %1168 = vmax.xlane.f32.xlu0 %v1167
        %v1169 = vpop.xlane.xlu0 %1168
        %v1170 = vsub.f32 %v1164, %v1169
        %v1171 = vmul.f32 %v1170, 1.442695
        %v1172 = vpow.pop %v1171
        %v1173 = vsel %vm1147, %v1172, 0.0
        %1174 = vadd.xlane.f32.xlu0 %v1173
        %v1175 = vpop.xlane.xlu0 %1174
        %v1176 = vrcp.pop %v1175
        %v1177 = vmul.f32 %v1172, %v1176
        %v1178 = vpack.c.bf16 %v1177, %v1177
        %v1179 = vpack.c.bf16 %v1140, %v1140
        %v1181 = vsel %vm1147, %v1178, 0
        %vm1183 = vcmask 1043456
        %v1185 = vsel %vm1183, %v1179, 0
        %1187 = vmatpush.bf16.msra.mxu0 0
        %1188 = vmatpush.bf16.msra.mxu0 0
        %1189 = vmatpush.bf16.msra.mxu0 0
        %1190 = vmatpush.bf16.msra.mxu0 0
        %1191 = vmatpush.bf16.msra.mxu0 0
        %1192 = vmatpush.bf16.msra.mxu0 0
        %1193 = vmatpush.bf16.msra.mxu0 0
        %1194 = vmatpush.bf16.msra.mxu0 %v1185
        %1195 = vmatmul.bf16.gmra.mxu0 %v1181
        %v1196 = vpop.f32.mrf.mxu0
        %v1197 = vadd.f32 0.0, %v1196
        %v1198 = vpop.f32.mrf.mxu0
        %1199 = vdwg.mxu0
        %1200 = vst.msk [vmem:[#allocation2] sm:$0xff] %vm1147, %v1197
        %1201 = vrot.lane.b32.xlu0 %v1143, 120
        %v1202 = vpop.permute.xlu0 %1201
        %1203 = vrot.lane.b32.xlu0 %v1143, 88
        %v1204 = vpop.permute.xlu0 %1203
        %v1206 = vsel %vm1147, %v1202, 0
        %v1209 = vsel %vm1147, %v1204, 0
        %1211 = vmatpush.bf16.xpose.msra.mxu0 0
        %1212 = vmatpush.bf16.xpose.msra.mxu0 0
        %1213 = vmatpush.bf16.xpose.msra.mxu0 0
        %1214 = vmatpush.bf16.xpose.msra.mxu0 0
        %1215 = vmatpush.bf16.xpose.msra.mxu0 0
        %1216 = vmatpush.bf16.xpose.msra.mxu0 0
        %1217 = vmatpush.bf16.xpose.msra.mxu0 0
        %1218 = vmatpush.bf16.xpose.msra.mxu0 %v1209
        %1219 = vmatmul.bf16.gmra.mxu0 %v1206
        %v1220 = vpop.f32.mrf.mxu0
        %v1221 = vadd.f32 0.0, %v1220
        %v1222 = vpop.f32.mrf.mxu0
        %1223 = vdwg.mxu0
        %v1224 = vsel %vm1147, %v1221, -inf
        %1225 = vmax.xlane.f32.xlu0 %v1224
        %v1226 = vpop.xlane.xlu0 %1225
        %v1227 = vsub.f32 %v1221, %v1226
        %v1228 = vmul.f32 %v1227, 1.442695
        %v1229 = vpow.pop %v1228
        %v1230 = vsel %vm1147, %v1229, 0.0
        %1231 = vadd.xlane.f32.xlu0 %v1230
        %v1232 = vpop.xlane.xlu0 %1231
        %v1233 = vrcp.pop %v1232
        %v1234 = vmul.f32 %v1229, %v1233
        %v1235 = vpack.c.bf16 %v1234, %v1234
        %1237 = vrot.lane.b32.xlu0 %v1179, 120
        %v1238 = vpop.permute.xlu0 %1237
        %v1240 = vsel %vm1147, %v1235, 0
        %v1243 = vsel %vm1183, %v1238, 0
        %1245 = vmatpush.bf16.msra.mxu0 0
        %1246 = vmatpush.bf16.msra.mxu0 0
        %1247 = vmatpush.bf16.msra.mxu0 0
        %1248 = vmatpush.bf16.msra.mxu0 0
        %1249 = vmatpush.bf16.msra.mxu0 0
        %1250 = vmatpush.bf16.msra.mxu0 0
        %1251 = vmatpush.bf16.msra.mxu0 0
        %1252 = vmatpush.bf16.msra.mxu0 %v1243
        %1253 = vmatmul.bf16.gmra.mxu0 %v1240
        %v1254 = vpop.f32.mrf.mxu0
        %v1255 = vadd.f32 0.0, %v1254
        %v1256 = vpop.f32.mrf.mxu0
        %1257 = vdwg.mxu0
        %1259 = vrot.lane.b32.xlu0 %v1255, 8
        %v1260 = vpop.permute.xlu0 %1259
        %vm1262 = vcmask 130112
        %1263 = vst.msk [vmem:[#allocation2] sm:$0xff] %vm1262, %v1260
        %1264 = vrot.lane.b32.xlu0 %v1143, 112
        %v1265 = vpop.permute.xlu0 %1264
        %1266 = vrot.lane.b32.xlu0 %v1143, 80
        %v1267 = vpop.permute.xlu0 %1266
        %v1269 = vsel %vm1147, %v1265, 0
        %v1272 = vsel %vm1147, %v1267, 0
        %1274 = vmatpush.bf16.xpose.msra.mxu0 0
        %1275 = vmatpush.bf16.xpose.msra.mxu0 0
        %1276 = vmatpush.bf16.xpose.msra.mxu0 0
        %1277 = vmatpush.bf16.xpose.msra.mxu0 0
        %1278 = vmatpush.bf16.xpose.msra.mxu0 0
        %1279 = vmatpush.bf16.xpose.msra.mxu0 0
        %1280 = vmatpush.bf16.xpose.msra.mxu0 0
        %1281 = vmatpush.bf16.xpose.msra.mxu0 %v1272
        %1282 = vmatmul.bf16.gmra.mxu0 %v1269
        %v1283 = vpop.f32.mrf.mxu0
        %v1284 = vadd.f32 0.0, %v1283
        %v1285 = vpop.f32.mrf.mxu0
        %1286 = vdwg.mxu0
        %v1287 = vsel %vm1147, %v1284, -inf
        %1288 = vmax.xlane.f32.xlu0 %v1287
        %v1289 = vpop.xlane.xlu0 %1288
        %v1290 = vsub.f32 %v1284, %v1289
        %v1291 = vmul.f32 %v1290, 1.442695
        %v1292 = vpow.pop %v1291
        %v1293 = vsel %vm1147, %v1292, 0.0
        %1294 = vadd.xlane.f32.xlu0 %v1293
        %v1295 = vpop.xlane.xlu0 %1294
        %v1296 = vrcp.pop %v1295
        %v1297 = vmul.f32 %v1292, %v1296
        %v1298 = vpack.c.bf16 %v1297, %v1297
        %1299 = vrot.lane.b32.xlu0 %v1179, 112
        %v1300 = vpop.permute.xlu0 %1299
        %v1302 = vsel %vm1147, %v1298, 0
        %v1305 = vsel %vm1183, %v1300, 0
        %1307 = vmatpush.bf16.msra.mxu0 0
        %1308 = vmatpush.bf16.msra.mxu0 0
        %1309 = vmatpush.bf16.msra.mxu0 0
        %1310 = vmatpush.bf16.msra.mxu0 0
        %1311 = vmatpush.bf16.msra.mxu0 0
        %1312 = vmatpush.bf16.msra.mxu0 0
        %1313 = vmatpush.bf16.msra.mxu0 0
        %1314 = vmatpush.bf16.msra.mxu0 %v1305
        %1315 = vmatmul.bf16.gmra.mxu0 %v1302
        %v1316 = vpop.f32.mrf.mxu0
        %v1317 = vadd.f32 0.0, %v1316
        %v1318 = vpop.f32.mrf.mxu0
        %1319 = vdwg.mxu0
        %1321 = vrot.lane.b32.xlu0 %v1317, 16
        %v1322 = vpop.permute.xlu0 %1321
        %vm1324 = vcmask 195712
        %1325 = vst.msk [vmem:[#allocation2] sm:$0xff] %vm1324, %v1322
        %1326 = vrot.lane.b32.xlu0 %v1143, 104
        %v1327 = vpop.permute.xlu0 %1326
        %1328 = vrot.lane.b32.xlu0 %v1143, 72
        %v1329 = vpop.permute.xlu0 %1328
        %v1331 = vsel %vm1147, %v1327, 0
        %v1334 = vsel %vm1147, %v1329, 0
        %1336 = vmatpush.bf16.xpose.msra.mxu0 0
        %1337 = vmatpush.bf16.xpose.msra.mxu0 0
        %1338 = vmatpush.bf16.xpose.msra.mxu0 0
        %1339 = vmatpush.bf16.xpose.msra.mxu0 0
        %1340 = vmatpush.bf16.xpose.msra.mxu0 0
        %1341 = vmatpush.bf16.xpose.msra.mxu0 0
        %1342 = vmatpush.bf16.xpose.msra.mxu0 0
        %1343 = vmatpush.bf16.xpose.msra.mxu0 %v1334
        %1344 = vmatmul.bf16.gmra.mxu0 %v1331
        %v1345 = vpop.f32.mrf.mxu0
        %v1346 = vadd.f32 0.0, %v1345
        %v1347 = vpop.f32.mrf.mxu0
        %1348 = vdwg.mxu0
        %v1349 = vsel %vm1147, %v1346, -inf
        %1350 = vmax.xlane.f32.xlu0 %v1349
        %v1351 = vpop.xlane.xlu0 %1350
        %v1352 = vsub.f32 %v1346, %v1351
        %v1353 = vmul.f32 %v1352, 1.442695
        %v1354 = vpow.pop %v1353
        %v1355 = vsel %vm1147, %v1354, 0.0
        %1356 = vadd.xlane.f32.xlu0 %v1355
        %v1357 = vpop.xlane.xlu0 %1356
        %v1358 = vrcp.pop %v1357
        %v1359 = vmul.f32 %v1354, %v1358
        %v1360 = vpack.c.bf16 %v1359, %v1359
        %1361 = vrot.lane.b32.xlu0 %v1179, 104
        %v1362 = vpop.permute.xlu0 %1361
        %v1364 = vsel %vm1147, %v1360, 0
        %v1367 = vsel %vm1183, %v1362, 0
        %1369 = vmatpush.bf16.msra.mxu0 0
        %1370 = vmatpush.bf16.msra.mxu0 0
        %1371 = vmatpush.bf16.msra.mxu0 0
        %1372 = vmatpush.bf16.msra.mxu0 0
        %1373 = vmatpush.bf16.msra.mxu0 0
        %1374 = vmatpush.bf16.msra.mxu0 0
        %1375 = vmatpush.bf16.msra.mxu0 0
        %1376 = vmatpush.bf16.msra.mxu0 %v1367
        %1377 = vmatmul.bf16.gmra.mxu0 %v1364
        %v1378 = vpop.f32.mrf.mxu0
        %v1379 = vadd.f32 0.0, %v1378
        %v1380 = vpop.f32.mrf.mxu0
        %1381 = vdwg.mxu0
        %1383 = vrot.lane.b32.xlu0 %v1379, 24
        %v1384 = vpop.permute.xlu0 %1383
        %vm1386 = vcmask 261312
        %1387 = vst.msk [vmem:[#allocation2] sm:$0xff] %vm1386, %v1384
        %v1388 = vld [vmem:[#allocation2] sm:$0xff]
        %v1389 = vpack.c.bf16 %v1388, %v1388
        %v1390 = vld [vmem:[%s19] sm:$0xf]
        %v1391 = vld [vmem:[%s19 + $0x4] sm:$0xf]
        %v1392 = vld [vmem:[%s19 + $0x8] sm:$0xf]
        %v1393 = vld [vmem:[%s19 + $0xc] sm:$0xf]
        %v1394 = vld [vmem:[%s21] sm:$0x1]
        %v1396 = vperm.slane %v1394, 0
        %v1402 = vunpack.c.l.b16 %v1390
        %v1403 = vunpack.c.l.b16 %v1391
        %v1404 = vunpack.c.l.b16 %v1392
        %v1405 = vunpack.c.l.b16 %v1393
        %v1406 = vpack.c.b16 %v1403, %v1402
        %v1407 = vpack.c.b16 %v1405, %v1404
        %v1411 = vsel %vm1089, %v1389, 0
        %1413 = vmatpush.bf16.msra.mxu0 0
        %1414 = vmatpush.bf16.msra.mxu0 0
        %1415 = vmatpush.bf16.msra.mxu0 0
        %1416 = vmatpush.bf16.msra.mxu0 0
        %1417 = vmatpush.bf16.msra.mxu0 0
        %1418 = vmatpush.bf16.msra.mxu0 0
        %1419 = vmatpush.bf16.msra.mxu0 %v1407
        %1420 = vmatpush.bf16.msra.mxu0 %v1406
        %1421 = vmatmul.bf16.gmra.mxu0 %v1411
        %v1422 = vpop.f32.mrf.mxu0
        %v1423 = vadd.f32 %v1396, %v1422
        %v1424 = vpop.f32.mrf.mxu0
        %1425 = vdwg.mxu0
        %v1426 = vadd.f32 %v1048, %v1423
        %v1427 = vld [vmem:[%s23] sm:$0x1]
        %v1428 = vld [vmem:[%s25] sm:$0x1]
        %v1429 = vsel %vm1089, %v1426, 0.0
        %1430 = vadd.xlane.f32.xlu0 %v1429
        %v1431 = vpop.xlane.xlu0 %1430
        %v1432 = vrcp.pop 32.0
        %v1433 = vmul.f32 32.0, %v1432
        %v1434 = vsub.f32 1.0, %v1433
        %v1435 = vmul.f32 %v1432, %v1434
        %v1436 = vadd.f32 %v1432, %v1435
        %vm1437 = vweird.f32 %v1432
        %v1438 = vsel %vm1437, %v1432, %v1436
        %v1439 = vmul.f32 %v1431, %v1438
        %v1440 = vsub.f32 %v1426, %v1439
        %v1441 = vmul.f32 %v1440, %v1440
        %v1442 = vsel %vm1089, %v1441, 0.0
        %1443 = vadd.xlane.f32.xlu0 %v1442
        %v1444 = vpop.xlane.xlu0 %1443
        %v1445 = vmul.f32 %v1444, %v1438
        %v1446 = vadd.f32 %v1445, 1e-05
        %v1447 = vrsqrt.pop %v1446
        %v1448 = vmul.f32 %v1447, %v1446
        %v1449 = vmul.f32 %v1448, %v1447
        %v1450 = vmul.f32 0.5, %v1449
        %v1451 = vsub.f32 1.5, %v1450
        %v1452 = vmul.f32 %v1447, %v1451
        %vm1453 = vweird.f32 %v1446
        %vm1454 = vweird.f32 %v1447
        %vm1455 = vmor %vm1453, %vm1454
        %v1456 = vsel %vm1455, %v1447, %v1452
        %v1457 = vmul.f32 %v1440, %v1456
        %v1459 = vperm.slane %v1427, 0
        %v1461 = vmul.f32 %v1457, %v1459
        %v1463 = vperm.slane %v1428, 0
        %v1465 = vadd.f32 %v1461, %v1463
        %v1466 = vadd.f32 %v1465, %v1049
        %v1467 = vpack.c.bf16 %v1466, %v1466
        %v1468 = vld [vmem:[%s27] sm:$0xf]
        %v1469 = vld [vmem:[%s27 + $0x4] sm:$0xf]
        %v1470 = vld [vmem:[%s27 + $0x8] sm:$0xf]
        %v1471 = vld [vmem:[%s27 + $0xc] sm:$0xf]
        %v1472 = vld [vmem:[%s29] sm:$0x1]
        %v1474 = vperm.slane %v1472, 0
        %v1480 = vunpack.c.l.b16 %v1468
        %v1481 = vunpack.c.l.b16 %v1469
        %v1482 = vunpack.c.l.b16 %v1470
        %v1483 = vunpack.c.l.b16 %v1471
        %v1484 = vpack.c.b16 %v1481, %v1480
        %v1485 = vpack.c.b16 %v1483, %v1482
        %v1489 = vsel %vm1089, %v1467, 0
        %1491 = vmatpush.bf16.msra.mxu0 0
        %1492 = vmatpush.bf16.msra.mxu0 0
        %1493 = vmatpush.bf16.msra.mxu0 0
        %1494 = vmatpush.bf16.msra.mxu0 0
        %1495 = vmatpush.bf16.msra.mxu0 0
        %1496 = vmatpush.bf16.msra.mxu0 0
        %1497 = vmatpush.bf16.msra.mxu0 %v1485
        %1498 = vmatpush.bf16.msra.mxu0 %v1484
        %1499 = vmatmul.bf16.gmra.mxu0 %v1489
        %v1500 = vpop.f32.mrf.mxu0
        %v1501 = vadd.f32 %v1474, %v1500
        %v1502 = vpop.f32.mrf.mxu0
        %1503 = vdwg.mxu0
        %v1504 = vadd.f32 %v1050, %v1058
        %v1505 = vadd.f32 %v1051, %v1059
        %v1506 = vadd.f32 %v1052, %v1060
        %v1507 = vadd.f32 %v1053, %v1061
        %v1508 = vadd.f32 %v1054, %v1062
        %v1509 = vadd.f32 %v1055, %v1063
        %v1510 = vadd.f32 %v1056, %v1064
        %v1511 = vadd.f32 %v1057, %v1065
        %v1512 = vpack.c.bf16 %v1505, %v1504
        %v1513 = vpack.c.bf16 %v1507, %v1506
        %v1514 = vpack.c.bf16 %v1509, %v1508
        %v1515 = vpack.c.bf16 %v1511, %v1510
        %v1516 = vld [vmem:[%s31] sm:$0xf]
        %v1517 = vld [vmem:[%s31 + $0x4] sm:$0xf]
        %v1518 = vld [vmem:[%s31 + $0x8] sm:$0xf]
        %v1519 = vld [vmem:[%s31 + $0xc] sm:$0xf]
        %v1520 = vld [vmem:[%s33] sm:$0x1]
        %v1522 = vperm.slane %v1520, 0
        %v1528 = vunpack.c.l.b16 %v1516
        %v1529 = vunpack.c.l.b16 %v1517
        %v1530 = vunpack.c.l.b16 %v1518
        %v1531 = vunpack.c.l.b16 %v1519
        %v1532 = vpack.c.b16 %v1529, %v1528
        %v1533 = vpack.c.b16 %v1531, %v1530
        %v1537 = vsel %vm1089, %v1512, 0
        %v1540 = vsel %vm1089, %v1513, 0
        %v1543 = vsel %vm1089, %v1514, 0
        %v1546 = vsel %vm1089, %v1515, 0
        %1548 = vmatpush.bf16.msra.mxu0 0
        %1549 = vmatpush.bf16.msra.mxu0 0
        %1550 = vmatpush.bf16.msra.mxu0 0
        %1551 = vmatpush.bf16.msra.mxu0 0
        %1552 = vmatpush.bf16.msra.mxu0 0
        %1553 = vmatpush.bf16.msra.mxu0 0
        %1554 = vmatpush.bf16.msra.mxu0 %v1533
        %1555 = vmatpush.bf16.msra.mxu0 %v1532
        %1556 = vmatmul.bf16.gmra.mxu0 %v1537
        %v1557 = vpop.f32.mrf.mxu0
        %v1558 = vadd.f32 %v1522, %v1557
        %v1559 = vpop.f32.mrf.mxu0
        %v1560 = vadd.f32 %v1522, %v1559
        %1561 = vmatmul.bf16.gmra.mxu0 %v1540
        %v1562 = vpop.f32.mrf.mxu0
        %v1563 = vadd.f32 %v1522, %v1562
        %v1564 = vpop.f32.mrf.mxu0
        %v1565 = vadd.f32 %v1522, %v1564
        %1566 = vmatmul.bf16.gmra.mxu0 %v1543
        %v1567 = vpop.f32.mrf.mxu0
        %v1568 = vadd.f32 %v1522, %v1567
        %v1569 = vpop.f32.mrf.mxu0
        %v1570 = vadd.f32 %v1522, %v1569
        %1571 = vmatmul.bf16.gmra.mxu0 %v1546
        %v1572 = vpop.f32.mrf.mxu0
        %v1573 = vadd.f32 %v1522, %v1572
        %v1574 = vpop.f32.mrf.mxu0
        %v1575 = vadd.f32 %v1522, %v1574
        %1576 = vdwg.mxu0
        %v1577 = vpack.c.bf16 %v1051, %v1050
        %v1578 = vpack.c.bf16 %v1053, %v1052
        %v1579 = vpack.c.bf16 %v1055, %v1054
        %v1580 = vpack.c.bf16 %v1057, %v1056
        %v1581 = vld [vmem:[%s35] sm:$0xf]
        %v1582 = vld [vmem:[%s35 + $0x4] sm:$0xf]
        %v1583 = vld [vmem:[%s35 + $0x8] sm:$0xf]
        %v1584 = vld [vmem:[%s35 + $0xc] sm:$0xf]
        %v1585 = vld [vmem:[%s37] sm:$0x1]
        %v1587 = vperm.slane %v1585, 0
        %v1593 = vunpack.c.l.b16 %v1581
        %v1594 = vunpack.c.l.b16 %v1582
        %v1595 = vunpack.c.l.b16 %v1583
        %v1596 = vunpack.c.l.b16 %v1584
        %v1597 = vpack.c.b16 %v1594, %v1593
        %v1598 = vpack.c.b16 %v1596, %v1595
        %v1602 = vsel %vm1089, %v1577, 0
        %v1605 = vsel %vm1089, %v1578, 0
        %v1608 = vsel %vm1089, %v1579, 0
        %v1611 = vsel %vm1089, %v1580, 0
        %1613 = vmatpush.bf16.msra.mxu0 0
        %1614 = vmatpush.bf16.msra.mxu0 0
        %1615 = vmatpush.bf16.msra.mxu0 0
        %1616 = vmatpush.bf16.msra.mxu0 0
        %1617 = vmatpush.bf16.msra.mxu0 0
        %1618 = vmatpush.bf16.msra.mxu0 0
        %1619 = vmatpush.bf16.msra.mxu0 %v1598
        %1620 = vmatpush.bf16.msra.mxu0 %v1597
        %1621 = vmatmul.bf16.gmra.mxu0 %v1602
        %v1622 = vpop.f32.mrf.mxu0
        %v1623 = vadd.f32 %v1587, %v1622
        %v1624 = vpop.f32.mrf.mxu0
        %v1625 = vadd.f32 %v1587, %v1624
        %1626 = vmatmul.bf16.gmra.mxu0 %v1605
        %v1627 = vpop.f32.mrf.mxu0
        %v1628 = vadd.f32 %v1587, %v1627
        %v1629 = vpop.f32.mrf.mxu0
        %v1630 = vadd.f32 %v1587, %v1629
        %1631 = vmatmul.bf16.gmra.mxu0 %v1608
        %v1632 = vpop.f32.mrf.mxu0
        %v1633 = vadd.f32 %v1587, %v1632
        %v1634 = vpop.f32.mrf.mxu0
        %v1635 = vadd.f32 %v1587, %v1634
        %1636 = vmatmul.bf16.gmra.mxu0 %v1611
        %v1637 = vpop.f32.mrf.mxu0
        %v1638 = vadd.f32 %v1587, %v1637
        %v1639 = vpop.f32.mrf.mxu0
        %v1640 = vadd.f32 %v1587, %v1639
        %1641 = vdwg.mxu0
        %v1642 = vpack.c.bf16 %v1501, %v1501
        %v1643 = vpack.c.bf16 %v1560, %v1558
        %v1644 = vpack.c.bf16 %v1565, %v1563
        %v1645 = vpack.c.bf16 %v1570, %v1568
        %v1646 = vpack.c.bf16 %v1575, %v1573
        %v1648 = vperm.slane %v1066, 0
        %v1651 = vsel %vm1147, %v1642, 0
        %v1654 = vsel %vm1147, %v1643, 0
        %v1657 = vsel %vm1147, %v1644, 0
        %v1660 = vsel %vm1147, %v1645, 0
        %v1663 = vsel %vm1147, %v1646, 0
        %1665 = vmatpush.bf16.xpose.msra.mxu0 0
        %1666 = vmatpush.bf16.xpose.msra.mxu0 0
        %1667 = vmatpush.bf16.xpose.msra.mxu0 0
        %1668 = vmatpush.bf16.xpose.msra.mxu0 0
        %1669 = vmatpush.bf16.xpose.msra.mxu0 %v1663
        %1670 = vmatpush.bf16.xpose.msra.mxu0 %v1660
        %1671 = vmatpush.bf16.xpose.msra.mxu0 %v1657
        %1672 = vmatpush.bf16.xpose.msra.mxu0 %v1654
        %1673 = vmatmul.bf16.gmra.mxu0 %v1651
        %v1674 = vpop.f32.mrf.mxu0
        %v1675 = vadd.f32 %v1648, %v1674
        %v1676 = vpop.f32.mrf.mxu0
        %1677 = vdwg.mxu0
        %vm1678 = vcmask 523264
        %v1679 = vsel %vm1678, %v1675, -inf
        %1680 = vmax.xlane.f32.xlu0 %v1679
        %v1681 = vpop.xlane.xlu0 %1680
        %v1682 = vsub.f32 %v1675, %v1681
        %v1683 = vmul.f32 %v1682, 1.442695
        %v1684 = vpow.pop %v1683
        %v1685 = vsel %vm1678, %v1684, 0.0
        %1686 = vadd.xlane.f32.xlu0 %v1685
        %v1687 = vpop.xlane.xlu0 %1686
        %v1688 = vrcp.pop %v1687
        %v1689 = vmul.f32 %v1684, %v1688
        %v1690 = vpack.c.bf16 %v1689, %v1689
        %v1691 = vpack.c.bf16 %v1625, %v1623
        %v1692 = vpack.c.bf16 %v1630, %v1628
        %v1693 = vpack.c.bf16 %v1635, %v1633
        %v1694 = vpack.c.bf16 %v1640, %v1638
        %v1696 = vsel %vm1678, %v1690, 0
        %1698 = vmatpush.bf16.msra.mxu0 0
        %1699 = vmatpush.bf16.msra.mxu0 0
        %1700 = vmatpush.bf16.msra.mxu0 0
        %1701 = vmatpush.bf16.msra.mxu0 0
        %1702 = vmatpush.bf16.msra.mxu0 %v1694
        %1703 = vmatpush.bf16.msra.mxu0 %v1693
        %1704 = vmatpush.bf16.msra.mxu0 %v1692
        %1705 = vmatpush.bf16.msra.mxu0 %v1691
        %1706 = vmatmul.bf16.gmra.mxu0 %v1696
        %v1707 = vpop.f32.mrf.mxu0
        %v1708 = vadd.f32 0.0, %v1707
        %v1709 = vpop.f32.mrf.mxu0
        %1710 = vdwg.mxu0
        %1711 = vst.msk [vmem:[#allocation2] sm:$0xff] %vm1147, %v1708
        %1713 = vrot.lane.b32.xlu0 %v1642, 120
        %v1714 = vpop.permute.xlu0 %1713
        %1719 = vrot.lane.b32.xlu0 %v1643, 120
        %v1720 = vpop.permute.xlu0 %1719
        %1721 = vrot.lane.b32.xlu0 %v1644, 120
        %v1722 = vpop.permute.xlu0 %1721
        %1723 = vrot.lane.b32.xlu0 %v1645, 120
        %v1724 = vpop.permute.xlu0 %1723
        %1725 = vrot.lane.b32.xlu0 %v1646, 120
        %v1726 = vpop.permute.xlu0 %1725
        %v1728 = vsel %vm1147, %v1714, 0
        %v1731 = vsel %vm1147, %v1720, 0
        %v1734 = vsel %vm1147, %v1722, 0
        %v1737 = vsel %vm1147, %v1724, 0
        %v1740 = vsel %vm1147, %v1726, 0
        %1742 = vmatpush.bf16.xpose.msra.mxu0 0
        %1743 = vmatpush.bf16.xpose.msra.mxu0 0
        %1744 = vmatpush.bf16.xpose.msra.mxu0 0
        %1745 = vmatpush.bf16.xpose.msra.mxu0 0
        %1746 = vmatpush.bf16.xpose.msra.mxu0 %v1740
        %1747 = vmatpush.bf16.xpose.msra.mxu0 %v1737
        %1748 = vmatpush.bf16.xpose.msra.mxu0 %v1734
        %1749 = vmatpush.bf16.xpose.msra.mxu0 %v1731
        %1750 = vmatmul.bf16.gmra.mxu0 %v1728
        %v1751 = vpop.f32.mrf.mxu0
        %v1752 = vadd.f32 %v1648, %v1751
        %v1753 = vpop.f32.mrf.mxu0
        %1754 = vdwg.mxu0
        %v1755 = vsel %vm1678, %v1752, -inf
        %1756 = vmax.xlane.f32.xlu0 %v1755
        %v1757 = vpop.xlane.xlu0 %1756
        %v1758 = vsub.f32 %v1752, %v1757
        %v1759 = vmul.f32 %v1758, 1.442695
        %v1760 = vpow.pop %v1759
        %v1761 = vsel %vm1678, %v1760, 0.0
        %1762 = vadd.xlane.f32.xlu0 %v1761
        %v1763 = vpop.xlane.xlu0 %1762
        %v1764 = vrcp.pop %v1763
        %v1765 = vmul.f32 %v1760, %v1764
        %v1766 = vpack.c.bf16 %v1765, %v1765
        %1771 = vrot.lane.b32.xlu0 %v1691, 120
        %v1772 = vpop.permute.xlu0 %1771
        %1773 = vrot.lane.b32.xlu0 %v1692, 120
        %v1774 = vpop.permute.xlu0 %1773
        %1775 = vrot.lane.b32.xlu0 %v1693, 120
        %v1776 = vpop.permute.xlu0 %1775
        %1777 = vrot.lane.b32.xlu0 %v1694, 120
        %v1778 = vpop.permute.xlu0 %1777
        %v1784 = vsel %vm1678, %v1766, 0
        %1786 = vmatpush.bf16.msra.mxu0 0
        %1787 = vmatpush.bf16.msra.mxu0 0
        %1788 = vmatpush.bf16.msra.mxu0 0
        %1789 = vmatpush.bf16.msra.mxu0 0
        %1790 = vmatpush.bf16.msra.mxu0 %v1778
        %1791 = vmatpush.bf16.msra.mxu0 %v1776
        %1792 = vmatpush.bf16.msra.mxu0 %v1774
        %1793 = vmatpush.bf16.msra.mxu0 %v1772
        %1794 = vmatmul.bf16.gmra.mxu0 %v1784
        %v1795 = vpop.f32.mrf.mxu0
        %v1796 = vadd.f32 0.0, %v1795
        %v1797 = vpop.f32.mrf.mxu0
        %1798 = vdwg.mxu0
        %1800 = vrot.lane.b32.xlu0 %v1796, 8
        %v1801 = vpop.permute.xlu0 %1800
        %1803 = vst.msk [vmem:[#allocation2] sm:$0xff] %vm1262, %v1801
        %1804 = vrot.lane.b32.xlu0 %v1642, 112
        %v1805 = vpop.permute.xlu0 %1804
        %1806 = vrot.lane.b32.xlu0 %v1643, 112
        %v1807 = vpop.permute.xlu0 %1806
        %1808 = vrot.lane.b32.xlu0 %v1644, 112
        %v1809 = vpop.permute.xlu0 %1808
        %1810 = vrot.lane.b32.xlu0 %v1645, 112
        %v1811 = vpop.permute.xlu0 %1810
        %1812 = vrot.lane.b32.xlu0 %v1646, 112
        %v1813 = vpop.permute.xlu0 %1812
        %v1815 = vsel %vm1147, %v1805, 0
        %v1818 = vsel %vm1147, %v1807, 0
        %v1821 = vsel %vm1147, %v1809, 0
        %v1824 = vsel %vm1147, %v1811, 0
        %v1827 = vsel %vm1147, %v1813, 0
        %1829 = vmatpush.bf16.xpose.msra.mxu0 0
        %1830 = vmatpush.bf16.xpose.msra.mxu0 0
        %1831 = vmatpush.bf16.xpose.msra.mxu0 0
        %1832 = vmatpush.bf16.xpose.msra.mxu0 0
        %1833 = vmatpush.bf16.xpose.msra.mxu0 %v1827
        %1834 = vmatpush.bf16.xpose.msra.mxu0 %v1824
        %1835 = vmatpush.bf16.xpose.msra.mxu0 %v1821
        %1836 = vmatpush.bf16.xpose.msra.mxu0 %v1818
        %1837 = vmatmul.bf16.gmra.mxu0 %v1815
        %v1838 = vpop.f32.mrf.mxu0
        %v1839 = vadd.f32 %v1648, %v1838
        %v1840 = vpop.f32.mrf.mxu0
        %1841 = vdwg.mxu0
        %v1842 = vsel %vm1678, %v1839, -inf
        %1843 = vmax.xlane.f32.xlu0 %v1842
        %v1844 = vpop.xlane.xlu0 %1843
        %v1845 = vsub.f32 %v1839, %v1844
        %v1846 = vmul.f32 %v1845, 1.442695
        %v1847 = vpow.pop %v1846
        %v1848 = vsel %vm1678, %v1847, 0.0
        %1849 = vadd.xlane.f32.xlu0 %v1848
        %v1850 = vpop.xlane.xlu0 %1849
        %v1851 = vrcp.pop %v1850
        %v1852 = vmul.f32 %v1847, %v1851
        %v1853 = vpack.c.bf16 %v1852, %v1852
        %1854 = vrot.lane.b32.xlu0 %v1691, 112
        %v1855 = vpop.permute.xlu0 %1854
        %1856 = vrot.lane.b32.xlu0 %v1692, 112
        %v1857 = vpop.permute.xlu0 %1856
        %1858 = vrot.lane.b32.xlu0 %v1693, 112
        %v1859 = vpop.permute.xlu0 %1858
        %1860 = vrot.lane.b32.xlu0 %v1694, 112
        %v1861 = vpop.permute.xlu0 %1860
        %v1867 = vsel %vm1678, %v1853, 0
        %1869 = vmatpush.bf16.msra.mxu0 0
        %1870 = vmatpush.bf16.msra.mxu0 0
        %1871 = vmatpush.bf16.msra.mxu0 0
        %1872 = vmatpush.bf16.msra.mxu0 0
        %1873 = vmatpush.bf16.msra.mxu0 %v1861
        %1874 = vmatpush.bf16.msra.mxu0 %v1859
        %1875 = vmatpush.bf16.msra.mxu0 %v1857
        %1876 = vmatpush.bf16.msra.mxu0 %v1855
        %1877 = vmatmul.bf16.gmra.mxu0 %v1867
        %v1878 = vpop.f32.mrf.mxu0
        %v1879 = vadd.f32 0.0, %v1878
        %v1880 = vpop.f32.mrf.mxu0
        %1881 = vdwg.mxu0
        %1883 = vrot.lane.b32.xlu0 %v1879, 16
        %v1884 = vpop.permute.xlu0 %1883
        %1886 = vst.msk [vmem:[#allocation2] sm:$0xff] %vm1324, %v1884
        %1887 = vrot.lane.b32.xlu0 %v1642, 104
        %v1888 = vpop.permute.xlu0 %1887
        %1889 = vrot.lane.b32.xlu0 %v1643, 104
        %v1890 = vpop.permute.xlu0 %1889
        %1891 = vrot.lane.b32.xlu0 %v1644, 104
        %v1892 = vpop.permute.xlu0 %1891
        %1893 = vrot.lane.b32.xlu0 %v1645, 104
        %v1894 = vpop.permute.xlu0 %1893
        %1895 = vrot.lane.b32.xlu0 %v1646, 104
        %v1896 = vpop.permute.xlu0 %1895
        %v1898 = vsel %vm1147, %v1888, 0
        %v1901 = vsel %vm1147, %v1890, 0
        %v1904 = vsel %vm1147, %v1892, 0
        %v1907 = vsel %vm1147, %v1894, 0
        %v1910 = vsel %vm1147, %v1896, 0
        %1912 = vmatpush.bf16.xpose.msra.mxu0 0
        %1913 = vmatpush.bf16.xpose.msra.mxu0 0
        %1914 = vmatpush.bf16.xpose.msra.mxu0 0
        %1915 = vmatpush.bf16.xpose.msra.mxu0 0
        %1916 = vmatpush.bf16.xpose.msra.mxu0 %v1910
        %1917 = vmatpush.bf16.xpose.msra.mxu0 %v1907
        %1918 = vmatpush.bf16.xpose.msra.mxu0 %v1904
        %1919 = vmatpush.bf16.xpose.msra.mxu0 %v1901
        %1920 = vmatmul.bf16.gmra.mxu0 %v1898
        %v1921 = vpop.f32.mrf.mxu0
        %v1922 = vadd.f32 %v1648, %v1921
        %v1923 = vpop.f32.mrf.mxu0
        %1924 = vdwg.mxu0
        %v1925 = vsel %vm1678, %v1922, -inf
        %1926 = vmax.xlane.f32.xlu0 %v1925
        %v1927 = vpop.xlane.xlu0 %1926
        %v1928 = vsub.f32 %v1922, %v1927
        %v1929 = vmul.f32 %v1928, 1.442695
        %v1930 = vpow.pop %v1929
        %v1931 = vsel %vm1678, %v1930, 0.0
        %1932 = vadd.xlane.f32.xlu0 %v1931
        %v1933 = vpop.xlane.xlu0 %1932
        %v1934 = vrcp.pop %v1933
        %v1935 = vmul.f32 %v1930, %v1934
        %v1936 = vpack.c.bf16 %v1935, %v1935
        %1937 = vrot.lane.b32.xlu0 %v1691, 104
        %v1938 = vpop.permute.xlu0 %1937
        %1939 = vrot.lane.b32.xlu0 %v1692, 104
        %v1940 = vpop.permute.xlu0 %1939
        %1941 = vrot.lane.b32.xlu0 %v1693, 104
        %v1942 = vpop.permute.xlu0 %1941
        %1943 = vrot.lane.b32.xlu0 %v1694, 104
        %v1944 = vpop.permute.xlu0 %1943
        %v1950 = vsel %vm1678, %v1936, 0
        %1952 = vmatpush.bf16.msra.mxu0 0
        %1953 = vmatpush.bf16.msra.mxu0 0
        %1954 = vmatpush.bf16.msra.mxu0 0
        %1955 = vmatpush.bf16.msra.mxu0 0
        %1956 = vmatpush.bf16.msra.mxu0 %v1944
        %1957 = vmatpush.bf16.msra.mxu0 %v1942
        %1958 = vmatpush.bf16.msra.mxu0 %v1940
        %1959 = vmatpush.bf16.msra.mxu0 %v1938
        %1960 = vmatmul.bf16.gmra.mxu0 %v1950
        %v1961 = vpop.f32.mrf.mxu0
        %v1962 = vadd.f32 0.0, %v1961
        %v1963 = vpop.f32.mrf.mxu0
        %1964 = vdwg.mxu0
        %1966 = vrot.lane.b32.xlu0 %v1962, 24
        %v1967 = vpop.permute.xlu0 %1966
        %1969 = vst.msk [vmem:[#allocation2] sm:$0xff] %vm1386, %v1967
        %v1970 = vld [vmem:[#allocation2] sm:$0xff]
        %v1971 = vpack.c.bf16 %v1970, %v1970
        %v1972 = vld [vmem:[%s39] sm:$0xf]
        %v1973 = vld [vmem:[%s39 + $0x4] sm:$0xf]
        %v1974 = vld [vmem:[%s39 + $0x8] sm:$0xf]
        %v1975 = vld [vmem:[%s39 + $0xc] sm:$0xf]
        %v1976 = vld [vmem:[%s41] sm:$0x1]
        %v1978 = vperm.slane %v1976, 0
        %v1984 = vunpack.c.l.b16 %v1972
        %v1985 = vunpack.c.l.b16 %v1973
        %v1986 = vunpack.c.l.b16 %v1974
        %v1987 = vunpack.c.l.b16 %v1975
        %v1988 = vpack.c.b16 %v1985, %v1984
        %v1989 = vpack.c.b16 %v1987, %v1986
        %v1993 = vsel %vm1089, %v1971, 0
        %1995 = vmatpush.bf16.msra.mxu0 0
        %1996 = vmatpush.bf16.msra.mxu0 0
        %1997 = vmatpush.bf16.msra.mxu0 0
        %1998 = vmatpush.bf16.msra.mxu0 0
        %1999 = vmatpush.bf16.msra.mxu0 0
        %2000 = vmatpush.bf16.msra.mxu0 0
        %2001 = vmatpush.bf16.msra.mxu0 %v1989
        %2002 = vmatpush.bf16.msra.mxu0 %v1988
        %2003 = vmatmul.bf16.gmra.mxu0 %v1993
        %v2004 = vpop.f32.mrf.mxu0
        %v2005 = vadd.f32 %v1978, %v2004
        %v2006 = vpop.f32.mrf.mxu0
        %2007 = vdwg.mxu0
        %v2008 = vadd.f32 %v1465, %v2005
        %v2009 = vld [vmem:[%s43] sm:$0x1]
        %v2010 = vld [vmem:[%s45] sm:$0x1]
        %v2011 = vsel %vm1089, %v2008, 0.0
        %2012 = vadd.xlane.f32.xlu0 %v2011
        %v2013 = vpop.xlane.xlu0 %2012
        %v2014 = vmul.f32 %v2013, %v1438
        %v2015 = vsub.f32 %v2008, %v2014
        %v2016 = vmul.f32 %v2015, %v2015
        %v2017 = vsel %vm1089, %v2016, 0.0
        %2018 = vadd.xlane.f32.xlu0 %v2017
        %v2019 = vpop.xlane.xlu0 %2018
        %v2020 = vmul.f32 %v2019, %v1438
        %v2021 = vadd.f32 %v2020, 1e-05
        %v2022 = vrsqrt.pop %v2021
        %v2023 = vmul.f32 %v2022, %v2021
        %v2024 = vmul.f32 %v2023, %v2022
        %v2025 = vmul.f32 0.5, %v2024
        %v2026 = vsub.f32 1.5, %v2025
        %v2027 = vmul.f32 %v2022, %v2026
        %vm2028 = vweird.f32 %v2021
        %vm2029 = vweird.f32 %v2022
        %vm2030 = vmor %vm2028, %vm2029
        %v2031 = vsel %vm2030, %v2022, %v2027
        %v2032 = vmul.f32 %v2015, %v2031
        %v2034 = vperm.slane %v2009, 0
        %v2036 = vmul.f32 %v2032, %v2034
        %v2038 = vperm.slane %v2010, 0
        %v2040 = vadd.f32 %v2036, %v2038
        %v2041 = vpack.c.bf16 %v2040, %v2040
        %v2042 = vld [vmem:[%s47] sm:$0xf]
        %v2043 = vld [vmem:[%s47 + $0x4] sm:$0xf]
        %v2044 = vld [vmem:[%s47 + $0x8] sm:$0xf]
        %v2045 = vld [vmem:[%s47 + $0xc] sm:$0xf]
        %v2046 = vld [vmem:[%s49] sm:$0x1]
        %v2048 = vperm.slane %v2046, 0
        %v2054 = vunpack.c.l.b16 %v2042
        %v2055 = vunpack.c.l.b16 %v2043
        %v2056 = vunpack.c.l.b16 %v2044
        %v2057 = vunpack.c.l.b16 %v2045
        %v2058 = vpack.c.b16 %v2055, %v2054
        %v2059 = vpack.c.b16 %v2057, %v2056
        %v2063 = vsel %vm1089, %v2041, 0
        %2065 = vmatpush.bf16.msra.mxu0 0
        %2066 = vmatpush.bf16.msra.mxu0 0
        %2067 = vmatpush.bf16.msra.mxu0 0
        %2068 = vmatpush.bf16.msra.mxu0 0
        %2069 = vmatpush.bf16.msra.mxu0 0
        %2070 = vmatpush.bf16.msra.mxu0 0
        %2071 = vmatpush.bf16.msra.mxu0 %v2059
        %2072 = vmatpush.bf16.msra.mxu0 %v2058
        %2073 = vmatmul.bf16.gmra.mxu0 %v2063
        %v2074 = vpop.f32.mrf.mxu0
        %v2075 = vadd.f32 %v2048, %v2074
        %v2076 = vpop.f32.mrf.mxu0
        %2077 = vdwg.mxu0
        %v2078 = vmax.f32 %v2075, 0.0
        %v2079 = vpack.c.bf16 %v2078, %v2078
        %v2080 = vld [vmem:[%s51] sm:$0xf]
        %v2081 = vld [vmem:[%s51 + $0x4] sm:$0xf]
        %v2082 = vld [vmem:[%s51 + $0x8] sm:$0xf]
        %v2083 = vld [vmem:[%s51 + $0xc] sm:$0xf]
        %v2084 = vld [vmem:[%s51 + $0x10] sm:$0xf]
        %v2085 = vld [vmem:[%s51 + $0x14] sm:$0xf]
        %v2086 = vld [vmem:[%s51 + $0x18] sm:$0xf]
        %v2087 = vld [vmem:[%s51 + $0x1c] sm:$0xf]
        %v2088 = vld [vmem:[%s53] sm:$0x1]
        %v2090 = vperm.slane %v2088, 0
        %v2100 = vunpack.c.l.b16 %v2080
        %v2101 = vunpack.c.l.b16 %v2081
        %v2102 = vunpack.c.l.b16 %v2082
        %v2103 = vunpack.c.l.b16 %v2083
        %v2104 = vunpack.c.l.b16 %v2084
        %v2105 = vunpack.c.l.b16 %v2085
        %v2106 = vunpack.c.l.b16 %v2086
        %v2107 = vunpack.c.l.b16 %v2087
        %v2108 = vpack.c.b16 %v2101, %v2100
        %v2109 = vpack.c.b16 %v2103, %v2102
        %v2110 = vpack.c.b16 %v2105, %v2104
        %v2111 = vpack.c.b16 %v2107, %v2106
        %v2117 = vsel %vm1678, %v2079, 0
        %2119 = vmatpush.bf16.msra.mxu0 0
        %2120 = vmatpush.bf16.msra.mxu0 0
        %2121 = vmatpush.bf16.msra.mxu0 0
        %2122 = vmatpush.bf16.msra.mxu0 0
        %2123 = vmatpush.bf16.msra.mxu0 %v2111
        %2124 = vmatpush.bf16.msra.mxu0 %v2110
        %2125 = vmatpush.bf16.msra.mxu0 %v2109
        %2126 = vmatpush.bf16.msra.mxu0 %v2108
        %2127 = vmatmul.bf16.gmra.mxu0 %v2117
        %v2128 = vpop.f32.mrf.mxu0
        %v2129 = vadd.f32 %v2090, %v2128
        %v2130 = vpop.f32.mrf.mxu0
        %2131 = vdwg.mxu0
        %v2132 = vadd.f32 %v2040, %v2129
        %v2133 = vld [vmem:[%s55] sm:$0x1]
        %v2134 = vld [vmem:[%s57] sm:$0x1]
        %v2135 = vsel %vm1089, %v2132, 0.0
        %2136 = vadd.xlane.f32.xlu0 %v2135
        %v2137 = vpop.xlane.xlu0 %2136
        %v2138 = vmul.f32 %v2137, %v1438
        %v2139 = vsub.f32 %v2132, %v2138
        %v2140 = vmul.f32 %v2139, %v2139
        %v2141 = vsel %vm1089, %v2140, 0.0
        %2142 = vadd.xlane.f32.xlu0 %v2141
        %v2143 = vpop.xlane.xlu0 %2142
        %v2144 = vmul.f32 %v2143, %v1438
        %v2145 = vadd.f32 %v2144, 1e-05
        %v2146 = vrsqrt.pop %v2145
        %v2147 = vmul.f32 %v2146, %v2145
        %v2148 = vmul.f32 %v2147, %v2146
        %v2149 = vmul.f32 0.5, %v2148
        %v2150 = vsub.f32 1.5, %v2149
        %v2151 = vmul.f32 %v2146, %v2150
        %vm2152 = vweird.f32 %v2145
        %vm2153 = vweird.f32 %v2146
        %vm2154 = vmor %vm2152, %vm2153
        %v2155 = vsel %vm2154, %v2146, %v2151
        %v2156 = vmul.f32 %v2139, %v2155
        %v2158 = vperm.slane %v2133, 0
        %v2160 = vmul.f32 %v2156, %v2158
        %v2162 = vperm.slane %v2134, 0
        %v2164 = vadd.f32 %v2160, %v2162
        %2165 = vst.msk [vmem:[%s1019] sm:$0xff] %vm1089, %v2164
        %v2166 = vld [vmem:[%s59] sm:$0x1]
        %v2167 = vld [vmem:[%s61] sm:$0x1]
        %v2168 = vsel %vm1089, %v2164, 0.0
        %2169 = vadd.xlane.f32.xlu0 %v2168
        %v2170 = vpop.xlane.xlu0 %2169
        %v2171 = vmul.f32 %v2170, %v1438
        %v2172 = vsub.f32 %v2164, %v2171
        %v2173 = vmul.f32 %v2172, %v2172
        %v2174 = vsel %vm1089, %v2173, 0.0
        %2175 = vadd.xlane.f32.xlu0 %v2174
        %v2176 = vpop.xlane.xlu0 %2175
        %v2177 = vmul.f32 %v2176, %v1438
        %v2178 = vadd.f32 %v2177, 1e-05
        %v2179 = vrsqrt.pop %v2178
        %v2180 = vmul.f32 %v2179, %v2178
        %v2181 = vmul.f32 %v2180, %v2179
        %v2182 = vmul.f32 0.5, %v2181
        %v2183 = vsub.f32 1.5, %v2182
        %v2184 = vmul.f32 %v2179, %v2183
        %vm2185 = vweird.f32 %v2178
        %vm2186 = vweird.f32 %v2179
        %vm2187 = vmor %vm2185, %vm2186
        %v2188 = vsel %vm2187, %v2179, %v2184
        %v2189 = vmul.f32 %v2172, %v2188
        %v2191 = vperm.slane %v2166, 0
        %v2193 = vmul.f32 %v2189, %v2191
        %v2195 = vperm.slane %v2167, 0
        %v2197 = vadd.f32 %v2193, %v2195
        %2198 = vst.msk [vmem:[%s1046] sm:$0xff] %vm1089, %v2197
        %s2199 = sand.u32 %s759, 1
        %s2200 = scalar_lea.sflag [#allocation4], %s2199
        %s2201 = sand.u32 %s759, 1
        %s2202 = smul.addr %s2201, 8
        %s2203 = scalar_lea.vmem [#allocation3], %s2202
        %p2204 = scmp.lt.s32.totalorder %s80, 1
        %s2205 = scalar_select %p2204, %s80, 1
        %s2206 = smul.addr %s2205, 8
        %s2207 = scalar_lea.vmem %s65, %s2206
        // Predicated region
        $region145: #{graphdetr_forward.10} parent=143 // pred_check
          %p2208 = pneg %p769
        $region146: #{graphdetr_forward.10} parent=143 // pred_check_branch
          %2210 = sbr.rel (%p2208) target = $region148
        $region147: #{graphdetr_forward.10} parent=143 // pred_region
          %2212 = vsyncadd %s2200, 0
          %s2213 = smul.addr %s80, 8
          %s2214 = scalar_lea.hbm %s63, %s2213
          %s2216 = sshll.u32 %s2203, 4
          %s2217 = int_to_ptr.vmem [resolvable:$true] %s2216
          %s2218 = sshll.u32 %s2214, 4
          %s2219 = int_to_ptr.hbm [resolvable:$true] %s2218
          %2221 = dma.vmem_to_hbm [thread:$0]  %s2217, 128, %s2219, %s2200
        $region148: #{graphdetr_forward.10} parent=143 // pred_fallthru
          _
        // Predicated region
        $region149: #{graphdetr_forward.10} parent=143 // pred_check
          %p2222 = pneg %p795
        $region150: #{graphdetr_forward.10} parent=143 // pred_check_branch
          %2224 = sbr.rel (%p2222) target = $region152
        $region151: #{graphdetr_forward.10} parent=143 // pred_region
          _
        $region152: #{graphdetr_forward.10} parent=143 // pred_fallthru
          _
      $region144: #{graphdetr_forward.10} parent=5 // pred_fallthru
        _
      %p2225 = scmp.le.s32.totalorder 2, %s75
      // Predicated region
      $region153: #{graphdetr_forward.10} parent=5 // pred_check
        %p2226 = pneg %p2225
      $region154: #{graphdetr_forward.10} parent=5 // pred_check_branch
        %2228 = sbr.rel (%p2226) target = $region156
      $region155: #{graphdetr_forward.10} parent=5 // pred_region
        %s2229 = ssub.s32 %s75, 2
        // Predicated region
        $region157: #{graphdetr_forward.10} parent=155 // pred_check
          %p2230 = pneg %p775
        $region158: #{graphdetr_forward.10} parent=155 // pred_check_branch
          %2232 = sbr.rel (%p2230) target = $region160
        $region159: #{graphdetr_forward.10} parent=155 // pred_region
          %s2233 = sand.u32 %s760, 1
          %s2234 = scalar_lea.sflag [#allocation4], %s2233
          %s2235 = sand.u32 %s760, 1
          %s2236 = smul.addr %s2235, 8
          %s2237 = scalar_lea.vmem [#allocation3], %s2236
          %2239 = dma.done %s2234, 128
        $region160: #{graphdetr_forward.10} parent=155 // pred_fallthru
          _
        // Predicated region
        $region161: #{graphdetr_forward.10} parent=155 // pred_check
          %p2240 = pneg %p801
        $region162: #{graphdetr_forward.10} parent=155 // pred_check_branch
          %2242 = sbr.rel (%p2240) target = $region164
        $region163: #{graphdetr_forward.10} parent=155 // pred_region
          %p2243 = scmp.lt.s32.totalorder %s81, 1
          %s2244 = scalar_select %p2243, %s81, 1
          %s2245 = smul.addr %s2244, 8
          %s2246 = scalar_lea.vmem %s65, %s2245
        $region164: #{graphdetr_forward.10} parent=155 // pred_fallthru
          _
      $region156: #{graphdetr_forward.10} parent=5 // pred_fallthru
        _
    $region6: #{graphdetr_forward.10} parent=1 // loop_footer
      %s79 = sadd.s32 1, %s75
    $region7: #{graphdetr_forward.10} parent=1 // loop_footer_branch
      %74 = sbr.rel target = $region3
    $region8: #{graphdetr_forward.10} parent=1 // loop_exit
      _
    %2247 = vsyncpa [#allocation4], 1
    %s2248 = scalar_lea.sflag [#allocation4], 1
    %2249 = vsyncpa %s2248, 1

</llo_original>
